<compile_context>
chip_gen: v5e
topology: v5e:2x2
jax: 0.10.0
libtpu: 0.0.40
codegen_flags: <defaults>
</compile_context>

<pallas_src>
import numpy as np
import jax
import jax.numpy as jnp
from jax.experimental import pallas as pl
from jax.experimental.pallas import tpu as pltpu

KW = 4            # conv kernel size
PAD = 2           # torch padding = ceil((kw-1)/2)
LRELU_SLOPE = 0.2
BN_EPS = 1e-5
CPAD = 128        # every channel dim padded to one full lane width

INPUT_NC = 4
NDF = 8
# (cin, cout, stride, has_bn, has_lrelu)
LAYER_CFG = [
    (INPUT_NC, NDF,     2, False, True),
    (NDF,      NDF * 2, 2, True,  True),
    (NDF * 2,  NDF * 4, 2, True,  True),
    (NDF * 4,  NDF * 8, 1, True,  True),
    (NDF * 8,  1,       1, False, False),
]


def _round_up(x, m):
    return (x + m - 1) // m * m


# ----------------------------- Pallas kernel --------------------------------

def _make_layer_kernel(stride, has_bn, has_lrelu, inv_count, n_rows):
    """Fused conv(+bias)(+BN)(+LeakyReLU) for one layer.

    grid = (KW,) over the kernel row kh ("arbitrary" reduction axis).
    Each step the BlockSpecs DMA only that kh's pre-shifted, phase-split input
    slab and weight taps; 4 of the 16 conv taps are done per step as bf16 MXU
    matmuls accumulating into a resident f32 VMEM scratch.  The epilogue
    (bias / exact batch-norm stats / LeakyReLU) runs under pl.when on the
    last step and writes a lane-dense (rows, 128) output slab.
    """
    n_wphase = stride           # number of column-parity phases (1 or 2)
    n_qw = KW // stride         # taps per (kh, phase)

    def kernel(x_ref, w_ref, *rest):
        if has_bn:
            g_ref, b_ref, m_ref, o_ref, acc_ref = rest
        else:
            b_ref, o_ref, acc_ref = rest

        kh = pl.program_id(0)

        @pl.when(kh == 0)
        def _init():
            acc_ref[...] = jnp.zeros_like(acc_ref)

        # 4 conv taps per grid step, all on the MXU (bf16 in, f32 accumulate).
        for aw in range(n_wphase):
            slab = x_ref[0, aw]                          # (n_rows + qmax, CPAD)
            for qw in range(n_qw):
                kw = stride * qw + aw
                lhs = slab[qw:qw + n_rows, :]            # static flat shift
                acc_ref[...] += jnp.dot(lhs, w_ref[0, kw],
                                        preferred_element_type=jnp.float32)

        @pl.when(kh == KW - 1)
        def _finalize():
            y = acc_ref[...]
            if has_bn:
                # Exact training-mode batch statistics over the valid rows.
                # The conv bias is skipped for BN layers (mean subtraction
                # cancels it exactly).
                m = m_ref[...]                                   # (n_rows, 1)
                mean = jnp.sum(y * m, axis=0, keepdims=True) * inv_count
                d = y - mean
                var = jnp.sum(d * d * m, axis=0, keepdims=True) * inv_count
                y = d * jax.lax.rsqrt(var + BN_EPS)
                y = y * g_ref[...] + b_ref[...]
            else:
                y = y + b_ref[...]
            if has_lrelu:
                y = jnp.where(y > 0, y, LRELU_SLOPE * y)
            o_ref[...] = y.astype(o_ref.dtype)

    return kernel


# ------------------------------ layer wrapper --------------------------------

def _conv_layer_pallas(x, p, stride, has_bn, has_lrelu):
    """x: (N, H, W, CPAD) bf16 (channels already zero-padded to CPAD).
    Returns (N, OH, OW, CPAD) bf16."""
    n, h, w, c = x.shape
    s = stride
    oh, ow = h // s + 1, w // s + 1              # 2*PAD - KW == 0
    hp, wp = h + 2 * PAD, w + 2 * PAD
    hq, wq = -(-hp // s), -(-wp // s)            # phase-plane extents

    # spatial zero pad; also round H/W up to a multiple of the stride
    xp = jnp.pad(x, ((0, 0),
                     (PAD, PAD + s * hq - hp),
                     (PAD, PAD + s * wq - wp),
                     (0, 0)))

    g_valid = n * hq * wq                        # "wide" flat output rows
    g_rows = _round_up(g_valid, 8)
    qmax = (KW - 1) // s                         # max kh//s == max kw//s
    g_slab = g_rows + qmax                       # rows per per-kh input slab
    g_full = g_rows + qmax * wq + qmax           # rows of a padded phase plane

    # Phase-deinterleave (stride-s row/column parity) and flatten each phase
    # plane into a lane-dense (rows, CPAD) slab.  Pre-shift each kh's slab by
    # (kh//s)*wq rows so every in-kernel tap read is a static contiguous slice.
    planes = {}
    for ah in range(s):
        for aw in range(s):
            plane = xp[:, ah::s, aw::s, :].reshape(n * hq * wq, c)
            planes[(ah, aw)] = jnp.pad(plane, ((0, g_full - g_valid), (0, 0)))
    slabs = []
    for kh in range(KW):
        ah, qh = kh % s, kh // s
        slabs.append(jnp.stack(
            [planes[(ah, aw)][qh * wq: qh * wq + g_slab] for aw in range(s)],
            axis=0))
    x_stack = jnp.stack(slabs, axis=0)           # (KW, s, g_slab, CPAD) bf16

    inv_count = 1.0 / float(n * oh * ow)
    kernel = _make_layer_kernel(s, has_bn, has_lrelu, inv_count, g_rows)

    x_spec = pl.BlockSpec((1, s, g_slab, CPAD), lambda k: (k, 0, 0, 0))
    w_spec = pl.BlockSpec((1, KW, CPAD, CPAD), lambda k: (k, 0, 0, 0))
    vec_spec = pl.BlockSpec((1, CPAD), lambda k: (0, 0))

    if has_bn:
        # Validity mask over the wide flat rows (drops halo rows/cols and the
        # 8-row rounding tail) -- only needed for the BN statistics.
        f = np.arange(g_rows)
        valid = (f < g_valid) & (f % wq < ow) & ((f // wq) % hq < oh)
        mask = jnp.asarray(valid.astype(np.float32)).reshape(g_rows, 1)
        inputs = (x_stack, p["w_stack"], p["gamma"], p["beta"], mask)
        in_specs = [x_spec, w_spec, vec_spec, vec_spec,
                    pl.BlockSpec((g_rows, 1), lambda k: (0, 0))]
    else:
        inputs = (x_stack, p["w_stack"], p["bias"])
        in_specs = [x_spec, w_spec, vec_spec]

    y_wide = pl.pallas_call(
        kernel,
        out_shape=jax.ShapeDtypeStruct((g_rows, CPAD), jnp.bfloat16),
        grid=(KW,),
        in_specs=in_specs,
        out_specs=pl.BlockSpec((g_rows, CPAD), lambda k: (0, 0)),
        scratch_shapes=[pltpu.VMEM((g_rows, CPAD), jnp.float32)],
        compiler_params=pltpu.CompilerParams(
            dimension_semantics=("arbitrary",)),
    )(*inputs)

    y = y_wide[:g_valid].reshape(n, hq, wq, CPAD)[:, :oh, :ow, :]
    return y


# -------------------------------- params -------------------------------------

def init_params(key):
    params = []
    for cin, cout, _s, has_bn, _lr in LAYER_CFG:
        key, kw_, kb_, kg_, kbt_ = jax.random.split(key, 5)
        w_hwio = jax.random.normal(kw_, (KW, KW, cin, cout), jnp.float32) * 0.05
        b = jax.random.normal(kb_, (cout,), jnp.float32) * 0.01
        p = {
            "w_hwio": w_hwio,                                       # reference
            "b": b,                                                 # reference
            "w_stack": jnp.pad(w_hwio, ((0, 0), (0, 0),
                                        (0, CPAD - cin),
                                        (0, CPAD - cout))).astype(jnp.bfloat16),
            "bias": jnp.pad(b, (0, CPAD - cout)).reshape(1, CPAD),
        }
        if has_bn:
            gamma = 1.0 + 0.1 * jax.random.normal(kg_, (cout,), jnp.float32)
            beta = 0.1 * jax.random.normal(kbt_, (cout,), jnp.float32)
            p["gamma_raw"] = gamma
            p["beta_raw"] = beta
            p["gamma"] = jnp.pad(gamma, (0, CPAD - cout)).reshape(1, CPAD)
            p["beta"] = jnp.pad(beta, (0, CPAD - cout)).reshape(1, CPAD)
        params.append(p)
    return params


# -------------------------------- forward ------------------------------------

@jax.jit
def nlayer_discriminator_forward(x_nchw, params):
    """Returns (final_output, [feat0, ..., feat4]) in NCHW, matching torch."""
    x = jnp.transpose(x_nchw, (0, 2, 3, 1)).astype(jnp.float32)      # -> NHWC
    x = jnp.pad(x, ((0, 0), (0, 0), (0, 0), (0, CPAD - x.shape[-1])))
    x = x.astype(jnp.bfloat16)                                       # bf16 MXU path
    feats = []
    for (cin, cout, stride, has_bn, has_lrelu), p in zip(LAYER_CFG, params):
        x = _conv_layer_pallas(x, p, stride, has_bn, has_lrelu)      # (N,OH,OW,CPAD)
        feats.append(jnp.transpose(x[..., :cout], (0, 3, 1, 2)).astype(jnp.float32))
    return feats[-1], feats


# ---------------------------- pure-JAX reference ------------------------------

def reference_forward(x_nchw, params):
    x = jnp.transpose(x_nchw, (0, 2, 3, 1)).astype(jnp.float32)
    feats = []
    for (cin, cout, stride, has_bn, has_lrelu), p in zip(LAYER_CFG, params):
        y = jax.lax.conv_general_dilated(
            x, p["w_hwio"], (stride, stride), [(PAD, PAD), (PAD, PAD)],
            dimension_numbers=("NHWC", "HWIO", "NHWC"))
        y = y + p["b"].reshape(1, 1, 1, cout)       # bias kept here on purpose
        if has_bn:
            mean = jnp.mean(y, axis=(0, 1, 2), keepdims=True)
            var = jnp.mean((y - mean) ** 2, axis=(0, 1, 2), keepdims=True)
            y = (y - mean) * jax.lax.rsqrt(var + BN_EPS)
            y = (y * p["gamma_raw"].reshape(1, 1, 1, cout)
                 + p["beta_raw"].reshape(1, 1, 1, cout))
        if has_lrelu:
            y = jnp.where(y > 0, y, LRELU_SLOPE * y)
        x = y
        feats.append(jnp.transpose(x, (0, 3, 1, 2)))
    return feats[-1], feats


# ---------------------------------- main --------------------------------------

if __name__ == "__main__":
    key = jax.random.PRNGKey(0)
    key, kx = jax.random.split(key)
    x = jax.random.normal(kx, (2, INPUT_NC, 16, 16), jnp.float32)    # NCHW input
    params = init_params(key)

    out, feats = nlayer_discriminator_forward(x, params)
    out = jax.block_until_ready(out)
    feats = [jax.block_until_ready(f) for f in feats]

    ref_out, ref_feats = reference_forward(x, params)
    assert out.shape == ref_out.shape
    assert len(feats) == len(LAYER_CFG)
    # bf16 MXU inputs + bf16 inter-layer activations -> relaxed tolerance.
    for f, rf in zip(feats, ref_feats):
        np.testing.assert_allclose(np.asarray(f), np.asarray(rf),
                                   rtol=5e-2, atol=5e-2)
    print("KERNEL_OK")
</pallas_src>

<mosaic_0001>
module attributes {stable_mosaic.version = 11 : i64} {
  func.func @kernel(%arg0: i32, %arg1: memref<1x2x201x128xbf16, #tpu.memory_space<vmem>>, %arg2: memref<1x4x128x128xbf16, #tpu.memory_space<vmem>>, %arg3: memref<1x128xf32, #tpu.memory_space<vmem>>, %arg4: memref<200x128xbf16, #tpu.memory_space<vmem>>, %arg5: memref<200x128xf32, #tpu.memory_space<vmem>>) attributes {dimension_semantics = [#tpu.dimension_semantics<arbitrary>], iteration_bounds = array<i64: 4>, scalar_prefetch = 0 : i64, scratch_operands = 1 : i64, tpu.core_type = #tpu.core_type<tc>, window_params = [{transform_indices = @transform_0, window_bounds = array<i64: 1, 2, 201, 128>}, {transform_indices = @transform_1, window_bounds = array<i64: 1, 4, 128, 128>}, {pipeline_mode = #tpu.pipeline_mode<synchronous>, transform_indices = @transform_2, window_bounds = array<i64: 1, 128>}, {pipeline_mode = #tpu.pipeline_mode<synchronous>, transform_indices = @transform_3, window_bounds = array<i64: 200, 128>}]} {
    %c0_i32 = arith.constant 0 : i32
    %0 = arith.cmpi eq, %arg0, %c0_i32 : i32
    %1 = arith.extui %0 : i1 to i32
    %c0_i32_0 = arith.constant 0 : i32
    %2 = arith.cmpi ne, %1, %c0_i32_0 : i32
    scf.if %2 {
      %cst_41 = arith.constant 0.000000e+00 : f32
      %38 = vector.broadcast %cst_41 : f32 to vector<200x128xf32>
      %c0_42 = arith.constant 0 : index
      %c0_43 = arith.constant 0 : index
      %39 = vector.load %arg5[%c0_42, %c0_43] : memref<200x128xf32, #tpu.memory_space<vmem>>, vector<200x128xf32>
      tpu.vector_store %arg5[%c0_42, %c0_43], %38 {strides = array<i32>} : memref<200x128xf32, #tpu.memory_space<vmem>>, vector<200x128xf32>,
    } else {
    }
    %c0 = arith.constant 0 : index
    %c0_1 = arith.constant 0 : index
    %c0_2 = arith.constant 0 : index
    %c0_3 = arith.constant 0 : index
    %3 = vector.load %arg1[%c0, %c0_1, %c0_2, %c0_3] : memref<1x2x201x128xbf16, #tpu.memory_space<vmem>>, vector<1x1x201x128xbf16>
    %4 = vector.shape_cast %3 : vector<1x1x201x128xbf16> to vector<201x128xbf16>
    %5 = vector.extract_strided_slice %4 {offsets = [0, 0], sizes = [200, 128], strides = [1, 1]} : vector<201x128xbf16> to vector<200x128xbf16>
    %c0_4 = arith.constant 0 : index
    %c0_5 = arith.constant 0 : index
    %6 = vector.load %arg5[%c0_4, %c0_5] : memref<200x128xf32, #tpu.memory_space<vmem>>, vector<200x128xf32>
    %c0_6 = arith.constant 0 : index
    %c0_7 = arith.constant 0 : index
    %c0_8 = arith.constant 0 : index
    %c0_9 = arith.constant 0 : index
    %7 = vector.load %arg2[%c0_6, %c0_7, %c0_8, %c0_9] : memref<1x4x128x128xbf16, #tpu.memory_space<vmem>>, vector<1x1x128x128xbf16>
    %8 = vector.shape_cast %7 : vector<1x1x128x128xbf16> to vector<128x128xbf16>
    %cst = arith.constant dense<0.000000e+00> : vector<200x128xf32>
    %9 = tpu.matmul %5, %8, %cst {dimension_numbers = #tpu.dot_dimension_numbers<[1], [0], [0], [1], [0, 0, 1, 1], [], []>} : vector<200x128xbf16>, vector<128x128xbf16>, vector<200x128xf32> -> vector<200x128xf32>
    %10 = arith.addf %6, %9 : vector<200x128xf32>
    %c0_10 = arith.constant 0 : index
    %c0_11 = arith.constant 0 : index
    %11 = vector.load %arg5[%c0_10, %c0_11] : memref<200x128xf32, #tpu.memory_space<vmem>>, vector<200x128xf32>
    tpu.vector_store %arg5[%c0_10, %c0_11], %10 {strides = array<i32>} : memref<200x128xf32, #tpu.memory_space<vmem>>, vector<200x128xf32>,
    %12 = vector.extract_strided_slice %4 {offsets = [1, 0], sizes = [200, 128], strides = [1, 1]} : vector<201x128xbf16> to vector<200x128xbf16>
    %c0_12 = arith.constant 0 : index
    %c0_13 = arith.constant 0 : index
    %13 = vector.load %arg5[%c0_12, %c0_13] : memref<200x128xf32, #tpu.memory_space<vmem>>, vector<200x128xf32>
    %c0_14 = arith.constant 0 : index
    %c2 = arith.constant 2 : index
    %c0_15 = arith.constant 0 : index
    %c0_16 = arith.constant 0 : index
    %14 = vector.load %arg2[%c0_14, %c2, %c0_15, %c0_16] : memref<1x4x128x128xbf16, #tpu.memory_space<vmem>>, vector<1x1x128x128xbf16>
    %15 = vector.shape_cast %14 : vector<1x1x128x128xbf16> to vector<128x128xbf16>
    %cst_17 = arith.constant dense<0.000000e+00> : vector<200x128xf32>
    %16 = tpu.matmul %12, %15, %cst_17 {dimension_numbers = #tpu.dot_dimension_numbers<[1], [0], [0], [1], [0, 0, 1, 1], [], []>} : vector<200x128xbf16>, vector<128x128xbf16>, vector<200x128xf32> -> vector<200x128xf32>
    %17 = arith.addf %13, %16 : vector<200x128xf32>
    %c0_18 = arith.constant 0 : index
    %c0_19 = arith.constant 0 : index
    %18 = vector.load %arg5[%c0_18, %c0_19] : memref<200x128xf32, #tpu.memory_space<vmem>>, vector<200x128xf32>
    tpu.vector_store %arg5[%c0_18, %c0_19], %17 {strides = array<i32>} : memref<200x128xf32, #tpu.memory_space<vmem>>, vector<200x128xf32>,
    %c0_20 = arith.constant 0 : index
    %c1 = arith.constant 1 : index
    %c0_21 = arith.constant 0 : index
    %c0_22 = arith.constant 0 : index
    %19 = vector.load %arg1[%c0_20, %c1, %c0_21, %c0_22] : memref<1x2x201x128xbf16, #tpu.memory_space<vmem>>, vector<1x1x201x128xbf16>
    %20 = vector.shape_cast %19 : vector<1x1x201x128xbf16> to vector<201x128xbf16>
    %21 = vector.extract_strided_slice %20 {offsets = [0, 0], sizes = [200, 128], strides = [1, 1]} : vector<201x128xbf16> to vector<200x128xbf16>
    %c0_23 = arith.constant 0 : index
    %c0_24 = arith.constant 0 : index
    %22 = vector.load %arg5[%c0_23, %c0_24] : memref<200x128xf32, #tpu.memory_space<vmem>>, vector<200x128xf32>
    %c0_25 = arith.constant 0 : index
    %c1_26 = arith.constant 1 : index
    %c0_27 = arith.constant 0 : index
    %c0_28 = arith.constant 0 : index
    %23 = vector.load %arg2[%c0_25, %c1_26, %c0_27, %c0_28] : memref<1x4x128x128xbf16, #tpu.memory_space<vmem>>, vector<1x1x128x128xbf16>
    %24 = vector.shape_cast %23 : vector<1x1x128x128xbf16> to vector<128x128xbf16>
    %cst_29 = arith.constant dense<0.000000e+00> : vector<200x128xf32>
    %25 = tpu.matmul %21, %24, %cst_29 {dimension_numbers = #tpu.dot_dimension_numbers<[1], [0], [0], [1], [0, 0, 1, 1], [], []>} : vector<200x128xbf16>, vector<128x128xbf16>, vector<200x128xf32> -> vector<200x128xf32>
    %26 = arith.addf %22, %25 : vector<200x128xf32>
    %c0_30 = arith.constant 0 : index
    %c0_31 = arith.constant 0 : index
    %27 = vector.load %arg5[%c0_30, %c0_31] : memref<200x128xf32, #tpu.memory_space<vmem>>, vector<200x128xf32>
    tpu.vector_store %arg5[%c0_30, %c0_31], %26 {strides = array<i32>} : memref<200x128xf32, #tpu.memory_space<vmem>>, vector<200x128xf32>,
    %28 = vector.extract_strided_slice %20 {offsets = [1, 0], sizes = [200, 128], strides = [1, 1]} : vector<201x128xbf16> to vector<200x128xbf16>
    %c0_32 = arith.constant 0 : index
    %c0_33 = arith.constant 0 : index
    %29 = vector.load %arg5[%c0_32, %c0_33] : memref<200x128xf32, #tpu.memory_space<vmem>>, vector<200x128xf32>
    %c0_34 = arith.constant 0 : index
    %c3 = arith.constant 3 : index
    %c0_35 = arith.constant 0 : index
    %c0_36 = arith.constant 0 : index
    %30 = vector.load %arg2[%c0_34, %c3, %c0_35, %c0_36] : memref<1x4x128x128xbf16, #tpu.memory_space<vmem>>, vector<1x1x128x128xbf16>
    %31 = vector.shape_cast %30 : vector<1x1x128x128xbf16> to vector<128x128xbf16>
    %cst_37 = arith.constant dense<0.000000e+00> : vector<200x128xf32>
    %32 = tpu.matmul %28, %31, %cst_37 {dimension_numbers = #tpu.dot_dimension_numbers<[1], [0], [0], [1], [0, 0, 1, 1], [], []>} : vector<200x128xbf16>, vector<128x128xbf16>, vector<200x128xf32> -> vector<200x128xf32>
    %33 = arith.addf %29, %32 : vector<200x128xf32>
    %c0_38 = arith.constant 0 : index
    %c0_39 = arith.constant 0 : index
    %34 = vector.load %arg5[%c0_38, %c0_39] : memref<200x128xf32, #tpu.memory_space<vmem>>, vector<200x128xf32>
    tpu.vector_store %arg5[%c0_38, %c0_39], %33 {strides = array<i32>} : memref<200x128xf32, #tpu.memory_space<vmem>>, vector<200x128xf32>,
    %c3_i32 = arith.constant 3 : i32
    %35 = arith.cmpi eq, %arg0, %c3_i32 : i32
    %36 = arith.extui %35 : i1 to i32
    %c0_i32_40 = arith.constant 0 : i32
    %37 = arith.cmpi ne, %36, %c0_i32_40 : i32
    scf.if %37 {
      %c0_41 = arith.constant 0 : index
      %c0_42 = arith.constant 0 : index
      %38 = vector.load %arg5[%c0_41, %c0_42] : memref<200x128xf32, #tpu.memory_space<vmem>>, vector<200x128xf32>
      %c0_43 = arith.constant 0 : index
      %c0_44 = arith.constant 0 : index
      %39 = vector.load %arg3[%c0_43, %c0_44] : memref<1x128xf32, #tpu.memory_space<vmem>>, vector<1x128xf32>
      %40 = vector.broadcast %39 : vector<1x128xf32> to vector<200x128xf32>
      %41 = arith.addf %38, %40 : vector<200x128xf32>
      %cst_45 = arith.constant 0.000000e+00 : f32
      %42 = vector.broadcast %cst_45 : f32 to vector<200x128xf32>
      %43 = arith.cmpf ogt, %41, %42 : vector<200x128xf32>
      %cst_46 = arith.constant 2.000000e-01 : f32
      %44 = vector.broadcast %cst_46 : f32 to vector<200x128xf32>
      %45 = arith.mulf %44, %41 : vector<200x128xf32>
      %46 = arith.select %43, %41, %45 : vector<200x128xi1>, vector<200x128xf32>
      %47 = arith.truncf %46 : vector<200x128xf32> to vector<200x128xbf16>
      %c0_47 = arith.constant 0 : index
      %c0_48 = arith.constant 0 : index
      %48 = vector.load %arg4[%c0_47, %c0_48] : memref<200x128xbf16, #tpu.memory_space<vmem>>, vector<200x128xbf16>
      tpu.vector_store %arg4[%c0_47, %c0_48], %47 {strides = array<i32>} : memref<200x128xbf16, #tpu.memory_space<vmem>>, vector<200x128xbf16>,
    } else {
    }
    return
  }
  func.func @transform_0(%arg0: i32) -> (i32, i32, i32, i32) {
    %c0_i32 = arith.constant 0 : i32
    %c0_i32_0 = arith.constant 0 : i32
    %c0_i32_1 = arith.constant 0 : i32
    %c0_i32_2 = arith.constant 0 : i32
    return %arg0, %c0_i32, %c0_i32_0, %c0_i32_1 : i32, i32, i32, i32
  }
  func.func @transform_1(%arg0: i32) -> (i32, i32, i32, i32) {
    %c0_i32 = arith.constant 0 : i32
    %c0_i32_0 = arith.constant 0 : i32
    %c0_i32_1 = arith.constant 0 : i32
    %c0_i32_2 = arith.constant 0 : i32
    return %arg0, %c0_i32, %c0_i32_0, %c0_i32_1 : i32, i32, i32, i32
  }
  func.func @transform_2(%arg0: i32) -> (i32, i32) {
    %c0_i32 = arith.constant 0 : i32
    %c0_i32_0 = arith.constant 0 : i32
    %c0_i32_1 = arith.constant 0 : i32
    return %c0_i32, %c0_i32_0 : i32, i32
  }
  func.func @transform_3(%arg0: i32) -> (i32, i32) {
    %c0_i32 = arith.constant 0 : i32
    %c0_i32_0 = arith.constant 0 : i32
    %c0_i32_1 = arith.constant 0 : i32
    return %c0_i32, %c0_i32_0 : i32, i32
  }
}

module attributes {stable_mosaic.version = 11 : i64} {
  func.func @kernel(%arg0: i32, %arg1: memref<1x2x105x128xbf16, #tpu.memory_space<vmem>>, %arg2: memref<1x4x128x128xbf16, #tpu.memory_space<vmem>>, %arg3: memref<1x128xf32, #tpu.memory_space<vmem>>, %arg4: memref<1x128xf32, #tpu.memory_space<vmem>>, %arg5: memref<104x1xf32, #tpu.memory_space<vmem>>, %arg6: memref<104x128xbf16, #tpu.memory_space<vmem>>, %arg7: memref<104x128xf32, #tpu.memory_space<vmem>>) attributes {dimension_semantics = [#tpu.dimension_semantics<arbitrary>], iteration_bounds = array<i64: 4>, scalar_prefetch = 0 : i64, scratch_operands = 1 : i64, tpu.core_type = #tpu.core_type<tc>, window_params = [{transform_indices = @transform_0, window_bounds = array<i64: 1, 2, 105, 128>}, {transform_indices = @transform_1, window_bounds = array<i64: 1, 4, 128, 128>}, {pipeline_mode = #tpu.pipeline_mode<synchronous>, transform_indices = @transform_2, window_bounds = array<i64: 1, 128>}, {pipeline_mode = #tpu.pipeline_mode<synchronous>, transform_indices = @transform_3, window_bounds = array<i64: 1, 128>}, {pipeline_mode = #tpu.pipeline_mode<synchronous>, transform_indices = @transform_4, window_bounds = array<i64: 104, 1>}, {pipeline_mode = #tpu.pipeline_mode<synchronous>, transform_indices = @transform_5, window_bounds = array<i64: 104, 128>}]} {
    %c0_i32 = arith.constant 0 : i32
    %0 = arith.cmpi eq, %arg0, %c0_i32 : i32
    %1 = arith.extui %0 : i1 to i32
    %c0_i32_0 = arith.constant 0 : i32
    %2 = arith.cmpi ne, %1, %c0_i32_0 : i32
    scf.if %2 {
      %cst_41 = arith.constant 0.000000e+00 : f32
      %38 = vector.broadcast %cst_41 : f32 to vector<104x128xf32>
      %c0_42 = arith.constant 0 : index
      %c0_43 = arith.constant 0 : index
      %39 = vector.load %arg7[%c0_42, %c0_43] : memref<104x128xf32, #tpu.memory_space<vmem>>, vector<104x128xf32>
      tpu.vector_store %arg7[%c0_42, %c0_43], %38 {strides = array<i32>} : memref<104x128xf32, #tpu.memory_space<vmem>>, vector<104x128xf32>,
    } else {
    }
    %c0 = arith.constant 0 : index
    %c0_1 = arith.constant 0 : index
    %c0_2 = arith.constant 0 : index
    %c0_3 = arith.constant 0 : index
    %3 = vector.load %arg1[%c0, %c0_1, %c0_2, %c0_3] : memref<1x2x105x128xbf16, #tpu.memory_space<vmem>>, vector<1x1x105x128xbf16>
    %4 = vector.shape_cast %3 : vector<1x1x105x128xbf16> to vector<105x128xbf16>
    %5 = vector.extract_strided_slice %4 {offsets = [0, 0], sizes = [104, 128], strides = [1, 1]} : vector<105x128xbf16> to vector<104x128xbf16>
    %c0_4 = arith.constant 0 : index
    %c0_5 = arith.constant 0 : index
    %6 = vector.load %arg7[%c0_4, %c0_5] : memref<104x128xf32, #tpu.memory_space<vmem>>, vector<104x128xf32>
    %c0_6 = arith.constant 0 : index
    %c0_7 = arith.constant 0 : index
    %c0_8 = arith.constant 0 : index
    %c0_9 = arith.constant 0 : index
    %7 = vector.load %arg2[%c0_6, %c0_7, %c0_8, %c0_9] : memref<1x4x128x128xbf16, #tpu.memory_space<vmem>>, vector<1x1x128x128xbf16>
    %8 = vector.shape_cast %7 : vector<1x1x128x128xbf16> to vector<128x128xbf16>
    %cst = arith.constant dense<0.000000e+00> : vector<104x128xf32>
    %9 = tpu.matmul %5, %8, %cst {dimension_numbers = #tpu.dot_dimension_numbers<[1], [0], [0], [1], [0, 0, 1, 1], [], []>} : vector<104x128xbf16>, vector<128x128xbf16>, vector<104x128xf32> -> vector<104x128xf32>
    %10 = arith.addf %6, %9 : vector<104x128xf32>
    %c0_10 = arith.constant 0 : index
    %c0_11 = arith.constant 0 : index
    %11 = vector.load %arg7[%c0_10, %c0_11] : memref<104x128xf32, #tpu.memory_space<vmem>>, vector<104x128xf32>
    tpu.vector_store %arg7[%c0_10, %c0_11], %10 {strides = array<i32>} : memref<104x128xf32, #tpu.memory_space<vmem>>, vector<104x128xf32>,
    %12 = vector.extract_strided_slice %4 {offsets = [1, 0], sizes = [104, 128], strides = [1, 1]} : vector<105x128xbf16> to vector<104x128xbf16>
    %c0_12 = arith.constant 0 : index
    %c0_13 = arith.constant 0 : index
    %13 = vector.load %arg7[%c0_12, %c0_13] : memref<104x128xf32, #tpu.memory_space<vmem>>, vector<104x128xf32>
    %c0_14 = arith.constant 0 : index
    %c2 = arith.constant 2 : index
    %c0_15 = arith.constant 0 : index
    %c0_16 = arith.constant 0 : index
    %14 = vector.load %arg2[%c0_14, %c2, %c0_15, %c0_16] : memref<1x4x128x128xbf16, #tpu.memory_space<vmem>>, vector<1x1x128x128xbf16>
    %15 = vector.shape_cast %14 : vector<1x1x128x128xbf16> to vector<128x128xbf16>
    %cst_17 = arith.constant dense<0.000000e+00> : vector<104x128xf32>
    %16 = tpu.matmul %12, %15, %cst_17 {dimension_numbers = #tpu.dot_dimension_numbers<[1], [0], [0], [1], [0, 0, 1, 1], [], []>} : vector<104x128xbf16>, vector<128x128xbf16>, vector<104x128xf32> -> vector<104x128xf32>
    %17 = arith.addf %13, %16 : vector<104x128xf32>
    %c0_18 = arith.constant 0 : index
    %c0_19 = arith.constant 0 : index
    %18 = vector.load %arg7[%c0_18, %c0_19] : memref<104x128xf32, #tpu.memory_space<vmem>>, vector<104x128xf32>
    tpu.vector_store %arg7[%c0_18, %c0_19], %17 {strides = array<i32>} : memref<104x128xf32, #tpu.memory_space<vmem>>, vector<104x128xf32>,
    %c0_20 = arith.constant 0 : index
    %c1 = arith.constant 1 : index
    %c0_21 = arith.constant 0 : index
    %c0_22 = arith.constant 0 : index
    %19 = vector.load %arg1[%c0_20, %c1, %c0_21, %c0_22] : memref<1x2x105x128xbf16, #tpu.memory_space<vmem>>, vector<1x1x105x128xbf16>
    %20 = vector.shape_cast %19 : vector<1x1x105x128xbf16> to vector<105x128xbf16>
    %21 = vector.extract_strided_slice %20 {offsets = [0, 0], sizes = [104, 128], strides = [1, 1]} : vector<105x128xbf16> to vector<104x128xbf16>
    %c0_23 = arith.constant 0 : index
    %c0_24 = arith.constant 0 : index
    %22 = vector.load %arg7[%c0_23, %c0_24] : memref<104x128xf32, #tpu.memory_space<vmem>>, vector<104x128xf32>
    %c0_25 = arith.constant 0 : index
    %c1_26 = arith.constant 1 : index
    %c0_27 = arith.constant 0 : index
    %c0_28 = arith.constant 0 : index
    %23 = vector.load %arg2[%c0_25, %c1_26, %c0_27, %c0_28] : memref<1x4x128x128xbf16, #tpu.memory_space<vmem>>, vector<1x1x128x128xbf16>
    %24 = vector.shape_cast %23 : vector<1x1x128x128xbf16> to vector<128x128xbf16>
    %cst_29 = arith.constant dense<0.000000e+00> : vector<104x128xf32>
    %25 = tpu.matmul %21, %24, %cst_29 {dimension_numbers = #tpu.dot_dimension_numbers<[1], [0], [0], [1], [0, 0, 1, 1], [], []>} : vector<104x128xbf16>, vector<128x128xbf16>, vector<104x128xf32> -> vector<104x128xf32>
    %26 = arith.addf %22, %25 : vector<104x128xf32>
    %c0_30 = arith.constant 0 : index
    %c0_31 = arith.constant 0 : index
    %27 = vector.load %arg7[%c0_30, %c0_31] : memref<104x128xf32, #tpu.memory_space<vmem>>, vector<104x128xf32>
    tpu.vector_store %arg7[%c0_30, %c0_31], %26 {strides = array<i32>} : memref<104x128xf32, #tpu.memory_space<vmem>>, vector<104x128xf32>,
    %28 = vector.extract_strided_slice %20 {offsets = [1, 0], sizes = [104, 128], strides = [1, 1]} : vector<105x128xbf16> to vector<104x128xbf16>
    %c0_32 = arith.constant 0 : index
    %c0_33 = arith.constant 0 : index
    %29 = vector.load %arg7[%c0_32, %c0_33] : memref<104x128xf32, #tpu.memory_space<vmem>>, vector<104x128xf32>
    %c0_34 = arith.constant 0 : index
    %c3 = arith.constant 3 : index
    %c0_35 = arith.constant 0 : index
    %c0_36 = arith.constant 0 : index
    %30 = vector.load %arg2[%c0_34, %c3, %c0_35, %c0_36] : memref<1x4x128x128xbf16, #tpu.memory_space<vmem>>, vector<1x1x128x128xbf16>
    %31 = vector.shape_cast %30 : vector<1x1x128x128xbf16> to vector<128x128xbf16>
    %cst_37 = arith.constant dense<0.000000e+00> : vector<104x128xf32>
    %32 = tpu.matmul %28, %31, %cst_37 {dimension_numbers = #tpu.dot_dimension_numbers<[1], [0], [0], [1], [0, 0, 1, 1], [], []>} : vector<104x128xbf16>, vector<128x128xbf16>, vector<104x128xf32> -> vector<104x128xf32>
    %33 = arith.addf %29, %32 : vector<104x128xf32>
    %c0_38 = arith.constant 0 : index
    %c0_39 = arith.constant 0 : index
    %34 = vector.load %arg7[%c0_38, %c0_39] : memref<104x128xf32, #tpu.memory_space<vmem>>, vector<104x128xf32>
    tpu.vector_store %arg7[%c0_38, %c0_39], %33 {strides = array<i32>} : memref<104x128xf32, #tpu.memory_space<vmem>>, vector<104x128xf32>,
    %c3_i32 = arith.constant 3 : i32
    %35 = arith.cmpi eq, %arg0, %c3_i32 : i32
    %36 = arith.extui %35 : i1 to i32
    %c0_i32_40 = arith.constant 0 : i32
    %37 = arith.cmpi ne, %36, %c0_i32_40 : i32
    scf.if %37 {
      %c0_41 = arith.constant 0 : index
      %c0_42 = arith.constant 0 : index
      %38 = vector.load %arg7[%c0_41, %c0_42] : memref<104x128xf32, #tpu.memory_space<vmem>>, vector<104x128xf32>
      %c0_43 = arith.constant 0 : index
      %c0_44 = arith.constant 0 : index
      %39 = vector.load %arg5[%c0_43, %c0_44] : memref<104x1xf32, #tpu.memory_space<vmem>>, vector<104x1xf32>
      %40 = vector.broadcast %39 : vector<104x1xf32> to vector<104x128xf32>
      %41 = arith.mulf %38, %40 : vector<104x128xf32>
      %cst_45 = arith.constant dense<0.000000e+00> : vector<128xf32>
      %42 = vector.multi_reduction <add>, %41, %cst_45 [0] : vector<104x128xf32> to vector<128xf32>
      %43 = vector.shape_cast %42 : vector<128xf32> to vector<1x128xf32>
      %cst_46 = arith.constant 2.000000e-02 : f32
      %44 = vector.broadcast %cst_46 : f32 to vector<1x128xf32>
      %45 = arith.mulf %43, %44 : vector<1x128xf32>
      %46 = vector.broadcast %45 : vector<1x128xf32> to vector<104x128xf32>
      %47 = arith.subf %38, %46 : vector<104x128xf32>
      %48 = arith.mulf %47, %47 : vector<104x128xf32>
      %49 = vector.broadcast %39 : vector<104x1xf32> to vector<104x128xf32>
      %50 = arith.mulf %48, %49 : vector<104x128xf32>
      %cst_47 = arith.constant dense<0.000000e+00> : vector<128xf32>
      %51 = vector.multi_reduction <add>, %50, %cst_47 [0] : vector<104x128xf32> to vector<128xf32>
      %52 = vector.shape_cast %51 : vector<128xf32> to vector<1x128xf32>
      %cst_48 = arith.constant 2.000000e-02 : f32
      %53 = vector.broadcast %cst_48 : f32 to vector<1x128xf32>
      %54 = arith.mulf %52, %53 : vector<1x128xf32>
      %cst_49 = arith.constant 9.99999974E-6 : f32
      %55 = vector.broadcast %cst_49 : f32 to vector<1x128xf32>
      %56 = arith.addf %54, %55 : vector<1x128xf32>
      %57 = math.rsqrt %56 : vector<1x128xf32>
      %58 = vector.broadcast %57 : vector<1x128xf32> to vector<104x128xf32>
      %59 = arith.mulf %47, %58 : vector<104x128xf32>
      %c0_50 = arith.constant 0 : index
      %c0_51 = arith.constant 0 : index
      %60 = vector.load %arg3[%c0_50, %c0_51] : memref<1x128xf32, #tpu.memory_space<vmem>>, vector<1x128xf32>
      %61 = vector.broadcast %60 : vector<1x128xf32> to vector<104x128xf32>
      %62 = arith.mulf %59, %61 : vector<104x128xf32>
      %c0_52 = arith.constant 0 : index
      %c0_53 = arith.constant 0 : index
      %63 = vector.load %arg4[%c0_52, %c0_53] : memref<1x128xf32, #tpu.memory_space<vmem>>, vector<1x128xf32>
      %64 = vector.broadcast %63 : vector<1x128xf32> to vector<104x128xf32>
      %65 = arith.addf %62, %64 : vector<104x128xf32>
      %cst_54 = arith.constant 0.000000e+00 : f32
      %66 = vector.broadcast %cst_54 : f32 to vector<104x128xf32>
      %67 = arith.cmpf ogt, %65, %66 : vector<104x128xf32>
      %cst_55 = arith.constant 2.000000e-01 : f32
      %68 = vector.broadcast %cst_55 : f32 to vector<104x128xf32>
      %69 = arith.mulf %68, %65 : vector<104x128xf32>
      %70 = arith.select %67, %65, %69 : vector<104x128xi1>, vector<104x128xf32>
      %71 = arith.truncf %70 : vector<104x128xf32> to vector<104x128xbf16>
      %c0_56 = arith.constant 0 : index
      %c0_57 = arith.constant 0 : index
      %72 = vector.load %arg6[%c0_56, %c0_57] : memref<104x128xbf16, #tpu.memory_space<vmem>>, vector<104x128xbf16>
      tpu.vector_store %arg6[%c0_56, %c0_57], %71 {strides = array<i32>} : memref<104x128xbf16, #tpu.memory_space<vmem>>, vector<104x128xbf16>,
    } else {
    }
    return
  }
  func.func @transform_0(%arg0: i32) -> (i32, i32, i32, i32) {
    %c0_i32 = arith.constant 0 : i32
    %c0_i32_0 = arith.constant 0 : i32
    %c0_i32_1 = arith.constant 0 : i32
    %c0_i32_2 = arith.constant 0 : i32
    return %arg0, %c0_i32, %c0_i32_0, %c0_i32_1 : i32, i32, i32, i32
  }
  func.func @transform_1(%arg0: i32) -> (i32, i32, i32, i32) {
    %c0_i32 = arith.constant 0 : i32
    %c0_i32_0 = arith.constant 0 : i32
    %c0_i32_1 = arith.constant 0 : i32
    %c0_i32_2 = arith.constant 0 : i32
    return %arg0, %c0_i32, %c0_i32_0, %c0_i32_1 : i32, i32, i32, i32
  }
  func.func @transform_2(%arg0: i32) -> (i32, i32) {
    %c0_i32 = arith.constant 0 : i32
    %c0_i32_0 = arith.constant 0 : i32
    %c0_i32_1 = arith.constant 0 : i32
    return %c0_i32, %c0_i32_0 : i32, i32
  }
  func.func @transform_3(%arg0: i32) -> (i32, i32) {
    %c0_i32 = arith.constant 0 : i32
    %c0_i32_0 = arith.constant 0 : i32
    %c0_i32_1 = arith.constant 0 : i32
    return %c0_i32, %c0_i32_0 : i32, i32
  }
  func.func @transform_4(%arg0: i32) -> (i32, i32) {
    %c0_i32 = arith.constant 0 : i32
    %c0_i32_0 = arith.constant 0 : i32
    %c0_i32_1 = arith.constant 0 : i32
    return %c0_i32, %c0_i32_0 : i32, i32
  }
  func.func @transform_5(%arg0: i32) -> (i32, i32) {
    %c0_i32 = arith.constant 0 : i32
    %c0_i32_0 = arith.constant 0 : i32
    %c0_i32_1 = arith.constant 0 : i32
    return %c0_i32, %c0_i32_0 : i32, i32
  }
}

module attributes {stable_mosaic.version = 11 : i64} {
  func.func @kernel(%arg0: i32, %arg1: memref<1x2x57x128xbf16, #tpu.memory_space<vmem>>, %arg2: memref<1x4x128x128xbf16, #tpu.memory_space<vmem>>, %arg3: memref<1x128xf32, #tpu.memory_space<vmem>>, %arg4: memref<1x128xf32, #tpu.memory_space<vmem>>, %arg5: memref<56x1xf32, #tpu.memory_space<vmem>>, %arg6: memref<56x128xbf16, #tpu.memory_space<vmem>>, %arg7: memref<56x128xf32, #tpu.memory_space<vmem>>) attributes {dimension_semantics = [#tpu.dimension_semantics<arbitrary>], iteration_bounds = array<i64: 4>, scalar_prefetch = 0 : i64, scratch_operands = 1 : i64, tpu.core_type = #tpu.core_type<tc>, window_params = [{transform_indices = @transform_0, window_bounds = array<i64: 1, 2, 57, 128>}, {transform_indices = @transform_1, window_bounds = array<i64: 1, 4, 128, 128>}, {pipeline_mode = #tpu.pipeline_mode<synchronous>, transform_indices = @transform_2, window_bounds = array<i64: 1, 128>}, {pipeline_mode = #tpu.pipeline_mode<synchronous>, transform_indices = @transform_3, window_bounds = array<i64: 1, 128>}, {pipeline_mode = #tpu.pipeline_mode<synchronous>, transform_indices = @transform_4, window_bounds = array<i64: 56, 1>}, {pipeline_mode = #tpu.pipeline_mode<synchronous>, transform_indices = @transform_5, window_bounds = array<i64: 56, 128>}]} {
    %c0_i32 = arith.constant 0 : i32
    %0 = arith.cmpi eq, %arg0, %c0_i32 : i32
    %1 = arith.extui %0 : i1 to i32
    %c0_i32_0 = arith.constant 0 : i32
    %2 = arith.cmpi ne, %1, %c0_i32_0 : i32
    scf.if %2 {
      %cst_41 = arith.constant 0.000000e+00 : f32
      %38 = vector.broadcast %cst_41 : f32 to vector<56x128xf32>
      %c0_42 = arith.constant 0 : index
      %c0_43 = arith.constant 0 : index
      %39 = vector.load %arg7[%c0_42, %c0_43] : memref<56x128xf32, #tpu.memory_space<vmem>>, vector<56x128xf32>
      tpu.vector_store %arg7[%c0_42, %c0_43], %38 {strides = array<i32>} : memref<56x128xf32, #tpu.memory_space<vmem>>, vector<56x128xf32>,
    } else {
    }
    %c0 = arith.constant 0 : index
    %c0_1 = arith.constant 0 : index
    %c0_2 = arith.constant 0 : index
    %c0_3 = arith.constant 0 : index
    %3 = vector.load %arg1[%c0, %c0_1, %c0_2, %c0_3] : memref<1x2x57x128xbf16, #tpu.memory_space<vmem>>, vector<1x1x57x128xbf16>
    %4 = vector.shape_cast %3 : vector<1x1x57x128xbf16> to vector<57x128xbf16>
    %5 = vector.extract_strided_slice %4 {offsets = [0, 0], sizes = [56, 128], strides = [1, 1]} : vector<57x128xbf16> to vector<56x128xbf16>
    %c0_4 = arith.constant 0 : index
    %c0_5 = arith.constant 0 : index
    %6 = vector.load %arg7[%c0_4, %c0_5] : memref<56x128xf32, #tpu.memory_space<vmem>>, vector<56x128xf32>
    %c0_6 = arith.constant 0 : index
    %c0_7 = arith.constant 0 : index
    %c0_8 = arith.constant 0 : index
    %c0_9 = arith.constant 0 : index
    %7 = vector.load %arg2[%c0_6, %c0_7, %c0_8, %c0_9] : memref<1x4x128x128xbf16, #tpu.memory_space<vmem>>, vector<1x1x128x128xbf16>
    %8 = vector.shape_cast %7 : vector<1x1x128x128xbf16> to vector<128x128xbf16>
    %cst = arith.constant dense<0.000000e+00> : vector<56x128xf32>
    %9 = tpu.matmul %5, %8, %cst {dimension_numbers = #tpu.dot_dimension_numbers<[1], [0], [0], [1], [0, 0, 1, 1], [], []>} : vector<56x128xbf16>, vector<128x128xbf16>, vector<56x128xf32> -> vector<56x128xf32>
    %10 = arith.addf %6, %9 : vector<56x128xf32>
    %c0_10 = arith.constant 0 : index
    %c0_11 = arith.constant 0 : index
    %11 = vector.load %arg7[%c0_10, %c0_11] : memref<56x128xf32, #tpu.memory_space<vmem>>, vector<56x128xf32>
    tpu.vector_store %arg7[%c0_10, %c0_11], %10 {strides = array<i32>} : memref<56x128xf32, #tpu.memory_space<vmem>>, vector<56x128xf32>,
    %12 = vector.extract_strided_slice %4 {offsets = [1, 0], sizes = [56, 128], strides = [1, 1]} : vector<57x128xbf16> to vector<56x128xbf16>
    %c0_12 = arith.constant 0 : index
    %c0_13 = arith.constant 0 : index
    %13 = vector.load %arg7[%c0_12, %c0_13] : memref<56x128xf32, #tpu.memory_space<vmem>>, vector<56x128xf32>
    %c0_14 = arith.constant 0 : index
    %c2 = arith.constant 2 : index
    %c0_15 = arith.constant 0 : index
    %c0_16 = arith.constant 0 : index
    %14 = vector.load %arg2[%c0_14, %c2, %c0_15, %c0_16] : memref<1x4x128x128xbf16, #tpu.memory_space<vmem>>, vector<1x1x128x128xbf16>
    %15 = vector.shape_cast %14 : vector<1x1x128x128xbf16> to vector<128x128xbf16>
    %cst_17 = arith.constant dense<0.000000e+00> : vector<56x128xf32>
    %16 = tpu.matmul %12, %15, %cst_17 {dimension_numbers = #tpu.dot_dimension_numbers<[1], [0], [0], [1], [0, 0, 1, 1], [], []>} : vector<56x128xbf16>, vector<128x128xbf16>, vector<56x128xf32> -> vector<56x128xf32>
    %17 = arith.addf %13, %16 : vector<56x128xf32>
    %c0_18 = arith.constant 0 : index
    %c0_19 = arith.constant 0 : index
    %18 = vector.load %arg7[%c0_18, %c0_19] : memref<56x128xf32, #tpu.memory_space<vmem>>, vector<56x128xf32>
    tpu.vector_store %arg7[%c0_18, %c0_19], %17 {strides = array<i32>} : memref<56x128xf32, #tpu.memory_space<vmem>>, vector<56x128xf32>,
    %c0_20 = arith.constant 0 : index
    %c1 = arith.constant 1 : index
    %c0_21 = arith.constant 0 : index
    %c0_22 = arith.constant 0 : index
    %19 = vector.load %arg1[%c0_20, %c1, %c0_21, %c0_22] : memref<1x2x57x128xbf16, #tpu.memory_space<vmem>>, vector<1x1x57x128xbf16>
    %20 = vector.shape_cast %19 : vector<1x1x57x128xbf16> to vector<57x128xbf16>
    %21 = vector.extract_strided_slice %20 {offsets = [0, 0], sizes = [56, 128], strides = [1, 1]} : vector<57x128xbf16> to vector<56x128xbf16>
    %c0_23 = arith.constant 0 : index
    %c0_24 = arith.constant 0 : index
    %22 = vector.load %arg7[%c0_23, %c0_24] : memref<56x128xf32, #tpu.memory_space<vmem>>, vector<56x128xf32>
    %c0_25 = arith.constant 0 : index
    %c1_26 = arith.constant 1 : index
    %c0_27 = arith.constant 0 : index
    %c0_28 = arith.constant 0 : index
    %23 = vector.load %arg2[%c0_25, %c1_26, %c0_27, %c0_28] : memref<1x4x128x128xbf16, #tpu.memory_space<vmem>>, vector<1x1x128x128xbf16>
    %24 = vector.shape_cast %23 : vector<1x1x128x128xbf16> to vector<128x128xbf16>
    %cst_29 = arith.constant dense<0.000000e+00> : vector<56x128xf32>
    %25 = tpu.matmul %21, %24, %cst_29 {dimension_numbers = #tpu.dot_dimension_numbers<[1], [0], [0], [1], [0, 0, 1, 1], [], []>} : vector<56x128xbf16>, vector<128x128xbf16>, vector<56x128xf32> -> vector<56x128xf32>
    %26 = arith.addf %22, %25 : vector<56x128xf32>
    %c0_30 = arith.constant 0 : index
    %c0_31 = arith.constant 0 : index
    %27 = vector.load %arg7[%c0_30, %c0_31] : memref<56x128xf32, #tpu.memory_space<vmem>>, vector<56x128xf32>
    tpu.vector_store %arg7[%c0_30, %c0_31], %26 {strides = array<i32>} : memref<56x128xf32, #tpu.memory_space<vmem>>, vector<56x128xf32>,
    %28 = vector.extract_strided_slice %20 {offsets = [1, 0], sizes = [56, 128], strides = [1, 1]} : vector<57x128xbf16> to vector<56x128xbf16>
    %c0_32 = arith.constant 0 : index
    %c0_33 = arith.constant 0 : index
    %29 = vector.load %arg7[%c0_32, %c0_33] : memref<56x128xf32, #tpu.memory_space<vmem>>, vector<56x128xf32>
    %c0_34 = arith.constant 0 : index
    %c3 = arith.constant 3 : index
    %c0_35 = arith.constant 0 : index
    %c0_36 = arith.constant 0 : index
    %30 = vector.load %arg2[%c0_34, %c3, %c0_35, %c0_36] : memref<1x4x128x128xbf16, #tpu.memory_space<vmem>>, vector<1x1x128x128xbf16>
    %31 = vector.shape_cast %30 : vector<1x1x128x128xbf16> to vector<128x128xbf16>
    %cst_37 = arith.constant dense<0.000000e+00> : vector<56x128xf32>
    %32 = tpu.matmul %28, %31, %cst_37 {dimension_numbers = #tpu.dot_dimension_numbers<[1], [0], [0], [1], [0, 0, 1, 1], [], []>} : vector<56x128xbf16>, vector<128x128xbf16>, vector<56x128xf32> -> vector<56x128xf32>
    %33 = arith.addf %29, %32 : vector<56x128xf32>
    %c0_38 = arith.constant 0 : index
    %c0_39 = arith.constant 0 : index
    %34 = vector.load %arg7[%c0_38, %c0_39] : memref<56x128xf32, #tpu.memory_space<vmem>>, vector<56x128xf32>
    tpu.vector_store %arg7[%c0_38, %c0_39], %33 {strides = array<i32>} : memref<56x128xf32, #tpu.memory_space<vmem>>, vector<56x128xf32>,
    %c3_i32 = arith.constant 3 : i32
    %35 = arith.cmpi eq, %arg0, %c3_i32 : i32
    %36 = arith.extui %35 : i1 to i32
    %c0_i32_40 = arith.constant 0 : i32
    %37 = arith.cmpi ne, %36, %c0_i32_40 : i32
    scf.if %37 {
      %c0_41 = arith.constant 0 : index
      %c0_42 = arith.constant 0 : index
      %38 = vector.load %arg7[%c0_41, %c0_42] : memref<56x128xf32, #tpu.memory_space<vmem>>, vector<56x128xf32>
      %c0_43 = arith.constant 0 : index
      %c0_44 = arith.constant 0 : index
      %39 = vector.load %arg5[%c0_43, %c0_44] : memref<56x1xf32, #tpu.memory_space<vmem>>, vector<56x1xf32>
      %40 = vector.broadcast %39 : vector<56x1xf32> to vector<56x128xf32>
      %41 = arith.mulf %38, %40 : vector<56x128xf32>
      %cst_45 = arith.constant dense<0.000000e+00> : vector<128xf32>
      %42 = vector.multi_reduction <add>, %41, %cst_45 [0] : vector<56x128xf32> to vector<128xf32>
      %43 = vector.shape_cast %42 : vector<128xf32> to vector<1x128xf32>
      %cst_46 = arith.constant 0.055555556 : f32
      %44 = vector.broadcast %cst_46 : f32 to vector<1x128xf32>
      %45 = arith.mulf %43, %44 : vector<1x128xf32>
      %46 = vector.broadcast %45 : vector<1x128xf32> to vector<56x128xf32>
      %47 = arith.subf %38, %46 : vector<56x128xf32>
      %48 = arith.mulf %47, %47 : vector<56x128xf32>
      %49 = vector.broadcast %39 : vector<56x1xf32> to vector<56x128xf32>
      %50 = arith.mulf %48, %49 : vector<56x128xf32>
      %cst_47 = arith.constant dense<0.000000e+00> : vector<128xf32>
      %51 = vector.multi_reduction <add>, %50, %cst_47 [0] : vector<56x128xf32> to vector<128xf32>
      %52 = vector.shape_cast %51 : vector<128xf32> to vector<1x128xf32>
      %cst_48 = arith.constant 0.055555556 : f32
      %53 = vector.broadcast %cst_48 : f32 to vector<1x128xf32>
      %54 = arith.mulf %52, %53 : vector<1x128xf32>
      %cst_49 = arith.constant 9.99999974E-6 : f32
      %55 = vector.broadcast %cst_49 : f32 to vector<1x128xf32>
      %56 = arith.addf %54, %55 : vector<1x128xf32>
      %57 = math.rsqrt %56 : vector<1x128xf32>
      %58 = vector.broadcast %57 : vector<1x128xf32> to vector<56x128xf32>
      %59 = arith.mulf %47, %58 : vector<56x128xf32>
      %c0_50 = arith.constant 0 : index
      %c0_51 = arith.constant 0 : index
      %60 = vector.load %arg3[%c0_50, %c0_51] : memref<1x128xf32, #tpu.memory_space<vmem>>, vector<1x128xf32>
      %61 = vector.broadcast %60 : vector<1x128xf32> to vector<56x128xf32>
      %62 = arith.mulf %59, %61 : vector<56x128xf32>
      %c0_52 = arith.constant 0 : index
      %c0_53 = arith.constant 0 : index
      %63 = vector.load %arg4[%c0_52, %c0_53] : memref<1x128xf32, #tpu.memory_space<vmem>>, vector<1x128xf32>
      %64 = vector.broadcast %63 : vector<1x128xf32> to vector<56x128xf32>
      %65 = arith.addf %62, %64 : vector<56x128xf32>
      %cst_54 = arith.constant 0.000000e+00 : f32
      %66 = vector.broadcast %cst_54 : f32 to vector<56x128xf32>
      %67 = arith.cmpf ogt, %65, %66 : vector<56x128xf32>
      %cst_55 = arith.constant 2.000000e-01 : f32
      %68 = vector.broadcast %cst_55 : f32 to vector<56x128xf32>
      %69 = arith.mulf %68, %65 : vector<56x128xf32>
      %70 = arith.select %67, %65, %69 : vector<56x128xi1>, vector<56x128xf32>
      %71 = arith.truncf %70 : vector<56x128xf32> to vector<56x128xbf16>
      %c0_56 = arith.constant 0 : index
      %c0_57 = arith.constant 0 : index
      %72 = vector.load %arg6[%c0_56, %c0_57] : memref<56x128xbf16, #tpu.memory_space<vmem>>, vector<56x128xbf16>
      tpu.vector_store %arg6[%c0_56, %c0_57], %71 {strides = array<i32>} : memref<56x128xbf16, #tpu.memory_space<vmem>>, vector<56x128xbf16>,
    } else {
    }
    return
  }
  func.func @transform_0(%arg0: i32) -> (i32, i32, i32, i32) {
    %c0_i32 = arith.constant 0 : i32
    %c0_i32_0 = arith.constant 0 : i32
    %c0_i32_1 = arith.constant 0 : i32
    %c0_i32_2 = arith.constant 0 : i32
    return %arg0, %c0_i32, %c0_i32_0, %c0_i32_1 : i32, i32, i32, i32
  }
  func.func @transform_1(%arg0: i32) -> (i32, i32, i32, i32) {
    %c0_i32 = arith.constant 0 : i32
    %c0_i32_0 = arith.constant 0 : i32
    %c0_i32_1 = arith.constant 0 : i32
    %c0_i32_2 = arith.constant 0 : i32
    return %arg0, %c0_i32, %c0_i32_0, %c0_i32_1 : i32, i32, i32, i32
  }
  func.func @transform_2(%arg0: i32) -> (i32, i32) {
    %c0_i32 = arith.constant 0 : i32
    %c0_i32_0 = arith.constant 0 : i32
    %c0_i32_1 = arith.constant 0 : i32
    return %c0_i32, %c0_i32_0 : i32, i32
  }
  func.func @transform_3(%arg0: i32) -> (i32, i32) {
    %c0_i32 = arith.constant 0 : i32
    %c0_i32_0 = arith.constant 0 : i32
    %c0_i32_1 = arith.constant 0 : i32
    return %c0_i32, %c0_i32_0 : i32, i32
  }
  func.func @transform_4(%arg0: i32) -> (i32, i32) {
    %c0_i32 = arith.constant 0 : i32
    %c0_i32_0 = arith.constant 0 : i32
    %c0_i32_1 = arith.constant 0 : i32
    return %c0_i32, %c0_i32_0 : i32, i32
  }
  func.func @transform_5(%arg0: i32) -> (i32, i32) {
    %c0_i32 = arith.constant 0 : i32
    %c0_i32_0 = arith.constant 0 : i32
    %c0_i32_1 = arith.constant 0 : i32
    return %c0_i32, %c0_i32_0 : i32, i32
  }
}

module attributes {stable_mosaic.version = 11 : i64} {
  func.func @kernel(%arg0: i32, %arg1: memref<1x1x107x128xbf16, #tpu.memory_space<vmem>>, %arg2: memref<1x4x128x128xbf16, #tpu.memory_space<vmem>>, %arg3: memref<1x128xf32, #tpu.memory_space<vmem>>, %arg4: memref<1x128xf32, #tpu.memory_space<vmem>>, %arg5: memref<104x1xf32, #tpu.memory_space<vmem>>, %arg6: memref<104x128xbf16, #tpu.memory_space<vmem>>, %arg7: memref<104x128xf32, #tpu.memory_space<vmem>>) attributes {dimension_semantics = [#tpu.dimension_semantics<arbitrary>], iteration_bounds = array<i64: 4>, scalar_prefetch = 0 : i64, scratch_operands = 1 : i64, tpu.core_type = #tpu.core_type<tc>, window_params = [{transform_indices = @transform_0, window_bounds = array<i64: 1, 1, 107, 128>}, {transform_indices = @transform_1, window_bounds = array<i64: 1, 4, 128, 128>}, {pipeline_mode = #tpu.pipeline_mode<synchronous>, transform_indices = @transform_2, window_bounds = array<i64: 1, 128>}, {pipeline_mode = #tpu.pipeline_mode<synchronous>, transform_indices = @transform_3, window_bounds = array<i64: 1, 128>}, {pipeline_mode = #tpu.pipeline_mode<synchronous>, transform_indices = @transform_4, window_bounds = array<i64: 104, 1>}, {pipeline_mode = #tpu.pipeline_mode<synchronous>, transform_indices = @transform_5, window_bounds = array<i64: 104, 128>}]} {
    %c0_i32 = arith.constant 0 : i32
    %0 = arith.cmpi eq, %arg0, %c0_i32 : i32
    %1 = arith.extui %0 : i1 to i32
    %c0_i32_0 = arith.constant 0 : i32
    %2 = arith.cmpi ne, %1, %c0_i32_0 : i32
    scf.if %2 {
      %cst_37 = arith.constant 0.000000e+00 : f32
      %36 = vector.broadcast %cst_37 : f32 to vector<104x128xf32>
      %c0_38 = arith.constant 0 : index
      %c0_39 = arith.constant 0 : index
      %37 = vector.load %arg7[%c0_38, %c0_39] : memref<104x128xf32, #tpu.memory_space<vmem>>, vector<104x128xf32>
      tpu.vector_store %arg7[%c0_38, %c0_39], %36 {strides = array<i32>} : memref<104x128xf32, #tpu.memory_space<vmem>>, vector<104x128xf32>,
    } else {
    }
    %c0 = arith.constant 0 : index
    %c0_1 = arith.constant 0 : index
    %c0_2 = arith.constant 0 : index
    %c0_3 = arith.constant 0 : index
    %3 = vector.load %arg1[%c0, %c0_1, %c0_2, %c0_3] : memref<1x1x107x128xbf16, #tpu.memory_space<vmem>>, vector<1x1x107x128xbf16>
    %4 = vector.shape_cast %3 : vector<1x1x107x128xbf16> to vector<107x128xbf16>
    %5 = vector.extract_strided_slice %4 {offsets = [0, 0], sizes = [104, 128], strides = [1, 1]} : vector<107x128xbf16> to vector<104x128xbf16>
    %c0_4 = arith.constant 0 : index
    %c0_5 = arith.constant 0 : index
    %6 = vector.load %arg7[%c0_4, %c0_5] : memref<104x128xf32, #tpu.memory_space<vmem>>, vector<104x128xf32>
    %c0_6 = arith.constant 0 : index
    %c0_7 = arith.constant 0 : index
    %c0_8 = arith.constant 0 : index
    %c0_9 = arith.constant 0 : index
    %7 = vector.load %arg2[%c0_6, %c0_7, %c0_8, %c0_9] : memref<1x4x128x128xbf16, #tpu.memory_space<vmem>>, vector<1x1x128x128xbf16>
    %8 = vector.shape_cast %7 : vector<1x1x128x128xbf16> to vector<128x128xbf16>
    %cst = arith.constant dense<0.000000e+00> : vector<104x128xf32>
    %9 = tpu.matmul %5, %8, %cst {dimension_numbers = #tpu.dot_dimension_numbers<[1], [0], [0], [1], [0, 0, 1, 1], [], []>} : vector<104x128xbf16>, vector<128x128xbf16>, vector<104x128xf32> -> vector<104x128xf32>
    %10 = arith.addf %6, %9 : vector<104x128xf32>
    %c0_10 = arith.constant 0 : index
    %c0_11 = arith.constant 0 : index
    %11 = vector.load %arg7[%c0_10, %c0_11] : memref<104x128xf32, #tpu.memory_space<vmem>>, vector<104x128xf32>
    tpu.vector_store %arg7[%c0_10, %c0_11], %10 {strides = array<i32>} : memref<104x128xf32, #tpu.memory_space<vmem>>, vector<104x128xf32>,
    %12 = vector.extract_strided_slice %4 {offsets = [1, 0], sizes = [104, 128], strides = [1, 1]} : vector<107x128xbf16> to vector<104x128xbf16>
    %c0_12 = arith.constant 0 : index
    %c0_13 = arith.constant 0 : index
    %13 = vector.load %arg7[%c0_12, %c0_13] : memref<104x128xf32, #tpu.memory_space<vmem>>, vector<104x128xf32>
    %c0_14 = arith.constant 0 : index
    %c1 = arith.constant 1 : index
    %c0_15 = arith.constant 0 : index
    %c0_16 = arith.constant 0 : index
    %14 = vector.load %arg2[%c0_14, %c1, %c0_15, %c0_16] : memref<1x4x128x128xbf16, #tpu.memory_space<vmem>>, vector<1x1x128x128xbf16>
    %15 = vector.shape_cast %14 : vector<1x1x128x128xbf16> to vector<128x128xbf16>
    %cst_17 = arith.constant dense<0.000000e+00> : vector<104x128xf32>
    %16 = tpu.matmul %12, %15, %cst_17 {dimension_numbers = #tpu.dot_dimension_numbers<[1], [0], [0], [1], [0, 0, 1, 1], [], []>} : vector<104x128xbf16>, vector<128x128xbf16>, vector<104x128xf32> -> vector<104x128xf32>
    %17 = arith.addf %13, %16 : vector<104x128xf32>
    %c0_18 = arith.constant 0 : index
    %c0_19 = arith.constant 0 : index
    %18 = vector.load %arg7[%c0_18, %c0_19] : memref<104x128xf32, #tpu.memory_space<vmem>>, vector<104x128xf32>
    tpu.vector_store %arg7[%c0_18, %c0_19], %17 {strides = array<i32>} : memref<104x128xf32, #tpu.memory_space<vmem>>, vector<104x128xf32>,
    %19 = vector.extract_strided_slice %4 {offsets = [2, 0], sizes = [104, 128], strides = [1, 1]} : vector<107x128xbf16> to vector<104x128xbf16>
    %c0_20 = arith.constant 0 : index
    %c0_21 = arith.constant 0 : index
    %20 = vector.load %arg7[%c0_20, %c0_21] : memref<104x128xf32, #tpu.memory_space<vmem>>, vector<104x128xf32>
    %c0_22 = arith.constant 0 : index
    %c2 = arith.constant 2 : index
    %c0_23 = arith.constant 0 : index
    %c0_24 = arith.constant 0 : index
    %21 = vector.load %arg2[%c0_22, %c2, %c0_23, %c0_24] : memref<1x4x128x128xbf16, #tpu.memory_space<vmem>>, vector<1x1x128x128xbf16>
    %22 = vector.shape_cast %21 : vector<1x1x128x128xbf16> to vector<128x128xbf16>
    %cst_25 = arith.constant dense<0.000000e+00> : vector<104x128xf32>
    %23 = tpu.matmul %19, %22, %cst_25 {dimension_numbers = #tpu.dot_dimension_numbers<[1], [0], [0], [1], [0, 0, 1, 1], [], []>} : vector<104x128xbf16>, vector<128x128xbf16>, vector<104x128xf32> -> vector<104x128xf32>
    %24 = arith.addf %20, %23 : vector<104x128xf32>
    %c0_26 = arith.constant 0 : index
    %c0_27 = arith.constant 0 : index
    %25 = vector.load %arg7[%c0_26, %c0_27] : memref<104x128xf32, #tpu.memory_space<vmem>>, vector<104x128xf32>
    tpu.vector_store %arg7[%c0_26, %c0_27], %24 {strides = array<i32>} : memref<104x128xf32, #tpu.memory_space<vmem>>, vector<104x128xf32>,
    %26 = vector.extract_strided_slice %4 {offsets = [3, 0], sizes = [104, 128], strides = [1, 1]} : vector<107x128xbf16> to vector<104x128xbf16>
    %c0_28 = arith.constant 0 : index
    %c0_29 = arith.constant 0 : index
    %27 = vector.load %arg7[%c0_28, %c0_29] : memref<104x128xf32, #tpu.memory_space<vmem>>, vector<104x128xf32>
    %c0_30 = arith.constant 0 : index
    %c3 = arith.constant 3 : index
    %c0_31 = arith.constant 0 : index
    %c0_32 = arith.constant 0 : index
    %28 = vector.load %arg2[%c0_30, %c3, %c0_31, %c0_32] : memref<1x4x128x128xbf16, #tpu.memory_space<vmem>>, vector<1x1x128x128xbf16>
    %29 = vector.shape_cast %28 : vector<1x1x128x128xbf16> to vector<128x128xbf16>
    %cst_33 = arith.constant dense<0.000000e+00> : vector<104x128xf32>
    %30 = tpu.matmul %26, %29, %cst_33 {dimension_numbers = #tpu.dot_dimension_numbers<[1], [0], [0], [1], [0, 0, 1, 1], [], []>} : vector<104x128xbf16>, vector<128x128xbf16>, vector<104x128xf32> -> vector<104x128xf32>
    %31 = arith.addf %27, %30 : vector<104x128xf32>
    %c0_34 = arith.constant 0 : index
    %c0_35 = arith.constant 0 : index
    %32 = vector.load %arg7[%c0_34, %c0_35] : memref<104x128xf32, #tpu.memory_space<vmem>>, vector<104x128xf32>
    tpu.vector_store %arg7[%c0_34, %c0_35], %31 {strides = array<i32>} : memref<104x128xf32, #tpu.memory_space<vmem>>, vector<104x128xf32>,
    %c3_i32 = arith.constant 3 : i32
    %33 = arith.cmpi eq, %arg0, %c3_i32 : i32
    %34 = arith.extui %33 : i1 to i32
    %c0_i32_36 = arith.constant 0 : i32
    %35 = arith.cmpi ne, %34, %c0_i32_36 : i32
    scf.if %35 {
      %c0_37 = arith.constant 0 : index
      %c0_38 = arith.constant 0 : index
      %36 = vector.load %arg7[%c0_37, %c0_38] : memref<104x128xf32, #tpu.memory_space<vmem>>, vector<104x128xf32>
      %c0_39 = arith.constant 0 : index
      %c0_40 = arith.constant 0 : index
      %37 = vector.load %arg5[%c0_39, %c0_40] : memref<104x1xf32, #tpu.memory_space<vmem>>, vector<104x1xf32>
      %38 = vector.broadcast %37 : vector<104x1xf32> to vector<104x128xf32>
      %39 = arith.mulf %36, %38 : vector<104x128xf32>
      %cst_41 = arith.constant dense<0.000000e+00> : vector<128xf32>
      %40 = vector.multi_reduction <add>, %39, %cst_41 [0] : vector<104x128xf32> to vector<128xf32>
      %41 = vector.shape_cast %40 : vector<128xf32> to vector<1x128xf32>
      %cst_42 = arith.constant 3.125000e-02 : f32
      %42 = vector.broadcast %cst_42 : f32 to vector<1x128xf32>
      %43 = arith.mulf %41, %42 : vector<1x128xf32>
      %44 = vector.broadcast %43 : vector<1x128xf32> to vector<104x128xf32>
      %45 = arith.subf %36, %44 : vector<104x128xf32>
      %46 = arith.mulf %45, %45 : vector<104x128xf32>
      %47 = vector.broadcast %37 : vector<104x1xf32> to vector<104x128xf32>
      %48 = arith.mulf %46, %47 : vector<104x128xf32>
      %cst_43 = arith.constant dense<0.000000e+00> : vector<128xf32>
      %49 = vector.multi_reduction <add>, %48, %cst_43 [0] : vector<104x128xf32> to vector<128xf32>
      %50 = vector.shape_cast %49 : vector<128xf32> to vector<1x128xf32>
      %cst_44 = arith.constant 3.125000e-02 : f32
      %51 = vector.broadcast %cst_44 : f32 to vector<1x128xf32>
      %52 = arith.mulf %50, %51 : vector<1x128xf32>
      %cst_45 = arith.constant 9.99999974E-6 : f32
      %53 = vector.broadcast %cst_45 : f32 to vector<1x128xf32>
      %54 = arith.addf %52, %53 : vector<1x128xf32>
      %55 = math.rsqrt %54 : vector<1x128xf32>
      %56 = vector.broadcast %55 : vector<1x128xf32> to vector<104x128xf32>
      %57 = arith.mulf %45, %56 : vector<104x128xf32>
      %c0_46 = arith.constant 0 : index
      %c0_47 = arith.constant 0 : index
      %58 = vector.load %arg3[%c0_46, %c0_47] : memref<1x128xf32, #tpu.memory_space<vmem>>, vector<1x128xf32>
      %59 = vector.broadcast %58 : vector<1x128xf32> to vector<104x128xf32>
      %60 = arith.mulf %57, %59 : vector<104x128xf32>
      %c0_48 = arith.constant 0 : index
      %c0_49 = arith.constant 0 : index
      %61 = vector.load %arg4[%c0_48, %c0_49] : memref<1x128xf32, #tpu.memory_space<vmem>>, vector<1x128xf32>
      %62 = vector.broadcast %61 : vector<1x128xf32> to vector<104x128xf32>
      %63 = arith.addf %60, %62 : vector<104x128xf32>
      %cst_50 = arith.constant 0.000000e+00 : f32
      %64 = vector.broadcast %cst_50 : f32 to vector<104x128xf32>
      %65 = arith.cmpf ogt, %63, %64 : vector<104x128xf32>
      %cst_51 = arith.constant 2.000000e-01 : f32
      %66 = vector.broadcast %cst_51 : f32 to vector<104x128xf32>
      %67 = arith.mulf %66, %63 : vector<104x128xf32>
      %68 = arith.select %65, %63, %67 : vector<104x128xi1>, vector<104x128xf32>
      %69 = arith.truncf %68 : vector<104x128xf32> to vector<104x128xbf16>
      %c0_52 = arith.constant 0 : index
      %c0_53 = arith.constant 0 : index
      %70 = vector.load %arg6[%c0_52, %c0_53] : memref<104x128xbf16, #tpu.memory_space<vmem>>, vector<104x128xbf16>
      tpu.vector_store %arg6[%c0_52, %c0_53], %69 {strides = array<i32>} : memref<104x128xbf16, #tpu.memory_space<vmem>>, vector<104x128xbf16>,
    } else {
    }
    return
  }
  func.func @transform_0(%arg0: i32) -> (i32, i32, i32, i32) {
    %c0_i32 = arith.constant 0 : i32
    %c0_i32_0 = arith.constant 0 : i32
    %c0_i32_1 = arith.constant 0 : i32
    %c0_i32_2 = arith.constant 0 : i32
    return %arg0, %c0_i32, %c0_i32_0, %c0_i32_1 : i32, i32, i32, i32
  }
  func.func @transform_1(%arg0: i32) -> (i32, i32, i32, i32) {
    %c0_i32 = arith.constant 0 : i32
    %c0_i32_0 = arith.constant 0 : i32
    %c0_i32_1 = arith.constant 0 : i32
    %c0_i32_2 = arith.constant 0 : i32
    return %arg0, %c0_i32, %c0_i32_0, %c0_i32_1 : i32, i32, i32, i32
  }
  func.func @transform_2(%arg0: i32) -> (i32, i32) {
    %c0_i32 = arith.constant 0 : i32
    %c0_i32_0 = arith.constant 0 : i32
    %c0_i32_1 = arith.constant 0 : i32
    return %c0_i32, %c0_i32_0 : i32, i32
  }
  func.func @transform_3(%arg0: i32) -> (i32, i32) {
    %c0_i32 = arith.constant 0 : i32
    %c0_i32_0 = arith.constant 0 : i32
    %c0_i32_1 = arith.constant 0 : i32
    return %c0_i32, %c0_i32_0 : i32, i32
  }
  func.func @transform_4(%arg0: i32) -> (i32, i32) {
    %c0_i32 = arith.constant 0 : i32
    %c0_i32_0 = arith.constant 0 : i32
    %c0_i32_1 = arith.constant 0 : i32
    return %c0_i32, %c0_i32_0 : i32, i32
  }
  func.func @transform_5(%arg0: i32) -> (i32, i32) {
    %c0_i32 = arith.constant 0 : i32
    %c0_i32_0 = arith.constant 0 : i32
    %c0_i32_1 = arith.constant 0 : i32
    return %c0_i32, %c0_i32_0 : i32, i32
  }
}

module attributes {stable_mosaic.version = 11 : i64} {
  func.func @kernel(%arg0: i32, %arg1: memref<1x1x131x128xbf16, #tpu.memory_space<vmem>>, %arg2: memref<1x4x128x128xbf16, #tpu.memory_space<vmem>>, %arg3: memref<1x128xf32, #tpu.memory_space<vmem>>, %arg4: memref<128x128xbf16, #tpu.memory_space<vmem>>, %arg5: memref<128x128xf32, #tpu.memory_space<vmem>>) attributes {dimension_semantics = [#tpu.dimension_semantics<arbitrary>], iteration_bounds = array<i64: 4>, scalar_prefetch = 0 : i64, scratch_operands = 1 : i64, tpu.core_type = #tpu.core_type<tc>, window_params = [{transform_indices = @transform_0, window_bounds = array<i64: 1, 1, 131, 128>}, {transform_indices = @transform_1, window_bounds = array<i64: 1, 4, 128, 128>}, {pipeline_mode = #tpu.pipeline_mode<synchronous>, transform_indices = @transform_2, window_bounds = array<i64: 1, 128>}, {pipeline_mode = #tpu.pipeline_mode<synchronous>, transform_indices = @transform_3, window_bounds = array<i64: 128, 128>}]} {
    %c0_i32 = arith.constant 0 : i32
    %0 = arith.cmpi eq, %arg0, %c0_i32 : i32
    %1 = arith.extui %0 : i1 to i32
    %c0_i32_0 = arith.constant 0 : i32
    %2 = arith.cmpi ne, %1, %c0_i32_0 : i32
    scf.if %2 {
      %cst_37 = arith.constant 0.000000e+00 : f32
      %36 = vector.broadcast %cst_37 : f32 to vector<128x128xf32>
      %c0_38 = arith.constant 0 : index
      %c0_39 = arith.constant 0 : index
      %37 = vector.load %arg5[%c0_38, %c0_39] : memref<128x128xf32, #tpu.memory_space<vmem>>, vector<128x128xf32>
      tpu.vector_store %arg5[%c0_38, %c0_39], %36 {strides = array<i32>} : memref<128x128xf32, #tpu.memory_space<vmem>>, vector<128x128xf32>,
    } else {
    }
    %c0 = arith.constant 0 : index
    %c0_1 = arith.constant 0 : index
    %c0_2 = arith.constant 0 : index
    %c0_3 = arith.constant 0 : index
    %3 = vector.load %arg1[%c0, %c0_1, %c0_2, %c0_3] : memref<1x1x131x128xbf16, #tpu.memory_space<vmem>>, vector<1x1x131x128xbf16>
    %4 = vector.shape_cast %3 : vector<1x1x131x128xbf16> to vector<131x128xbf16>
    %5 = vector.extract_strided_slice %4 {offsets = [0, 0], sizes = [128, 128], strides = [1, 1]} : vector<131x128xbf16> to vector<128x128xbf16>
    %c0_4 = arith.constant 0 : index
    %c0_5 = arith.constant 0 : index
    %6 = vector.load %arg5[%c0_4, %c0_5] : memref<128x128xf32, #tpu.memory_space<vmem>>, vector<128x128xf32>
    %c0_6 = arith.constant 0 : index
    %c0_7 = arith.constant 0 : index
    %c0_8 = arith.constant 0 : index
    %c0_9 = arith.constant 0 : index
    %7 = vector.load %arg2[%c0_6, %c0_7, %c0_8, %c0_9] : memref<1x4x128x128xbf16, #tpu.memory_space<vmem>>, vector<1x1x128x128xbf16>
    %8 = vector.shape_cast %7 : vector<1x1x128x128xbf16> to vector<128x128xbf16>
    %cst = arith.constant dense<0.000000e+00> : vector<128x128xf32>
    %9 = tpu.matmul %5, %8, %cst {dimension_numbers = #tpu.dot_dimension_numbers<[1], [0], [0], [1], [0, 0, 1, 1], [], []>} : vector<128x128xbf16>, vector<128x128xbf16>, vector<128x128xf32> -> vector<128x128xf32>
    %10 = arith.addf %6, %9 : vector<128x128xf32>
    %c0_10 = arith.constant 0 : index
    %c0_11 = arith.constant 0 : index
    %11 = vector.load %arg5[%c0_10, %c0_11] : memref<128x128xf32, #tpu.memory_space<vmem>>, vector<128x128xf32>
    tpu.vector_store %arg5[%c0_10, %c0_11], %10 {strides = array<i32>} : memref<128x128xf32, #tpu.memory_space<vmem>>, vector<128x128xf32>,
    %12 = vector.extract_strided_slice %4 {offsets = [1, 0], sizes = [128, 128], strides = [1, 1]} : vector<131x128xbf16> to vector<128x128xbf16>
    %c0_12 = arith.constant 0 : index
    %c0_13 = arith.constant 0 : index
    %13 = vector.load %arg5[%c0_12, %c0_13] : memref<128x128xf32, #tpu.memory_space<vmem>>, vector<128x128xf32>
    %c0_14 = arith.constant 0 : index
    %c1 = arith.constant 1 : index
    %c0_15 = arith.constant 0 : index
    %c0_16 = arith.constant 0 : index
    %14 = vector.load %arg2[%c0_14, %c1, %c0_15, %c0_16] : memref<1x4x128x128xbf16, #tpu.memory_space<vmem>>, vector<1x1x128x128xbf16>
    %15 = vector.shape_cast %14 : vector<1x1x128x128xbf16> to vector<128x128xbf16>
    %cst_17 = arith.constant dense<0.000000e+00> : vector<128x128xf32>
    %16 = tpu.matmul %12, %15, %cst_17 {dimension_numbers = #tpu.dot_dimension_numbers<[1], [0], [0], [1], [0, 0, 1, 1], [], []>} : vector<128x128xbf16>, vector<128x128xbf16>, vector<128x128xf32> -> vector<128x128xf32>
    %17 = arith.addf %13, %16 : vector<128x128xf32>
    %c0_18 = arith.constant 0 : index
    %c0_19 = arith.constant 0 : index
    %18 = vector.load %arg5[%c0_18, %c0_19] : memref<128x128xf32, #tpu.memory_space<vmem>>, vector<128x128xf32>
    tpu.vector_store %arg5[%c0_18, %c0_19], %17 {strides = array<i32>} : memref<128x128xf32, #tpu.memory_space<vmem>>, vector<128x128xf32>,
    %19 = vector.extract_strided_slice %4 {offsets = [2, 0], sizes = [128, 128], strides = [1, 1]} : vector<131x128xbf16> to vector<128x128xbf16>
    %c0_20 = arith.constant 0 : index
    %c0_21 = arith.constant 0 : index
    %20 = vector.load %arg5[%c0_20, %c0_21] : memref<128x128xf32, #tpu.memory_space<vmem>>, vector<128x128xf32>
    %c0_22 = arith.constant 0 : index
    %c2 = arith.constant 2 : index
    %c0_23 = arith.constant 0 : index
    %c0_24 = arith.constant 0 : index
    %21 = vector.load %arg2[%c0_22, %c2, %c0_23, %c0_24] : memref<1x4x128x128xbf16, #tpu.memory_space<vmem>>, vector<1x1x128x128xbf16>
    %22 = vector.shape_cast %21 : vector<1x1x128x128xbf16> to vector<128x128xbf16>
    %cst_25 = arith.constant dense<0.000000e+00> : vector<128x128xf32>
    %23 = tpu.matmul %19, %22, %cst_25 {dimension_numbers = #tpu.dot_dimension_numbers<[1], [0], [0], [1], [0, 0, 1, 1], [], []>} : vector<128x128xbf16>, vector<128x128xbf16>, vector<128x128xf32> -> vector<128x128xf32>
    %24 = arith.addf %20, %23 : vector<128x128xf32>
    %c0_26 = arith.constant 0 : index
    %c0_27 = arith.constant 0 : index
    %25 = vector.load %arg5[%c0_26, %c0_27] : memref<128x128xf32, #tpu.memory_space<vmem>>, vector<128x128xf32>
    tpu.vector_store %arg5[%c0_26, %c0_27], %24 {strides = array<i32>} : memref<128x128xf32, #tpu.memory_space<vmem>>, vector<128x128xf32>,
    %26 = vector.extract_strided_slice %4 {offsets = [3, 0], sizes = [128, 128], strides = [1, 1]} : vector<131x128xbf16> to vector<128x128xbf16>
    %c0_28 = arith.constant 0 : index
    %c0_29 = arith.constant 0 : index
    %27 = vector.load %arg5[%c0_28, %c0_29] : memref<128x128xf32, #tpu.memory_space<vmem>>, vector<128x128xf32>
    %c0_30 = arith.constant 0 : index
    %c3 = arith.constant 3 : index
    %c0_31 = arith.constant 0 : index
    %c0_32 = arith.constant 0 : index
    %28 = vector.load %arg2[%c0_30, %c3, %c0_31, %c0_32] : memref<1x4x128x128xbf16, #tpu.memory_space<vmem>>, vector<1x1x128x128xbf16>
    %29 = vector.shape_cast %28 : vector<1x1x128x128xbf16> to vector<128x128xbf16>
    %cst_33 = arith.constant dense<0.000000e+00> : vector<128x128xf32>
    %30 = tpu.matmul %26, %29, %cst_33 {dimension_numbers = #tpu.dot_dimension_numbers<[1], [0], [0], [1], [0, 0, 1, 1], [], []>} : vector<128x128xbf16>, vector<128x128xbf16>, vector<128x128xf32> -> vector<128x128xf32>
    %31 = arith.addf %27, %30 : vector<128x128xf32>
    %c0_34 = arith.constant 0 : index
    %c0_35 = arith.constant 0 : index
    %32 = vector.load %arg5[%c0_34, %c0_35] : memref<128x128xf32, #tpu.memory_space<vmem>>, vector<128x128xf32>
    tpu.vector_store %arg5[%c0_34, %c0_35], %31 {strides = array<i32>} : memref<128x128xf32, #tpu.memory_space<vmem>>, vector<128x128xf32>,
    %c3_i32 = arith.constant 3 : i32
    %33 = arith.cmpi eq, %arg0, %c3_i32 : i32
    %34 = arith.extui %33 : i1 to i32
    %c0_i32_36 = arith.constant 0 : i32
    %35 = arith.cmpi ne, %34, %c0_i32_36 : i32
    scf.if %35 {
      %c0_37 = arith.constant 0 : index
      %c0_38 = arith.constant 0 : index
      %36 = vector.load %arg5[%c0_37, %c0_38] : memref<128x128xf32, #tpu.memory_space<vmem>>, vector<128x128xf32>
      %c0_39 = arith.constant 0 : index
      %c0_40 = arith.constant 0 : index
      %37 = vector.load %arg3[%c0_39, %c0_40] : memref<1x128xf32, #tpu.memory_space<vmem>>, vector<1x128xf32>
      %38 = vector.broadcast %37 : vector<1x128xf32> to vector<128x128xf32>
      %39 = arith.addf %36, %38 : vector<128x128xf32>
      %40 = arith.truncf %39 : vector<128x128xf32> to vector<128x128xbf16>
      %c0_41 = arith.constant 0 : index
      %c0_42 = arith.constant 0 : index
      %41 = vector.load %arg4[%c0_41, %c0_42] : memref<128x128xbf16, #tpu.memory_space<vmem>>, vector<128x128xbf16>
      tpu.vector_store %arg4[%c0_41, %c0_42], %40 {strides = array<i32>} : memref<128x128xbf16, #tpu.memory_space<vmem>>, vector<128x128xbf16>,
    } else {
    }
    return
  }
  func.func @transform_0(%arg0: i32) -> (i32, i32, i32, i32) {
    %c0_i32 = arith.constant 0 : i32
    %c0_i32_0 = arith.constant 0 : i32
    %c0_i32_1 = arith.constant 0 : i32
    %c0_i32_2 = arith.constant 0 : i32
    return %arg0, %c0_i32, %c0_i32_0, %c0_i32_1 : i32, i32, i32, i32
  }
  func.func @transform_1(%arg0: i32) -> (i32, i32, i32, i32) {
    %c0_i32 = arith.constant 0 : i32
    %c0_i32_0 = arith.constant 0 : i32
    %c0_i32_1 = arith.constant 0 : i32
    %c0_i32_2 = arith.constant 0 : i32
    return %arg0, %c0_i32, %c0_i32_0, %c0_i32_1 : i32, i32, i32, i32
  }
  func.func @transform_2(%arg0: i32) -> (i32, i32) {
    %c0_i32 = arith.constant 0 : i32
    %c0_i32_0 = arith.constant 0 : i32
    %c0_i32_1 = arith.constant 0 : i32
    return %c0_i32, %c0_i32_0 : i32, i32
  }
  func.func @transform_3(%arg0: i32) -> (i32, i32) {
    %c0_i32 = arith.constant 0 : i32
    %c0_i32_0 = arith.constant 0 : i32
    %c0_i32_1 = arith.constant 0 : i32
    return %c0_i32, %c0_i32_0 : i32, i32
  }
}

</mosaic_0001>

<llo_original>
// kernel: nlayer_discriminator_forward.5
$region0: #{nlayer_discriminator_forward.5}
  #allocation0 [shape = 'u32[]', space=smem, size = 0x4, offset = 0x4, fixed_abs, tag = 'smem constant byte address 0x4 - core index']
  #allocation1 [shape = 'u32[72,128]{1,0:T(1,128)}', space=vmem, size = 0x9000, scoped, tag = 'internal scratch']
  #allocation2 [shape = 'f32[200,128]{1,0:T(8,128)}', space=vmem, size = 0x19000, scoped, tag = 'scratch operand']
  %s0 = inlined_call_operand.vmem [shape: bf16[4,2,201,128], index: 0, kind: input, shape index: {}]
  %s1 = inlined_call_operand.vmem [shape: bf16[4,4,128,128], index: 1, kind: input, shape index: {}]
  %s2 = inlined_call_operand.vmem [shape: f32[1,128], index: 2, kind: input, shape index: {}]
  %s3 = inlined_call_operand.vmem [shape: bf16[200,128], index: 3, kind: output, shape index: {}]
  %s4 = sld [smem:[#allocation0]]
  $region53: #{nlayer_discriminator_forward.5} parent=0
    _
  %s6 = ssub.s32 1, %s4
  %s7 = scalar_select 0, %s6, %s4
  loop: start=0, step=1, limit=6
  $region2: #{nlayer_discriminator_forward.5} parent=0 // loop_pre_header
    _
  $region3: #{nlayer_discriminator_forward.5} parent=0 // loop_header
    %s9 = sphi 0, %s13
    %p10 = scmp.ge.s32.totalorder %s9, 6
    %s19 = sphi 0, %s21
    %s22 = sphi 0, %s19
    %s23 = sphi 0, %s22
    %s39 = sphi 0, %s23
    %s45 = sphi 0, %s47
    %s48 = sphi 0, %s45
    %s49 = sphi 0, %s48
    %s65 = sphi 0, %s49
    %s69 = sphi 0, %s69
    %s71 = sphi 0, %s69
    %s72 = sphi 0, %s71
    %s86 = sphi 0, %s72
    %s90 = sphi 0, %s90
    %s92 = sphi 0, %s90
    %s93 = sphi 0, %s92
    %s107 = sphi 0, %s93
  $region4: #{nlayer_discriminator_forward.5} parent=0 // loop_header_branch
    %12 = sbr.rel (%p10) target = $region8
  $region5: #{nlayer_discriminator_forward.5} parent=0 // loop_body
    %s14 = ssub.s32 %s9, 1
    %s15 = ssub.s32 %s9, 2
    %s16 = sadd.s32 %s9, 1
    %s17 = ssub.s32 %s9, %s16
    %p18 = scmp.eq.s32.totalorder %s17, 0
    %s20 = sadd.s32 %s19, 1
    %s21 = scalar_select %p18, %s19, %s20
    %p24 = pneg %p18
    %p25 = scmp.eq.s32.totalorder %s9, 3
    %p26 = por %p24, %p25
    %p27 = scmp.ne.s32.totalorder %s19, %s22
    %p28 = scmp.eq.s32.totalorder %s9, 0
    %p29 = por %p27, %p28
    %p30 = scmp.ne.s32.totalorder %s19, %s22
    %p31 = scmp.eq.s32.totalorder %s14, 3
    %p32 = por %p30, %p31
    %p33 = scmp.ne.s32.totalorder %s22, %s23
    %p34 = scmp.eq.s32.totalorder %s14, 0
    %p35 = por %p33, %p34
    %p36 = scmp.ne.s32.totalorder %s22, %s23
    %p37 = scmp.eq.s32.totalorder %s15, 3
    %p38 = por %p36, %p37
    %p40 = scmp.ne.s32.totalorder %s23, %s39
    %p41 = scmp.eq.s32.totalorder %s15, 0
    %p42 = por %p40, %p41
    %s43 = ssub.s32 %s9, %s16
    %p44 = scmp.eq.s32.totalorder %s43, 0
    %s46 = sadd.s32 %s45, 1
    %s47 = scalar_select %p44, %s45, %s46
    %p50 = pneg %p44
    %p51 = scmp.eq.s32.totalorder %s9, 3
    %p52 = por %p50, %p51
    %p53 = scmp.ne.s32.totalorder %s45, %s48
    %p54 = scmp.eq.s32.totalorder %s9, 0
    %p55 = por %p53, %p54
    %p56 = scmp.ne.s32.totalorder %s45, %s48
    %p57 = scmp.eq.s32.totalorder %s14, 3
    %p58 = por %p56, %p57
    %p59 = scmp.ne.s32.totalorder %s48, %s49
    %p60 = scmp.eq.s32.totalorder %s14, 0
    %p61 = por %p59, %p60
    %p62 = scmp.ne.s32.totalorder %s48, %s49
    %p63 = scmp.eq.s32.totalorder %s15, 3
    %p64 = por %p62, %p63
    %p66 = scmp.ne.s32.totalorder %s49, %s65
    %p67 = scmp.eq.s32.totalorder %s15, 0
    %p68 = por %p66, %p67
    %s70 = sadd.s32 %s69, 1
    %p73 = scmp.eq.s32.totalorder %s9, 3
    %p74 = scmp.ne.s32.totalorder %s69, %s71
    %p75 = scmp.eq.s32.totalorder %s9, 0
    %p76 = por %p74, %p75
    %p77 = scmp.ne.s32.totalorder %s69, %s71
    %p78 = scmp.eq.s32.totalorder %s14, 3
    %p79 = por %p77, %p78
    %p80 = scmp.ne.s32.totalorder %s71, %s72
    %p81 = scmp.eq.s32.totalorder %s14, 0
    %p82 = por %p80, %p81
    %p83 = scmp.ne.s32.totalorder %s71, %s72
    %p84 = scmp.eq.s32.totalorder %s15, 3
    %p85 = por %p83, %p84
    %p87 = scmp.ne.s32.totalorder %s72, %s86
    %p88 = scmp.eq.s32.totalorder %s15, 0
    %p89 = por %p87, %p88
    %s91 = sadd.s32 %s90, 1
    %p94 = scmp.eq.s32.totalorder %s9, 3
    %p95 = scmp.ne.s32.totalorder %s90, %s92
    %p96 = scmp.eq.s32.totalorder %s9, 0
    %p97 = por %p95, %p96
    %p98 = scmp.ne.s32.totalorder %s90, %s92
    %p99 = scmp.eq.s32.totalorder %s14, 3
    %p100 = por %p98, %p99
    %p101 = scmp.ne.s32.totalorder %s92, %s93
    %p102 = scmp.eq.s32.totalorder %s14, 0
    %p103 = por %p101, %p102
    %p104 = scmp.ne.s32.totalorder %s92, %s93
    %p105 = scmp.eq.s32.totalorder %s15, 3
    %p106 = por %p104, %p105
    %p108 = scmp.ne.s32.totalorder %s93, %s107
    %p109 = scmp.eq.s32.totalorder %s15, 0
    %p110 = por %p108, %p109
    %p111 = scmp.le.s32.totalorder 1, %s9
    %p112 = scmp.lt.s32.totalorder %s9, 5
    %p113 = pnand %p111, %p112
    %p114 = pneg %p113
    // Predicated region
    $region9: #{nlayer_discriminator_forward.5} parent=5 // pred_check
      _
    $region10: #{nlayer_discriminator_forward.5} parent=5 // pred_check_branch
      %116 = sbr.rel (%p113) target = $region12
    $region11: #{nlayer_discriminator_forward.5} parent=5 // pred_region
      %s117 = ssub.s32 %s9, 1
      // Predicated region
      $region13: #{nlayer_discriminator_forward.5} parent=11 // pred_check
        %p118 = pneg %p82
      $region14: #{nlayer_discriminator_forward.5} parent=11 // pred_check_branch
        %120 = sbr.rel (%p118) target = $region16
      $region15: #{nlayer_discriminator_forward.5} parent=11 // pred_region
        _
      $region16: #{nlayer_discriminator_forward.5} parent=11 // pred_fallthru
        _
    $region12: #{nlayer_discriminator_forward.5} parent=5 // pred_fallthru
      _
    %p121 = scmp.lt.s32.totalorder %s9, 4
    // Predicated region
    $region17: #{nlayer_discriminator_forward.5} parent=5 // pred_check
      %p122 = pneg %p121
    $region18: #{nlayer_discriminator_forward.5} parent=5 // pred_check_branch
      %124 = sbr.rel (%p122) target = $region20
    $region19: #{nlayer_discriminator_forward.5} parent=5 // pred_region
      // Predicated region
      $region21: #{nlayer_discriminator_forward.5} parent=19 // pred_check
        %p125 = pneg %p29
      $region22: #{nlayer_discriminator_forward.5} parent=19 // pred_check_branch
        %127 = sbr.rel (%p125) target = $region24
      $region23: #{nlayer_discriminator_forward.5} parent=19 // pred_region
        %p128 = scmp.lt.s32.totalorder %s9, 3
        %s129 = scalar_select %p128, %s9, 3
        %s130 = smul.addr %s129, 52
        %s131 = smul.addr %s130, 4
        %s132 = scalar_lea.vmem %s0, %s131
      $region24: #{nlayer_discriminator_forward.5} parent=19 // pred_fallthru
        _
      // Predicated region
      $region25: #{nlayer_discriminator_forward.5} parent=19 // pred_check
        %p133 = pneg %p55
      $region26: #{nlayer_discriminator_forward.5} parent=19 // pred_check_branch
        %135 = sbr.rel (%p133) target = $region28
      $region27: #{nlayer_discriminator_forward.5} parent=19 // pred_region
        %p136 = scmp.lt.s32.totalorder %s9, 3
        %s137 = scalar_select %p136, %s9, 3
        %s138 = smul.addr %s137, 64
        %s139 = smul.addr %s138, 4
        %s140 = scalar_lea.vmem %s1, %s139
      $region28: #{nlayer_discriminator_forward.5} parent=19 // pred_fallthru
        _
    $region20: #{nlayer_discriminator_forward.5} parent=5 // pred_fallthru
      _
    %p141 = scmp.le.s32.totalorder 1, %s9
    %p142 = scmp.lt.s32.totalorder %s9, 5
    %p143 = pnand %p141, %p142
    %p144 = pneg %p143
    // Predicated region
    $region29: #{nlayer_discriminator_forward.5} parent=5 // pred_check
      _
    $region30: #{nlayer_discriminator_forward.5} parent=5 // pred_check_branch
      %146 = sbr.rel (%p143) target = $region32
    $region31: #{nlayer_discriminator_forward.5} parent=5 // pred_region
      %s147 = ssub.s32 %s9, 1
      %p148 = scmp.lt.s32.totalorder %s14, 3
      %s149 = scalar_select %p148, %s14, 3
      %s150 = smul.addr %s149, 52
      %s151 = smul.addr %s150, 4
      %s152 = scalar_lea.vmem %s0, %s151
      %p153 = pneg %p35
      %p154 = pneg %p32
      %p155 = scmp.lt.s32.totalorder %s14, 3
      %s156 = scalar_select %p155, %s14, 3
      %s157 = smul.addr %s156, 64
      %s158 = smul.addr %s157, 4
      %s159 = scalar_lea.vmem %s1, %s158
      %p160 = pneg %p61
      %p161 = pneg %p58
      %p162 = pneg %p82
      %p163 = pneg %p79
      %p164 = pneg %p103
      %p165 = pneg %p100
      %p166 = scmp.lt.s32.totalorder %s14, 3
      %s167 = scalar_select %p166, %s14, 3
      %s168 = smul.addr %s167, 52
      %s169 = smul.addr %s168, 4
      %s170 = scalar_lea.vmem %s0, %s169
      %p171 = scmp.lt.s32.totalorder %s14, 3
      %s172 = scalar_select %p171, %s14, 3
      %s173 = smul.addr %s172, 64
      %s174 = smul.addr %s173, 4
      %s175 = scalar_lea.vmem %s1, %s174
      %p176 = scmp.eq.s32.totalorder %s14, 0
      // Predicated region
      $region33: #{nlayer_discriminator_forward.5} parent=31 // pred_check
        %p177 = pneg %p176
      $region34: #{nlayer_discriminator_forward.5} parent=31 // pred_check_branch
        %179 = sbr.rel (%p177) target = $region36
      $region35: #{nlayer_discriminator_forward.5} parent=31 // pred_region
        %180 = vst [vmem:[#allocation2] sm:$0xff] 0.0
        %181 = vst [vmem:[#allocation2 + $0x8] sm:$0xff] 0.0
        %182 = vst [vmem:[#allocation2 + $0x10] sm:$0xff] 0.0
        %183 = vst [vmem:[#allocation2 + $0x18] sm:$0xff] 0.0
        %184 = vst [vmem:[#allocation2 + $0x20] sm:$0xff] 0.0
        %185 = vst [vmem:[#allocation2 + $0x28] sm:$0xff] 0.0
        %186 = vst [vmem:[#allocation2 + $0x30] sm:$0xff] 0.0
        %187 = vst [vmem:[#allocation2 + $0x38] sm:$0xff] 0.0
        %188 = vst [vmem:[#allocation2 + $0x40] sm:$0xff] 0.0
        %189 = vst [vmem:[#allocation2 + $0x48] sm:$0xff] 0.0
        %190 = vst [vmem:[#allocation2 + $0x50] sm:$0xff] 0.0
        %191 = vst [vmem:[#allocation2 + $0x58] sm:$0xff] 0.0
        %192 = vst [vmem:[#allocation2 + $0x60] sm:$0xff] 0.0
        %193 = vst [vmem:[#allocation2 + $0x68] sm:$0xff] 0.0
        %194 = vst [vmem:[#allocation2 + $0x70] sm:$0xff] 0.0
        %195 = vst [vmem:[#allocation2 + $0x78] sm:$0xff] 0.0
        %196 = vst [vmem:[#allocation2 + $0x80] sm:$0xff] 0.0
        %197 = vst [vmem:[#allocation2 + $0x88] sm:$0xff] 0.0
        %198 = vst [vmem:[#allocation2 + $0x90] sm:$0xff] 0.0
        %199 = vst [vmem:[#allocation2 + $0x98] sm:$0xff] 0.0
        %200 = vst [vmem:[#allocation2 + $0xa0] sm:$0xff] 0.0
        %201 = vst [vmem:[#allocation2 + $0xa8] sm:$0xff] 0.0
        %202 = vst [vmem:[#allocation2 + $0xb0] sm:$0xff] 0.0
        %203 = vst [vmem:[#allocation2 + $0xb8] sm:$0xff] 0.0
        %204 = vst [vmem:[#allocation2 + $0xc0] sm:$0xff] 0.0
      $region36: #{nlayer_discriminator_forward.5} parent=31 // pred_fallthru
        _
      %v205 = vld [vmem:[%s170] sm:$0xf]
      %v206 = vld [vmem:[%s170 + $0x4] sm:$0xf]
      %v207 = vld [vmem:[%s170 + $0x8] sm:$0xf]
      %v208 = vld [vmem:[%s170 + $0xc] sm:$0xf]
      %v209 = vld [vmem:[%s170 + $0x10] sm:$0xf]
      %v210 = vld [vmem:[%s170 + $0x14] sm:$0xf]
      %v211 = vld [vmem:[%s170 + $0x18] sm:$0xf]
      %v212 = vld [vmem:[%s170 + $0x1c] sm:$0xf]
      %v213 = vld [vmem:[%s170 + $0x20] sm:$0xf]
      %v214 = vld [vmem:[%s170 + $0x24] sm:$0xf]
      %v215 = vld [vmem:[%s170 + $0x28] sm:$0xf]
      %v216 = vld [vmem:[%s170 + $0x2c] sm:$0xf]
      %v217 = vld [vmem:[%s170 + $0x30] sm:$0xf]
      %v218 = vld [vmem:[%s170 + $0x34] sm:$0xf]
      %v219 = vld [vmem:[%s170 + $0x38] sm:$0xf]
      %v220 = vld [vmem:[%s170 + $0x3c] sm:$0xf]
      %v221 = vld [vmem:[%s170 + $0x40] sm:$0xf]
      %v222 = vld [vmem:[%s170 + $0x44] sm:$0xf]
      %v223 = vld [vmem:[%s170 + $0x48] sm:$0xf]
      %v224 = vld [vmem:[%s170 + $0x4c] sm:$0xf]
      %v225 = vld [vmem:[%s170 + $0x50] sm:$0xf]
      %v226 = vld [vmem:[%s170 + $0x54] sm:$0xf]
      %v227 = vld [vmem:[%s170 + $0x58] sm:$0xf]
      %v228 = vld [vmem:[%s170 + $0x5c] sm:$0xf]
      %v229 = vld [vmem:[%s170 + $0x60] sm:$0xf]
      %v230 = vld [vmem:[%s170 + $0x64] sm:$0x1]
      %v231 = vld [vmem:[#allocation2] sm:$0xff]
      %v232 = vld [vmem:[#allocation2 + $0x8] sm:$0xff]
      %v233 = vld [vmem:[#allocation2 + $0x10] sm:$0xff]
      %v234 = vld [vmem:[#allocation2 + $0x18] sm:$0xff]
      %v235 = vld [vmem:[#allocation2 + $0x20] sm:$0xff]
      %v236 = vld [vmem:[#allocation2 + $0x28] sm:$0xff]
      %v237 = vld [vmem:[#allocation2 + $0x30] sm:$0xff]
      %v238 = vld [vmem:[#allocation2 + $0x38] sm:$0xff]
      %v239 = vld [vmem:[#allocation2 + $0x40] sm:$0xff]
      %v240 = vld [vmem:[#allocation2 + $0x48] sm:$0xff]
      %v241 = vld [vmem:[#allocation2 + $0x50] sm:$0xff]
      %v242 = vld [vmem:[#allocation2 + $0x58] sm:$0xff]
      %v243 = vld [vmem:[#allocation2 + $0x60] sm:$0xff]
      %v244 = vld [vmem:[#allocation2 + $0x68] sm:$0xff]
      %v245 = vld [vmem:[#allocation2 + $0x70] sm:$0xff]
      %v246 = vld [vmem:[#allocation2 + $0x78] sm:$0xff]
      %v247 = vld [vmem:[#allocation2 + $0x80] sm:$0xff]
      %v248 = vld [vmem:[#allocation2 + $0x88] sm:$0xff]
      %v249 = vld [vmem:[#allocation2 + $0x90] sm:$0xff]
      %v250 = vld [vmem:[#allocation2 + $0x98] sm:$0xff]
      %v251 = vld [vmem:[#allocation2 + $0xa0] sm:$0xff]
      %v252 = vld [vmem:[#allocation2 + $0xa8] sm:$0xff]
      %v253 = vld [vmem:[#allocation2 + $0xb0] sm:$0xff]
      %v254 = vld [vmem:[#allocation2 + $0xb8] sm:$0xff]
      %v255 = vld [vmem:[#allocation2 + $0xc0] sm:$0xff]
      %v256 = vld [vmem:[%s175] sm:$0xf]
      %v257 = vld [vmem:[%s175 + $0x4] sm:$0xf]
      %v258 = vld [vmem:[%s175 + $0x8] sm:$0xf]
      %v259 = vld [vmem:[%s175 + $0xc] sm:$0xf]
      %v260 = vld [vmem:[%s175 + $0x10] sm:$0xf]
      %v261 = vld [vmem:[%s175 + $0x14] sm:$0xf]
      %v262 = vld [vmem:[%s175 + $0x18] sm:$0xf]
      %v263 = vld [vmem:[%s175 + $0x1c] sm:$0xf]
      %v264 = vld [vmem:[%s175 + $0x20] sm:$0xf]
      %v265 = vld [vmem:[%s175 + $0x24] sm:$0xf]
      %v266 = vld [vmem:[%s175 + $0x28] sm:$0xf]
      %v267 = vld [vmem:[%s175 + $0x2c] sm:$0xf]
      %v268 = vld [vmem:[%s175 + $0x30] sm:$0xf]
      %v269 = vld [vmem:[%s175 + $0x34] sm:$0xf]
      %v270 = vld [vmem:[%s175 + $0x38] sm:$0xf]
      %v271 = vld [vmem:[%s175 + $0x3c] sm:$0xf]
      %v297 = vunpack.c.l.b16 %v205
      %v298 = vunpack.c.l.b16 %v206
      %v299 = vunpack.c.l.b16 %v207
      %v300 = vunpack.c.l.b16 %v208
      %v301 = vunpack.c.l.b16 %v209
      %v302 = vunpack.c.l.b16 %v210
      %v303 = vunpack.c.l.b16 %v211
      %v304 = vunpack.c.l.b16 %v212
      %v305 = vunpack.c.l.b16 %v213
      %v306 = vunpack.c.l.b16 %v214
      %v307 = vunpack.c.l.b16 %v215
      %v308 = vunpack.c.l.b16 %v216
      %v309 = vunpack.c.l.b16 %v217
      %v310 = vunpack.c.l.b16 %v218
      %v311 = vunpack.c.l.b16 %v219
      %v312 = vunpack.c.l.b16 %v220
      %v313 = vunpack.c.l.b16 %v221
      %v314 = vunpack.c.l.b16 %v222
      %v315 = vunpack.c.l.b16 %v223
      %v316 = vunpack.c.l.b16 %v224
      %v317 = vunpack.c.l.b16 %v225
      %v318 = vunpack.c.l.b16 %v226
      %v319 = vunpack.c.l.b16 %v227
      %v320 = vunpack.c.l.b16 %v228
      %v321 = vunpack.c.l.b16 %v229
      %v322 = vpack.c.b16 %v298, %v297
      %v323 = vpack.c.b16 %v300, %v299
      %v324 = vpack.c.b16 %v302, %v301
      %v325 = vpack.c.b16 %v304, %v303
      %v326 = vpack.c.b16 %v306, %v305
      %v327 = vpack.c.b16 %v308, %v307
      %v328 = vpack.c.b16 %v310, %v309
      %v329 = vpack.c.b16 %v312, %v311
      %v330 = vpack.c.b16 %v314, %v313
      %v331 = vpack.c.b16 %v316, %v315
      %v332 = vpack.c.b16 %v318, %v317
      %v333 = vpack.c.b16 %v320, %v319
      %v334 = vpack.c.b16 %v321, %v321
      %v364 = vunpack.c.l.b16 %v256
      %v365 = vunpack.c.l.b16 %v257
      %v366 = vunpack.c.l.b16 %v258
      %v367 = vunpack.c.l.b16 %v259
      %v368 = vunpack.c.l.b16 %v260
      %v369 = vunpack.c.l.b16 %v261
      %v370 = vunpack.c.l.b16 %v262
      %v371 = vunpack.c.l.b16 %v263
      %v372 = vunpack.c.l.b16 %v264
      %v373 = vunpack.c.l.b16 %v265
      %v374 = vunpack.c.l.b16 %v266
      %v375 = vunpack.c.l.b16 %v267
      %v376 = vunpack.c.l.b16 %v268
      %v377 = vunpack.c.l.b16 %v269
      %v378 = vunpack.c.l.b16 %v270
      %v379 = vunpack.c.l.b16 %v271
      %v380 = vpack.c.b16 %v365, %v364
      %v381 = vpack.c.b16 %v367, %v366
      %v382 = vpack.c.b16 %v369, %v368
      %v383 = vpack.c.b16 %v371, %v370
      %v384 = vpack.c.b16 %v373, %v372
      %v385 = vpack.c.b16 %v375, %v374
      %v386 = vpack.c.b16 %v377, %v376
      %v387 = vpack.c.b16 %v379, %v378
      %396 = vmatpush.bf16.msra.mxu0 %v387
      %397 = vmatpush.bf16.msra.mxu0 %v386
      %398 = vmatpush.bf16.msra.mxu0 %v385
      %399 = vmatpush.bf16.msra.mxu0 %v384
      %400 = vmatpush.bf16.msra.mxu0 %v383
      %401 = vmatpush.bf16.msra.mxu0 %v382
      %402 = vmatpush.bf16.msra.mxu0 %v381
      %403 = vmatpush.bf16.msra.mxu0 %v380
      %404 = vmatmul.bf16.gmra.mxu0 %v322
      %v405 = vpop.f32.mrf.mxu0
      %v406 = vadd.f32 0.0, %v405
      %v407 = vpop.f32.mrf.mxu0
      %v408 = vadd.f32 0.0, %v407
      %409 = vmatmul.bf16.gmra.mxu0 %v323
      %v410 = vpop.f32.mrf.mxu0
      %v411 = vadd.f32 0.0, %v410
      %v412 = vpop.f32.mrf.mxu0
      %v413 = vadd.f32 0.0, %v412
      %414 = vmatmul.bf16.gmra.mxu0 %v324
      %v415 = vpop.f32.mrf.mxu0
      %v416 = vadd.f32 0.0, %v415
      %v417 = vpop.f32.mrf.mxu0
      %v418 = vadd.f32 0.0, %v417
      %419 = vmatmul.bf16.gmra.mxu0 %v325
      %v420 = vpop.f32.mrf.mxu0
      %v421 = vadd.f32 0.0, %v420
      %v422 = vpop.f32.mrf.mxu0
      %v423 = vadd.f32 0.0, %v422
      %424 = vmatmul.bf16.gmra.mxu0 %v326
      %v425 = vpop.f32.mrf.mxu0
      %v426 = vadd.f32 0.0, %v425
      %v427 = vpop.f32.mrf.mxu0
      %v428 = vadd.f32 0.0, %v427
      %429 = vmatmul.bf16.gmra.mxu0 %v327
      %v430 = vpop.f32.mrf.mxu0
      %v431 = vadd.f32 0.0, %v430
      %v432 = vpop.f32.mrf.mxu0
      %v433 = vadd.f32 0.0, %v432
      %434 = vmatmul.bf16.gmra.mxu0 %v328
      %v435 = vpop.f32.mrf.mxu0
      %v436 = vadd.f32 0.0, %v435
      %v437 = vpop.f32.mrf.mxu0
      %v438 = vadd.f32 0.0, %v437
      %439 = vmatmul.bf16.gmra.mxu0 %v329
      %v440 = vpop.f32.mrf.mxu0
      %v441 = vadd.f32 0.0, %v440
      %v442 = vpop.f32.mrf.mxu0
      %v443 = vadd.f32 0.0, %v442
      %444 = vmatmul.bf16.gmra.mxu0 %v330
      %v445 = vpop.f32.mrf.mxu0
      %v446 = vadd.f32 0.0, %v445
      %v447 = vpop.f32.mrf.mxu0
      %v448 = vadd.f32 0.0, %v447
      %449 = vmatmul.bf16.gmra.mxu0 %v331
      %v450 = vpop.f32.mrf.mxu0
      %v451 = vadd.f32 0.0, %v450
      %v452 = vpop.f32.mrf.mxu0
      %v453 = vadd.f32 0.0, %v452
      %454 = vmatmul.bf16.gmra.mxu0 %v332
      %v455 = vpop.f32.mrf.mxu0
      %v456 = vadd.f32 0.0, %v455
      %v457 = vpop.f32.mrf.mxu0
      %v458 = vadd.f32 0.0, %v457
      %459 = vmatmul.bf16.gmra.mxu0 %v333
      %v460 = vpop.f32.mrf.mxu0
      %v461 = vadd.f32 0.0, %v460
      %v462 = vpop.f32.mrf.mxu0
      %v463 = vadd.f32 0.0, %v462
      %464 = vmatmul.bf16.gmra.mxu0 %v334
      %v465 = vpop.f32.mrf.mxu0
      %v466 = vadd.f32 0.0, %v465
      %v467 = vpop.f32.mrf.mxu0
      %468 = vdwg.mxu0
      %v469 = vadd.f32 %v231, %v406
      %v470 = vadd.f32 %v232, %v408
      %v471 = vadd.f32 %v233, %v411
      %v472 = vadd.f32 %v234, %v413
      %v473 = vadd.f32 %v235, %v416
      %v474 = vadd.f32 %v236, %v418
      %v475 = vadd.f32 %v237, %v421
      %v476 = vadd.f32 %v238, %v423
      %v477 = vadd.f32 %v239, %v426
      %v478 = vadd.f32 %v240, %v428
      %v479 = vadd.f32 %v241, %v431
      %v480 = vadd.f32 %v242, %v433
      %v481 = vadd.f32 %v243, %v436
      %v482 = vadd.f32 %v244, %v438
      %v483 = vadd.f32 %v245, %v441
      %v484 = vadd.f32 %v246, %v443
      %v485 = vadd.f32 %v247, %v446
      %v486 = vadd.f32 %v248, %v448
      %v487 = vadd.f32 %v249, %v451
      %v488 = vadd.f32 %v250, %v453
      %v489 = vadd.f32 %v251, %v456
      %v490 = vadd.f32 %v252, %v458
      %v491 = vadd.f32 %v253, %v461
      %v492 = vadd.f32 %v254, %v463
      %v493 = vadd.f32 %v255, %v466
      %494 = vst [vmem:[#allocation2] sm:$0xff] %v469
      %495 = vst [vmem:[#allocation2 + $0x8] sm:$0xff] %v470
      %496 = vst [vmem:[#allocation2 + $0x10] sm:$0xff] %v471
      %497 = vst [vmem:[#allocation2 + $0x18] sm:$0xff] %v472
      %498 = vst [vmem:[#allocation2 + $0x20] sm:$0xff] %v473
      %499 = vst [vmem:[#allocation2 + $0x28] sm:$0xff] %v474
      %500 = vst [vmem:[#allocation2 + $0x30] sm:$0xff] %v475
      %501 = vst [vmem:[#allocation2 + $0x38] sm:$0xff] %v476
      %502 = vst [vmem:[#allocation2 + $0x40] sm:$0xff] %v477
      %503 = vst [vmem:[#allocation2 + $0x48] sm:$0xff] %v478
      %504 = vst [vmem:[#allocation2 + $0x50] sm:$0xff] %v479
      %505 = vst [vmem:[#allocation2 + $0x58] sm:$0xff] %v480
      %506 = vst [vmem:[#allocation2 + $0x60] sm:$0xff] %v481
      %507 = vst [vmem:[#allocation2 + $0x68] sm:$0xff] %v482
      %508 = vst [vmem:[#allocation2 + $0x70] sm:$0xff] %v483
      %509 = vst [vmem:[#allocation2 + $0x78] sm:$0xff] %v484
      %510 = vst [vmem:[#allocation2 + $0x80] sm:$0xff] %v485
      %511 = vst [vmem:[#allocation2 + $0x88] sm:$0xff] %v486
      %512 = vst [vmem:[#allocation2 + $0x90] sm:$0xff] %v487
      %513 = vst [vmem:[#allocation2 + $0x98] sm:$0xff] %v488
      %514 = vst [vmem:[#allocation2 + $0xa0] sm:$0xff] %v489
      %515 = vst [vmem:[#allocation2 + $0xa8] sm:$0xff] %v490
      %516 = vst [vmem:[#allocation2 + $0xb0] sm:$0xff] %v491
      %517 = vst [vmem:[#allocation2 + $0xb8] sm:$0xff] %v492
      %518 = vst [vmem:[#allocation2 + $0xc0] sm:$0xff] %v493
      %v519 = vld [vmem:[#allocation2] sm:$0xff]
      %v520 = vld [vmem:[#allocation2 + $0x8] sm:$0xff]
      %v521 = vld [vmem:[#allocation2 + $0x10] sm:$0xff]
      %v522 = vld [vmem:[#allocation2 + $0x18] sm:$0xff]
      %v523 = vld [vmem:[#allocation2 + $0x20] sm:$0xff]
      %v524 = vld [vmem:[#allocation2 + $0x28] sm:$0xff]
      %v525 = vld [vmem:[#allocation2 + $0x30] sm:$0xff]
      %v526 = vld [vmem:[#allocation2 + $0x38] sm:$0xff]
      %v527 = vld [vmem:[#allocation2 + $0x40] sm:$0xff]
      %v528 = vld [vmem:[#allocation2 + $0x48] sm:$0xff]
      %v529 = vld [vmem:[#allocation2 + $0x50] sm:$0xff]
      %v530 = vld [vmem:[#allocation2 + $0x58] sm:$0xff]
      %v531 = vld [vmem:[#allocation2 + $0x60] sm:$0xff]
      %v532 = vld [vmem:[#allocation2 + $0x68] sm:$0xff]
      %v533 = vld [vmem:[#allocation2 + $0x70] sm:$0xff]
      %v534 = vld [vmem:[#allocation2 + $0x78] sm:$0xff]
      %v535 = vld [vmem:[#allocation2 + $0x80] sm:$0xff]
      %v536 = vld [vmem:[#allocation2 + $0x88] sm:$0xff]
      %v537 = vld [vmem:[#allocation2 + $0x90] sm:$0xff]
      %v538 = vld [vmem:[#allocation2 + $0x98] sm:$0xff]
      %v539 = vld [vmem:[#allocation2 + $0xa0] sm:$0xff]
      %v540 = vld [vmem:[#allocation2 + $0xa8] sm:$0xff]
      %v541 = vld [vmem:[#allocation2 + $0xb0] sm:$0xff]
      %v542 = vld [vmem:[#allocation2 + $0xb8] sm:$0xff]
      %v543 = vld [vmem:[#allocation2 + $0xc0] sm:$0xff]
      %s544 = scalar_lea.vmem %s175, 128
      %v545 = vld [vmem:[%s544] sm:$0xf]
      %v546 = vld [vmem:[%s544 + $0x4] sm:$0xf]
      %v547 = vld [vmem:[%s544 + $0x8] sm:$0xf]
      %v548 = vld [vmem:[%s544 + $0xc] sm:$0xf]
      %v549 = vld [vmem:[%s544 + $0x10] sm:$0xf]
      %v550 = vld [vmem:[%s544 + $0x14] sm:$0xf]
      %v551 = vld [vmem:[%s544 + $0x18] sm:$0xf]
      %v552 = vld [vmem:[%s544 + $0x1c] sm:$0xf]
      %v553 = vld [vmem:[%s544 + $0x20] sm:$0xf]
      %v554 = vld [vmem:[%s544 + $0x24] sm:$0xf]
      %v555 = vld [vmem:[%s544 + $0x28] sm:$0xf]
      %v556 = vld [vmem:[%s544 + $0x2c] sm:$0xf]
      %v557 = vld [vmem:[%s544 + $0x30] sm:$0xf]
      %v558 = vld [vmem:[%s544 + $0x34] sm:$0xf]
      %v559 = vld [vmem:[%s544 + $0x38] sm:$0xf]
      %v560 = vld [vmem:[%s544 + $0x3c] sm:$0xf]
      %v562 = vunpack.c.l.b16 %v230
      %v563 = vpack.c.b16 %v562, %v321
      %vm564 = vsmask.f32 7424
      %v566 = vshrl.u32 %v322, 16
      %v568 = vshll.u32 %v322, 16
      %v570 = vrot.slane %v568, 1
      %v571 = vor.u32 %v566, %v570
      %v573 = vshll.u32 %v323, 16
      %v575 = vrot.slane %v573, 1
      %v576 = vsel %vm564, %v571, %v575
      %v577 = vshrl.u32 %v323, 16
      %v579 = vor.u32 %v577, %v575
      %v581 = vshll.u32 %v324, 16
      %v583 = vrot.slane %v581, 1
      %v584 = vsel %vm564, %v579, %v583
      %v585 = vshrl.u32 %v324, 16
      %v587 = vor.u32 %v585, %v583
      %v589 = vshll.u32 %v325, 16
      %v591 = vrot.slane %v589, 1
      %v592 = vsel %vm564, %v587, %v591
      %v593 = vshrl.u32 %v325, 16
      %v595 = vor.u32 %v593, %v591
      %v597 = vshll.u32 %v326, 16
      %v599 = vrot.slane %v597, 1
      %v600 = vsel %vm564, %v595, %v599
      %v601 = vshrl.u32 %v326, 16
      %v603 = vor.u32 %v601, %v599
      %v605 = vshll.u32 %v327, 16
      %v607 = vrot.slane %v605, 1
      %v608 = vsel %vm564, %v603, %v607
      %v609 = vshrl.u32 %v327, 16
      %v611 = vor.u32 %v609, %v607
      %v613 = vshll.u32 %v328, 16
      %v615 = vrot.slane %v613, 1
      %v616 = vsel %vm564, %v611, %v615
      %v617 = vshrl.u32 %v328, 16
      %v619 = vor.u32 %v617, %v615
      %v621 = vshll.u32 %v329, 16
      %v623 = vrot.slane %v621, 1
      %v624 = vsel %vm564, %v619, %v623
      %v625 = vshrl.u32 %v329, 16
      %v627 = vor.u32 %v625, %v623
      %v629 = vshll.u32 %v330, 16
      %v631 = vrot.slane %v629, 1
      %v632 = vsel %vm564, %v627, %v631
      %v633 = vshrl.u32 %v330, 16
      %v635 = vor.u32 %v633, %v631
      %v637 = vshll.u32 %v331, 16
      %v639 = vrot.slane %v637, 1
      %v640 = vsel %vm564, %v635, %v639
      %v641 = vshrl.u32 %v331, 16
      %v643 = vor.u32 %v641, %v639
      %v645 = vshll.u32 %v332, 16
      %v647 = vrot.slane %v645, 1
      %v648 = vsel %vm564, %v643, %v647
      %v649 = vshrl.u32 %v332, 16
      %v651 = vor.u32 %v649, %v647
      %v653 = vshll.u32 %v333, 16
      %v655 = vrot.slane %v653, 1
      %v656 = vsel %vm564, %v651, %v655
      %v657 = vshrl.u32 %v333, 16
      %v659 = vor.u32 %v657, %v655
      %v661 = vshll.u32 %v563, 16
      %v663 = vrot.slane %v661, 1
      %v664 = vsel %vm564, %v659, %v663
      %v665 = vshrl.u32 %v563, 16
      %v667 = vor.u32 %v665, %v663
      %v697 = vunpack.c.l.b16 %v545
      %v698 = vunpack.c.l.b16 %v546
      %v699 = vunpack.c.l.b16 %v547
      %v700 = vunpack.c.l.b16 %v548
      %v701 = vunpack.c.l.b16 %v549
      %v702 = vunpack.c.l.b16 %v550
      %v703 = vunpack.c.l.b16 %v551
      %v704 = vunpack.c.l.b16 %v552
      %v705 = vunpack.c.l.b16 %v553
      %v706 = vunpack.c.l.b16 %v554
      %v707 = vunpack.c.l.b16 %v555
      %v708 = vunpack.c.l.b16 %v556
      %v709 = vunpack.c.l.b16 %v557
      %v710 = vunpack.c.l.b16 %v558
      %v711 = vunpack.c.l.b16 %v559
      %v712 = vunpack.c.l.b16 %v560
      %v713 = vpack.c.b16 %v698, %v697
      %v714 = vpack.c.b16 %v700, %v699
      %v715 = vpack.c.b16 %v702, %v701
      %v716 = vpack.c.b16 %v704, %v703
      %v717 = vpack.c.b16 %v706, %v705
      %v718 = vpack.c.b16 %v708, %v707
      %v719 = vpack.c.b16 %v710, %v709
      %v720 = vpack.c.b16 %v712, %v711
      %729 = vmatpush.bf16.msra.mxu0 %v720
      %730 = vmatpush.bf16.msra.mxu0 %v719
      %731 = vmatpush.bf16.msra.mxu0 %v718
      %732 = vmatpush.bf16.msra.mxu0 %v717
      %733 = vmatpush.bf16.msra.mxu0 %v716
      %734 = vmatpush.bf16.msra.mxu0 %v715
      %735 = vmatpush.bf16.msra.mxu0 %v714
      %736 = vmatpush.bf16.msra.mxu0 %v713
      %737 = vmatmul.bf16.gmra.mxu0 %v576
      %v738 = vpop.f32.mrf.mxu0
      %v739 = vadd.f32 0.0, %v738
      %v740 = vpop.f32.mrf.mxu0
      %v741 = vadd.f32 0.0, %v740
      %742 = vmatmul.bf16.gmra.mxu0 %v584
      %v743 = vpop.f32.mrf.mxu0
      %v744 = vadd.f32 0.0, %v743
      %v745 = vpop.f32.mrf.mxu0
      %v746 = vadd.f32 0.0, %v745
      %747 = vmatmul.bf16.gmra.mxu0 %v592
      %v748 = vpop.f32.mrf.mxu0
      %v749 = vadd.f32 0.0, %v748
      %v750 = vpop.f32.mrf.mxu0
      %v751 = vadd.f32 0.0, %v750
      %752 = vmatmul.bf16.gmra.mxu0 %v600
      %v753 = vpop.f32.mrf.mxu0
      %v754 = vadd.f32 0.0, %v753
      %v755 = vpop.f32.mrf.mxu0
      %v756 = vadd.f32 0.0, %v755
      %757 = vmatmul.bf16.gmra.mxu0 %v608
      %v758 = vpop.f32.mrf.mxu0
      %v759 = vadd.f32 0.0, %v758
      %v760 = vpop.f32.mrf.mxu0
      %v761 = vadd.f32 0.0, %v760
      %762 = vmatmul.bf16.gmra.mxu0 %v616
      %v763 = vpop.f32.mrf.mxu0
      %v764 = vadd.f32 0.0, %v763
      %v765 = vpop.f32.mrf.mxu0
      %v766 = vadd.f32 0.0, %v765
      %767 = vmatmul.bf16.gmra.mxu0 %v624
      %v768 = vpop.f32.mrf.mxu0
      %v769 = vadd.f32 0.0, %v768
      %v770 = vpop.f32.mrf.mxu0
      %v771 = vadd.f32 0.0, %v770
      %772 = vmatmul.bf16.gmra.mxu0 %v632
      %v773 = vpop.f32.mrf.mxu0
      %v774 = vadd.f32 0.0, %v773
      %v775 = vpop.f32.mrf.mxu0
      %v776 = vadd.f32 0.0, %v775
      %777 = vmatmul.bf16.gmra.mxu0 %v640
      %v778 = vpop.f32.mrf.mxu0
      %v779 = vadd.f32 0.0, %v778
      %v780 = vpop.f32.mrf.mxu0
      %v781 = vadd.f32 0.0, %v780
      %782 = vmatmul.bf16.gmra.mxu0 %v648
      %v783 = vpop.f32.mrf.mxu0
      %v784 = vadd.f32 0.0, %v783
      %v785 = vpop.f32.mrf.mxu0
      %v786 = vadd.f32 0.0, %v785
      %787 = vmatmul.bf16.gmra.mxu0 %v656
      %v788 = vpop.f32.mrf.mxu0
      %v789 = vadd.f32 0.0, %v788
      %v790 = vpop.f32.mrf.mxu0
      %v791 = vadd.f32 0.0, %v790
      %792 = vmatmul.bf16.gmra.mxu0 %v664
      %v793 = vpop.f32.mrf.mxu0
      %v794 = vadd.f32 0.0, %v793
      %v795 = vpop.f32.mrf.mxu0
      %v796 = vadd.f32 0.0, %v795
      %797 = vmatmul.bf16.gmra.mxu0 %v667
      %v798 = vpop.f32.mrf.mxu0
      %v799 = vadd.f32 0.0, %v798
      %v800 = vpop.f32.mrf.mxu0
      %801 = vdwg.mxu0
      %v802 = vadd.f32 %v519, %v739
      %v803 = vadd.f32 %v520, %v741
      %v804 = vadd.f32 %v521, %v744
      %v805 = vadd.f32 %v522, %v746
      %v806 = vadd.f32 %v523, %v749
      %v807 = vadd.f32 %v524, %v751
      %v808 = vadd.f32 %v525, %v754
      %v809 = vadd.f32 %v526, %v756
      %v810 = vadd.f32 %v527, %v759
      %v811 = vadd.f32 %v528, %v761
      %v812 = vadd.f32 %v529, %v764
      %v813 = vadd.f32 %v530, %v766
      %v814 = vadd.f32 %v531, %v769
      %v815 = vadd.f32 %v532, %v771
      %v816 = vadd.f32 %v533, %v774
      %v817 = vadd.f32 %v534, %v776
      %v818 = vadd.f32 %v535, %v779
      %v819 = vadd.f32 %v536, %v781
      %v820 = vadd.f32 %v537, %v784
      %v821 = vadd.f32 %v538, %v786
      %v822 = vadd.f32 %v539, %v789
      %v823 = vadd.f32 %v540, %v791
      %v824 = vadd.f32 %v541, %v794
      %v825 = vadd.f32 %v542, %v796
      %v826 = vadd.f32 %v543, %v799
      %827 = vst [vmem:[#allocation2] sm:$0xff] %v802
      %828 = vst [vmem:[#allocation2 + $0x8] sm:$0xff] %v803
      %829 = vst [vmem:[#allocation2 + $0x10] sm:$0xff] %v804
      %830 = vst [vmem:[#allocation2 + $0x18] sm:$0xff] %v805
      %831 = vst [vmem:[#allocation2 + $0x20] sm:$0xff] %v806
      %832 = vst [vmem:[#allocation2 + $0x28] sm:$0xff] %v807
      %833 = vst [vmem:[#allocation2 + $0x30] sm:$0xff] %v808
      %834 = vst [vmem:[#allocation2 + $0x38] sm:$0xff] %v809
      %835 = vst [vmem:[#allocation2 + $0x40] sm:$0xff] %v810
      %836 = vst [vmem:[#allocation2 + $0x48] sm:$0xff] %v811
      %837 = vst [vmem:[#allocation2 + $0x50] sm:$0xff] %v812
      %838 = vst [vmem:[#allocation2 + $0x58] sm:$0xff] %v813
      %839 = vst [vmem:[#allocation2 + $0x60] sm:$0xff] %v814
      %840 = vst [vmem:[#allocation2 + $0x68] sm:$0xff] %v815
      %841 = vst [vmem:[#allocation2 + $0x70] sm:$0xff] %v816
      %842 = vst [vmem:[#allocation2 + $0x78] sm:$0xff] %v817
      %843 = vst [vmem:[#allocation2 + $0x80] sm:$0xff] %v818
      %844 = vst [vmem:[#allocation2 + $0x88] sm:$0xff] %v819
      %845 = vst [vmem:[#allocation2 + $0x90] sm:$0xff] %v820
      %846 = vst [vmem:[#allocation2 + $0x98] sm:$0xff] %v821
      %847 = vst [vmem:[#allocation2 + $0xa0] sm:$0xff] %v822
      %848 = vst [vmem:[#allocation2 + $0xa8] sm:$0xff] %v823
      %849 = vst [vmem:[#allocation2 + $0xb0] sm:$0xff] %v824
      %850 = vst [vmem:[#allocation2 + $0xb8] sm:$0xff] %v825
      %851 = vst [vmem:[#allocation2 + $0xc0] sm:$0xff] %v826
      %s852 = scalar_lea.vmem %s170, 104
      %v853 = vld [vmem:[%s852] sm:$0xf]
      %v854 = vld [vmem:[%s852 + $0x4] sm:$0xf]
      %v855 = vld [vmem:[%s852 + $0x8] sm:$0xf]
      %v856 = vld [vmem:[%s852 + $0xc] sm:$0xf]
      %v857 = vld [vmem:[%s852 + $0x10] sm:$0xf]
      %v858 = vld [vmem:[%s852 + $0x14] sm:$0xf]
      %v859 = vld [vmem:[%s852 + $0x18] sm:$0xf]
      %v860 = vld [vmem:[%s852 + $0x1c] sm:$0xf]
      %v861 = vld [vmem:[%s852 + $0x20] sm:$0xf]
      %v862 = vld [vmem:[%s852 + $0x24] sm:$0xf]
      %v863 = vld [vmem:[%s852 + $0x28] sm:$0xf]
      %v864 = vld [vmem:[%s852 + $0x2c] sm:$0xf]
      %v865 = vld [vmem:[%s852 + $0x30] sm:$0xf]
      %v866 = vld [vmem:[%s852 + $0x34] sm:$0xf]
      %v867 = vld [vmem:[%s852 + $0x38] sm:$0xf]
      %v868 = vld [vmem:[%s852 + $0x3c] sm:$0xf]
      %v869 = vld [vmem:[%s852 + $0x40] sm:$0xf]
      %v870 = vld [vmem:[%s852 + $0x44] sm:$0xf]
      %v871 = vld [vmem:[%s852 + $0x48] sm:$0xf]
      %v872 = vld [vmem:[%s852 + $0x4c] sm:$0xf]
      %v873 = vld [vmem:[%s852 + $0x50] sm:$0xf]
      %v874 = vld [vmem:[%s852 + $0x54] sm:$0xf]
      %v875 = vld [vmem:[%s852 + $0x58] sm:$0xf]
      %v876 = vld [vmem:[%s852 + $0x5c] sm:$0xf]
      %v877 = vld [vmem:[%s852 + $0x60] sm:$0xf]
      %v878 = vld [vmem:[%s852 + $0x64] sm:$0x1]
      %v879 = vld [vmem:[#allocation2] sm:$0xff]
      %v880 = vld [vmem:[#allocation2 + $0x8] sm:$0xff]
      %v881 = vld [vmem:[#allocation2 + $0x10] sm:$0xff]
      %v882 = vld [vmem:[#allocation2 + $0x18] sm:$0xff]
      %v883 = vld [vmem:[#allocation2 + $0x20] sm:$0xff]
      %v884 = vld [vmem:[#allocation2 + $0x28] sm:$0xff]
      %v885 = vld [vmem:[#allocation2 + $0x30] sm:$0xff]
      %v886 = vld [vmem:[#allocation2 + $0x38] sm:$0xff]
      %v887 = vld [vmem:[#allocation2 + $0x40] sm:$0xff]
      %v888 = vld [vmem:[#allocation2 + $0x48] sm:$0xff]
      %v889 = vld [vmem:[#allocation2 + $0x50] sm:$0xff]
      %v890 = vld [vmem:[#allocation2 + $0x58] sm:$0xff]
      %v891 = vld [vmem:[#allocation2 + $0x60] sm:$0xff]
      %v892 = vld [vmem:[#allocation2 + $0x68] sm:$0xff]
      %v893 = vld [vmem:[#allocation2 + $0x70] sm:$0xff]
      %v894 = vld [vmem:[#allocation2 + $0x78] sm:$0xff]
      %v895 = vld [vmem:[#allocation2 + $0x80] sm:$0xff]
      %v896 = vld [vmem:[#allocation2 + $0x88] sm:$0xff]
      %v897 = vld [vmem:[#allocation2 + $0x90] sm:$0xff]
      %v898 = vld [vmem:[#allocation2 + $0x98] sm:$0xff]
      %v899 = vld [vmem:[#allocation2 + $0xa0] sm:$0xff]
      %v900 = vld [vmem:[#allocation2 + $0xa8] sm:$0xff]
      %v901 = vld [vmem:[#allocation2 + $0xb0] sm:$0xff]
      %v902 = vld [vmem:[#allocation2 + $0xb8] sm:$0xff]
      %v903 = vld [vmem:[#allocation2 + $0xc0] sm:$0xff]
      %s904 = scalar_lea.vmem %s175, 64
      %v905 = vld [vmem:[%s904] sm:$0xf]
      %v906 = vld [vmem:[%s904 + $0x4] sm:$0xf]
      %v907 = vld [vmem:[%s904 + $0x8] sm:$0xf]
      %v908 = vld [vmem:[%s904 + $0xc] sm:$0xf]
      %v909 = vld [vmem:[%s904 + $0x10] sm:$0xf]
      %v910 = vld [vmem:[%s904 + $0x14] sm:$0xf]
      %v911 = vld [vmem:[%s904 + $0x18] sm:$0xf]
      %v912 = vld [vmem:[%s904 + $0x1c] sm:$0xf]
      %v913 = vld [vmem:[%s904 + $0x20] sm:$0xf]
      %v914 = vld [vmem:[%s904 + $0x24] sm:$0xf]
      %v915 = vld [vmem:[%s904 + $0x28] sm:$0xf]
      %v916 = vld [vmem:[%s904 + $0x2c] sm:$0xf]
      %v917 = vld [vmem:[%s904 + $0x30] sm:$0xf]
      %v918 = vld [vmem:[%s904 + $0x34] sm:$0xf]
      %v919 = vld [vmem:[%s904 + $0x38] sm:$0xf]
      %v920 = vld [vmem:[%s904 + $0x3c] sm:$0xf]
      %v946 = vunpack.c.l.b16 %v853
      %v947 = vunpack.c.l.b16 %v854
      %v948 = vunpack.c.l.b16 %v855
      %v949 = vunpack.c.l.b16 %v856
      %v950 = vunpack.c.l.b16 %v857
      %v951 = vunpack.c.l.b16 %v858
      %v952 = vunpack.c.l.b16 %v859
      %v953 = vunpack.c.l.b16 %v860
      %v954 = vunpack.c.l.b16 %v861
      %v955 = vunpack.c.l.b16 %v862
      %v956 = vunpack.c.l.b16 %v863
      %v957 = vunpack.c.l.b16 %v864
      %v958 = vunpack.c.l.b16 %v865
      %v959 = vunpack.c.l.b16 %v866
      %v960 = vunpack.c.l.b16 %v867
      %v961 = vunpack.c.l.b16 %v868
      %v962 = vunpack.c.l.b16 %v869
      %v963 = vunpack.c.l.b16 %v870
      %v964 = vunpack.c.l.b16 %v871
      %v965 = vunpack.c.l.b16 %v872
      %v966 = vunpack.c.l.b16 %v873
      %v967 = vunpack.c.l.b16 %v874
      %v968 = vunpack.c.l.b16 %v875
      %v969 = vunpack.c.l.b16 %v876
      %v970 = vunpack.c.l.b16 %v877
      %v971 = vpack.c.b16 %v947, %v946
      %v972 = vpack.c.b16 %v949, %v948
      %v973 = vpack.c.b16 %v951, %v950
      %v974 = vpack.c.b16 %v953, %v952
      %v975 = vpack.c.b16 %v955, %v954
      %v976 = vpack.c.b16 %v957, %v956
      %v977 = vpack.c.b16 %v959, %v958
      %v978 = vpack.c.b16 %v961, %v960
      %v979 = vpack.c.b16 %v963, %v962
      %v980 = vpack.c.b16 %v965, %v964
      %v981 = vpack.c.b16 %v967, %v966
      %v982 = vpack.c.b16 %v969, %v968
      %v983 = vpack.c.b16 %v970, %v970
      %v1013 = vunpack.c.l.b16 %v905
      %v1014 = vunpack.c.l.b16 %v906
      %v1015 = vunpack.c.l.b16 %v907
      %v1016 = vunpack.c.l.b16 %v908
      %v1017 = vunpack.c.l.b16 %v909
      %v1018 = vunpack.c.l.b16 %v910
      %v1019 = vunpack.c.l.b16 %v911
      %v1020 = vunpack.c.l.b16 %v912
      %v1021 = vunpack.c.l.b16 %v913
      %v1022 = vunpack.c.l.b16 %v914
      %v1023 = vunpack.c.l.b16 %v915
      %v1024 = vunpack.c.l.b16 %v916
      %v1025 = vunpack.c.l.b16 %v917
      %v1026 = vunpack.c.l.b16 %v918
      %v1027 = vunpack.c.l.b16 %v919
      %v1028 = vunpack.c.l.b16 %v920
      %v1029 = vpack.c.b16 %v1014, %v1013
      %v1030 = vpack.c.b16 %v1016, %v1015
      %v1031 = vpack.c.b16 %v1018, %v1017
      %v1032 = vpack.c.b16 %v1020, %v1019
      %v1033 = vpack.c.b16 %v1022, %v1021
      %v1034 = vpack.c.b16 %v1024, %v1023
      %v1035 = vpack.c.b16 %v1026, %v1025
      %v1036 = vpack.c.b16 %v1028, %v1027
      %1045 = vmatpush.bf16.msra.mxu0 %v1036
      %1046 = vmatpush.bf16.msra.mxu0 %v1035
      %1047 = vmatpush.bf16.msra.mxu0 %v1034
      %1048 = vmatpush.bf16.msra.mxu0 %v1033
      %1049 = vmatpush.bf16.msra.mxu0 %v1032
      %1050 = vmatpush.bf16.msra.mxu0 %v1031
      %1051 = vmatpush.bf16.msra.mxu0 %v1030
      %1052 = vmatpush.bf16.msra.mxu0 %v1029
      %1053 = vmatmul.bf16.gmra.mxu0 %v971
      %v1054 = vpop.f32.mrf.mxu0
      %v1055 = vadd.f32 0.0, %v1054
      %v1056 = vpop.f32.mrf.mxu0
      %v1057 = vadd.f32 0.0, %v1056
      %1058 = vmatmul.bf16.gmra.mxu0 %v972
      %v1059 = vpop.f32.mrf.mxu0
      %v1060 = vadd.f32 0.0, %v1059
      %v1061 = vpop.f32.mrf.mxu0
      %v1062 = vadd.f32 0.0, %v1061
      %1063 = vmatmul.bf16.gmra.mxu0 %v973
      %v1064 = vpop.f32.mrf.mxu0
      %v1065 = vadd.f32 0.0, %v1064
      %v1066 = vpop.f32.mrf.mxu0
      %v1067 = vadd.f32 0.0, %v1066
      %1068 = vmatmul.bf16.gmra.mxu0 %v974
      %v1069 = vpop.f32.mrf.mxu0
      %v1070 = vadd.f32 0.0, %v1069
      %v1071 = vpop.f32.mrf.mxu0
      %v1072 = vadd.f32 0.0, %v1071
      %1073 = vmatmul.bf16.gmra.mxu0 %v975
      %v1074 = vpop.f32.mrf.mxu0
      %v1075 = vadd.f32 0.0, %v1074
      %v1076 = vpop.f32.mrf.mxu0
      %v1077 = vadd.f32 0.0, %v1076
      %1078 = vmatmul.bf16.gmra.mxu0 %v976
      %v1079 = vpop.f32.mrf.mxu0
      %v1080 = vadd.f32 0.0, %v1079
      %v1081 = vpop.f32.mrf.mxu0
      %v1082 = vadd.f32 0.0, %v1081
      %1083 = vmatmul.bf16.gmra.mxu0 %v977
      %v1084 = vpop.f32.mrf.mxu0
      %v1085 = vadd.f32 0.0, %v1084
      %v1086 = vpop.f32.mrf.mxu0
      %v1087 = vadd.f32 0.0, %v1086
      %1088 = vmatmul.bf16.gmra.mxu0 %v978
      %v1089 = vpop.f32.mrf.mxu0
      %v1090 = vadd.f32 0.0, %v1089
      %v1091 = vpop.f32.mrf.mxu0
      %v1092 = vadd.f32 0.0, %v1091
      %1093 = vmatmul.bf16.gmra.mxu0 %v979
      %v1094 = vpop.f32.mrf.mxu0
      %v1095 = vadd.f32 0.0, %v1094
      %v1096 = vpop.f32.mrf.mxu0
      %v1097 = vadd.f32 0.0, %v1096
      %1098 = vmatmul.bf16.gmra.mxu0 %v980
      %v1099 = vpop.f32.mrf.mxu0
      %v1100 = vadd.f32 0.0, %v1099
      %v1101 = vpop.f32.mrf.mxu0
      %v1102 = vadd.f32 0.0, %v1101
      %1103 = vmatmul.bf16.gmra.mxu0 %v981
      %v1104 = vpop.f32.mrf.mxu0
      %v1105 = vadd.f32 0.0, %v1104
      %v1106 = vpop.f32.mrf.mxu0
      %v1107 = vadd.f32 0.0, %v1106
      %1108 = vmatmul.bf16.gmra.mxu0 %v982
      %v1109 = vpop.f32.mrf.mxu0
      %v1110 = vadd.f32 0.0, %v1109
      %v1111 = vpop.f32.mrf.mxu0
      %v1112 = vadd.f32 0.0, %v1111
      %1113 = vmatmul.bf16.gmra.mxu0 %v983
      %v1114 = vpop.f32.mrf.mxu0
      %v1115 = vadd.f32 0.0, %v1114
      %v1116 = vpop.f32.mrf.mxu0
      %1117 = vdwg.mxu0
      %v1118 = vadd.f32 %v879, %v1055
      %v1119 = vadd.f32 %v880, %v1057
      %v1120 = vadd.f32 %v881, %v1060
      %v1121 = vadd.f32 %v882, %v1062
      %v1122 = vadd.f32 %v883, %v1065
      %v1123 = vadd.f32 %v884, %v1067
      %v1124 = vadd.f32 %v885, %v1070
      %v1125 = vadd.f32 %v886, %v1072
      %v1126 = vadd.f32 %v887, %v1075
      %v1127 = vadd.f32 %v888, %v1077
      %v1128 = vadd.f32 %v889, %v1080
      %v1129 = vadd.f32 %v890, %v1082
      %v1130 = vadd.f32 %v891, %v1085
      %v1131 = vadd.f32 %v892, %v1087
      %v1132 = vadd.f32 %v893, %v1090
      %v1133 = vadd.f32 %v894, %v1092
      %v1134 = vadd.f32 %v895, %v1095
      %v1135 = vadd.f32 %v896, %v1097
      %v1136 = vadd.f32 %v897, %v1100
      %v1137 = vadd.f32 %v898, %v1102
      %v1138 = vadd.f32 %v899, %v1105
      %v1139 = vadd.f32 %v900, %v1107
      %v1140 = vadd.f32 %v901, %v1110
      %v1141 = vadd.f32 %v902, %v1112
      %v1142 = vadd.f32 %v903, %v1115
      %1143 = vst [vmem:[#allocation2] sm:$0xff] %v1118
      %1144 = vst [vmem:[#allocation2 + $0x8] sm:$0xff] %v1119
      %1145 = vst [vmem:[#allocation2 + $0x10] sm:$0xff] %v1120
      %1146 = vst [vmem:[#allocation2 + $0x18] sm:$0xff] %v1121
      %1147 = vst [vmem:[#allocation2 + $0x20] sm:$0xff] %v1122
      %1148 = vst [vmem:[#allocation2 + $0x28] sm:$0xff] %v1123
      %1149 = vst [vmem:[#allocation2 + $0x30] sm:$0xff] %v1124
      %1150 = vst [vmem:[#allocation2 + $0x38] sm:$0xff] %v1125
      %1151 = vst [vmem:[#allocation2 + $0x40] sm:$0xff] %v1126
      %1152 = vst [vmem:[#allocation2 + $0x48] sm:$0xff] %v1127
      %1153 = vst [vmem:[#allocation2 + $0x50] sm:$0xff] %v1128
      %1154 = vst [vmem:[#allocation2 + $0x58] sm:$0xff] %v1129
      %1155 = vst [vmem:[#allocation2 + $0x60] sm:$0xff] %v1130
      %1156 = vst [vmem:[#allocation2 + $0x68] sm:$0xff] %v1131
      %1157 = vst [vmem:[#allocation2 + $0x70] sm:$0xff] %v1132
      %1158 = vst [vmem:[#allocation2 + $0x78] sm:$0xff] %v1133
      %1159 = vst [vmem:[#allocation2 + $0x80] sm:$0xff] %v1134
      %1160 = vst [vmem:[#allocation2 + $0x88] sm:$0xff] %v1135
      %1161 = vst [vmem:[#allocation2 + $0x90] sm:$0xff] %v1136
      %1162 = vst [vmem:[#allocation2 + $0x98] sm:$0xff] %v1137
      %1163 = vst [vmem:[#allocation2 + $0xa0] sm:$0xff] %v1138
      %1164 = vst [vmem:[#allocation2 + $0xa8] sm:$0xff] %v1139
      %1165 = vst [vmem:[#allocation2 + $0xb0] sm:$0xff] %v1140
      %1166 = vst [vmem:[#allocation2 + $0xb8] sm:$0xff] %v1141
      %1167 = vst [vmem:[#allocation2 + $0xc0] sm:$0xff] %v1142
      %v1168 = vld [vmem:[#allocation2] sm:$0xff]
      %v1169 = vld [vmem:[#allocation2 + $0x8] sm:$0xff]
      %v1170 = vld [vmem:[#allocation2 + $0x10] sm:$0xff]
      %v1171 = vld [vmem:[#allocation2 + $0x18] sm:$0xff]
      %v1172 = vld [vmem:[#allocation2 + $0x20] sm:$0xff]
      %v1173 = vld [vmem:[#allocation2 + $0x28] sm:$0xff]
      %v1174 = vld [vmem:[#allocation2 + $0x30] sm:$0xff]
      %v1175 = vld [vmem:[#allocation2 + $0x38] sm:$0xff]
      %v1176 = vld [vmem:[#allocation2 + $0x40] sm:$0xff]
      %v1177 = vld [vmem:[#allocation2 + $0x48] sm:$0xff]
      %v1178 = vld [vmem:[#allocation2 + $0x50] sm:$0xff]
      %v1179 = vld [vmem:[#allocation2 + $0x58] sm:$0xff]
      %v1180 = vld [vmem:[#allocation2 + $0x60] sm:$0xff]
      %v1181 = vld [vmem:[#allocation2 + $0x68] sm:$0xff]
      %v1182 = vld [vmem:[#allocation2 + $0x70] sm:$0xff]
      %v1183 = vld [vmem:[#allocation2 + $0x78] sm:$0xff]
      %v1184 = vld [vmem:[#allocation2 + $0x80] sm:$0xff]
      %v1185 = vld [vmem:[#allocation2 + $0x88] sm:$0xff]
      %v1186 = vld [vmem:[#allocation2 + $0x90] sm:$0xff]
      %v1187 = vld [vmem:[#allocation2 + $0x98] sm:$0xff]
      %v1188 = vld [vmem:[#allocation2 + $0xa0] sm:$0xff]
      %v1189 = vld [vmem:[#allocation2 + $0xa8] sm:$0xff]
      %v1190 = vld [vmem:[#allocation2 + $0xb0] sm:$0xff]
      %v1191 = vld [vmem:[#allocation2 + $0xb8] sm:$0xff]
      %v1192 = vld [vmem:[#allocation2 + $0xc0] sm:$0xff]
      %s1193 = scalar_lea.vmem %s175, 192
      %v1194 = vld [vmem:[%s1193] sm:$0xf]
      %v1195 = vld [vmem:[%s1193 + $0x4] sm:$0xf]
      %v1196 = vld [vmem:[%s1193 + $0x8] sm:$0xf]
      %v1197 = vld [vmem:[%s1193 + $0xc] sm:$0xf]
      %v1198 = vld [vmem:[%s1193 + $0x10] sm:$0xf]
      %v1199 = vld [vmem:[%s1193 + $0x14] sm:$0xf]
      %v1200 = vld [vmem:[%s1193 + $0x18] sm:$0xf]
      %v1201 = vld [vmem:[%s1193 + $0x1c] sm:$0xf]
      %v1202 = vld [vmem:[%s1193 + $0x20] sm:$0xf]
      %v1203 = vld [vmem:[%s1193 + $0x24] sm:$0xf]
      %v1204 = vld [vmem:[%s1193 + $0x28] sm:$0xf]
      %v1205 = vld [vmem:[%s1193 + $0x2c] sm:$0xf]
      %v1206 = vld [vmem:[%s1193 + $0x30] sm:$0xf]
      %v1207 = vld [vmem:[%s1193 + $0x34] sm:$0xf]
      %v1208 = vld [vmem:[%s1193 + $0x38] sm:$0xf]
      %v1209 = vld [vmem:[%s1193 + $0x3c] sm:$0xf]
      %v1211 = vunpack.c.l.b16 %v878
      %v1212 = vpack.c.b16 %v1211, %v970
      %v1214 = vshrl.u32 %v971, 16
      %v1216 = vshll.u32 %v971, 16
      %v1218 = vrot.slane %v1216, 1
      %v1219 = vor.u32 %v1214, %v1218
      %v1221 = vshll.u32 %v972, 16
      %v1223 = vrot.slane %v1221, 1
      %v1224 = vsel %vm564, %v1219, %v1223
      %v1225 = vshrl.u32 %v972, 16
      %v1227 = vor.u32 %v1225, %v1223
      %v1229 = vshll.u32 %v973, 16
      %v1231 = vrot.slane %v1229, 1
      %v1232 = vsel %vm564, %v1227, %v1231
      %v1233 = vshrl.u32 %v973, 16
      %v1235 = vor.u32 %v1233, %v1231
      %v1237 = vshll.u32 %v974, 16
      %v1239 = vrot.slane %v1237, 1
      %v1240 = vsel %vm564, %v1235, %v1239
      %v1241 = vshrl.u32 %v974, 16
      %v1243 = vor.u32 %v1241, %v1239
      %v1245 = vshll.u32 %v975, 16
      %v1247 = vrot.slane %v1245, 1
      %v1248 = vsel %vm564, %v1243, %v1247
      %v1249 = vshrl.u32 %v975, 16
      %v1251 = vor.u32 %v1249, %v1247
      %v1253 = vshll.u32 %v976, 16
      %v1255 = vrot.slane %v1253, 1
      %v1256 = vsel %vm564, %v1251, %v1255
      %v1257 = vshrl.u32 %v976, 16
      %v1259 = vor.u32 %v1257, %v1255
      %v1261 = vshll.u32 %v977, 16
      %v1263 = vrot.slane %v1261, 1
      %v1264 = vsel %vm564, %v1259, %v1263
      %v1265 = vshrl.u32 %v977, 16
      %v1267 = vor.u32 %v1265, %v1263
      %v1269 = vshll.u32 %v978, 16
      %v1271 = vrot.slane %v1269, 1
      %v1272 = vsel %vm564, %v1267, %v1271
      %v1273 = vshrl.u32 %v978, 16
      %v1275 = vor.u32 %v1273, %v1271
      %v1277 = vshll.u32 %v979, 16
      %v1279 = vrot.slane %v1277, 1
      %v1280 = vsel %vm564, %v1275, %v1279
      %v1281 = vshrl.u32 %v979, 16
      %v1283 = vor.u32 %v1281, %v1279
      %v1285 = vshll.u32 %v980, 16
      %v1287 = vrot.slane %v1285, 1
      %v1288 = vsel %vm564, %v1283, %v1287
      %v1289 = vshrl.u32 %v980, 16
      %v1291 = vor.u32 %v1289, %v1287
      %v1293 = vshll.u32 %v981, 16
      %v1295 = vrot.slane %v1293, 1
      %v1296 = vsel %vm564, %v1291, %v1295
      %v1297 = vshrl.u32 %v981, 16
      %v1299 = vor.u32 %v1297, %v1295
      %v1301 = vshll.u32 %v982, 16
      %v1303 = vrot.slane %v1301, 1
      %v1304 = vsel %vm564, %v1299, %v1303
      %v1305 = vshrl.u32 %v982, 16
      %v1307 = vor.u32 %v1305, %v1303
      %v1309 = vshll.u32 %v1212, 16
      %v1311 = vrot.slane %v1309, 1
      %v1312 = vsel %vm564, %v1307, %v1311
      %v1313 = vshrl.u32 %v1212, 16
      %v1315 = vor.u32 %v1313, %v1311
      %v1345 = vunpack.c.l.b16 %v1194
      %v1346 = vunpack.c.l.b16 %v1195
      %v1347 = vunpack.c.l.b16 %v1196
      %v1348 = vunpack.c.l.b16 %v1197
      %v1349 = vunpack.c.l.b16 %v1198
      %v1350 = vunpack.c.l.b16 %v1199
      %v1351 = vunpack.c.l.b16 %v1200
      %v1352 = vunpack.c.l.b16 %v1201
      %v1353 = vunpack.c.l.b16 %v1202
      %v1354 = vunpack.c.l.b16 %v1203
      %v1355 = vunpack.c.l.b16 %v1204
      %v1356 = vunpack.c.l.b16 %v1205
      %v1357 = vunpack.c.l.b16 %v1206
      %v1358 = vunpack.c.l.b16 %v1207
      %v1359 = vunpack.c.l.b16 %v1208
      %v1360 = vunpack.c.l.b16 %v1209
      %v1361 = vpack.c.b16 %v1346, %v1345
      %v1362 = vpack.c.b16 %v1348, %v1347
      %v1363 = vpack.c.b16 %v1350, %v1349
      %v1364 = vpack.c.b16 %v1352, %v1351
      %v1365 = vpack.c.b16 %v1354, %v1353
      %v1366 = vpack.c.b16 %v1356, %v1355
      %v1367 = vpack.c.b16 %v1358, %v1357
      %v1368 = vpack.c.b16 %v1360, %v1359
      %1377 = vmatpush.bf16.msra.mxu0 %v1368
      %1378 = vmatpush.bf16.msra.mxu0 %v1367
      %1379 = vmatpush.bf16.msra.mxu0 %v1366
      %1380 = vmatpush.bf16.msra.mxu0 %v1365
      %1381 = vmatpush.bf16.msra.mxu0 %v1364
      %1382 = vmatpush.bf16.msra.mxu0 %v1363
      %1383 = vmatpush.bf16.msra.mxu0 %v1362
      %1384 = vmatpush.bf16.msra.mxu0 %v1361
      %1385 = vmatmul.bf16.gmra.mxu0 %v1224
      %v1386 = vpop.f32.mrf.mxu0
      %v1387 = vadd.f32 0.0, %v1386
      %v1388 = vpop.f32.mrf.mxu0
      %v1389 = vadd.f32 0.0, %v1388
      %1390 = vmatmul.bf16.gmra.mxu0 %v1232
      %v1391 = vpop.f32.mrf.mxu0
      %v1392 = vadd.f32 0.0, %v1391
      %v1393 = vpop.f32.mrf.mxu0
      %v1394 = vadd.f32 0.0, %v1393
      %1395 = vmatmul.bf16.gmra.mxu0 %v1240
      %v1396 = vpop.f32.mrf.mxu0
      %v1397 = vadd.f32 0.0, %v1396
      %v1398 = vpop.f32.mrf.mxu0
      %v1399 = vadd.f32 0.0, %v1398
      %1400 = vmatmul.bf16.gmra.mxu0 %v1248
      %v1401 = vpop.f32.mrf.mxu0
      %v1402 = vadd.f32 0.0, %v1401
      %v1403 = vpop.f32.mrf.mxu0
      %v1404 = vadd.f32 0.0, %v1403
      %1405 = vmatmul.bf16.gmra.mxu0 %v1256
      %v1406 = vpop.f32.mrf.mxu0
      %v1407 = vadd.f32 0.0, %v1406
      %v1408 = vpop.f32.mrf.mxu0
      %v1409 = vadd.f32 0.0, %v1408
      %1410 = vmatmul.bf16.gmra.mxu0 %v1264
      %v1411 = vpop.f32.mrf.mxu0
      %v1412 = vadd.f32 0.0, %v1411
      %v1413 = vpop.f32.mrf.mxu0
      %v1414 = vadd.f32 0.0, %v1413
      %1415 = vmatmul.bf16.gmra.mxu0 %v1272
      %v1416 = vpop.f32.mrf.mxu0
      %v1417 = vadd.f32 0.0, %v1416
      %v1418 = vpop.f32.mrf.mxu0
      %v1419 = vadd.f32 0.0, %v1418
      %1420 = vmatmul.bf16.gmra.mxu0 %v1280
      %v1421 = vpop.f32.mrf.mxu0
      %v1422 = vadd.f32 0.0, %v1421
      %v1423 = vpop.f32.mrf.mxu0
      %v1424 = vadd.f32 0.0, %v1423
      %1425 = vmatmul.bf16.gmra.mxu0 %v1288
      %v1426 = vpop.f32.mrf.mxu0
      %v1427 = vadd.f32 0.0, %v1426
      %v1428 = vpop.f32.mrf.mxu0
      %v1429 = vadd.f32 0.0, %v1428
      %1430 = vmatmul.bf16.gmra.mxu0 %v1296
      %v1431 = vpop.f32.mrf.mxu0
      %v1432 = vadd.f32 0.0, %v1431
      %v1433 = vpop.f32.mrf.mxu0
      %v1434 = vadd.f32 0.0, %v1433
      %1435 = vmatmul.bf16.gmra.mxu0 %v1304
      %v1436 = vpop.f32.mrf.mxu0
      %v1437 = vadd.f32 0.0, %v1436
      %v1438 = vpop.f32.mrf.mxu0
      %v1439 = vadd.f32 0.0, %v1438
      %1440 = vmatmul.bf16.gmra.mxu0 %v1312
      %v1441 = vpop.f32.mrf.mxu0
      %v1442 = vadd.f32 0.0, %v1441
      %v1443 = vpop.f32.mrf.mxu0
      %v1444 = vadd.f32 0.0, %v1443
      %1445 = vmatmul.bf16.gmra.mxu0 %v1315
      %v1446 = vpop.f32.mrf.mxu0
      %v1447 = vadd.f32 0.0, %v1446
      %v1448 = vpop.f32.mrf.mxu0
      %1449 = vdwg.mxu0
      %v1450 = vadd.f32 %v1168, %v1387
      %v1451 = vadd.f32 %v1169, %v1389
      %v1452 = vadd.f32 %v1170, %v1392
      %v1453 = vadd.f32 %v1171, %v1394
      %v1454 = vadd.f32 %v1172, %v1397
      %v1455 = vadd.f32 %v1173, %v1399
      %v1456 = vadd.f32 %v1174, %v1402
      %v1457 = vadd.f32 %v1175, %v1404
      %v1458 = vadd.f32 %v1176, %v1407
      %v1459 = vadd.f32 %v1177, %v1409
      %v1460 = vadd.f32 %v1178, %v1412
      %v1461 = vadd.f32 %v1179, %v1414
      %v1462 = vadd.f32 %v1180, %v1417
      %v1463 = vadd.f32 %v1181, %v1419
      %v1464 = vadd.f32 %v1182, %v1422
      %v1465 = vadd.f32 %v1183, %v1424
      %v1466 = vadd.f32 %v1184, %v1427
      %v1467 = vadd.f32 %v1185, %v1429
      %v1468 = vadd.f32 %v1186, %v1432
      %v1469 = vadd.f32 %v1187, %v1434
      %v1470 = vadd.f32 %v1188, %v1437
      %v1471 = vadd.f32 %v1189, %v1439
      %v1472 = vadd.f32 %v1190, %v1442
      %v1473 = vadd.f32 %v1191, %v1444
      %v1474 = vadd.f32 %v1192, %v1447
      %1475 = vst [vmem:[#allocation2] sm:$0xff] %v1450
      %1476 = vst [vmem:[#allocation2 + $0x8] sm:$0xff] %v1451
      %1477 = vst [vmem:[#allocation2 + $0x10] sm:$0xff] %v1452
      %1478 = vst [vmem:[#allocation2 + $0x18] sm:$0xff] %v1453
      %1479 = vst [vmem:[#allocation2 + $0x20] sm:$0xff] %v1454
      %1480 = vst [vmem:[#allocation2 + $0x28] sm:$0xff] %v1455
      %1481 = vst [vmem:[#allocation2 + $0x30] sm:$0xff] %v1456
      %1482 = vst [vmem:[#allocation2 + $0x38] sm:$0xff] %v1457
      %1483 = vst [vmem:[#allocation2 + $0x40] sm:$0xff] %v1458
      %1484 = vst [vmem:[#allocation2 + $0x48] sm:$0xff] %v1459
      %1485 = vst [vmem:[#allocation2 + $0x50] sm:$0xff] %v1460
      %1486 = vst [vmem:[#allocation2 + $0x58] sm:$0xff] %v1461
      %1487 = vst [vmem:[#allocation2 + $0x60] sm:$0xff] %v1462
      %1488 = vst [vmem:[#allocation2 + $0x68] sm:$0xff] %v1463
      %1489 = vst [vmem:[#allocation2 + $0x70] sm:$0xff] %v1464
      %1490 = vst [vmem:[#allocation2 + $0x78] sm:$0xff] %v1465
      %1491 = vst [vmem:[#allocation2 + $0x80] sm:$0xff] %v1466
      %1492 = vst [vmem:[#allocation2 + $0x88] sm:$0xff] %v1467
      %1493 = vst [vmem:[#allocation2 + $0x90] sm:$0xff] %v1468
      %1494 = vst [vmem:[#allocation2 + $0x98] sm:$0xff] %v1469
      %1495 = vst [vmem:[#allocation2 + $0xa0] sm:$0xff] %v1470
      %1496 = vst [vmem:[#allocation2 + $0xa8] sm:$0xff] %v1471
      %1497 = vst [vmem:[#allocation2 + $0xb0] sm:$0xff] %v1472
      %1498 = vst [vmem:[#allocation2 + $0xb8] sm:$0xff] %v1473
      %1499 = vst [vmem:[#allocation2 + $0xc0] sm:$0xff] %v1474
      %p1500 = scmp.eq.s32.totalorder %s14, 3
      // Predicated region
      $region37: #{nlayer_discriminator_forward.5} parent=31 // pred_check
        %p1501 = pneg %p1500
      $region38: #{nlayer_discriminator_forward.5} parent=31 // pred_check_branch
        %1503 = sbr.rel (%p1501) target = $region40
      $region39: #{nlayer_discriminator_forward.5} parent=31 // pred_region
        %v1504 = vld [vmem:[#allocation2] sm:$0xff]
        %v1505 = vld [vmem:[#allocation2 + $0x8] sm:$0xff]
        %v1506 = vld [vmem:[#allocation2 + $0x10] sm:$0xff]
        %v1507 = vld [vmem:[#allocation2 + $0x18] sm:$0xff]
        %v1508 = vld [vmem:[#allocation2 + $0x20] sm:$0xff]
        %v1509 = vld [vmem:[#allocation2 + $0x28] sm:$0xff]
        %v1510 = vld [vmem:[#allocation2 + $0x30] sm:$0xff]
        %v1511 = vld [vmem:[#allocation2 + $0x38] sm:$0xff]
        %v1512 = vld [vmem:[#allocation2 + $0x40] sm:$0xff]
        %v1513 = vld [vmem:[#allocation2 + $0x48] sm:$0xff]
        %v1514 = vld [vmem:[#allocation2 + $0x50] sm:$0xff]
        %v1515 = vld [vmem:[#allocation2 + $0x58] sm:$0xff]
        %v1516 = vld [vmem:[#allocation2 + $0x60] sm:$0xff]
        %v1517 = vld [vmem:[#allocation2 + $0x68] sm:$0xff]
        %v1518 = vld [vmem:[#allocation2 + $0x70] sm:$0xff]
        %v1519 = vld [vmem:[#allocation2 + $0x78] sm:$0xff]
        %v1520 = vld [vmem:[#allocation2 + $0x80] sm:$0xff]
        %v1521 = vld [vmem:[#allocation2 + $0x88] sm:$0xff]
        %v1522 = vld [vmem:[#allocation2 + $0x90] sm:$0xff]
        %v1523 = vld [vmem:[#allocation2 + $0x98] sm:$0xff]
        %v1524 = vld [vmem:[#allocation2 + $0xa0] sm:$0xff]
        %v1525 = vld [vmem:[#allocation2 + $0xa8] sm:$0xff]
        %v1526 = vld [vmem:[#allocation2 + $0xb0] sm:$0xff]
        %v1527 = vld [vmem:[#allocation2 + $0xb8] sm:$0xff]
        %v1528 = vld [vmem:[#allocation2 + $0xc0] sm:$0xff]
        %v1529 = vld [vmem:[%s2] sm:$0x1]
        %v1531 = vperm.slane %v1529, 0
        %v1533 = vadd.f32 %v1504, %v1531
        %v1534 = vadd.f32 %v1505, %v1531
        %v1535 = vadd.f32 %v1506, %v1531
        %v1536 = vadd.f32 %v1507, %v1531
        %v1537 = vadd.f32 %v1508, %v1531
        %v1538 = vadd.f32 %v1509, %v1531
        %v1539 = vadd.f32 %v1510, %v1531
        %v1540 = vadd.f32 %v1511, %v1531
        %v1541 = vadd.f32 %v1512, %v1531
        %v1542 = vadd.f32 %v1513, %v1531
        %v1543 = vadd.f32 %v1514, %v1531
        %v1544 = vadd.f32 %v1515, %v1531
        %v1545 = vadd.f32 %v1516, %v1531
        %v1546 = vadd.f32 %v1517, %v1531
        %v1547 = vadd.f32 %v1518, %v1531
        %v1548 = vadd.f32 %v1519, %v1531
        %v1549 = vadd.f32 %v1520, %v1531
        %v1550 = vadd.f32 %v1521, %v1531
        %v1551 = vadd.f32 %v1522, %v1531
        %v1552 = vadd.f32 %v1523, %v1531
        %v1553 = vadd.f32 %v1524, %v1531
        %v1554 = vadd.f32 %v1525, %v1531
        %v1555 = vadd.f32 %v1526, %v1531
        %v1556 = vadd.f32 %v1527, %v1531
        %v1557 = vadd.f32 %v1528, %v1531
        %vm1558 = vcmp.gt.f32.partialorder %v1533, 0.0
        %vm1559 = vcmp.gt.f32.partialorder %v1534, 0.0
        %vm1560 = vcmp.gt.f32.partialorder %v1535, 0.0
        %vm1561 = vcmp.gt.f32.partialorder %v1536, 0.0
        %vm1562 = vcmp.gt.f32.partialorder %v1537, 0.0
        %vm1563 = vcmp.gt.f32.partialorder %v1538, 0.0
        %vm1564 = vcmp.gt.f32.partialorder %v1539, 0.0
        %vm1565 = vcmp.gt.f32.partialorder %v1540, 0.0
        %vm1566 = vcmp.gt.f32.partialorder %v1541, 0.0
        %vm1567 = vcmp.gt.f32.partialorder %v1542, 0.0
        %vm1568 = vcmp.gt.f32.partialorder %v1543, 0.0
        %vm1569 = vcmp.gt.f32.partialorder %v1544, 0.0
        %vm1570 = vcmp.gt.f32.partialorder %v1545, 0.0
        %vm1571 = vcmp.gt.f32.partialorder %v1546, 0.0
        %vm1572 = vcmp.gt.f32.partialorder %v1547, 0.0
        %vm1573 = vcmp.gt.f32.partialorder %v1548, 0.0
        %vm1574 = vcmp.gt.f32.partialorder %v1549, 0.0
        %vm1575 = vcmp.gt.f32.partialorder %v1550, 0.0
        %vm1576 = vcmp.gt.f32.partialorder %v1551, 0.0
        %vm1577 = vcmp.gt.f32.partialorder %v1552, 0.0
        %vm1578 = vcmp.gt.f32.partialorder %v1553, 0.0
        %vm1579 = vcmp.gt.f32.partialorder %v1554, 0.0
        %vm1580 = vcmp.gt.f32.partialorder %v1555, 0.0
        %vm1581 = vcmp.gt.f32.partialorder %v1556, 0.0
        %vm1582 = vcmp.gt.f32.partialorder %v1557, 0.0
        %v1583 = vmul.f32 %v1533, 0.2
        %v1584 = vmul.f32 %v1534, 0.2
        %v1585 = vmul.f32 %v1535, 0.2
        %v1586 = vmul.f32 %v1536, 0.2
        %v1587 = vmul.f32 %v1537, 0.2
        %v1588 = vmul.f32 %v1538, 0.2
        %v1589 = vmul.f32 %v1539, 0.2
        %v1590 = vmul.f32 %v1540, 0.2
        %v1591 = vmul.f32 %v1541, 0.2
        %v1592 = vmul.f32 %v1542, 0.2
        %v1593 = vmul.f32 %v1543, 0.2
        %v1594 = vmul.f32 %v1544, 0.2
        %v1595 = vmul.f32 %v1545, 0.2
        %v1596 = vmul.f32 %v1546, 0.2
        %v1597 = vmul.f32 %v1547, 0.2
        %v1598 = vmul.f32 %v1548, 0.2
        %v1599 = vmul.f32 %v1549, 0.2
        %v1600 = vmul.f32 %v1550, 0.2
        %v1601 = vmul.f32 %v1551, 0.2
        %v1602 = vmul.f32 %v1552, 0.2
        %v1603 = vmul.f32 %v1553, 0.2
        %v1604 = vmul.f32 %v1554, 0.2
        %v1605 = vmul.f32 %v1555, 0.2
        %v1606 = vmul.f32 %v1556, 0.2
        %v1607 = vmul.f32 %v1557, 0.2
        %v1608 = vsel %vm1558, %v1533, %v1583
        %v1609 = vsel %vm1559, %v1534, %v1584
        %v1610 = vsel %vm1560, %v1535, %v1585
        %v1611 = vsel %vm1561, %v1536, %v1586
        %v1612 = vsel %vm1562, %v1537, %v1587
        %v1613 = vsel %vm1563, %v1538, %v1588
        %v1614 = vsel %vm1564, %v1539, %v1589
        %v1615 = vsel %vm1565, %v1540, %v1590
        %v1616 = vsel %vm1566, %v1541, %v1591
        %v1617 = vsel %vm1567, %v1542, %v1592
        %v1618 = vsel %vm1568, %v1543, %v1593
        %v1619 = vsel %vm1569, %v1544, %v1594
        %v1620 = vsel %vm1570, %v1545, %v1595
        %v1621 = vsel %vm1571, %v1546, %v1596
        %v1622 = vsel %vm1572, %v1547, %v1597
        %v1623 = vsel %vm1573, %v1548, %v1598
        %v1624 = vsel %vm1574, %v1549, %v1599
        %v1625 = vsel %vm1575, %v1550, %v1600
        %v1626 = vsel %vm1576, %v1551, %v1601
        %v1627 = vsel %vm1577, %v1552, %v1602
        %v1628 = vsel %vm1578, %v1553, %v1603
        %v1629 = vsel %vm1579, %v1554, %v1604
        %v1630 = vsel %vm1580, %v1555, %v1605
        %v1631 = vsel %vm1581, %v1556, %v1606
        %v1632 = vsel %vm1582, %v1557, %v1607
        %v1633 = vpack.c.bf16 %v1608, %v1608
        %v1634 = vpack.c.bf16 %v1609, %v1609
        %v1635 = vpack.c.bf16 %v1610, %v1610
        %v1636 = vpack.c.bf16 %v1611, %v1611
        %v1637 = vpack.c.bf16 %v1612, %v1612
        %v1638 = vpack.c.bf16 %v1613, %v1613
        %v1639 = vpack.c.bf16 %v1614, %v1614
        %v1640 = vpack.c.bf16 %v1615, %v1615
        %v1641 = vpack.c.bf16 %v1616, %v1616
        %v1642 = vpack.c.bf16 %v1617, %v1617
        %v1643 = vpack.c.bf16 %v1618, %v1618
        %v1644 = vpack.c.bf16 %v1619, %v1619
        %v1645 = vpack.c.bf16 %v1620, %v1620
        %v1646 = vpack.c.bf16 %v1621, %v1621
        %v1647 = vpack.c.bf16 %v1622, %v1622
        %v1648 = vpack.c.bf16 %v1623, %v1623
        %v1649 = vpack.c.bf16 %v1624, %v1624
        %v1650 = vpack.c.bf16 %v1625, %v1625
        %v1651 = vpack.c.bf16 %v1626, %v1626
        %v1652 = vpack.c.bf16 %v1627, %v1627
        %v1653 = vpack.c.bf16 %v1628, %v1628
        %v1654 = vpack.c.bf16 %v1629, %v1629
        %v1655 = vpack.c.bf16 %v1630, %v1630
        %v1656 = vpack.c.bf16 %v1631, %v1631
        %v1657 = vpack.c.bf16 %v1632, %v1632
        %1658 = vst [vmem:[%s3] sm:$0xf] %v1633
        %1659 = vst [vmem:[%s3 + $0x4] sm:$0xf] %v1634
        %1660 = vst [vmem:[%s3 + $0x8] sm:$0xf] %v1635
        %1661 = vst [vmem:[%s3 + $0xc] sm:$0xf] %v1636
        %1662 = vst [vmem:[%s3 + $0x10] sm:$0xf] %v1637
        %1663 = vst [vmem:[%s3 + $0x14] sm:$0xf] %v1638
        %1664 = vst [vmem:[%s3 + $0x18] sm:$0xf] %v1639
        %1665 = vst [vmem:[%s3 + $0x1c] sm:$0xf] %v1640
        %1666 = vst [vmem:[%s3 + $0x20] sm:$0xf] %v1641
        %1667 = vst [vmem:[%s3 + $0x24] sm:$0xf] %v1642
        %1668 = vst [vmem:[%s3 + $0x28] sm:$0xf] %v1643
        %1669 = vst [vmem:[%s3 + $0x2c] sm:$0xf] %v1644
        %1670 = vst [vmem:[%s3 + $0x30] sm:$0xf] %v1645
        %1671 = vst [vmem:[%s3 + $0x34] sm:$0xf] %v1646
        %1672 = vst [vmem:[%s3 + $0x38] sm:$0xf] %v1647
        %1673 = vst [vmem:[%s3 + $0x3c] sm:$0xf] %v1648
        %1674 = vst [vmem:[%s3 + $0x40] sm:$0xf] %v1649
        %1675 = vst [vmem:[%s3 + $0x44] sm:$0xf] %v1650
        %1676 = vst [vmem:[%s3 + $0x48] sm:$0xf] %v1651
        %1677 = vst [vmem:[%s3 + $0x4c] sm:$0xf] %v1652
        %1678 = vst [vmem:[%s3 + $0x50] sm:$0xf] %v1653
        %1679 = vst [vmem:[%s3 + $0x54] sm:$0xf] %v1654
        %1680 = vst [vmem:[%s3 + $0x58] sm:$0xf] %v1655
        %1681 = vst [vmem:[%s3 + $0x5c] sm:$0xf] %v1656
        %1682 = vst [vmem:[%s3 + $0x60] sm:$0xf] %v1657
      $region40: #{nlayer_discriminator_forward.5} parent=31 // pred_fallthru
        _
      // Predicated region
      $region41: #{nlayer_discriminator_forward.5} parent=31 // pred_check
        %p1683 = pneg %p100
      $region42: #{nlayer_discriminator_forward.5} parent=31 // pred_check_branch
        %1685 = sbr.rel (%p1683) target = $region44
      $region43: #{nlayer_discriminator_forward.5} parent=31 // pred_region
        _
      $region44: #{nlayer_discriminator_forward.5} parent=31 // pred_fallthru
        _
      // Predicated region
      $region45: #{nlayer_discriminator_forward.5} parent=31 // pred_check
        %p1686 = pneg %p100
      $region46: #{nlayer_discriminator_forward.5} parent=31 // pred_check_branch
        %1688 = sbr.rel (%p1686) target = $region48
      $region47: #{nlayer_discriminator_forward.5} parent=31 // pred_region
        _
      $region48: #{nlayer_discriminator_forward.5} parent=31 // pred_fallthru
        _
    $region32: #{nlayer_discriminator_forward.5} parent=5 // pred_fallthru
      _
    %p1689 = scmp.le.s32.totalorder 2, %s9
    // Predicated region
    $region49: #{nlayer_discriminator_forward.5} parent=5 // pred_check
      %p1690 = pneg %p1689
    $region50: #{nlayer_discriminator_forward.5} parent=5 // pred_check_branch
      %1692 = sbr.rel (%p1690) target = $region52
    $region51: #{nlayer_discriminator_forward.5} parent=5 // pred_region
      %s1693 = ssub.s32 %s9, 2
    $region52: #{nlayer_discriminator_forward.5} parent=5 // pred_fallthru
      _
  $region6: #{nlayer_discriminator_forward.5} parent=0 // loop_footer
    %s13 = sadd.s32 1, %s9
  $region7: #{nlayer_discriminator_forward.5} parent=0 // loop_footer_branch
    %8 = sbr.rel target = $region3
  $region8: #{nlayer_discriminator_forward.5} parent=0 // loop_exit
    _

// kernel: nlayer_discriminator_forward.6
$region0: #{nlayer_discriminator_forward.6}
  #allocation0 [shape = 'u32[]', space=smem, size = 0x4, offset = 0x4, fixed_abs, tag = 'smem constant byte address 0x4 - core index']
  #allocation1 [shape = 'u32[72,128]{1,0:T(1,128)}', space=vmem, size = 0x9000, scoped, tag = 'internal scratch']
  #allocation2 [shape = 'f32[104,128]{1,0:T(8,128)}', space=vmem, size = 0xd000, scoped, tag = 'scratch operand']
  %s0 = inlined_call_operand.vmem [shape: bf16[4,2,105,128], index: 0, kind: input, shape index: {}]
  %s1 = inlined_call_operand.vmem [shape: bf16[4,4,128,128], index: 1, kind: input, shape index: {}]
  %s2 = inlined_call_operand.vmem [shape: f32[1,128], index: 2, kind: input, shape index: {}]
  %s3 = inlined_call_operand.vmem [shape: f32[1,128], index: 3, kind: input, shape index: {}]
  %s4 = inlined_call_operand.vmem [shape: f32[104,1], index: 4, kind: input, shape index: {}]
  %s5 = inlined_call_operand.vmem [shape: bf16[104,128], index: 5, kind: output, shape index: {}]
  %s6 = sld [smem:[#allocation0]]
  $region61: #{nlayer_discriminator_forward.6} parent=0
    _
  %s8 = ssub.s32 1, %s6
  %s9 = scalar_select 0, %s8, %s6
  loop: start=0, step=1, limit=6
  $region2: #{nlayer_discriminator_forward.6} parent=0 // loop_pre_header
    _
  $region3: #{nlayer_discriminator_forward.6} parent=0 // loop_header
    %s11 = sphi 0, %s15
    %p12 = scmp.ge.s32.totalorder %s11, 6
    %s21 = sphi 0, %s23
    %s24 = sphi 0, %s21
    %s25 = sphi 0, %s24
    %s41 = sphi 0, %s25
    %s47 = sphi 0, %s49
    %s50 = sphi 0, %s47
    %s51 = sphi 0, %s50
    %s67 = sphi 0, %s51
    %s71 = sphi 0, %s71
    %s73 = sphi 0, %s71
    %s74 = sphi 0, %s73
    %s88 = sphi 0, %s74
    %s92 = sphi 0, %s92
    %s94 = sphi 0, %s92
    %s95 = sphi 0, %s94
    %s109 = sphi 0, %s95
    %s113 = sphi 0, %s113
    %s115 = sphi 0, %s113
    %s116 = sphi 0, %s115
    %s130 = sphi 0, %s116
    %s134 = sphi 0, %s134
    %s136 = sphi 0, %s134
    %s137 = sphi 0, %s136
    %s151 = sphi 0, %s137
  $region4: #{nlayer_discriminator_forward.6} parent=0 // loop_header_branch
    %14 = sbr.rel (%p12) target = $region8
  $region5: #{nlayer_discriminator_forward.6} parent=0 // loop_body
    %s16 = ssub.s32 %s11, 1
    %s17 = ssub.s32 %s11, 2
    %s18 = sadd.s32 %s11, 1
    %s19 = ssub.s32 %s11, %s18
    %p20 = scmp.eq.s32.totalorder %s19, 0
    %s22 = sadd.s32 %s21, 1
    %s23 = scalar_select %p20, %s21, %s22
    %p26 = pneg %p20
    %p27 = scmp.eq.s32.totalorder %s11, 3
    %p28 = por %p26, %p27
    %p29 = scmp.ne.s32.totalorder %s21, %s24
    %p30 = scmp.eq.s32.totalorder %s11, 0
    %p31 = por %p29, %p30
    %p32 = scmp.ne.s32.totalorder %s21, %s24
    %p33 = scmp.eq.s32.totalorder %s16, 3
    %p34 = por %p32, %p33
    %p35 = scmp.ne.s32.totalorder %s24, %s25
    %p36 = scmp.eq.s32.totalorder %s16, 0
    %p37 = por %p35, %p36
    %p38 = scmp.ne.s32.totalorder %s24, %s25
    %p39 = scmp.eq.s32.totalorder %s17, 3
    %p40 = por %p38, %p39
    %p42 = scmp.ne.s32.totalorder %s25, %s41
    %p43 = scmp.eq.s32.totalorder %s17, 0
    %p44 = por %p42, %p43
    %s45 = ssub.s32 %s11, %s18
    %p46 = scmp.eq.s32.totalorder %s45, 0
    %s48 = sadd.s32 %s47, 1
    %s49 = scalar_select %p46, %s47, %s48
    %p52 = pneg %p46
    %p53 = scmp.eq.s32.totalorder %s11, 3
    %p54 = por %p52, %p53
    %p55 = scmp.ne.s32.totalorder %s47, %s50
    %p56 = scmp.eq.s32.totalorder %s11, 0
    %p57 = por %p55, %p56
    %p58 = scmp.ne.s32.totalorder %s47, %s50
    %p59 = scmp.eq.s32.totalorder %s16, 3
    %p60 = por %p58, %p59
    %p61 = scmp.ne.s32.totalorder %s50, %s51
    %p62 = scmp.eq.s32.totalorder %s16, 0
    %p63 = por %p61, %p62
    %p64 = scmp.ne.s32.totalorder %s50, %s51
    %p65 = scmp.eq.s32.totalorder %s17, 3
    %p66 = por %p64, %p65
    %p68 = scmp.ne.s32.totalorder %s51, %s67
    %p69 = scmp.eq.s32.totalorder %s17, 0
    %p70 = por %p68, %p69
    %s72 = sadd.s32 %s71, 1
    %p75 = scmp.eq.s32.totalorder %s11, 3
    %p76 = scmp.ne.s32.totalorder %s71, %s73
    %p77 = scmp.eq.s32.totalorder %s11, 0
    %p78 = por %p76, %p77
    %p79 = scmp.ne.s32.totalorder %s71, %s73
    %p80 = scmp.eq.s32.totalorder %s16, 3
    %p81 = por %p79, %p80
    %p82 = scmp.ne.s32.totalorder %s73, %s74
    %p83 = scmp.eq.s32.totalorder %s16, 0
    %p84 = por %p82, %p83
    %p85 = scmp.ne.s32.totalorder %s73, %s74
    %p86 = scmp.eq.s32.totalorder %s17, 3
    %p87 = por %p85, %p86
    %p89 = scmp.ne.s32.totalorder %s74, %s88
    %p90 = scmp.eq.s32.totalorder %s17, 0
    %p91 = por %p89, %p90
    %s93 = sadd.s32 %s92, 1
    %p96 = scmp.eq.s32.totalorder %s11, 3
    %p97 = scmp.ne.s32.totalorder %s92, %s94
    %p98 = scmp.eq.s32.totalorder %s11, 0
    %p99 = por %p97, %p98
    %p100 = scmp.ne.s32.totalorder %s92, %s94
    %p101 = scmp.eq.s32.totalorder %s16, 3
    %p102 = por %p100, %p101
    %p103 = scmp.ne.s32.totalorder %s94, %s95
    %p104 = scmp.eq.s32.totalorder %s16, 0
    %p105 = por %p103, %p104
    %p106 = scmp.ne.s32.totalorder %s94, %s95
    %p107 = scmp.eq.s32.totalorder %s17, 3
    %p108 = por %p106, %p107
    %p110 = scmp.ne.s32.totalorder %s95, %s109
    %p111 = scmp.eq.s32.totalorder %s17, 0
    %p112 = por %p110, %p111
    %s114 = sadd.s32 %s113, 1
    %p117 = scmp.eq.s32.totalorder %s11, 3
    %p118 = scmp.ne.s32.totalorder %s113, %s115
    %p119 = scmp.eq.s32.totalorder %s11, 0
    %p120 = por %p118, %p119
    %p121 = scmp.ne.s32.totalorder %s113, %s115
    %p122 = scmp.eq.s32.totalorder %s16, 3
    %p123 = por %p121, %p122
    %p124 = scmp.ne.s32.totalorder %s115, %s116
    %p125 = scmp.eq.s32.totalorder %s16, 0
    %p126 = por %p124, %p125
    %p127 = scmp.ne.s32.totalorder %s115, %s116
    %p128 = scmp.eq.s32.totalorder %s17, 3
    %p129 = por %p127, %p128
    %p131 = scmp.ne.s32.totalorder %s116, %s130
    %p132 = scmp.eq.s32.totalorder %s17, 0
    %p133 = por %p131, %p132
    %s135 = sadd.s32 %s134, 1
    %p138 = scmp.eq.s32.totalorder %s11, 3
    %p139 = scmp.ne.s32.totalorder %s134, %s136
    %p140 = scmp.eq.s32.totalorder %s11, 0
    %p141 = por %p139, %p140
    %p142 = scmp.ne.s32.totalorder %s134, %s136
    %p143 = scmp.eq.s32.totalorder %s16, 3
    %p144 = por %p142, %p143
    %p145 = scmp.ne.s32.totalorder %s136, %s137
    %p146 = scmp.eq.s32.totalorder %s16, 0
    %p147 = por %p145, %p146
    %p148 = scmp.ne.s32.totalorder %s136, %s137
    %p149 = scmp.eq.s32.totalorder %s17, 3
    %p150 = por %p148, %p149
    %p152 = scmp.ne.s32.totalorder %s137, %s151
    %p153 = scmp.eq.s32.totalorder %s17, 0
    %p154 = por %p152, %p153
    %p155 = scmp.le.s32.totalorder 1, %s11
    %p156 = scmp.lt.s32.totalorder %s11, 5
    %p157 = pnand %p155, %p156
    %p158 = pneg %p157
    // Predicated region
    $region9: #{nlayer_discriminator_forward.6} parent=5 // pred_check
      _
    $region10: #{nlayer_discriminator_forward.6} parent=5 // pred_check_branch
      %160 = sbr.rel (%p157) target = $region12
    $region11: #{nlayer_discriminator_forward.6} parent=5 // pred_region
      %s161 = ssub.s32 %s11, 1
      // Predicated region
      $region13: #{nlayer_discriminator_forward.6} parent=11 // pred_check
        %p162 = pneg %p84
      $region14: #{nlayer_discriminator_forward.6} parent=11 // pred_check_branch
        %164 = sbr.rel (%p162) target = $region16
      $region15: #{nlayer_discriminator_forward.6} parent=11 // pred_region
        _
      $region16: #{nlayer_discriminator_forward.6} parent=11 // pred_fallthru
        _
      // Predicated region
      $region17: #{nlayer_discriminator_forward.6} parent=11 // pred_check
        %p165 = pneg %p105
      $region18: #{nlayer_discriminator_forward.6} parent=11 // pred_check_branch
        %167 = sbr.rel (%p165) target = $region20
      $region19: #{nlayer_discriminator_forward.6} parent=11 // pred_region
        _
      $region20: #{nlayer_discriminator_forward.6} parent=11 // pred_fallthru
        _
      // Predicated region
      $region21: #{nlayer_discriminator_forward.6} parent=11 // pred_check
        %p168 = pneg %p126
      $region22: #{nlayer_discriminator_forward.6} parent=11 // pred_check_branch
        %170 = sbr.rel (%p168) target = $region24
      $region23: #{nlayer_discriminator_forward.6} parent=11 // pred_region
        _
      $region24: #{nlayer_discriminator_forward.6} parent=11 // pred_fallthru
        _
    $region12: #{nlayer_discriminator_forward.6} parent=5 // pred_fallthru
      _
    %p171 = scmp.lt.s32.totalorder %s11, 4
    // Predicated region
    $region25: #{nlayer_discriminator_forward.6} parent=5 // pred_check
      %p172 = pneg %p171
    $region26: #{nlayer_discriminator_forward.6} parent=5 // pred_check_branch
      %174 = sbr.rel (%p172) target = $region28
    $region27: #{nlayer_discriminator_forward.6} parent=5 // pred_region
      // Predicated region
      $region29: #{nlayer_discriminator_forward.6} parent=27 // pred_check
        %p175 = pneg %p31
      $region30: #{nlayer_discriminator_forward.6} parent=27 // pred_check_branch
        %177 = sbr.rel (%p175) target = $region32
      $region31: #{nlayer_discriminator_forward.6} parent=27 // pred_region
        %p178 = scmp.lt.s32.totalorder %s11, 3
        %s179 = scalar_select %p178, %s11, 3
        %s180 = smul.addr %s179, 28
        %s181 = smul.addr %s180, 4
        %s182 = scalar_lea.vmem %s0, %s181
      $region32: #{nlayer_discriminator_forward.6} parent=27 // pred_fallthru
        _
      // Predicated region
      $region33: #{nlayer_discriminator_forward.6} parent=27 // pred_check
        %p183 = pneg %p57
      $region34: #{nlayer_discriminator_forward.6} parent=27 // pred_check_branch
        %185 = sbr.rel (%p183) target = $region36
      $region35: #{nlayer_discriminator_forward.6} parent=27 // pred_region
        %p186 = scmp.lt.s32.totalorder %s11, 3
        %s187 = scalar_select %p186, %s11, 3
        %s188 = smul.addr %s187, 64
        %s189 = smul.addr %s188, 4
        %s190 = scalar_lea.vmem %s1, %s189
      $region36: #{nlayer_discriminator_forward.6} parent=27 // pred_fallthru
        _
    $region28: #{nlayer_discriminator_forward.6} parent=5 // pred_fallthru
      _
    %p191 = scmp.le.s32.totalorder 1, %s11
    %p192 = scmp.lt.s32.totalorder %s11, 5
    %p193 = pnand %p191, %p192
    %p194 = pneg %p193
    // Predicated region
    $region37: #{nlayer_discriminator_forward.6} parent=5 // pred_check
      _
    $region38: #{nlayer_discriminator_forward.6} parent=5 // pred_check_branch
      %196 = sbr.rel (%p193) target = $region40
    $region39: #{nlayer_discriminator_forward.6} parent=5 // pred_region
      %s197 = ssub.s32 %s11, 1
      %p198 = scmp.lt.s32.totalorder %s16, 3
      %s199 = scalar_select %p198, %s16, 3
      %s200 = smul.addr %s199, 28
      %s201 = smul.addr %s200, 4
      %s202 = scalar_lea.vmem %s0, %s201
      %p203 = pneg %p37
      %p204 = pneg %p34
      %p205 = scmp.lt.s32.totalorder %s16, 3
      %s206 = scalar_select %p205, %s16, 3
      %s207 = smul.addr %s206, 64
      %s208 = smul.addr %s207, 4
      %s209 = scalar_lea.vmem %s1, %s208
      %p210 = pneg %p63
      %p211 = pneg %p60
      %p212 = pneg %p84
      %p213 = pneg %p81
      %p214 = pneg %p105
      %p215 = pneg %p102
      %p216 = pneg %p126
      %p217 = pneg %p123
      %p218 = pneg %p147
      %p219 = pneg %p144
      %p220 = scmp.lt.s32.totalorder %s16, 3
      %s221 = scalar_select %p220, %s16, 3
      %s222 = smul.addr %s221, 28
      %s223 = smul.addr %s222, 4
      %s224 = scalar_lea.vmem %s0, %s223
      %p225 = scmp.lt.s32.totalorder %s16, 3
      %s226 = scalar_select %p225, %s16, 3
      %s227 = smul.addr %s226, 64
      %s228 = smul.addr %s227, 4
      %s229 = scalar_lea.vmem %s1, %s228
      %p230 = scmp.eq.s32.totalorder %s16, 0
      // Predicated region
      $region41: #{nlayer_discriminator_forward.6} parent=39 // pred_check
        %p231 = pneg %p230
      $region42: #{nlayer_discriminator_forward.6} parent=39 // pred_check_branch
        %233 = sbr.rel (%p231) target = $region44
      $region43: #{nlayer_discriminator_forward.6} parent=39 // pred_region
        %234 = vst [vmem:[#allocation2] sm:$0xff] 0.0
        %235 = vst [vmem:[#allocation2 + $0x8] sm:$0xff] 0.0
        %236 = vst [vmem:[#allocation2 + $0x10] sm:$0xff] 0.0
        %237 = vst [vmem:[#allocation2 + $0x18] sm:$0xff] 0.0
        %238 = vst [vmem:[#allocation2 + $0x20] sm:$0xff] 0.0
        %239 = vst [vmem:[#allocation2 + $0x28] sm:$0xff] 0.0
        %240 = vst [vmem:[#allocation2 + $0x30] sm:$0xff] 0.0
        %241 = vst [vmem:[#allocation2 + $0x38] sm:$0xff] 0.0
        %242 = vst [vmem:[#allocation2 + $0x40] sm:$0xff] 0.0
        %243 = vst [vmem:[#allocation2 + $0x48] sm:$0xff] 0.0
        %244 = vst [vmem:[#allocation2 + $0x50] sm:$0xff] 0.0
        %245 = vst [vmem:[#allocation2 + $0x58] sm:$0xff] 0.0
        %246 = vst [vmem:[#allocation2 + $0x60] sm:$0xff] 0.0
      $region44: #{nlayer_discriminator_forward.6} parent=39 // pred_fallthru
        _
      %v247 = vld [vmem:[%s224] sm:$0xf]
      %v248 = vld [vmem:[%s224 + $0x4] sm:$0xf]
      %v249 = vld [vmem:[%s224 + $0x8] sm:$0xf]
      %v250 = vld [vmem:[%s224 + $0xc] sm:$0xf]
      %v251 = vld [vmem:[%s224 + $0x10] sm:$0xf]
      %v252 = vld [vmem:[%s224 + $0x14] sm:$0xf]
      %v253 = vld [vmem:[%s224 + $0x18] sm:$0xf]
      %v254 = vld [vmem:[%s224 + $0x1c] sm:$0xf]
      %v255 = vld [vmem:[%s224 + $0x20] sm:$0xf]
      %v256 = vld [vmem:[%s224 + $0x24] sm:$0xf]
      %v257 = vld [vmem:[%s224 + $0x28] sm:$0xf]
      %v258 = vld [vmem:[%s224 + $0x2c] sm:$0xf]
      %v259 = vld [vmem:[%s224 + $0x30] sm:$0xf]
      %v260 = vld [vmem:[%s224 + $0x34] sm:$0x1]
      %v261 = vld [vmem:[#allocation2] sm:$0xff]
      %v262 = vld [vmem:[#allocation2 + $0x8] sm:$0xff]
      %v263 = vld [vmem:[#allocation2 + $0x10] sm:$0xff]
      %v264 = vld [vmem:[#allocation2 + $0x18] sm:$0xff]
      %v265 = vld [vmem:[#allocation2 + $0x20] sm:$0xff]
      %v266 = vld [vmem:[#allocation2 + $0x28] sm:$0xff]
      %v267 = vld [vmem:[#allocation2 + $0x30] sm:$0xff]
      %v268 = vld [vmem:[#allocation2 + $0x38] sm:$0xff]
      %v269 = vld [vmem:[#allocation2 + $0x40] sm:$0xff]
      %v270 = vld [vmem:[#allocation2 + $0x48] sm:$0xff]
      %v271 = vld [vmem:[#allocation2 + $0x50] sm:$0xff]
      %v272 = vld [vmem:[#allocation2 + $0x58] sm:$0xff]
      %v273 = vld [vmem:[#allocation2 + $0x60] sm:$0xff]
      %v274 = vld [vmem:[%s229] sm:$0xf]
      %v275 = vld [vmem:[%s229 + $0x4] sm:$0xf]
      %v276 = vld [vmem:[%s229 + $0x8] sm:$0xf]
      %v277 = vld [vmem:[%s229 + $0xc] sm:$0xf]
      %v278 = vld [vmem:[%s229 + $0x10] sm:$0xf]
      %v279 = vld [vmem:[%s229 + $0x14] sm:$0xf]
      %v280 = vld [vmem:[%s229 + $0x18] sm:$0xf]
      %v281 = vld [vmem:[%s229 + $0x1c] sm:$0xf]
      %v282 = vld [vmem:[%s229 + $0x20] sm:$0xf]
      %v283 = vld [vmem:[%s229 + $0x24] sm:$0xf]
      %v284 = vld [vmem:[%s229 + $0x28] sm:$0xf]
      %v285 = vld [vmem:[%s229 + $0x2c] sm:$0xf]
      %v286 = vld [vmem:[%s229 + $0x30] sm:$0xf]
      %v287 = vld [vmem:[%s229 + $0x34] sm:$0xf]
      %v288 = vld [vmem:[%s229 + $0x38] sm:$0xf]
      %v289 = vld [vmem:[%s229 + $0x3c] sm:$0xf]
      %v303 = vunpack.c.l.b16 %v247
      %v304 = vunpack.c.l.b16 %v248
      %v305 = vunpack.c.l.b16 %v249
      %v306 = vunpack.c.l.b16 %v250
      %v307 = vunpack.c.l.b16 %v251
      %v308 = vunpack.c.l.b16 %v252
      %v309 = vunpack.c.l.b16 %v253
      %v310 = vunpack.c.l.b16 %v254
      %v311 = vunpack.c.l.b16 %v255
      %v312 = vunpack.c.l.b16 %v256
      %v313 = vunpack.c.l.b16 %v257
      %v314 = vunpack.c.l.b16 %v258
      %v315 = vunpack.c.l.b16 %v259
      %v316 = vpack.c.b16 %v304, %v303
      %v317 = vpack.c.b16 %v306, %v305
      %v318 = vpack.c.b16 %v308, %v307
      %v319 = vpack.c.b16 %v310, %v309
      %v320 = vpack.c.b16 %v312, %v311
      %v321 = vpack.c.b16 %v314, %v313
      %v322 = vpack.c.b16 %v315, %v315
      %v346 = vunpack.c.l.b16 %v274
      %v347 = vunpack.c.l.b16 %v275
      %v348 = vunpack.c.l.b16 %v276
      %v349 = vunpack.c.l.b16 %v277
      %v350 = vunpack.c.l.b16 %v278
      %v351 = vunpack.c.l.b16 %v279
      %v352 = vunpack.c.l.b16 %v280
      %v353 = vunpack.c.l.b16 %v281
      %v354 = vunpack.c.l.b16 %v282
      %v355 = vunpack.c.l.b16 %v283
      %v356 = vunpack.c.l.b16 %v284
      %v357 = vunpack.c.l.b16 %v285
      %v358 = vunpack.c.l.b16 %v286
      %v359 = vunpack.c.l.b16 %v287
      %v360 = vunpack.c.l.b16 %v288
      %v361 = vunpack.c.l.b16 %v289
      %v362 = vpack.c.b16 %v347, %v346
      %v363 = vpack.c.b16 %v349, %v348
      %v364 = vpack.c.b16 %v351, %v350
      %v365 = vpack.c.b16 %v353, %v352
      %v366 = vpack.c.b16 %v355, %v354
      %v367 = vpack.c.b16 %v357, %v356
      %v368 = vpack.c.b16 %v359, %v358
      %v369 = vpack.c.b16 %v361, %v360
      %378 = vmatpush.bf16.msra.mxu0 %v369
      %379 = vmatpush.bf16.msra.mxu0 %v368
      %380 = vmatpush.bf16.msra.mxu0 %v367
      %381 = vmatpush.bf16.msra.mxu0 %v366
      %382 = vmatpush.bf16.msra.mxu0 %v365
      %383 = vmatpush.bf16.msra.mxu0 %v364
      %384 = vmatpush.bf16.msra.mxu0 %v363
      %385 = vmatpush.bf16.msra.mxu0 %v362
      %386 = vmatmul.bf16.gmra.mxu0 %v316
      %v387 = vpop.f32.mrf.mxu0
      %v388 = vadd.f32 0.0, %v387
      %v389 = vpop.f32.mrf.mxu0
      %v390 = vadd.f32 0.0, %v389
      %391 = vmatmul.bf16.gmra.mxu0 %v317
      %v392 = vpop.f32.mrf.mxu0
      %v393 = vadd.f32 0.0, %v392
      %v394 = vpop.f32.mrf.mxu0
      %v395 = vadd.f32 0.0, %v394
      %396 = vmatmul.bf16.gmra.mxu0 %v318
      %v397 = vpop.f32.mrf.mxu0
      %v398 = vadd.f32 0.0, %v397
      %v399 = vpop.f32.mrf.mxu0
      %v400 = vadd.f32 0.0, %v399
      %401 = vmatmul.bf16.gmra.mxu0 %v319
      %v402 = vpop.f32.mrf.mxu0
      %v403 = vadd.f32 0.0, %v402
      %v404 = vpop.f32.mrf.mxu0
      %v405 = vadd.f32 0.0, %v404
      %406 = vmatmul.bf16.gmra.mxu0 %v320
      %v407 = vpop.f32.mrf.mxu0
      %v408 = vadd.f32 0.0, %v407
      %v409 = vpop.f32.mrf.mxu0
      %v410 = vadd.f32 0.0, %v409
      %411 = vmatmul.bf16.gmra.mxu0 %v321
      %v412 = vpop.f32.mrf.mxu0
      %v413 = vadd.f32 0.0, %v412
      %v414 = vpop.f32.mrf.mxu0
      %v415 = vadd.f32 0.0, %v414
      %416 = vmatmul.bf16.gmra.mxu0 %v322
      %v417 = vpop.f32.mrf.mxu0
      %v418 = vadd.f32 0.0, %v417
      %v419 = vpop.f32.mrf.mxu0
      %420 = vdwg.mxu0
      %v421 = vadd.f32 %v261, %v388
      %v422 = vadd.f32 %v262, %v390
      %v423 = vadd.f32 %v263, %v393
      %v424 = vadd.f32 %v264, %v395
      %v425 = vadd.f32 %v265, %v398
      %v426 = vadd.f32 %v266, %v400
      %v427 = vadd.f32 %v267, %v403
      %v428 = vadd.f32 %v268, %v405
      %v429 = vadd.f32 %v269, %v408
      %v430 = vadd.f32 %v270, %v410
      %v431 = vadd.f32 %v271, %v413
      %v432 = vadd.f32 %v272, %v415
      %v433 = vadd.f32 %v273, %v418
      %434 = vst [vmem:[#allocation2] sm:$0xff] %v421
      %435 = vst [vmem:[#allocation2 + $0x8] sm:$0xff] %v422
      %436 = vst [vmem:[#allocation2 + $0x10] sm:$0xff] %v423
      %437 = vst [vmem:[#allocation2 + $0x18] sm:$0xff] %v424
      %438 = vst [vmem:[#allocation2 + $0x20] sm:$0xff] %v425
      %439 = vst [vmem:[#allocation2 + $0x28] sm:$0xff] %v426
      %440 = vst [vmem:[#allocation2 + $0x30] sm:$0xff] %v427
      %441 = vst [vmem:[#allocation2 + $0x38] sm:$0xff] %v428
      %442 = vst [vmem:[#allocation2 + $0x40] sm:$0xff] %v429
      %443 = vst [vmem:[#allocation2 + $0x48] sm:$0xff] %v430
      %444 = vst [vmem:[#allocation2 + $0x50] sm:$0xff] %v431
      %445 = vst [vmem:[#allocation2 + $0x58] sm:$0xff] %v432
      %446 = vst [vmem:[#allocation2 + $0x60] sm:$0xff] %v433
      %v447 = vld [vmem:[#allocation2] sm:$0xff]
      %v448 = vld [vmem:[#allocation2 + $0x8] sm:$0xff]
      %v449 = vld [vmem:[#allocation2 + $0x10] sm:$0xff]
      %v450 = vld [vmem:[#allocation2 + $0x18] sm:$0xff]
      %v451 = vld [vmem:[#allocation2 + $0x20] sm:$0xff]
      %v452 = vld [vmem:[#allocation2 + $0x28] sm:$0xff]
      %v453 = vld [vmem:[#allocation2 + $0x30] sm:$0xff]
      %v454 = vld [vmem:[#allocation2 + $0x38] sm:$0xff]
      %v455 = vld [vmem:[#allocation2 + $0x40] sm:$0xff]
      %v456 = vld [vmem:[#allocation2 + $0x48] sm:$0xff]
      %v457 = vld [vmem:[#allocation2 + $0x50] sm:$0xff]
      %v458 = vld [vmem:[#allocation2 + $0x58] sm:$0xff]
      %v459 = vld [vmem:[#allocation2 + $0x60] sm:$0xff]
      %s460 = scalar_lea.vmem %s229, 128
      %v461 = vld [vmem:[%s460] sm:$0xf]
      %v462 = vld [vmem:[%s460 + $0x4] sm:$0xf]
      %v463 = vld [vmem:[%s460 + $0x8] sm:$0xf]
      %v464 = vld [vmem:[%s460 + $0xc] sm:$0xf]
      %v465 = vld [vmem:[%s460 + $0x10] sm:$0xf]
      %v466 = vld [vmem:[%s460 + $0x14] sm:$0xf]
      %v467 = vld [vmem:[%s460 + $0x18] sm:$0xf]
      %v468 = vld [vmem:[%s460 + $0x1c] sm:$0xf]
      %v469 = vld [vmem:[%s460 + $0x20] sm:$0xf]
      %v470 = vld [vmem:[%s460 + $0x24] sm:$0xf]
      %v471 = vld [vmem:[%s460 + $0x28] sm:$0xf]
      %v472 = vld [vmem:[%s460 + $0x2c] sm:$0xf]
      %v473 = vld [vmem:[%s460 + $0x30] sm:$0xf]
      %v474 = vld [vmem:[%s460 + $0x34] sm:$0xf]
      %v475 = vld [vmem:[%s460 + $0x38] sm:$0xf]
      %v476 = vld [vmem:[%s460 + $0x3c] sm:$0xf]
      %v478 = vunpack.c.l.b16 %v260
      %v479 = vpack.c.b16 %v478, %v315
      %vm480 = vsmask.f32 7424
      %v482 = vshrl.u32 %v316, 16
      %v484 = vshll.u32 %v316, 16
      %v486 = vrot.slane %v484, 1
      %v487 = vor.u32 %v482, %v486
      %v489 = vshll.u32 %v317, 16
      %v491 = vrot.slane %v489, 1
      %v492 = vsel %vm480, %v487, %v491
      %v493 = vshrl.u32 %v317, 16
      %v495 = vor.u32 %v493, %v491
      %v497 = vshll.u32 %v318, 16
      %v499 = vrot.slane %v497, 1
      %v500 = vsel %vm480, %v495, %v499
      %v501 = vshrl.u32 %v318, 16
      %v503 = vor.u32 %v501, %v499
      %v505 = vshll.u32 %v319, 16
      %v507 = vrot.slane %v505, 1
      %v508 = vsel %vm480, %v503, %v507
      %v509 = vshrl.u32 %v319, 16
      %v511 = vor.u32 %v509, %v507
      %v513 = vshll.u32 %v320, 16
      %v515 = vrot.slane %v513, 1
      %v516 = vsel %vm480, %v511, %v515
      %v517 = vshrl.u32 %v320, 16
      %v519 = vor.u32 %v517, %v515
      %v521 = vshll.u32 %v321, 16
      %v523 = vrot.slane %v521, 1
      %v524 = vsel %vm480, %v519, %v523
      %v525 = vshrl.u32 %v321, 16
      %v527 = vor.u32 %v525, %v523
      %v529 = vshll.u32 %v479, 16
      %v531 = vrot.slane %v529, 1
      %v532 = vsel %vm480, %v527, %v531
      %v533 = vshrl.u32 %v479, 16
      %v535 = vor.u32 %v533, %v531
      %v559 = vunpack.c.l.b16 %v461
      %v560 = vunpack.c.l.b16 %v462
      %v561 = vunpack.c.l.b16 %v463
      %v562 = vunpack.c.l.b16 %v464
      %v563 = vunpack.c.l.b16 %v465
      %v564 = vunpack.c.l.b16 %v466
      %v565 = vunpack.c.l.b16 %v467
      %v566 = vunpack.c.l.b16 %v468
      %v567 = vunpack.c.l.b16 %v469
      %v568 = vunpack.c.l.b16 %v470
      %v569 = vunpack.c.l.b16 %v471
      %v570 = vunpack.c.l.b16 %v472
      %v571 = vunpack.c.l.b16 %v473
      %v572 = vunpack.c.l.b16 %v474
      %v573 = vunpack.c.l.b16 %v475
      %v574 = vunpack.c.l.b16 %v476
      %v575 = vpack.c.b16 %v560, %v559
      %v576 = vpack.c.b16 %v562, %v561
      %v577 = vpack.c.b16 %v564, %v563
      %v578 = vpack.c.b16 %v566, %v565
      %v579 = vpack.c.b16 %v568, %v567
      %v580 = vpack.c.b16 %v570, %v569
      %v581 = vpack.c.b16 %v572, %v571
      %v582 = vpack.c.b16 %v574, %v573
      %591 = vmatpush.bf16.msra.mxu0 %v582
      %592 = vmatpush.bf16.msra.mxu0 %v581
      %593 = vmatpush.bf16.msra.mxu0 %v580
      %594 = vmatpush.bf16.msra.mxu0 %v579
      %595 = vmatpush.bf16.msra.mxu0 %v578
      %596 = vmatpush.bf16.msra.mxu0 %v577
      %597 = vmatpush.bf16.msra.mxu0 %v576
      %598 = vmatpush.bf16.msra.mxu0 %v575
      %599 = vmatmul.bf16.gmra.mxu0 %v492
      %v600 = vpop.f32.mrf.mxu0
      %v601 = vadd.f32 0.0, %v600
      %v602 = vpop.f32.mrf.mxu0
      %v603 = vadd.f32 0.0, %v602
      %604 = vmatmul.bf16.gmra.mxu0 %v500
      %v605 = vpop.f32.mrf.mxu0
      %v606 = vadd.f32 0.0, %v605
      %v607 = vpop.f32.mrf.mxu0
      %v608 = vadd.f32 0.0, %v607
      %609 = vmatmul.bf16.gmra.mxu0 %v508
      %v610 = vpop.f32.mrf.mxu0
      %v611 = vadd.f32 0.0, %v610
      %v612 = vpop.f32.mrf.mxu0
      %v613 = vadd.f32 0.0, %v612
      %614 = vmatmul.bf16.gmra.mxu0 %v516
      %v615 = vpop.f32.mrf.mxu0
      %v616 = vadd.f32 0.0, %v615
      %v617 = vpop.f32.mrf.mxu0
      %v618 = vadd.f32 0.0, %v617
      %619 = vmatmul.bf16.gmra.mxu0 %v524
      %v620 = vpop.f32.mrf.mxu0
      %v621 = vadd.f32 0.0, %v620
      %v622 = vpop.f32.mrf.mxu0
      %v623 = vadd.f32 0.0, %v622
      %624 = vmatmul.bf16.gmra.mxu0 %v532
      %v625 = vpop.f32.mrf.mxu0
      %v626 = vadd.f32 0.0, %v625
      %v627 = vpop.f32.mrf.mxu0
      %v628 = vadd.f32 0.0, %v627
      %629 = vmatmul.bf16.gmra.mxu0 %v535
      %v630 = vpop.f32.mrf.mxu0
      %v631 = vadd.f32 0.0, %v630
      %v632 = vpop.f32.mrf.mxu0
      %633 = vdwg.mxu0
      %v634 = vadd.f32 %v447, %v601
      %v635 = vadd.f32 %v448, %v603
      %v636 = vadd.f32 %v449, %v606
      %v637 = vadd.f32 %v450, %v608
      %v638 = vadd.f32 %v451, %v611
      %v639 = vadd.f32 %v452, %v613
      %v640 = vadd.f32 %v453, %v616
      %v641 = vadd.f32 %v454, %v618
      %v642 = vadd.f32 %v455, %v621
      %v643 = vadd.f32 %v456, %v623
      %v644 = vadd.f32 %v457, %v626
      %v645 = vadd.f32 %v458, %v628
      %v646 = vadd.f32 %v459, %v631
      %647 = vst [vmem:[#allocation2] sm:$0xff] %v634
      %648 = vst [vmem:[#allocation2 + $0x8] sm:$0xff] %v635
      %649 = vst [vmem:[#allocation2 + $0x10] sm:$0xff] %v636
      %650 = vst [vmem:[#allocation2 + $0x18] sm:$0xff] %v637
      %651 = vst [vmem:[#allocation2 + $0x20] sm:$0xff] %v638
      %652 = vst [vmem:[#allocation2 + $0x28] sm:$0xff] %v639
      %653 = vst [vmem:[#allocation2 + $0x30] sm:$0xff] %v640
      %654 = vst [vmem:[#allocation2 + $0x38] sm:$0xff] %v641
      %655 = vst [vmem:[#allocation2 + $0x40] sm:$0xff] %v642
      %656 = vst [vmem:[#allocation2 + $0x48] sm:$0xff] %v643
      %657 = vst [vmem:[#allocation2 + $0x50] sm:$0xff] %v644
      %658 = vst [vmem:[#allocation2 + $0x58] sm:$0xff] %v645
      %659 = vst [vmem:[#allocation2 + $0x60] sm:$0xff] %v646
      %s660 = scalar_lea.vmem %s224, 56
      %v661 = vld [vmem:[%s660] sm:$0xf]
      %v662 = vld [vmem:[%s660 + $0x4] sm:$0xf]
      %v663 = vld [vmem:[%s660 + $0x8] sm:$0xf]
      %v664 = vld [vmem:[%s660 + $0xc] sm:$0xf]
      %v665 = vld [vmem:[%s660 + $0x10] sm:$0xf]
      %v666 = vld [vmem:[%s660 + $0x14] sm:$0xf]
      %v667 = vld [vmem:[%s660 + $0x18] sm:$0xf]
      %v668 = vld [vmem:[%s660 + $0x1c] sm:$0xf]
      %v669 = vld [vmem:[%s660 + $0x20] sm:$0xf]
      %v670 = vld [vmem:[%s660 + $0x24] sm:$0xf]
      %v671 = vld [vmem:[%s660 + $0x28] sm:$0xf]
      %v672 = vld [vmem:[%s660 + $0x2c] sm:$0xf]
      %v673 = vld [vmem:[%s660 + $0x30] sm:$0xf]
      %v674 = vld [vmem:[%s660 + $0x34] sm:$0x1]
      %v675 = vld [vmem:[#allocation2] sm:$0xff]
      %v676 = vld [vmem:[#allocation2 + $0x8] sm:$0xff]
      %v677 = vld [vmem:[#allocation2 + $0x10] sm:$0xff]
      %v678 = vld [vmem:[#allocation2 + $0x18] sm:$0xff]
      %v679 = vld [vmem:[#allocation2 + $0x20] sm:$0xff]
      %v680 = vld [vmem:[#allocation2 + $0x28] sm:$0xff]
      %v681 = vld [vmem:[#allocation2 + $0x30] sm:$0xff]
      %v682 = vld [vmem:[#allocation2 + $0x38] sm:$0xff]
      %v683 = vld [vmem:[#allocation2 + $0x40] sm:$0xff]
      %v684 = vld [vmem:[#allocation2 + $0x48] sm:$0xff]
      %v685 = vld [vmem:[#allocation2 + $0x50] sm:$0xff]
      %v686 = vld [vmem:[#allocation2 + $0x58] sm:$0xff]
      %v687 = vld [vmem:[#allocation2 + $0x60] sm:$0xff]
      %s688 = scalar_lea.vmem %s229, 64
      %v689 = vld [vmem:[%s688] sm:$0xf]
      %v690 = vld [vmem:[%s688 + $0x4] sm:$0xf]
      %v691 = vld [vmem:[%s688 + $0x8] sm:$0xf]
      %v692 = vld [vmem:[%s688 + $0xc] sm:$0xf]
      %v693 = vld [vmem:[%s688 + $0x10] sm:$0xf]
      %v694 = vld [vmem:[%s688 + $0x14] sm:$0xf]
      %v695 = vld [vmem:[%s688 + $0x18] sm:$0xf]
      %v696 = vld [vmem:[%s688 + $0x1c] sm:$0xf]
      %v697 = vld [vmem:[%s688 + $0x20] sm:$0xf]
      %v698 = vld [vmem:[%s688 + $0x24] sm:$0xf]
      %v699 = vld [vmem:[%s688 + $0x28] sm:$0xf]
      %v700 = vld [vmem:[%s688 + $0x2c] sm:$0xf]
      %v701 = vld [vmem:[%s688 + $0x30] sm:$0xf]
      %v702 = vld [vmem:[%s688 + $0x34] sm:$0xf]
      %v703 = vld [vmem:[%s688 + $0x38] sm:$0xf]
      %v704 = vld [vmem:[%s688 + $0x3c] sm:$0xf]
      %v718 = vunpack.c.l.b16 %v661
      %v719 = vunpack.c.l.b16 %v662
      %v720 = vunpack.c.l.b16 %v663
      %v721 = vunpack.c.l.b16 %v664
      %v722 = vunpack.c.l.b16 %v665
      %v723 = vunpack.c.l.b16 %v666
      %v724 = vunpack.c.l.b16 %v667
      %v725 = vunpack.c.l.b16 %v668
      %v726 = vunpack.c.l.b16 %v669
      %v727 = vunpack.c.l.b16 %v670
      %v728 = vunpack.c.l.b16 %v671
      %v729 = vunpack.c.l.b16 %v672
      %v730 = vunpack.c.l.b16 %v673
      %v731 = vpack.c.b16 %v719, %v718
      %v732 = vpack.c.b16 %v721, %v720
      %v733 = vpack.c.b16 %v723, %v722
      %v734 = vpack.c.b16 %v725, %v724
      %v735 = vpack.c.b16 %v727, %v726
      %v736 = vpack.c.b16 %v729, %v728
      %v737 = vpack.c.b16 %v730, %v730
      %v761 = vunpack.c.l.b16 %v689
      %v762 = vunpack.c.l.b16 %v690
      %v763 = vunpack.c.l.b16 %v691
      %v764 = vunpack.c.l.b16 %v692
      %v765 = vunpack.c.l.b16 %v693
      %v766 = vunpack.c.l.b16 %v694
      %v767 = vunpack.c.l.b16 %v695
      %v768 = vunpack.c.l.b16 %v696
      %v769 = vunpack.c.l.b16 %v697
      %v770 = vunpack.c.l.b16 %v698
      %v771 = vunpack.c.l.b16 %v699
      %v772 = vunpack.c.l.b16 %v700
      %v773 = vunpack.c.l.b16 %v701
      %v774 = vunpack.c.l.b16 %v702
      %v775 = vunpack.c.l.b16 %v703
      %v776 = vunpack.c.l.b16 %v704
      %v777 = vpack.c.b16 %v762, %v761
      %v778 = vpack.c.b16 %v764, %v763
      %v779 = vpack.c.b16 %v766, %v765
      %v780 = vpack.c.b16 %v768, %v767
      %v781 = vpack.c.b16 %v770, %v769
      %v782 = vpack.c.b16 %v772, %v771
      %v783 = vpack.c.b16 %v774, %v773
      %v784 = vpack.c.b16 %v776, %v775
      %793 = vmatpush.bf16.msra.mxu0 %v784
      %794 = vmatpush.bf16.msra.mxu0 %v783
      %795 = vmatpush.bf16.msra.mxu0 %v782
      %796 = vmatpush.bf16.msra.mxu0 %v781
      %797 = vmatpush.bf16.msra.mxu0 %v780
      %798 = vmatpush.bf16.msra.mxu0 %v779
      %799 = vmatpush.bf16.msra.mxu0 %v778
      %800 = vmatpush.bf16.msra.mxu0 %v777
      %801 = vmatmul.bf16.gmra.mxu0 %v731
      %v802 = vpop.f32.mrf.mxu0
      %v803 = vadd.f32 0.0, %v802
      %v804 = vpop.f32.mrf.mxu0
      %v805 = vadd.f32 0.0, %v804
      %806 = vmatmul.bf16.gmra.mxu0 %v732
      %v807 = vpop.f32.mrf.mxu0
      %v808 = vadd.f32 0.0, %v807
      %v809 = vpop.f32.mrf.mxu0
      %v810 = vadd.f32 0.0, %v809
      %811 = vmatmul.bf16.gmra.mxu0 %v733
      %v812 = vpop.f32.mrf.mxu0
      %v813 = vadd.f32 0.0, %v812
      %v814 = vpop.f32.mrf.mxu0
      %v815 = vadd.f32 0.0, %v814
      %816 = vmatmul.bf16.gmra.mxu0 %v734
      %v817 = vpop.f32.mrf.mxu0
      %v818 = vadd.f32 0.0, %v817
      %v819 = vpop.f32.mrf.mxu0
      %v820 = vadd.f32 0.0, %v819
      %821 = vmatmul.bf16.gmra.mxu0 %v735
      %v822 = vpop.f32.mrf.mxu0
      %v823 = vadd.f32 0.0, %v822
      %v824 = vpop.f32.mrf.mxu0
      %v825 = vadd.f32 0.0, %v824
      %826 = vmatmul.bf16.gmra.mxu0 %v736
      %v827 = vpop.f32.mrf.mxu0
      %v828 = vadd.f32 0.0, %v827
      %v829 = vpop.f32.mrf.mxu0
      %v830 = vadd.f32 0.0, %v829
      %831 = vmatmul.bf16.gmra.mxu0 %v737
      %v832 = vpop.f32.mrf.mxu0
      %v833 = vadd.f32 0.0, %v832
      %v834 = vpop.f32.mrf.mxu0
      %835 = vdwg.mxu0
      %v836 = vadd.f32 %v675, %v803
      %v837 = vadd.f32 %v676, %v805
      %v838 = vadd.f32 %v677, %v808
      %v839 = vadd.f32 %v678, %v810
      %v840 = vadd.f32 %v679, %v813
      %v841 = vadd.f32 %v680, %v815
      %v842 = vadd.f32 %v681, %v818
      %v843 = vadd.f32 %v682, %v820
      %v844 = vadd.f32 %v683, %v823
      %v845 = vadd.f32 %v684, %v825
      %v846 = vadd.f32 %v685, %v828
      %v847 = vadd.f32 %v686, %v830
      %v848 = vadd.f32 %v687, %v833
      %849 = vst [vmem:[#allocation2] sm:$0xff] %v836
      %850 = vst [vmem:[#allocation2 + $0x8] sm:$0xff] %v837
      %851 = vst [vmem:[#allocation2 + $0x10] sm:$0xff] %v838
      %852 = vst [vmem:[#allocation2 + $0x18] sm:$0xff] %v839
      %853 = vst [vmem:[#allocation2 + $0x20] sm:$0xff] %v840
      %854 = vst [vmem:[#allocation2 + $0x28] sm:$0xff] %v841
      %855 = vst [vmem:[#allocation2 + $0x30] sm:$0xff] %v842
      %856 = vst [vmem:[#allocation2 + $0x38] sm:$0xff] %v843
      %857 = vst [vmem:[#allocation2 + $0x40] sm:$0xff] %v844
      %858 = vst [vmem:[#allocation2 + $0x48] sm:$0xff] %v845
      %859 = vst [vmem:[#allocation2 + $0x50] sm:$0xff] %v846
      %860 = vst [vmem:[#allocation2 + $0x58] sm:$0xff] %v847
      %861 = vst [vmem:[#allocation2 + $0x60] sm:$0xff] %v848
      %v862 = vld [vmem:[#allocation2] sm:$0xff]
      %v863 = vld [vmem:[#allocation2 + $0x8] sm:$0xff]
      %v864 = vld [vmem:[#allocation2 + $0x10] sm:$0xff]
      %v865 = vld [vmem:[#allocation2 + $0x18] sm:$0xff]
      %v866 = vld [vmem:[#allocation2 + $0x20] sm:$0xff]
      %v867 = vld [vmem:[#allocation2 + $0x28] sm:$0xff]
      %v868 = vld [vmem:[#allocation2 + $0x30] sm:$0xff]
      %v869 = vld [vmem:[#allocation2 + $0x38] sm:$0xff]
      %v870 = vld [vmem:[#allocation2 + $0x40] sm:$0xff]
      %v871 = vld [vmem:[#allocation2 + $0x48] sm:$0xff]
      %v872 = vld [vmem:[#allocation2 + $0x50] sm:$0xff]
      %v873 = vld [vmem:[#allocation2 + $0x58] sm:$0xff]
      %v874 = vld [vmem:[#allocation2 + $0x60] sm:$0xff]
      %s875 = scalar_lea.vmem %s229, 192
      %v876 = vld [vmem:[%s875] sm:$0xf]
      %v877 = vld [vmem:[%s875 + $0x4] sm:$0xf]
      %v878 = vld [vmem:[%s875 + $0x8] sm:$0xf]
      %v879 = vld [vmem:[%s875 + $0xc] sm:$0xf]
      %v880 = vld [vmem:[%s875 + $0x10] sm:$0xf]
      %v881 = vld [vmem:[%s875 + $0x14] sm:$0xf]
      %v882 = vld [vmem:[%s875 + $0x18] sm:$0xf]
      %v883 = vld [vmem:[%s875 + $0x1c] sm:$0xf]
      %v884 = vld [vmem:[%s875 + $0x20] sm:$0xf]
      %v885 = vld [vmem:[%s875 + $0x24] sm:$0xf]
      %v886 = vld [vmem:[%s875 + $0x28] sm:$0xf]
      %v887 = vld [vmem:[%s875 + $0x2c] sm:$0xf]
      %v888 = vld [vmem:[%s875 + $0x30] sm:$0xf]
      %v889 = vld [vmem:[%s875 + $0x34] sm:$0xf]
      %v890 = vld [vmem:[%s875 + $0x38] sm:$0xf]
      %v891 = vld [vmem:[%s875 + $0x3c] sm:$0xf]
      %v893 = vunpack.c.l.b16 %v674
      %v894 = vpack.c.b16 %v893, %v730
      %v896 = vshrl.u32 %v731, 16
      %v898 = vshll.u32 %v731, 16
      %v900 = vrot.slane %v898, 1
      %v901 = vor.u32 %v896, %v900
      %v903 = vshll.u32 %v732, 16
      %v905 = vrot.slane %v903, 1
      %v906 = vsel %vm480, %v901, %v905
      %v907 = vshrl.u32 %v732, 16
      %v909 = vor.u32 %v907, %v905
      %v911 = vshll.u32 %v733, 16
      %v913 = vrot.slane %v911, 1
      %v914 = vsel %vm480, %v909, %v913
      %v915 = vshrl.u32 %v733, 16
      %v917 = vor.u32 %v915, %v913
      %v919 = vshll.u32 %v734, 16
      %v921 = vrot.slane %v919, 1
      %v922 = vsel %vm480, %v917, %v921
      %v923 = vshrl.u32 %v734, 16
      %v925 = vor.u32 %v923, %v921
      %v927 = vshll.u32 %v735, 16
      %v929 = vrot.slane %v927, 1
      %v930 = vsel %vm480, %v925, %v929
      %v931 = vshrl.u32 %v735, 16
      %v933 = vor.u32 %v931, %v929
      %v935 = vshll.u32 %v736, 16
      %v937 = vrot.slane %v935, 1
      %v938 = vsel %vm480, %v933, %v937
      %v939 = vshrl.u32 %v736, 16
      %v941 = vor.u32 %v939, %v937
      %v943 = vshll.u32 %v894, 16
      %v945 = vrot.slane %v943, 1
      %v946 = vsel %vm480, %v941, %v945
      %v947 = vshrl.u32 %v894, 16
      %v949 = vor.u32 %v947, %v945
      %v973 = vunpack.c.l.b16 %v876
      %v974 = vunpack.c.l.b16 %v877
      %v975 = vunpack.c.l.b16 %v878
      %v976 = vunpack.c.l.b16 %v879
      %v977 = vunpack.c.l.b16 %v880
      %v978 = vunpack.c.l.b16 %v881
      %v979 = vunpack.c.l.b16 %v882
      %v980 = vunpack.c.l.b16 %v883
      %v981 = vunpack.c.l.b16 %v884
      %v982 = vunpack.c.l.b16 %v885
      %v983 = vunpack.c.l.b16 %v886
      %v984 = vunpack.c.l.b16 %v887
      %v985 = vunpack.c.l.b16 %v888
      %v986 = vunpack.c.l.b16 %v889
      %v987 = vunpack.c.l.b16 %v890
      %v988 = vunpack.c.l.b16 %v891
      %v989 = vpack.c.b16 %v974, %v973
      %v990 = vpack.c.b16 %v976, %v975
      %v991 = vpack.c.b16 %v978, %v977
      %v992 = vpack.c.b16 %v980, %v979
      %v993 = vpack.c.b16 %v982, %v981
      %v994 = vpack.c.b16 %v984, %v983
      %v995 = vpack.c.b16 %v986, %v985
      %v996 = vpack.c.b16 %v988, %v987
      %1005 = vmatpush.bf16.msra.mxu0 %v996
      %1006 = vmatpush.bf16.msra.mxu0 %v995
      %1007 = vmatpush.bf16.msra.mxu0 %v994
      %1008 = vmatpush.bf16.msra.mxu0 %v993
      %1009 = vmatpush.bf16.msra.mxu0 %v992
      %1010 = vmatpush.bf16.msra.mxu0 %v991
      %1011 = vmatpush.bf16.msra.mxu0 %v990
      %1012 = vmatpush.bf16.msra.mxu0 %v989
      %1013 = vmatmul.bf16.gmra.mxu0 %v906
      %v1014 = vpop.f32.mrf.mxu0
      %v1015 = vadd.f32 0.0, %v1014
      %v1016 = vpop.f32.mrf.mxu0
      %v1017 = vadd.f32 0.0, %v1016
      %1018 = vmatmul.bf16.gmra.mxu0 %v914
      %v1019 = vpop.f32.mrf.mxu0
      %v1020 = vadd.f32 0.0, %v1019
      %v1021 = vpop.f32.mrf.mxu0
      %v1022 = vadd.f32 0.0, %v1021
      %1023 = vmatmul.bf16.gmra.mxu0 %v922
      %v1024 = vpop.f32.mrf.mxu0
      %v1025 = vadd.f32 0.0, %v1024
      %v1026 = vpop.f32.mrf.mxu0
      %v1027 = vadd.f32 0.0, %v1026
      %1028 = vmatmul.bf16.gmra.mxu0 %v930
      %v1029 = vpop.f32.mrf.mxu0
      %v1030 = vadd.f32 0.0, %v1029
      %v1031 = vpop.f32.mrf.mxu0
      %v1032 = vadd.f32 0.0, %v1031
      %1033 = vmatmul.bf16.gmra.mxu0 %v938
      %v1034 = vpop.f32.mrf.mxu0
      %v1035 = vadd.f32 0.0, %v1034
      %v1036 = vpop.f32.mrf.mxu0
      %v1037 = vadd.f32 0.0, %v1036
      %1038 = vmatmul.bf16.gmra.mxu0 %v946
      %v1039 = vpop.f32.mrf.mxu0
      %v1040 = vadd.f32 0.0, %v1039
      %v1041 = vpop.f32.mrf.mxu0
      %v1042 = vadd.f32 0.0, %v1041
      %1043 = vmatmul.bf16.gmra.mxu0 %v949
      %v1044 = vpop.f32.mrf.mxu0
      %v1045 = vadd.f32 0.0, %v1044
      %v1046 = vpop.f32.mrf.mxu0
      %1047 = vdwg.mxu0
      %v1048 = vadd.f32 %v862, %v1015
      %v1049 = vadd.f32 %v863, %v1017
      %v1050 = vadd.f32 %v864, %v1020
      %v1051 = vadd.f32 %v865, %v1022
      %v1052 = vadd.f32 %v866, %v1025
      %v1053 = vadd.f32 %v867, %v1027
      %v1054 = vadd.f32 %v868, %v1030
      %v1055 = vadd.f32 %v869, %v1032
      %v1056 = vadd.f32 %v870, %v1035
      %v1057 = vadd.f32 %v871, %v1037
      %v1058 = vadd.f32 %v872, %v1040
      %v1059 = vadd.f32 %v873, %v1042
      %v1060 = vadd.f32 %v874, %v1045
      %1061 = vst [vmem:[#allocation2] sm:$0xff] %v1048
      %1062 = vst [vmem:[#allocation2 + $0x8] sm:$0xff] %v1049
      %1063 = vst [vmem:[#allocation2 + $0x10] sm:$0xff] %v1050
      %1064 = vst [vmem:[#allocation2 + $0x18] sm:$0xff] %v1051
      %1065 = vst [vmem:[#allocation2 + $0x20] sm:$0xff] %v1052
      %1066 = vst [vmem:[#allocation2 + $0x28] sm:$0xff] %v1053
      %1067 = vst [vmem:[#allocation2 + $0x30] sm:$0xff] %v1054
      %1068 = vst [vmem:[#allocation2 + $0x38] sm:$0xff] %v1055
      %1069 = vst [vmem:[#allocation2 + $0x40] sm:$0xff] %v1056
      %1070 = vst [vmem:[#allocation2 + $0x48] sm:$0xff] %v1057
      %1071 = vst [vmem:[#allocation2 + $0x50] sm:$0xff] %v1058
      %1072 = vst [vmem:[#allocation2 + $0x58] sm:$0xff] %v1059
      %1073 = vst [vmem:[#allocation2 + $0x60] sm:$0xff] %v1060
      %p1074 = scmp.eq.s32.totalorder %s16, 3
      // Predicated region
      $region45: #{nlayer_discriminator_forward.6} parent=39 // pred_check
        %p1075 = pneg %p1074
      $region46: #{nlayer_discriminator_forward.6} parent=39 // pred_check_branch
        %1077 = sbr.rel (%p1075) target = $region48
      $region47: #{nlayer_discriminator_forward.6} parent=39 // pred_region
        %v1078 = vld [vmem:[#allocation2] sm:$0xff]
        %v1079 = vld [vmem:[#allocation2 + $0x8] sm:$0xff]
        %v1080 = vld [vmem:[#allocation2 + $0x10] sm:$0xff]
        %v1081 = vld [vmem:[#allocation2 + $0x18] sm:$0xff]
        %v1082 = vld [vmem:[#allocation2 + $0x20] sm:$0xff]
        %v1083 = vld [vmem:[#allocation2 + $0x28] sm:$0xff]
        %v1084 = vld [vmem:[#allocation2 + $0x30] sm:$0xff]
        %v1085 = vld [vmem:[#allocation2 + $0x38] sm:$0xff]
        %v1086 = vld [vmem:[#allocation2 + $0x40] sm:$0xff]
        %v1087 = vld [vmem:[#allocation2 + $0x48] sm:$0xff]
        %v1088 = vld [vmem:[#allocation2 + $0x50] sm:$0xff]
        %v1089 = vld [vmem:[#allocation2 + $0x58] sm:$0xff]
        %v1090 = vld [vmem:[#allocation2 + $0x60] sm:$0xff]
        %v1091 = vld [vmem:[%s4] sm:$0xff]
        %v1092 = vld [vmem:[%s4 + $0x8] sm:$0xff]
        %v1093 = vld [vmem:[%s4 + $0x10] sm:$0xff]
        %v1094 = vld [vmem:[%s4 + $0x18] sm:$0xff]
        %v1095 = vld [vmem:[%s4 + $0x20] sm:$0xff]
        %v1096 = vld [vmem:[%s4 + $0x28] sm:$0xff]
        %v1097 = vld [vmem:[%s4 + $0x30] sm:$0xff]
        %v1098 = vld [vmem:[%s4 + $0x38] sm:$0xff]
        %v1099 = vld [vmem:[%s4 + $0x40] sm:$0xff]
        %v1100 = vld [vmem:[%s4 + $0x48] sm:$0xff]
        %v1101 = vld [vmem:[%s4 + $0x50] sm:$0xff]
        %v1102 = vld [vmem:[%s4 + $0x58] sm:$0xff]
        %v1103 = vld [vmem:[%s4 + $0x60] sm:$0xff]
        %1105 = vset.pattern.permute.xlu0 0
        %1106 = vperm.xlu0 %1105, %v1091
        %v1107 = vpop.permute.xlu0 %1106
        %1110 = vset.pattern.permute.xlu0 0
        %1111 = vperm.xlu0 %1110, %v1092
        %v1112 = vpop.permute.xlu0 %1111
        %1115 = vset.pattern.permute.xlu0 0
        %1116 = vperm.xlu0 %1115, %v1093
        %v1117 = vpop.permute.xlu0 %1116
        %1120 = vset.pattern.permute.xlu0 0
        %1121 = vperm.xlu0 %1120, %v1094
        %v1122 = vpop.permute.xlu0 %1121
        %1125 = vset.pattern.permute.xlu0 0
        %1126 = vperm.xlu0 %1125, %v1095
        %v1127 = vpop.permute.xlu0 %1126
        %1130 = vset.pattern.permute.xlu0 0
        %1131 = vperm.xlu0 %1130, %v1096
        %v1132 = vpop.permute.xlu0 %1131
        %1135 = vset.pattern.permute.xlu0 0
        %1136 = vperm.xlu0 %1135, %v1097
        %v1137 = vpop.permute.xlu0 %1136
        %1140 = vset.pattern.permute.xlu0 0
        %1141 = vperm.xlu0 %1140, %v1098
        %v1142 = vpop.permute.xlu0 %1141
        %1145 = vset.pattern.permute.xlu0 0
        %1146 = vperm.xlu0 %1145, %v1099
        %v1147 = vpop.permute.xlu0 %1146
        %1150 = vset.pattern.permute.xlu0 0
        %1151 = vperm.xlu0 %1150, %v1100
        %v1152 = vpop.permute.xlu0 %1151
        %1155 = vset.pattern.permute.xlu0 0
        %1156 = vperm.xlu0 %1155, %v1101
        %v1157 = vpop.permute.xlu0 %1156
        %1160 = vset.pattern.permute.xlu0 0
        %1161 = vperm.xlu0 %1160, %v1102
        %v1162 = vpop.permute.xlu0 %1161
        %1165 = vset.pattern.permute.xlu0 0
        %1166 = vperm.xlu0 %1165, %v1103
        %v1167 = vpop.permute.xlu0 %1166
        %v1169 = vmul.f32 %v1078, %v1107
        %v1170 = vmul.f32 %v1079, %v1112
        %v1171 = vmul.f32 %v1080, %v1117
        %v1172 = vmul.f32 %v1081, %v1122
        %v1173 = vmul.f32 %v1082, %v1127
        %v1174 = vmul.f32 %v1083, %v1132
        %v1175 = vmul.f32 %v1084, %v1137
        %v1176 = vmul.f32 %v1085, %v1142
        %v1177 = vmul.f32 %v1086, %v1147
        %v1178 = vmul.f32 %v1087, %v1152
        %v1179 = vmul.f32 %v1088, %v1157
        %v1180 = vmul.f32 %v1089, %v1162
        %v1181 = vmul.f32 %v1090, %v1167
        %v1182 = vadd.f32 %v1169, %v1170
        %v1183 = vadd.f32 %v1182, %v1171
        %v1184 = vadd.f32 %v1183, %v1172
        %v1185 = vadd.f32 %v1184, %v1173
        %v1186 = vadd.f32 %v1185, %v1174
        %v1187 = vadd.f32 %v1186, %v1175
        %v1188 = vadd.f32 %v1187, %v1176
        %v1189 = vadd.f32 %v1188, %v1177
        %v1190 = vadd.f32 %v1189, %v1178
        %v1191 = vadd.f32 %v1190, %v1179
        %v1192 = vadd.f32 %v1191, %v1180
        %v1193 = vadd.f32 %v1192, %v1181
        %v1194 = vrot.slane %v1193, 4
        %v1195 = vadd.f32 %v1193, %v1194
        %v1196 = vrot.slane %v1195, 2
        %v1197 = vadd.f32 %v1195, %v1196
        %v1198 = vrot.slane %v1197, 1
        %v1199 = vadd.f32 %v1197, %v1198
        %v1200 = vmul.f32 %v1199, 0.02
        %v1201 = vsub.f32 %v1078, %v1200
        %v1202 = vsub.f32 %v1079, %v1200
        %v1203 = vsub.f32 %v1080, %v1200
        %v1204 = vsub.f32 %v1081, %v1200
        %v1205 = vsub.f32 %v1082, %v1200
        %v1206 = vsub.f32 %v1083, %v1200
        %v1207 = vsub.f32 %v1084, %v1200
        %v1208 = vsub.f32 %v1085, %v1200
        %v1209 = vsub.f32 %v1086, %v1200
        %v1210 = vsub.f32 %v1087, %v1200
        %v1211 = vsub.f32 %v1088, %v1200
        %v1212 = vsub.f32 %v1089, %v1200
        %v1213 = vsub.f32 %v1090, %v1200
        %v1214 = vmul.f32 %v1201, %v1201
        %v1215 = vmul.f32 %v1202, %v1202
        %v1216 = vmul.f32 %v1203, %v1203
        %v1217 = vmul.f32 %v1204, %v1204
        %v1218 = vmul.f32 %v1205, %v1205
        %v1219 = vmul.f32 %v1206, %v1206
        %v1220 = vmul.f32 %v1207, %v1207
        %v1221 = vmul.f32 %v1208, %v1208
        %v1222 = vmul.f32 %v1209, %v1209
        %v1223 = vmul.f32 %v1210, %v1210
        %v1224 = vmul.f32 %v1211, %v1211
        %v1225 = vmul.f32 %v1212, %v1212
        %v1226 = vmul.f32 %v1213, %v1213
        %v1227 = vmul.f32 %v1214, %v1107
        %v1228 = vmul.f32 %v1215, %v1112
        %v1229 = vmul.f32 %v1216, %v1117
        %v1230 = vmul.f32 %v1217, %v1122
        %v1231 = vmul.f32 %v1218, %v1127
        %v1232 = vmul.f32 %v1219, %v1132
        %v1233 = vmul.f32 %v1220, %v1137
        %v1234 = vmul.f32 %v1221, %v1142
        %v1235 = vmul.f32 %v1222, %v1147
        %v1236 = vmul.f32 %v1223, %v1152
        %v1237 = vmul.f32 %v1224, %v1157
        %v1238 = vmul.f32 %v1225, %v1162
        %v1239 = vmul.f32 %v1226, %v1167
        %v1240 = vadd.f32 %v1227, %v1228
        %v1241 = vadd.f32 %v1240, %v1229
        %v1242 = vadd.f32 %v1241, %v1230
        %v1243 = vadd.f32 %v1242, %v1231
        %v1244 = vadd.f32 %v1243, %v1232
        %v1245 = vadd.f32 %v1244, %v1233
        %v1246 = vadd.f32 %v1245, %v1234
        %v1247 = vadd.f32 %v1246, %v1235
        %v1248 = vadd.f32 %v1247, %v1236
        %v1249 = vadd.f32 %v1248, %v1237
        %v1250 = vadd.f32 %v1249, %v1238
        %v1251 = vadd.f32 %v1250, %v1239
        %v1252 = vrot.slane %v1251, 4
        %v1253 = vadd.f32 %v1251, %v1252
        %v1254 = vrot.slane %v1253, 2
        %v1255 = vadd.f32 %v1253, %v1254
        %v1256 = vrot.slane %v1255, 1
        %v1257 = vadd.f32 %v1255, %v1256
        %v1258 = vmul.f32 %v1257, 0.02
        %v1259 = vadd.f32 %v1258, 1e-05
        %v1260 = vrsqrt.pop %v1259
        %v1261 = vmul.f32 %v1260, %v1259
        %v1262 = vmul.f32 %v1261, %v1260
        %v1263 = vmul.f32 0.5, %v1262
        %v1264 = vsub.f32 1.5, %v1263
        %v1265 = vmul.f32 %v1260, %v1264
        %vm1266 = vweird.f32 %v1259
        %vm1267 = vweird.f32 %v1260
        %vm1268 = vmor %vm1266, %vm1267
        %v1269 = vsel %vm1268, %v1260, %v1265
        %v1270 = vmul.f32 %v1201, %v1269
        %v1271 = vmul.f32 %v1202, %v1269
        %v1272 = vmul.f32 %v1203, %v1269
        %v1273 = vmul.f32 %v1204, %v1269
        %v1274 = vmul.f32 %v1205, %v1269
        %v1275 = vmul.f32 %v1206, %v1269
        %v1276 = vmul.f32 %v1207, %v1269
        %v1277 = vmul.f32 %v1208, %v1269
        %v1278 = vmul.f32 %v1209, %v1269
        %v1279 = vmul.f32 %v1210, %v1269
        %v1280 = vmul.f32 %v1211, %v1269
        %v1281 = vmul.f32 %v1212, %v1269
        %v1282 = vmul.f32 %v1213, %v1269
        %v1283 = vld [vmem:[%s2] sm:$0x1]
        %v1285 = vperm.slane %v1283, 0
        %v1287 = vmul.f32 %v1270, %v1285
        %v1288 = vmul.f32 %v1271, %v1285
        %v1289 = vmul.f32 %v1272, %v1285
        %v1290 = vmul.f32 %v1273, %v1285
        %v1291 = vmul.f32 %v1274, %v1285
        %v1292 = vmul.f32 %v1275, %v1285
        %v1293 = vmul.f32 %v1276, %v1285
        %v1294 = vmul.f32 %v1277, %v1285
        %v1295 = vmul.f32 %v1278, %v1285
        %v1296 = vmul.f32 %v1279, %v1285
        %v1297 = vmul.f32 %v1280, %v1285
        %v1298 = vmul.f32 %v1281, %v1285
        %v1299 = vmul.f32 %v1282, %v1285
        %v1300 = vld [vmem:[%s3] sm:$0x1]
        %v1302 = vperm.slane %v1300, 0
        %v1304 = vadd.f32 %v1287, %v1302
        %v1305 = vadd.f32 %v1288, %v1302
        %v1306 = vadd.f32 %v1289, %v1302
        %v1307 = vadd.f32 %v1290, %v1302
        %v1308 = vadd.f32 %v1291, %v1302
        %v1309 = vadd.f32 %v1292, %v1302
        %v1310 = vadd.f32 %v1293, %v1302
        %v1311 = vadd.f32 %v1294, %v1302
        %v1312 = vadd.f32 %v1295, %v1302
        %v1313 = vadd.f32 %v1296, %v1302
        %v1314 = vadd.f32 %v1297, %v1302
        %v1315 = vadd.f32 %v1298, %v1302
        %v1316 = vadd.f32 %v1299, %v1302
        %vm1317 = vcmp.gt.f32.partialorder %v1304, 0.0
        %vm1318 = vcmp.gt.f32.partialorder %v1305, 0.0
        %vm1319 = vcmp.gt.f32.partialorder %v1306, 0.0
        %vm1320 = vcmp.gt.f32.partialorder %v1307, 0.0
        %vm1321 = vcmp.gt.f32.partialorder %v1308, 0.0
        %vm1322 = vcmp.gt.f32.partialorder %v1309, 0.0
        %vm1323 = vcmp.gt.f32.partialorder %v1310, 0.0
        %vm1324 = vcmp.gt.f32.partialorder %v1311, 0.0
        %vm1325 = vcmp.gt.f32.partialorder %v1312, 0.0
        %vm1326 = vcmp.gt.f32.partialorder %v1313, 0.0
        %vm1327 = vcmp.gt.f32.partialorder %v1314, 0.0
        %vm1328 = vcmp.gt.f32.partialorder %v1315, 0.0
        %vm1329 = vcmp.gt.f32.partialorder %v1316, 0.0
        %v1330 = vmul.f32 %v1304, 0.2
        %v1331 = vmul.f32 %v1305, 0.2
        %v1332 = vmul.f32 %v1306, 0.2
        %v1333 = vmul.f32 %v1307, 0.2
        %v1334 = vmul.f32 %v1308, 0.2
        %v1335 = vmul.f32 %v1309, 0.2
        %v1336 = vmul.f32 %v1310, 0.2
        %v1337 = vmul.f32 %v1311, 0.2
        %v1338 = vmul.f32 %v1312, 0.2
        %v1339 = vmul.f32 %v1313, 0.2
        %v1340 = vmul.f32 %v1314, 0.2
        %v1341 = vmul.f32 %v1315, 0.2
        %v1342 = vmul.f32 %v1316, 0.2
        %v1343 = vsel %vm1317, %v1304, %v1330
        %v1344 = vsel %vm1318, %v1305, %v1331
        %v1345 = vsel %vm1319, %v1306, %v1332
        %v1346 = vsel %vm1320, %v1307, %v1333
        %v1347 = vsel %vm1321, %v1308, %v1334
        %v1348 = vsel %vm1322, %v1309, %v1335
        %v1349 = vsel %vm1323, %v1310, %v1336
        %v1350 = vsel %vm1324, %v1311, %v1337
        %v1351 = vsel %vm1325, %v1312, %v1338
        %v1352 = vsel %vm1326, %v1313, %v1339
        %v1353 = vsel %vm1327, %v1314, %v1340
        %v1354 = vsel %vm1328, %v1315, %v1341
        %v1355 = vsel %vm1329, %v1316, %v1342
        %v1356 = vpack.c.bf16 %v1343, %v1343
        %v1357 = vpack.c.bf16 %v1344, %v1344
        %v1358 = vpack.c.bf16 %v1345, %v1345
        %v1359 = vpack.c.bf16 %v1346, %v1346
        %v1360 = vpack.c.bf16 %v1347, %v1347
        %v1361 = vpack.c.bf16 %v1348, %v1348
        %v1362 = vpack.c.bf16 %v1349, %v1349
        %v1363 = vpack.c.bf16 %v1350, %v1350
        %v1364 = vpack.c.bf16 %v1351, %v1351
        %v1365 = vpack.c.bf16 %v1352, %v1352
        %v1366 = vpack.c.bf16 %v1353, %v1353
        %v1367 = vpack.c.bf16 %v1354, %v1354
        %v1368 = vpack.c.bf16 %v1355, %v1355
        %1369 = vst [vmem:[%s5] sm:$0xf] %v1356
        %1370 = vst [vmem:[%s5 + $0x4] sm:$0xf] %v1357
        %1371 = vst [vmem:[%s5 + $0x8] sm:$0xf] %v1358
        %1372 = vst [vmem:[%s5 + $0xc] sm:$0xf] %v1359
        %1373 = vst [vmem:[%s5 + $0x10] sm:$0xf] %v1360
        %1374 = vst [vmem:[%s5 + $0x14] sm:$0xf] %v1361
        %1375 = vst [vmem:[%s5 + $0x18] sm:$0xf] %v1362
        %1376 = vst [vmem:[%s5 + $0x1c] sm:$0xf] %v1363
        %1377 = vst [vmem:[%s5 + $0x20] sm:$0xf] %v1364
        %1378 = vst [vmem:[%s5 + $0x24] sm:$0xf] %v1365
        %1379 = vst [vmem:[%s5 + $0x28] sm:$0xf] %v1366
        %1380 = vst [vmem:[%s5 + $0x2c] sm:$0xf] %v1367
        %1381 = vst [vmem:[%s5 + $0x30] sm:$0xf] %v1368
      $region48: #{nlayer_discriminator_forward.6} parent=39 // pred_fallthru
        _
      // Predicated region
      $region49: #{nlayer_discriminator_forward.6} parent=39 // pred_check
        %p1382 = pneg %p144
      $region50: #{nlayer_discriminator_forward.6} parent=39 // pred_check_branch
        %1384 = sbr.rel (%p1382) target = $region52
      $region51: #{nlayer_discriminator_forward.6} parent=39 // pred_region
        _
      $region52: #{nlayer_discriminator_forward.6} parent=39 // pred_fallthru
        _
      // Predicated region
      $region53: #{nlayer_discriminator_forward.6} parent=39 // pred_check
        %p1385 = pneg %p144
      $region54: #{nlayer_discriminator_forward.6} parent=39 // pred_check_branch
        %1387 = sbr.rel (%p1385) target = $region56
      $region55: #{nlayer_discriminator_forward.6} parent=39 // pred_region
        _
      $region56: #{nlayer_discriminator_forward.6} parent=39 // pred_fallthru
        _
    $region40: #{nlayer_discriminator_forward.6} parent=5 // pred_fallthru
      _
    %p1388 = scmp.le.s32.totalorder 2, %s11
    // Predicated region
    $region57: #{nlayer_discriminator_forward.6} parent=5 // pred_check
      %p1389 = pneg %p1388
    $region58: #{nlayer_discriminator_forward.6} parent=5 // pred_check_branch
      %1391 = sbr.rel (%p1389) target = $region60
    $region59: #{nlayer_discriminator_forward.6} parent=5 // pred_region
      %s1392 = ssub.s32 %s11, 2
    $region60: #{nlayer_discriminator_forward.6} parent=5 // pred_fallthru
      _
  $region6: #{nlayer_discriminator_forward.6} parent=0 // loop_footer
    %s15 = sadd.s32 1, %s11
  $region7: #{nlayer_discriminator_forward.6} parent=0 // loop_footer_branch
    %10 = sbr.rel target = $region3
  $region8: #{nlayer_discriminator_forward.6} parent=0 // loop_exit
    _

// kernel: nlayer_discriminator_forward.7
$region0: #{nlayer_discriminator_forward.7}
  #allocation0 [shape = 'u32[]', space=smem, size = 0x4, offset = 0x4, fixed_abs, tag = 'smem constant byte address 0x4 - core index']
  #allocation1 [shape = 'u32[72,128]{1,0:T(1,128)}', space=vmem, size = 0x9000, scoped, tag = 'internal scratch']
  #allocation2 [shape = 'f32[56,128]{1,0:T(8,128)}', space=vmem, size = 0x7000, scoped, tag = 'scratch operand']
  %s0 = inlined_call_operand.vmem [shape: bf16[4,2,57,128], index: 0, kind: input, shape index: {}]
  %s1 = inlined_call_operand.vmem [shape: bf16[4,4,128,128], index: 1, kind: input, shape index: {}]
  %s2 = inlined_call_operand.vmem [shape: f32[1,128], index: 2, kind: input, shape index: {}]
  %s3 = inlined_call_operand.vmem [shape: f32[1,128], index: 3, kind: input, shape index: {}]
  %s4 = inlined_call_operand.vmem [shape: f32[56,1], index: 4, kind: input, shape index: {}]
  %s5 = inlined_call_operand.vmem [shape: bf16[56,128], index: 5, kind: output, shape index: {}]
  %s6 = sld [smem:[#allocation0]]
  $region61: #{nlayer_discriminator_forward.7} parent=0
    _
  %s8 = ssub.s32 1, %s6
  %s9 = scalar_select 0, %s8, %s6
  loop: start=0, step=1, limit=6
  $region2: #{nlayer_discriminator_forward.7} parent=0 // loop_pre_header
    _
  $region3: #{nlayer_discriminator_forward.7} parent=0 // loop_header
    %s11 = sphi 0, %s15
    %p12 = scmp.ge.s32.totalorder %s11, 6
    %s21 = sphi 0, %s23
    %s24 = sphi 0, %s21
    %s25 = sphi 0, %s24
    %s41 = sphi 0, %s25
    %s47 = sphi 0, %s49
    %s50 = sphi 0, %s47
    %s51 = sphi 0, %s50
    %s67 = sphi 0, %s51
    %s71 = sphi 0, %s71
    %s73 = sphi 0, %s71
    %s74 = sphi 0, %s73
    %s88 = sphi 0, %s74
    %s92 = sphi 0, %s92
    %s94 = sphi 0, %s92
    %s95 = sphi 0, %s94
    %s109 = sphi 0, %s95
    %s113 = sphi 0, %s113
    %s115 = sphi 0, %s113
    %s116 = sphi 0, %s115
    %s130 = sphi 0, %s116
    %s134 = sphi 0, %s134
    %s136 = sphi 0, %s134
    %s137 = sphi 0, %s136
    %s151 = sphi 0, %s137
  $region4: #{nlayer_discriminator_forward.7} parent=0 // loop_header_branch
    %14 = sbr.rel (%p12) target = $region8
  $region5: #{nlayer_discriminator_forward.7} parent=0 // loop_body
    %s16 = ssub.s32 %s11, 1
    %s17 = ssub.s32 %s11, 2
    %s18 = sadd.s32 %s11, 1
    %s19 = ssub.s32 %s11, %s18
    %p20 = scmp.eq.s32.totalorder %s19, 0
    %s22 = sadd.s32 %s21, 1
    %s23 = scalar_select %p20, %s21, %s22
    %p26 = pneg %p20
    %p27 = scmp.eq.s32.totalorder %s11, 3
    %p28 = por %p26, %p27
    %p29 = scmp.ne.s32.totalorder %s21, %s24
    %p30 = scmp.eq.s32.totalorder %s11, 0
    %p31 = por %p29, %p30
    %p32 = scmp.ne.s32.totalorder %s21, %s24
    %p33 = scmp.eq.s32.totalorder %s16, 3
    %p34 = por %p32, %p33
    %p35 = scmp.ne.s32.totalorder %s24, %s25
    %p36 = scmp.eq.s32.totalorder %s16, 0
    %p37 = por %p35, %p36
    %p38 = scmp.ne.s32.totalorder %s24, %s25
    %p39 = scmp.eq.s32.totalorder %s17, 3
    %p40 = por %p38, %p39
    %p42 = scmp.ne.s32.totalorder %s25, %s41
    %p43 = scmp.eq.s32.totalorder %s17, 0
    %p44 = por %p42, %p43
    %s45 = ssub.s32 %s11, %s18
    %p46 = scmp.eq.s32.totalorder %s45, 0
    %s48 = sadd.s32 %s47, 1
    %s49 = scalar_select %p46, %s47, %s48
    %p52 = pneg %p46
    %p53 = scmp.eq.s32.totalorder %s11, 3
    %p54 = por %p52, %p53
    %p55 = scmp.ne.s32.totalorder %s47, %s50
    %p56 = scmp.eq.s32.totalorder %s11, 0
    %p57 = por %p55, %p56
    %p58 = scmp.ne.s32.totalorder %s47, %s50
    %p59 = scmp.eq.s32.totalorder %s16, 3
    %p60 = por %p58, %p59
    %p61 = scmp.ne.s32.totalorder %s50, %s51
    %p62 = scmp.eq.s32.totalorder %s16, 0
    %p63 = por %p61, %p62
    %p64 = scmp.ne.s32.totalorder %s50, %s51
    %p65 = scmp.eq.s32.totalorder %s17, 3
    %p66 = por %p64, %p65
    %p68 = scmp.ne.s32.totalorder %s51, %s67
    %p69 = scmp.eq.s32.totalorder %s17, 0
    %p70 = por %p68, %p69
    %s72 = sadd.s32 %s71, 1
    %p75 = scmp.eq.s32.totalorder %s11, 3
    %p76 = scmp.ne.s32.totalorder %s71, %s73
    %p77 = scmp.eq.s32.totalorder %s11, 0
    %p78 = por %p76, %p77
    %p79 = scmp.ne.s32.totalorder %s71, %s73
    %p80 = scmp.eq.s32.totalorder %s16, 3
    %p81 = por %p79, %p80
    %p82 = scmp.ne.s32.totalorder %s73, %s74
    %p83 = scmp.eq.s32.totalorder %s16, 0
    %p84 = por %p82, %p83
    %p85 = scmp.ne.s32.totalorder %s73, %s74
    %p86 = scmp.eq.s32.totalorder %s17, 3
    %p87 = por %p85, %p86
    %p89 = scmp.ne.s32.totalorder %s74, %s88
    %p90 = scmp.eq.s32.totalorder %s17, 0
    %p91 = por %p89, %p90
    %s93 = sadd.s32 %s92, 1
    %p96 = scmp.eq.s32.totalorder %s11, 3
    %p97 = scmp.ne.s32.totalorder %s92, %s94
    %p98 = scmp.eq.s32.totalorder %s11, 0
    %p99 = por %p97, %p98
    %p100 = scmp.ne.s32.totalorder %s92, %s94
    %p101 = scmp.eq.s32.totalorder %s16, 3
    %p102 = por %p100, %p101
    %p103 = scmp.ne.s32.totalorder %s94, %s95
    %p104 = scmp.eq.s32.totalorder %s16, 0
    %p105 = por %p103, %p104
    %p106 = scmp.ne.s32.totalorder %s94, %s95
    %p107 = scmp.eq.s32.totalorder %s17, 3
    %p108 = por %p106, %p107
    %p110 = scmp.ne.s32.totalorder %s95, %s109
    %p111 = scmp.eq.s32.totalorder %s17, 0
    %p112 = por %p110, %p111
    %s114 = sadd.s32 %s113, 1
    %p117 = scmp.eq.s32.totalorder %s11, 3
    %p118 = scmp.ne.s32.totalorder %s113, %s115
    %p119 = scmp.eq.s32.totalorder %s11, 0
    %p120 = por %p118, %p119
    %p121 = scmp.ne.s32.totalorder %s113, %s115
    %p122 = scmp.eq.s32.totalorder %s16, 3
    %p123 = por %p121, %p122
    %p124 = scmp.ne.s32.totalorder %s115, %s116
    %p125 = scmp.eq.s32.totalorder %s16, 0
    %p126 = por %p124, %p125
    %p127 = scmp.ne.s32.totalorder %s115, %s116
    %p128 = scmp.eq.s32.totalorder %s17, 3
    %p129 = por %p127, %p128
    %p131 = scmp.ne.s32.totalorder %s116, %s130
    %p132 = scmp.eq.s32.totalorder %s17, 0
    %p133 = por %p131, %p132
    %s135 = sadd.s32 %s134, 1
    %p138 = scmp.eq.s32.totalorder %s11, 3
    %p139 = scmp.ne.s32.totalorder %s134, %s136
    %p140 = scmp.eq.s32.totalorder %s11, 0
    %p141 = por %p139, %p140
    %p142 = scmp.ne.s32.totalorder %s134, %s136
    %p143 = scmp.eq.s32.totalorder %s16, 3
    %p144 = por %p142, %p143
    %p145 = scmp.ne.s32.totalorder %s136, %s137
    %p146 = scmp.eq.s32.totalorder %s16, 0
    %p147 = por %p145, %p146
    %p148 = scmp.ne.s32.totalorder %s136, %s137
    %p149 = scmp.eq.s32.totalorder %s17, 3
    %p150 = por %p148, %p149
    %p152 = scmp.ne.s32.totalorder %s137, %s151
    %p153 = scmp.eq.s32.totalorder %s17, 0
    %p154 = por %p152, %p153
    %p155 = scmp.le.s32.totalorder 1, %s11
    %p156 = scmp.lt.s32.totalorder %s11, 5
    %p157 = pnand %p155, %p156
    %p158 = pneg %p157
    // Predicated region
    $region9: #{nlayer_discriminator_forward.7} parent=5 // pred_check
      _
    $region10: #{nlayer_discriminator_forward.7} parent=5 // pred_check_branch
      %160 = sbr.rel (%p157) target = $region12
    $region11: #{nlayer_discriminator_forward.7} parent=5 // pred_region
      %s161 = ssub.s32 %s11, 1
      // Predicated region
      $region13: #{nlayer_discriminator_forward.7} parent=11 // pred_check
        %p162 = pneg %p84
      $region14: #{nlayer_discriminator_forward.7} parent=11 // pred_check_branch
        %164 = sbr.rel (%p162) target = $region16
      $region15: #{nlayer_discriminator_forward.7} parent=11 // pred_region
        _
      $region16: #{nlayer_discriminator_forward.7} parent=11 // pred_fallthru
        _
      // Predicated region
      $region17: #{nlayer_discriminator_forward.7} parent=11 // pred_check
        %p165 = pneg %p105
      $region18: #{nlayer_discriminator_forward.7} parent=11 // pred_check_branch
        %167 = sbr.rel (%p165) target = $region20
      $region19: #{nlayer_discriminator_forward.7} parent=11 // pred_region
        _
      $region20: #{nlayer_discriminator_forward.7} parent=11 // pred_fallthru
        _
      // Predicated region
      $region21: #{nlayer_discriminator_forward.7} parent=11 // pred_check
        %p168 = pneg %p126
      $region22: #{nlayer_discriminator_forward.7} parent=11 // pred_check_branch
        %170 = sbr.rel (%p168) target = $region24
      $region23: #{nlayer_discriminator_forward.7} parent=11 // pred_region
        _
      $region24: #{nlayer_discriminator_forward.7} parent=11 // pred_fallthru
        _
    $region12: #{nlayer_discriminator_forward.7} parent=5 // pred_fallthru
      _
    %p171 = scmp.lt.s32.totalorder %s11, 4
    // Predicated region
    $region25: #{nlayer_discriminator_forward.7} parent=5 // pred_check
      %p172 = pneg %p171
    $region26: #{nlayer_discriminator_forward.7} parent=5 // pred_check_branch
      %174 = sbr.rel (%p172) target = $region28
    $region27: #{nlayer_discriminator_forward.7} parent=5 // pred_region
      // Predicated region
      $region29: #{nlayer_discriminator_forward.7} parent=27 // pred_check
        %p175 = pneg %p31
      $region30: #{nlayer_discriminator_forward.7} parent=27 // pred_check_branch
        %177 = sbr.rel (%p175) target = $region32
      $region31: #{nlayer_discriminator_forward.7} parent=27 // pred_region
        %p178 = scmp.lt.s32.totalorder %s11, 3
        %s179 = scalar_select %p178, %s11, 3
        %s180 = smul.addr %s179, 16
        %s181 = smul.addr %s180, 4
        %s182 = scalar_lea.vmem %s0, %s181
      $region32: #{nlayer_discriminator_forward.7} parent=27 // pred_fallthru
        _
      // Predicated region
      $region33: #{nlayer_discriminator_forward.7} parent=27 // pred_check
        %p183 = pneg %p57
      $region34: #{nlayer_discriminator_forward.7} parent=27 // pred_check_branch
        %185 = sbr.rel (%p183) target = $region36
      $region35: #{nlayer_discriminator_forward.7} parent=27 // pred_region
        %p186 = scmp.lt.s32.totalorder %s11, 3
        %s187 = scalar_select %p186, %s11, 3
        %s188 = smul.addr %s187, 64
        %s189 = smul.addr %s188, 4
        %s190 = scalar_lea.vmem %s1, %s189
      $region36: #{nlayer_discriminator_forward.7} parent=27 // pred_fallthru
        _
    $region28: #{nlayer_discriminator_forward.7} parent=5 // pred_fallthru
      _
    %p191 = scmp.le.s32.totalorder 1, %s11
    %p192 = scmp.lt.s32.totalorder %s11, 5
    %p193 = pnand %p191, %p192
    %p194 = pneg %p193
    // Predicated region
    $region37: #{nlayer_discriminator_forward.7} parent=5 // pred_check
      _
    $region38: #{nlayer_discriminator_forward.7} parent=5 // pred_check_branch
      %196 = sbr.rel (%p193) target = $region40
    $region39: #{nlayer_discriminator_forward.7} parent=5 // pred_region
      %s197 = ssub.s32 %s11, 1
      %p198 = scmp.lt.s32.totalorder %s16, 3
      %s199 = scalar_select %p198, %s16, 3
      %s200 = smul.addr %s199, 16
      %s201 = smul.addr %s200, 4
      %s202 = scalar_lea.vmem %s0, %s201
      %p203 = pneg %p37
      %p204 = pneg %p34
      %p205 = scmp.lt.s32.totalorder %s16, 3
      %s206 = scalar_select %p205, %s16, 3
      %s207 = smul.addr %s206, 64
      %s208 = smul.addr %s207, 4
      %s209 = scalar_lea.vmem %s1, %s208
      %p210 = pneg %p63
      %p211 = pneg %p60
      %p212 = pneg %p84
      %p213 = pneg %p81
      %p214 = pneg %p105
      %p215 = pneg %p102
      %p216 = pneg %p126
      %p217 = pneg %p123
      %p218 = pneg %p147
      %p219 = pneg %p144
      %p220 = scmp.lt.s32.totalorder %s16, 3
      %s221 = scalar_select %p220, %s16, 3
      %s222 = smul.addr %s221, 16
      %s223 = smul.addr %s222, 4
      %s224 = scalar_lea.vmem %s0, %s223
      %p225 = scmp.lt.s32.totalorder %s16, 3
      %s226 = scalar_select %p225, %s16, 3
      %s227 = smul.addr %s226, 64
      %s228 = smul.addr %s227, 4
      %s229 = scalar_lea.vmem %s1, %s228
      %p230 = scmp.eq.s32.totalorder %s16, 0
      // Predicated region
      $region41: #{nlayer_discriminator_forward.7} parent=39 // pred_check
        %p231 = pneg %p230
      $region42: #{nlayer_discriminator_forward.7} parent=39 // pred_check_branch
        %233 = sbr.rel (%p231) target = $region44
      $region43: #{nlayer_discriminator_forward.7} parent=39 // pred_region
        %234 = vst [vmem:[#allocation2] sm:$0xff] 0.0
        %235 = vst [vmem:[#allocation2 + $0x8] sm:$0xff] 0.0
        %236 = vst [vmem:[#allocation2 + $0x10] sm:$0xff] 0.0
        %237 = vst [vmem:[#allocation2 + $0x18] sm:$0xff] 0.0
        %238 = vst [vmem:[#allocation2 + $0x20] sm:$0xff] 0.0
        %239 = vst [vmem:[#allocation2 + $0x28] sm:$0xff] 0.0
        %240 = vst [vmem:[#allocation2 + $0x30] sm:$0xff] 0.0
      $region44: #{nlayer_discriminator_forward.7} parent=39 // pred_fallthru
        _
      %v241 = vld [vmem:[%s224] sm:$0xf]
      %v242 = vld [vmem:[%s224 + $0x4] sm:$0xf]
      %v243 = vld [vmem:[%s224 + $0x8] sm:$0xf]
      %v244 = vld [vmem:[%s224 + $0xc] sm:$0xf]
      %v245 = vld [vmem:[%s224 + $0x10] sm:$0xf]
      %v246 = vld [vmem:[%s224 + $0x14] sm:$0xf]
      %v247 = vld [vmem:[%s224 + $0x18] sm:$0xf]
      %v248 = vld [vmem:[%s224 + $0x1c] sm:$0x1]
      %v249 = vld [vmem:[#allocation2] sm:$0xff]
      %v250 = vld [vmem:[#allocation2 + $0x8] sm:$0xff]
      %v251 = vld [vmem:[#allocation2 + $0x10] sm:$0xff]
      %v252 = vld [vmem:[#allocation2 + $0x18] sm:$0xff]
      %v253 = vld [vmem:[#allocation2 + $0x20] sm:$0xff]
      %v254 = vld [vmem:[#allocation2 + $0x28] sm:$0xff]
      %v255 = vld [vmem:[#allocation2 + $0x30] sm:$0xff]
      %v256 = vld [vmem:[%s229] sm:$0xf]
      %v257 = vld [vmem:[%s229 + $0x4] sm:$0xf]
      %v258 = vld [vmem:[%s229 + $0x8] sm:$0xf]
      %v259 = vld [vmem:[%s229 + $0xc] sm:$0xf]
      %v260 = vld [vmem:[%s229 + $0x10] sm:$0xf]
      %v261 = vld [vmem:[%s229 + $0x14] sm:$0xf]
      %v262 = vld [vmem:[%s229 + $0x18] sm:$0xf]
      %v263 = vld [vmem:[%s229 + $0x1c] sm:$0xf]
      %v264 = vld [vmem:[%s229 + $0x20] sm:$0xf]
      %v265 = vld [vmem:[%s229 + $0x24] sm:$0xf]
      %v266 = vld [vmem:[%s229 + $0x28] sm:$0xf]
      %v267 = vld [vmem:[%s229 + $0x2c] sm:$0xf]
      %v268 = vld [vmem:[%s229 + $0x30] sm:$0xf]
      %v269 = vld [vmem:[%s229 + $0x34] sm:$0xf]
      %v270 = vld [vmem:[%s229 + $0x38] sm:$0xf]
      %v271 = vld [vmem:[%s229 + $0x3c] sm:$0xf]
      %v279 = vunpack.c.l.b16 %v241
      %v280 = vunpack.c.l.b16 %v242
      %v281 = vunpack.c.l.b16 %v243
      %v282 = vunpack.c.l.b16 %v244
      %v283 = vunpack.c.l.b16 %v245
      %v284 = vunpack.c.l.b16 %v246
      %v285 = vunpack.c.l.b16 %v247
      %v286 = vpack.c.b16 %v280, %v279
      %v287 = vpack.c.b16 %v282, %v281
      %v288 = vpack.c.b16 %v284, %v283
      %v289 = vpack.c.b16 %v285, %v285
      %v310 = vunpack.c.l.b16 %v256
      %v311 = vunpack.c.l.b16 %v257
      %v312 = vunpack.c.l.b16 %v258
      %v313 = vunpack.c.l.b16 %v259
      %v314 = vunpack.c.l.b16 %v260
      %v315 = vunpack.c.l.b16 %v261
      %v316 = vunpack.c.l.b16 %v262
      %v317 = vunpack.c.l.b16 %v263
      %v318 = vunpack.c.l.b16 %v264
      %v319 = vunpack.c.l.b16 %v265
      %v320 = vunpack.c.l.b16 %v266
      %v321 = vunpack.c.l.b16 %v267
      %v322 = vunpack.c.l.b16 %v268
      %v323 = vunpack.c.l.b16 %v269
      %v324 = vunpack.c.l.b16 %v270
      %v325 = vunpack.c.l.b16 %v271
      %v326 = vpack.c.b16 %v311, %v310
      %v327 = vpack.c.b16 %v313, %v312
      %v328 = vpack.c.b16 %v315, %v314
      %v329 = vpack.c.b16 %v317, %v316
      %v330 = vpack.c.b16 %v319, %v318
      %v331 = vpack.c.b16 %v321, %v320
      %v332 = vpack.c.b16 %v323, %v322
      %v333 = vpack.c.b16 %v325, %v324
      %342 = vmatpush.bf16.msra.mxu0 %v333
      %343 = vmatpush.bf16.msra.mxu0 %v332
      %344 = vmatpush.bf16.msra.mxu0 %v331
      %345 = vmatpush.bf16.msra.mxu0 %v330
      %346 = vmatpush.bf16.msra.mxu0 %v329
      %347 = vmatpush.bf16.msra.mxu0 %v328
      %348 = vmatpush.bf16.msra.mxu0 %v327
      %349 = vmatpush.bf16.msra.mxu0 %v326
      %350 = vmatmul.bf16.gmra.mxu0 %v286
      %v351 = vpop.f32.mrf.mxu0
      %v352 = vadd.f32 0.0, %v351
      %v353 = vpop.f32.mrf.mxu0
      %v354 = vadd.f32 0.0, %v353
      %355 = vmatmul.bf16.gmra.mxu0 %v287
      %v356 = vpop.f32.mrf.mxu0
      %v357 = vadd.f32 0.0, %v356
      %v358 = vpop.f32.mrf.mxu0
      %v359 = vadd.f32 0.0, %v358
      %360 = vmatmul.bf16.gmra.mxu0 %v288
      %v361 = vpop.f32.mrf.mxu0
      %v362 = vadd.f32 0.0, %v361
      %v363 = vpop.f32.mrf.mxu0
      %v364 = vadd.f32 0.0, %v363
      %365 = vmatmul.bf16.gmra.mxu0 %v289
      %v366 = vpop.f32.mrf.mxu0
      %v367 = vadd.f32 0.0, %v366
      %v368 = vpop.f32.mrf.mxu0
      %369 = vdwg.mxu0
      %v370 = vadd.f32 %v249, %v352
      %v371 = vadd.f32 %v250, %v354
      %v372 = vadd.f32 %v251, %v357
      %v373 = vadd.f32 %v252, %v359
      %v374 = vadd.f32 %v253, %v362
      %v375 = vadd.f32 %v254, %v364
      %v376 = vadd.f32 %v255, %v367
      %377 = vst [vmem:[#allocation2] sm:$0xff] %v370
      %378 = vst [vmem:[#allocation2 + $0x8] sm:$0xff] %v371
      %379 = vst [vmem:[#allocation2 + $0x10] sm:$0xff] %v372
      %380 = vst [vmem:[#allocation2 + $0x18] sm:$0xff] %v373
      %381 = vst [vmem:[#allocation2 + $0x20] sm:$0xff] %v374
      %382 = vst [vmem:[#allocation2 + $0x28] sm:$0xff] %v375
      %383 = vst [vmem:[#allocation2 + $0x30] sm:$0xff] %v376
      %v384 = vld [vmem:[#allocation2] sm:$0xff]
      %v385 = vld [vmem:[#allocation2 + $0x8] sm:$0xff]
      %v386 = vld [vmem:[#allocation2 + $0x10] sm:$0xff]
      %v387 = vld [vmem:[#allocation2 + $0x18] sm:$0xff]
      %v388 = vld [vmem:[#allocation2 + $0x20] sm:$0xff]
      %v389 = vld [vmem:[#allocation2 + $0x28] sm:$0xff]
      %v390 = vld [vmem:[#allocation2 + $0x30] sm:$0xff]
      %s391 = scalar_lea.vmem %s229, 128
      %v392 = vld [vmem:[%s391] sm:$0xf]
      %v393 = vld [vmem:[%s391 + $0x4] sm:$0xf]
      %v394 = vld [vmem:[%s391 + $0x8] sm:$0xf]
      %v395 = vld [vmem:[%s391 + $0xc] sm:$0xf]
      %v396 = vld [vmem:[%s391 + $0x10] sm:$0xf]
      %v397 = vld [vmem:[%s391 + $0x14] sm:$0xf]
      %v398 = vld [vmem:[%s391 + $0x18] sm:$0xf]
      %v399 = vld [vmem:[%s391 + $0x1c] sm:$0xf]
      %v400 = vld [vmem:[%s391 + $0x20] sm:$0xf]
      %v401 = vld [vmem:[%s391 + $0x24] sm:$0xf]
      %v402 = vld [vmem:[%s391 + $0x28] sm:$0xf]
      %v403 = vld [vmem:[%s391 + $0x2c] sm:$0xf]
      %v404 = vld [vmem:[%s391 + $0x30] sm:$0xf]
      %v405 = vld [vmem:[%s391 + $0x34] sm:$0xf]
      %v406 = vld [vmem:[%s391 + $0x38] sm:$0xf]
      %v407 = vld [vmem:[%s391 + $0x3c] sm:$0xf]
      %v409 = vunpack.c.l.b16 %v248
      %v410 = vpack.c.b16 %v409, %v285
      %vm411 = vsmask.f32 7424
      %v413 = vshrl.u32 %v286, 16
      %v415 = vshll.u32 %v286, 16
      %v417 = vrot.slane %v415, 1
      %v418 = vor.u32 %v413, %v417
      %v420 = vshll.u32 %v287, 16
      %v422 = vrot.slane %v420, 1
      %v423 = vsel %vm411, %v418, %v422
      %v424 = vshrl.u32 %v287, 16
      %v426 = vor.u32 %v424, %v422
      %v428 = vshll.u32 %v288, 16
      %v430 = vrot.slane %v428, 1
      %v431 = vsel %vm411, %v426, %v430
      %v432 = vshrl.u32 %v288, 16
      %v434 = vor.u32 %v432, %v430
      %v436 = vshll.u32 %v410, 16
      %v438 = vrot.slane %v436, 1
      %v439 = vsel %vm411, %v434, %v438
      %v440 = vshrl.u32 %v410, 16
      %v442 = vor.u32 %v440, %v438
      %v463 = vunpack.c.l.b16 %v392
      %v464 = vunpack.c.l.b16 %v393
      %v465 = vunpack.c.l.b16 %v394
      %v466 = vunpack.c.l.b16 %v395
      %v467 = vunpack.c.l.b16 %v396
      %v468 = vunpack.c.l.b16 %v397
      %v469 = vunpack.c.l.b16 %v398
      %v470 = vunpack.c.l.b16 %v399
      %v471 = vunpack.c.l.b16 %v400
      %v472 = vunpack.c.l.b16 %v401
      %v473 = vunpack.c.l.b16 %v402
      %v474 = vunpack.c.l.b16 %v403
      %v475 = vunpack.c.l.b16 %v404
      %v476 = vunpack.c.l.b16 %v405
      %v477 = vunpack.c.l.b16 %v406
      %v478 = vunpack.c.l.b16 %v407
      %v479 = vpack.c.b16 %v464, %v463
      %v480 = vpack.c.b16 %v466, %v465
      %v481 = vpack.c.b16 %v468, %v467
      %v482 = vpack.c.b16 %v470, %v469
      %v483 = vpack.c.b16 %v472, %v471
      %v484 = vpack.c.b16 %v474, %v473
      %v485 = vpack.c.b16 %v476, %v475
      %v486 = vpack.c.b16 %v478, %v477
      %495 = vmatpush.bf16.msra.mxu0 %v486
      %496 = vmatpush.bf16.msra.mxu0 %v485
      %497 = vmatpush.bf16.msra.mxu0 %v484
      %498 = vmatpush.bf16.msra.mxu0 %v483
      %499 = vmatpush.bf16.msra.mxu0 %v482
      %500 = vmatpush.bf16.msra.mxu0 %v481
      %501 = vmatpush.bf16.msra.mxu0 %v480
      %502 = vmatpush.bf16.msra.mxu0 %v479
      %503 = vmatmul.bf16.gmra.mxu0 %v423
      %v504 = vpop.f32.mrf.mxu0
      %v505 = vadd.f32 0.0, %v504
      %v506 = vpop.f32.mrf.mxu0
      %v507 = vadd.f32 0.0, %v506
      %508 = vmatmul.bf16.gmra.mxu0 %v431
      %v509 = vpop.f32.mrf.mxu0
      %v510 = vadd.f32 0.0, %v509
      %v511 = vpop.f32.mrf.mxu0
      %v512 = vadd.f32 0.0, %v511
      %513 = vmatmul.bf16.gmra.mxu0 %v439
      %v514 = vpop.f32.mrf.mxu0
      %v515 = vadd.f32 0.0, %v514
      %v516 = vpop.f32.mrf.mxu0
      %v517 = vadd.f32 0.0, %v516
      %518 = vmatmul.bf16.gmra.mxu0 %v442
      %v519 = vpop.f32.mrf.mxu0
      %v520 = vadd.f32 0.0, %v519
      %v521 = vpop.f32.mrf.mxu0
      %522 = vdwg.mxu0
      %v523 = vadd.f32 %v384, %v505
      %v524 = vadd.f32 %v385, %v507
      %v525 = vadd.f32 %v386, %v510
      %v526 = vadd.f32 %v387, %v512
      %v527 = vadd.f32 %v388, %v515
      %v528 = vadd.f32 %v389, %v517
      %v529 = vadd.f32 %v390, %v520
      %530 = vst [vmem:[#allocation2] sm:$0xff] %v523
      %531 = vst [vmem:[#allocation2 + $0x8] sm:$0xff] %v524
      %532 = vst [vmem:[#allocation2 + $0x10] sm:$0xff] %v525
      %533 = vst [vmem:[#allocation2 + $0x18] sm:$0xff] %v526
      %534 = vst [vmem:[#allocation2 + $0x20] sm:$0xff] %v527
      %535 = vst [vmem:[#allocation2 + $0x28] sm:$0xff] %v528
      %536 = vst [vmem:[#allocation2 + $0x30] sm:$0xff] %v529
      %s537 = scalar_lea.vmem %s224, 32
      %v538 = vld [vmem:[%s537] sm:$0xf]
      %v539 = vld [vmem:[%s537 + $0x4] sm:$0xf]
      %v540 = vld [vmem:[%s537 + $0x8] sm:$0xf]
      %v541 = vld [vmem:[%s537 + $0xc] sm:$0xf]
      %v542 = vld [vmem:[%s537 + $0x10] sm:$0xf]
      %v543 = vld [vmem:[%s537 + $0x14] sm:$0xf]
      %v544 = vld [vmem:[%s537 + $0x18] sm:$0xf]
      %v545 = vld [vmem:[%s537 + $0x1c] sm:$0x1]
      %v546 = vld [vmem:[#allocation2] sm:$0xff]
      %v547 = vld [vmem:[#allocation2 + $0x8] sm:$0xff]
      %v548 = vld [vmem:[#allocation2 + $0x10] sm:$0xff]
      %v549 = vld [vmem:[#allocation2 + $0x18] sm:$0xff]
      %v550 = vld [vmem:[#allocation2 + $0x20] sm:$0xff]
      %v551 = vld [vmem:[#allocation2 + $0x28] sm:$0xff]
      %v552 = vld [vmem:[#allocation2 + $0x30] sm:$0xff]
      %s553 = scalar_lea.vmem %s229, 64
      %v554 = vld [vmem:[%s553] sm:$0xf]
      %v555 = vld [vmem:[%s553 + $0x4] sm:$0xf]
      %v556 = vld [vmem:[%s553 + $0x8] sm:$0xf]
      %v557 = vld [vmem:[%s553 + $0xc] sm:$0xf]
      %v558 = vld [vmem:[%s553 + $0x10] sm:$0xf]
      %v559 = vld [vmem:[%s553 + $0x14] sm:$0xf]
      %v560 = vld [vmem:[%s553 + $0x18] sm:$0xf]
      %v561 = vld [vmem:[%s553 + $0x1c] sm:$0xf]
      %v562 = vld [vmem:[%s553 + $0x20] sm:$0xf]
      %v563 = vld [vmem:[%s553 + $0x24] sm:$0xf]
      %v564 = vld [vmem:[%s553 + $0x28] sm:$0xf]
      %v565 = vld [vmem:[%s553 + $0x2c] sm:$0xf]
      %v566 = vld [vmem:[%s553 + $0x30] sm:$0xf]
      %v567 = vld [vmem:[%s553 + $0x34] sm:$0xf]
      %v568 = vld [vmem:[%s553 + $0x38] sm:$0xf]
      %v569 = vld [vmem:[%s553 + $0x3c] sm:$0xf]
      %v577 = vunpack.c.l.b16 %v538
      %v578 = vunpack.c.l.b16 %v539
      %v579 = vunpack.c.l.b16 %v540
      %v580 = vunpack.c.l.b16 %v541
      %v581 = vunpack.c.l.b16 %v542
      %v582 = vunpack.c.l.b16 %v543
      %v583 = vunpack.c.l.b16 %v544
      %v584 = vpack.c.b16 %v578, %v577
      %v585 = vpack.c.b16 %v580, %v579
      %v586 = vpack.c.b16 %v582, %v581
      %v587 = vpack.c.b16 %v583, %v583
      %v608 = vunpack.c.l.b16 %v554
      %v609 = vunpack.c.l.b16 %v555
      %v610 = vunpack.c.l.b16 %v556
      %v611 = vunpack.c.l.b16 %v557
      %v612 = vunpack.c.l.b16 %v558
      %v613 = vunpack.c.l.b16 %v559
      %v614 = vunpack.c.l.b16 %v560
      %v615 = vunpack.c.l.b16 %v561
      %v616 = vunpack.c.l.b16 %v562
      %v617 = vunpack.c.l.b16 %v563
      %v618 = vunpack.c.l.b16 %v564
      %v619 = vunpack.c.l.b16 %v565
      %v620 = vunpack.c.l.b16 %v566
      %v621 = vunpack.c.l.b16 %v567
      %v622 = vunpack.c.l.b16 %v568
      %v623 = vunpack.c.l.b16 %v569
      %v624 = vpack.c.b16 %v609, %v608
      %v625 = vpack.c.b16 %v611, %v610
      %v626 = vpack.c.b16 %v613, %v612
      %v627 = vpack.c.b16 %v615, %v614
      %v628 = vpack.c.b16 %v617, %v616
      %v629 = vpack.c.b16 %v619, %v618
      %v630 = vpack.c.b16 %v621, %v620
      %v631 = vpack.c.b16 %v623, %v622
      %640 = vmatpush.bf16.msra.mxu0 %v631
      %641 = vmatpush.bf16.msra.mxu0 %v630
      %642 = vmatpush.bf16.msra.mxu0 %v629
      %643 = vmatpush.bf16.msra.mxu0 %v628
      %644 = vmatpush.bf16.msra.mxu0 %v627
      %645 = vmatpush.bf16.msra.mxu0 %v626
      %646 = vmatpush.bf16.msra.mxu0 %v625
      %647 = vmatpush.bf16.msra.mxu0 %v624
      %648 = vmatmul.bf16.gmra.mxu0 %v584
      %v649 = vpop.f32.mrf.mxu0
      %v650 = vadd.f32 0.0, %v649
      %v651 = vpop.f32.mrf.mxu0
      %v652 = vadd.f32 0.0, %v651
      %653 = vmatmul.bf16.gmra.mxu0 %v585
      %v654 = vpop.f32.mrf.mxu0
      %v655 = vadd.f32 0.0, %v654
      %v656 = vpop.f32.mrf.mxu0
      %v657 = vadd.f32 0.0, %v656
      %658 = vmatmul.bf16.gmra.mxu0 %v586
      %v659 = vpop.f32.mrf.mxu0
      %v660 = vadd.f32 0.0, %v659
      %v661 = vpop.f32.mrf.mxu0
      %v662 = vadd.f32 0.0, %v661
      %663 = vmatmul.bf16.gmra.mxu0 %v587
      %v664 = vpop.f32.mrf.mxu0
      %v665 = vadd.f32 0.0, %v664
      %v666 = vpop.f32.mrf.mxu0
      %667 = vdwg.mxu0
      %v668 = vadd.f32 %v546, %v650
      %v669 = vadd.f32 %v547, %v652
      %v670 = vadd.f32 %v548, %v655
      %v671 = vadd.f32 %v549, %v657
      %v672 = vadd.f32 %v550, %v660
      %v673 = vadd.f32 %v551, %v662
      %v674 = vadd.f32 %v552, %v665
      %675 = vst [vmem:[#allocation2] sm:$0xff] %v668
      %676 = vst [vmem:[#allocation2 + $0x8] sm:$0xff] %v669
      %677 = vst [vmem:[#allocation2 + $0x10] sm:$0xff] %v670
      %678 = vst [vmem:[#allocation2 + $0x18] sm:$0xff] %v671
      %679 = vst [vmem:[#allocation2 + $0x20] sm:$0xff] %v672
      %680 = vst [vmem:[#allocation2 + $0x28] sm:$0xff] %v673
      %681 = vst [vmem:[#allocation2 + $0x30] sm:$0xff] %v674
      %v682 = vld [vmem:[#allocation2] sm:$0xff]
      %v683 = vld [vmem:[#allocation2 + $0x8] sm:$0xff]
      %v684 = vld [vmem:[#allocation2 + $0x10] sm:$0xff]
      %v685 = vld [vmem:[#allocation2 + $0x18] sm:$0xff]
      %v686 = vld [vmem:[#allocation2 + $0x20] sm:$0xff]
      %v687 = vld [vmem:[#allocation2 + $0x28] sm:$0xff]
      %v688 = vld [vmem:[#allocation2 + $0x30] sm:$0xff]
      %s689 = scalar_lea.vmem %s229, 192
      %v690 = vld [vmem:[%s689] sm:$0xf]
      %v691 = vld [vmem:[%s689 + $0x4] sm:$0xf]
      %v692 = vld [vmem:[%s689 + $0x8] sm:$0xf]
      %v693 = vld [vmem:[%s689 + $0xc] sm:$0xf]
      %v694 = vld [vmem:[%s689 + $0x10] sm:$0xf]
      %v695 = vld [vmem:[%s689 + $0x14] sm:$0xf]
      %v696 = vld [vmem:[%s689 + $0x18] sm:$0xf]
      %v697 = vld [vmem:[%s689 + $0x1c] sm:$0xf]
      %v698 = vld [vmem:[%s689 + $0x20] sm:$0xf]
      %v699 = vld [vmem:[%s689 + $0x24] sm:$0xf]
      %v700 = vld [vmem:[%s689 + $0x28] sm:$0xf]
      %v701 = vld [vmem:[%s689 + $0x2c] sm:$0xf]
      %v702 = vld [vmem:[%s689 + $0x30] sm:$0xf]
      %v703 = vld [vmem:[%s689 + $0x34] sm:$0xf]
      %v704 = vld [vmem:[%s689 + $0x38] sm:$0xf]
      %v705 = vld [vmem:[%s689 + $0x3c] sm:$0xf]
      %v707 = vunpack.c.l.b16 %v545
      %v708 = vpack.c.b16 %v707, %v583
      %v710 = vshrl.u32 %v584, 16
      %v712 = vshll.u32 %v584, 16
      %v714 = vrot.slane %v712, 1
      %v715 = vor.u32 %v710, %v714
      %v717 = vshll.u32 %v585, 16
      %v719 = vrot.slane %v717, 1
      %v720 = vsel %vm411, %v715, %v719
      %v721 = vshrl.u32 %v585, 16
      %v723 = vor.u32 %v721, %v719
      %v725 = vshll.u32 %v586, 16
      %v727 = vrot.slane %v725, 1
      %v728 = vsel %vm411, %v723, %v727
      %v729 = vshrl.u32 %v586, 16
      %v731 = vor.u32 %v729, %v727
      %v733 = vshll.u32 %v708, 16
      %v735 = vrot.slane %v733, 1
      %v736 = vsel %vm411, %v731, %v735
      %v737 = vshrl.u32 %v708, 16
      %v739 = vor.u32 %v737, %v735
      %v760 = vunpack.c.l.b16 %v690
      %v761 = vunpack.c.l.b16 %v691
      %v762 = vunpack.c.l.b16 %v692
      %v763 = vunpack.c.l.b16 %v693
      %v764 = vunpack.c.l.b16 %v694
      %v765 = vunpack.c.l.b16 %v695
      %v766 = vunpack.c.l.b16 %v696
      %v767 = vunpack.c.l.b16 %v697
      %v768 = vunpack.c.l.b16 %v698
      %v769 = vunpack.c.l.b16 %v699
      %v770 = vunpack.c.l.b16 %v700
      %v771 = vunpack.c.l.b16 %v701
      %v772 = vunpack.c.l.b16 %v702
      %v773 = vunpack.c.l.b16 %v703
      %v774 = vunpack.c.l.b16 %v704
      %v775 = vunpack.c.l.b16 %v705
      %v776 = vpack.c.b16 %v761, %v760
      %v777 = vpack.c.b16 %v763, %v762
      %v778 = vpack.c.b16 %v765, %v764
      %v779 = vpack.c.b16 %v767, %v766
      %v780 = vpack.c.b16 %v769, %v768
      %v781 = vpack.c.b16 %v771, %v770
      %v782 = vpack.c.b16 %v773, %v772
      %v783 = vpack.c.b16 %v775, %v774
      %792 = vmatpush.bf16.msra.mxu0 %v783
      %793 = vmatpush.bf16.msra.mxu0 %v782
      %794 = vmatpush.bf16.msra.mxu0 %v781
      %795 = vmatpush.bf16.msra.mxu0 %v780
      %796 = vmatpush.bf16.msra.mxu0 %v779
      %797 = vmatpush.bf16.msra.mxu0 %v778
      %798 = vmatpush.bf16.msra.mxu0 %v777
      %799 = vmatpush.bf16.msra.mxu0 %v776
      %800 = vmatmul.bf16.gmra.mxu0 %v720
      %v801 = vpop.f32.mrf.mxu0
      %v802 = vadd.f32 0.0, %v801
      %v803 = vpop.f32.mrf.mxu0
      %v804 = vadd.f32 0.0, %v803
      %805 = vmatmul.bf16.gmra.mxu0 %v728
      %v806 = vpop.f32.mrf.mxu0
      %v807 = vadd.f32 0.0, %v806
      %v808 = vpop.f32.mrf.mxu0
      %v809 = vadd.f32 0.0, %v808
      %810 = vmatmul.bf16.gmra.mxu0 %v736
      %v811 = vpop.f32.mrf.mxu0
      %v812 = vadd.f32 0.0, %v811
      %v813 = vpop.f32.mrf.mxu0
      %v814 = vadd.f32 0.0, %v813
      %815 = vmatmul.bf16.gmra.mxu0 %v739
      %v816 = vpop.f32.mrf.mxu0
      %v817 = vadd.f32 0.0, %v816
      %v818 = vpop.f32.mrf.mxu0
      %819 = vdwg.mxu0
      %v820 = vadd.f32 %v682, %v802
      %v821 = vadd.f32 %v683, %v804
      %v822 = vadd.f32 %v684, %v807
      %v823 = vadd.f32 %v685, %v809
      %v824 = vadd.f32 %v686, %v812
      %v825 = vadd.f32 %v687, %v814
      %v826 = vadd.f32 %v688, %v817
      %827 = vst [vmem:[#allocation2] sm:$0xff] %v820
      %828 = vst [vmem:[#allocation2 + $0x8] sm:$0xff] %v821
      %829 = vst [vmem:[#allocation2 + $0x10] sm:$0xff] %v822
      %830 = vst [vmem:[#allocation2 + $0x18] sm:$0xff] %v823
      %831 = vst [vmem:[#allocation2 + $0x20] sm:$0xff] %v824
      %832 = vst [vmem:[#allocation2 + $0x28] sm:$0xff] %v825
      %833 = vst [vmem:[#allocation2 + $0x30] sm:$0xff] %v826
      %p834 = scmp.eq.s32.totalorder %s16, 3
      // Predicated region
      $region45: #{nlayer_discriminator_forward.7} parent=39 // pred_check
        %p835 = pneg %p834
      $region46: #{nlayer_discriminator_forward.7} parent=39 // pred_check_branch
        %837 = sbr.rel (%p835) target = $region48
      $region47: #{nlayer_discriminator_forward.7} parent=39 // pred_region
        %v838 = vld [vmem:[#allocation2] sm:$0xff]
        %v839 = vld [vmem:[#allocation2 + $0x8] sm:$0xff]
        %v840 = vld [vmem:[#allocation2 + $0x10] sm:$0xff]
        %v841 = vld [vmem:[#allocation2 + $0x18] sm:$0xff]
        %v842 = vld [vmem:[#allocation2 + $0x20] sm:$0xff]
        %v843 = vld [vmem:[#allocation2 + $0x28] sm:$0xff]
        %v844 = vld [vmem:[#allocation2 + $0x30] sm:$0xff]
        %v845 = vld [vmem:[%s4] sm:$0xff]
        %v846 = vld [vmem:[%s4 + $0x8] sm:$0xff]
        %v847 = vld [vmem:[%s4 + $0x10] sm:$0xff]
        %v848 = vld [vmem:[%s4 + $0x18] sm:$0xff]
        %v849 = vld [vmem:[%s4 + $0x20] sm:$0xff]
        %v850 = vld [vmem:[%s4 + $0x28] sm:$0xff]
        %v851 = vld [vmem:[%s4 + $0x30] sm:$0xff]
        %853 = vset.pattern.permute.xlu0 0
        %854 = vperm.xlu0 %853, %v845
        %v855 = vpop.permute.xlu0 %854
        %858 = vset.pattern.permute.xlu0 0
        %859 = vperm.xlu0 %858, %v846
        %v860 = vpop.permute.xlu0 %859
        %863 = vset.pattern.permute.xlu0 0
        %864 = vperm.xlu0 %863, %v847
        %v865 = vpop.permute.xlu0 %864
        %868 = vset.pattern.permute.xlu0 0
        %869 = vperm.xlu0 %868, %v848
        %v870 = vpop.permute.xlu0 %869
        %873 = vset.pattern.permute.xlu0 0
        %874 = vperm.xlu0 %873, %v849
        %v875 = vpop.permute.xlu0 %874
        %878 = vset.pattern.permute.xlu0 0
        %879 = vperm.xlu0 %878, %v850
        %v880 = vpop.permute.xlu0 %879
        %883 = vset.pattern.permute.xlu0 0
        %884 = vperm.xlu0 %883, %v851
        %v885 = vpop.permute.xlu0 %884
        %v887 = vmul.f32 %v838, %v855
        %v888 = vmul.f32 %v839, %v860
        %v889 = vmul.f32 %v840, %v865
        %v890 = vmul.f32 %v841, %v870
        %v891 = vmul.f32 %v842, %v875
        %v892 = vmul.f32 %v843, %v880
        %v893 = vmul.f32 %v844, %v885
        %v894 = vadd.f32 %v887, %v888
        %v895 = vadd.f32 %v894, %v889
        %v896 = vadd.f32 %v895, %v890
        %v897 = vadd.f32 %v896, %v891
        %v898 = vadd.f32 %v897, %v892
        %v899 = vadd.f32 %v898, %v893
        %v900 = vrot.slane %v899, 4
        %v901 = vadd.f32 %v899, %v900
        %v902 = vrot.slane %v901, 2
        %v903 = vadd.f32 %v901, %v902
        %v904 = vrot.slane %v903, 1
        %v905 = vadd.f32 %v903, %v904
        %v906 = vmul.f32 %v905, 0.055555556
        %v907 = vsub.f32 %v838, %v906
        %v908 = vsub.f32 %v839, %v906
        %v909 = vsub.f32 %v840, %v906
        %v910 = vsub.f32 %v841, %v906
        %v911 = vsub.f32 %v842, %v906
        %v912 = vsub.f32 %v843, %v906
        %v913 = vsub.f32 %v844, %v906
        %v914 = vmul.f32 %v907, %v907
        %v915 = vmul.f32 %v908, %v908
        %v916 = vmul.f32 %v909, %v909
        %v917 = vmul.f32 %v910, %v910
        %v918 = vmul.f32 %v911, %v911
        %v919 = vmul.f32 %v912, %v912
        %v920 = vmul.f32 %v913, %v913
        %v921 = vmul.f32 %v914, %v855
        %v922 = vmul.f32 %v915, %v860
        %v923 = vmul.f32 %v916, %v865
        %v924 = vmul.f32 %v917, %v870
        %v925 = vmul.f32 %v918, %v875
        %v926 = vmul.f32 %v919, %v880
        %v927 = vmul.f32 %v920, %v885
        %v928 = vadd.f32 %v921, %v922
        %v929 = vadd.f32 %v928, %v923
        %v930 = vadd.f32 %v929, %v924
        %v931 = vadd.f32 %v930, %v925
        %v932 = vadd.f32 %v931, %v926
        %v933 = vadd.f32 %v932, %v927
        %v934 = vrot.slane %v933, 4
        %v935 = vadd.f32 %v933, %v934
        %v936 = vrot.slane %v935, 2
        %v937 = vadd.f32 %v935, %v936
        %v938 = vrot.slane %v937, 1
        %v939 = vadd.f32 %v937, %v938
        %v940 = vmul.f32 %v939, 0.055555556
        %v941 = vadd.f32 %v940, 1e-05
        %v942 = vrsqrt.pop %v941
        %v943 = vmul.f32 %v942, %v941
        %v944 = vmul.f32 %v943, %v942
        %v945 = vmul.f32 0.5, %v944
        %v946 = vsub.f32 1.5, %v945
        %v947 = vmul.f32 %v942, %v946
        %vm948 = vweird.f32 %v941
        %vm949 = vweird.f32 %v942
        %vm950 = vmor %vm948, %vm949
        %v951 = vsel %vm950, %v942, %v947
        %v952 = vmul.f32 %v907, %v951
        %v953 = vmul.f32 %v908, %v951
        %v954 = vmul.f32 %v909, %v951
        %v955 = vmul.f32 %v910, %v951
        %v956 = vmul.f32 %v911, %v951
        %v957 = vmul.f32 %v912, %v951
        %v958 = vmul.f32 %v913, %v951
        %v959 = vld [vmem:[%s2] sm:$0x1]
        %v961 = vperm.slane %v959, 0
        %v963 = vmul.f32 %v952, %v961
        %v964 = vmul.f32 %v953, %v961
        %v965 = vmul.f32 %v954, %v961
        %v966 = vmul.f32 %v955, %v961
        %v967 = vmul.f32 %v956, %v961
        %v968 = vmul.f32 %v957, %v961
        %v969 = vmul.f32 %v958, %v961
        %v970 = vld [vmem:[%s3] sm:$0x1]
        %v972 = vperm.slane %v970, 0
        %v974 = vadd.f32 %v963, %v972
        %v975 = vadd.f32 %v964, %v972
        %v976 = vadd.f32 %v965, %v972
        %v977 = vadd.f32 %v966, %v972
        %v978 = vadd.f32 %v967, %v972
        %v979 = vadd.f32 %v968, %v972
        %v980 = vadd.f32 %v969, %v972
        %vm981 = vcmp.gt.f32.partialorder %v974, 0.0
        %vm982 = vcmp.gt.f32.partialorder %v975, 0.0
        %vm983 = vcmp.gt.f32.partialorder %v976, 0.0
        %vm984 = vcmp.gt.f32.partialorder %v977, 0.0
        %vm985 = vcmp.gt.f32.partialorder %v978, 0.0
        %vm986 = vcmp.gt.f32.partialorder %v979, 0.0
        %vm987 = vcmp.gt.f32.partialorder %v980, 0.0
        %v988 = vmul.f32 %v974, 0.2
        %v989 = vmul.f32 %v975, 0.2
        %v990 = vmul.f32 %v976, 0.2
        %v991 = vmul.f32 %v977, 0.2
        %v992 = vmul.f32 %v978, 0.2
        %v993 = vmul.f32 %v979, 0.2
        %v994 = vmul.f32 %v980, 0.2
        %v995 = vsel %vm981, %v974, %v988
        %v996 = vsel %vm982, %v975, %v989
        %v997 = vsel %vm983, %v976, %v990
        %v998 = vsel %vm984, %v977, %v991
        %v999 = vsel %vm985, %v978, %v992
        %v1000 = vsel %vm986, %v979, %v993
        %v1001 = vsel %vm987, %v980, %v994
        %v1002 = vpack.c.bf16 %v995, %v995
        %v1003 = vpack.c.bf16 %v996, %v996
        %v1004 = vpack.c.bf16 %v997, %v997
        %v1005 = vpack.c.bf16 %v998, %v998
        %v1006 = vpack.c.bf16 %v999, %v999
        %v1007 = vpack.c.bf16 %v1000, %v1000
        %v1008 = vpack.c.bf16 %v1001, %v1001
        %1009 = vst [vmem:[%s5] sm:$0xf] %v1002
        %1010 = vst [vmem:[%s5 + $0x4] sm:$0xf] %v1003
        %1011 = vst [vmem:[%s5 + $0x8] sm:$0xf] %v1004
        %1012 = vst [vmem:[%s5 + $0xc] sm:$0xf] %v1005
        %1013 = vst [vmem:[%s5 + $0x10] sm:$0xf] %v1006
        %1014 = vst [vmem:[%s5 + $0x14] sm:$0xf] %v1007
        %1015 = vst [vmem:[%s5 + $0x18] sm:$0xf] %v1008
      $region48: #{nlayer_discriminator_forward.7} parent=39 // pred_fallthru
        _
      // Predicated region
      $region49: #{nlayer_discriminator_forward.7} parent=39 // pred_check
        %p1016 = pneg %p144
      $region50: #{nlayer_discriminator_forward.7} parent=39 // pred_check_branch
        %1018 = sbr.rel (%p1016) target = $region52
      $region51: #{nlayer_discriminator_forward.7} parent=39 // pred_region
        _
      $region52: #{nlayer_discriminator_forward.7} parent=39 // pred_fallthru
        _
      // Predicated region
      $region53: #{nlayer_discriminator_forward.7} parent=39 // pred_check
        %p1019 = pneg %p144
      $region54: #{nlayer_discriminator_forward.7} parent=39 // pred_check_branch
        %1021 = sbr.rel (%p1019) target = $region56
      $region55: #{nlayer_discriminator_forward.7} parent=39 // pred_region
        _
      $region56: #{nlayer_discriminator_forward.7} parent=39 // pred_fallthru
        _
    $region40: #{nlayer_discriminator_forward.7} parent=5 // pred_fallthru
      _
    %p1022 = scmp.le.s32.totalorder 2, %s11
    // Predicated region
    $region57: #{nlayer_discriminator_forward.7} parent=5 // pred_check
      %p1023 = pneg %p1022
    $region58: #{nlayer_discriminator_forward.7} parent=5 // pred_check_branch
      %1025 = sbr.rel (%p1023) target = $region60
    $region59: #{nlayer_discriminator_forward.7} parent=5 // pred_region
      %s1026 = ssub.s32 %s11, 2
    $region60: #{nlayer_discriminator_forward.7} parent=5 // pred_fallthru
      _
  $region6: #{nlayer_discriminator_forward.7} parent=0 // loop_footer
    %s15 = sadd.s32 1, %s11
  $region7: #{nlayer_discriminator_forward.7} parent=0 // loop_footer_branch
    %10 = sbr.rel target = $region3
  $region8: #{nlayer_discriminator_forward.7} parent=0 // loop_exit
    _

// kernel: nlayer_discriminator_forward.8
$region0: #{nlayer_discriminator_forward.8}
  #allocation0 [shape = 'u32[]', space=smem, size = 0x4, offset = 0x4, fixed_abs, tag = 'smem constant byte address 0x4 - core index']
  #allocation1 [shape = 'u32[72,128]{1,0:T(1,128)}', space=vmem, size = 0x9000, scoped, tag = 'internal scratch']
  #allocation2 [shape = 'f32[104,128]{1,0:T(8,128)}', space=vmem, size = 0xd000, scoped, tag = 'scratch operand']
  %s0 = inlined_call_operand.vmem [shape: bf16[4,1,107,128], index: 0, kind: input, shape index: {}]
  %s1 = inlined_call_operand.vmem [shape: bf16[4,4,128,128], index: 1, kind: input, shape index: {}]
  %s2 = inlined_call_operand.vmem [shape: f32[1,128], index: 2, kind: input, shape index: {}]
  %s3 = inlined_call_operand.vmem [shape: f32[1,128], index: 3, kind: input, shape index: {}]
  %s4 = inlined_call_operand.vmem [shape: f32[104,1], index: 4, kind: input, shape index: {}]
  %s5 = inlined_call_operand.vmem [shape: bf16[104,128], index: 5, kind: output, shape index: {}]
  %s6 = sld [smem:[#allocation0]]
  $region61: #{nlayer_discriminator_forward.8} parent=0
    _
  %s8 = ssub.s32 1, %s6
  %s9 = scalar_select 0, %s8, %s6
  loop: start=0, step=1, limit=6
  $region2: #{nlayer_discriminator_forward.8} parent=0 // loop_pre_header
    _
  $region3: #{nlayer_discriminator_forward.8} parent=0 // loop_header
    %s11 = sphi 0, %s15
    %p12 = scmp.ge.s32.totalorder %s11, 6
    %s21 = sphi 0, %s23
    %s24 = sphi 0, %s21
    %s25 = sphi 0, %s24
    %s41 = sphi 0, %s25
    %s47 = sphi 0, %s49
    %s50 = sphi 0, %s47
    %s51 = sphi 0, %s50
    %s67 = sphi 0, %s51
    %s71 = sphi 0, %s71
    %s73 = sphi 0, %s71
    %s74 = sphi 0, %s73
    %s88 = sphi 0, %s74
    %s92 = sphi 0, %s92
    %s94 = sphi 0, %s92
    %s95 = sphi 0, %s94
    %s109 = sphi 0, %s95
    %s113 = sphi 0, %s113
    %s115 = sphi 0, %s113
    %s116 = sphi 0, %s115
    %s130 = sphi 0, %s116
    %s134 = sphi 0, %s134
    %s136 = sphi 0, %s134
    %s137 = sphi 0, %s136
    %s151 = sphi 0, %s137
  $region4: #{nlayer_discriminator_forward.8} parent=0 // loop_header_branch
    %14 = sbr.rel (%p12) target = $region8
  $region5: #{nlayer_discriminator_forward.8} parent=0 // loop_body
    %s16 = ssub.s32 %s11, 1
    %s17 = ssub.s32 %s11, 2
    %s18 = sadd.s32 %s11, 1
    %s19 = ssub.s32 %s11, %s18
    %p20 = scmp.eq.s32.totalorder %s19, 0
    %s22 = sadd.s32 %s21, 1
    %s23 = scalar_select %p20, %s21, %s22
    %p26 = pneg %p20
    %p27 = scmp.eq.s32.totalorder %s11, 3
    %p28 = por %p26, %p27
    %p29 = scmp.ne.s32.totalorder %s21, %s24
    %p30 = scmp.eq.s32.totalorder %s11, 0
    %p31 = por %p29, %p30
    %p32 = scmp.ne.s32.totalorder %s21, %s24
    %p33 = scmp.eq.s32.totalorder %s16, 3
    %p34 = por %p32, %p33
    %p35 = scmp.ne.s32.totalorder %s24, %s25
    %p36 = scmp.eq.s32.totalorder %s16, 0
    %p37 = por %p35, %p36
    %p38 = scmp.ne.s32.totalorder %s24, %s25
    %p39 = scmp.eq.s32.totalorder %s17, 3
    %p40 = por %p38, %p39
    %p42 = scmp.ne.s32.totalorder %s25, %s41
    %p43 = scmp.eq.s32.totalorder %s17, 0
    %p44 = por %p42, %p43
    %s45 = ssub.s32 %s11, %s18
    %p46 = scmp.eq.s32.totalorder %s45, 0
    %s48 = sadd.s32 %s47, 1
    %s49 = scalar_select %p46, %s47, %s48
    %p52 = pneg %p46
    %p53 = scmp.eq.s32.totalorder %s11, 3
    %p54 = por %p52, %p53
    %p55 = scmp.ne.s32.totalorder %s47, %s50
    %p56 = scmp.eq.s32.totalorder %s11, 0
    %p57 = por %p55, %p56
    %p58 = scmp.ne.s32.totalorder %s47, %s50
    %p59 = scmp.eq.s32.totalorder %s16, 3
    %p60 = por %p58, %p59
    %p61 = scmp.ne.s32.totalorder %s50, %s51
    %p62 = scmp.eq.s32.totalorder %s16, 0
    %p63 = por %p61, %p62
    %p64 = scmp.ne.s32.totalorder %s50, %s51
    %p65 = scmp.eq.s32.totalorder %s17, 3
    %p66 = por %p64, %p65
    %p68 = scmp.ne.s32.totalorder %s51, %s67
    %p69 = scmp.eq.s32.totalorder %s17, 0
    %p70 = por %p68, %p69
    %s72 = sadd.s32 %s71, 1
    %p75 = scmp.eq.s32.totalorder %s11, 3
    %p76 = scmp.ne.s32.totalorder %s71, %s73
    %p77 = scmp.eq.s32.totalorder %s11, 0
    %p78 = por %p76, %p77
    %p79 = scmp.ne.s32.totalorder %s71, %s73
    %p80 = scmp.eq.s32.totalorder %s16, 3
    %p81 = por %p79, %p80
    %p82 = scmp.ne.s32.totalorder %s73, %s74
    %p83 = scmp.eq.s32.totalorder %s16, 0
    %p84 = por %p82, %p83
    %p85 = scmp.ne.s32.totalorder %s73, %s74
    %p86 = scmp.eq.s32.totalorder %s17, 3
    %p87 = por %p85, %p86
    %p89 = scmp.ne.s32.totalorder %s74, %s88
    %p90 = scmp.eq.s32.totalorder %s17, 0
    %p91 = por %p89, %p90
    %s93 = sadd.s32 %s92, 1
    %p96 = scmp.eq.s32.totalorder %s11, 3
    %p97 = scmp.ne.s32.totalorder %s92, %s94
    %p98 = scmp.eq.s32.totalorder %s11, 0
    %p99 = por %p97, %p98
    %p100 = scmp.ne.s32.totalorder %s92, %s94
    %p101 = scmp.eq.s32.totalorder %s16, 3
    %p102 = por %p100, %p101
    %p103 = scmp.ne.s32.totalorder %s94, %s95
    %p104 = scmp.eq.s32.totalorder %s16, 0
    %p105 = por %p103, %p104
    %p106 = scmp.ne.s32.totalorder %s94, %s95
    %p107 = scmp.eq.s32.totalorder %s17, 3
    %p108 = por %p106, %p107
    %p110 = scmp.ne.s32.totalorder %s95, %s109
    %p111 = scmp.eq.s32.totalorder %s17, 0
    %p112 = por %p110, %p111
    %s114 = sadd.s32 %s113, 1
    %p117 = scmp.eq.s32.totalorder %s11, 3
    %p118 = scmp.ne.s32.totalorder %s113, %s115
    %p119 = scmp.eq.s32.totalorder %s11, 0
    %p120 = por %p118, %p119
    %p121 = scmp.ne.s32.totalorder %s113, %s115
    %p122 = scmp.eq.s32.totalorder %s16, 3
    %p123 = por %p121, %p122
    %p124 = scmp.ne.s32.totalorder %s115, %s116
    %p125 = scmp.eq.s32.totalorder %s16, 0
    %p126 = por %p124, %p125
    %p127 = scmp.ne.s32.totalorder %s115, %s116
    %p128 = scmp.eq.s32.totalorder %s17, 3
    %p129 = por %p127, %p128
    %p131 = scmp.ne.s32.totalorder %s116, %s130
    %p132 = scmp.eq.s32.totalorder %s17, 0
    %p133 = por %p131, %p132
    %s135 = sadd.s32 %s134, 1
    %p138 = scmp.eq.s32.totalorder %s11, 3
    %p139 = scmp.ne.s32.totalorder %s134, %s136
    %p140 = scmp.eq.s32.totalorder %s11, 0
    %p141 = por %p139, %p140
    %p142 = scmp.ne.s32.totalorder %s134, %s136
    %p143 = scmp.eq.s32.totalorder %s16, 3
    %p144 = por %p142, %p143
    %p145 = scmp.ne.s32.totalorder %s136, %s137
    %p146 = scmp.eq.s32.totalorder %s16, 0
    %p147 = por %p145, %p146
    %p148 = scmp.ne.s32.totalorder %s136, %s137
    %p149 = scmp.eq.s32.totalorder %s17, 3
    %p150 = por %p148, %p149
    %p152 = scmp.ne.s32.totalorder %s137, %s151
    %p153 = scmp.eq.s32.totalorder %s17, 0
    %p154 = por %p152, %p153
    %p155 = scmp.le.s32.totalorder 1, %s11
    %p156 = scmp.lt.s32.totalorder %s11, 5
    %p157 = pnand %p155, %p156
    %p158 = pneg %p157
    // Predicated region
    $region9: #{nlayer_discriminator_forward.8} parent=5 // pred_check
      _
    $region10: #{nlayer_discriminator_forward.8} parent=5 // pred_check_branch
      %160 = sbr.rel (%p157) target = $region12
    $region11: #{nlayer_discriminator_forward.8} parent=5 // pred_region
      %s161 = ssub.s32 %s11, 1
      // Predicated region
      $region13: #{nlayer_discriminator_forward.8} parent=11 // pred_check
        %p162 = pneg %p84
      $region14: #{nlayer_discriminator_forward.8} parent=11 // pred_check_branch
        %164 = sbr.rel (%p162) target = $region16
      $region15: #{nlayer_discriminator_forward.8} parent=11 // pred_region
        _
      $region16: #{nlayer_discriminator_forward.8} parent=11 // pred_fallthru
        _
      // Predicated region
      $region17: #{nlayer_discriminator_forward.8} parent=11 // pred_check
        %p165 = pneg %p105
      $region18: #{nlayer_discriminator_forward.8} parent=11 // pred_check_branch
        %167 = sbr.rel (%p165) target = $region20
      $region19: #{nlayer_discriminator_forward.8} parent=11 // pred_region
        _
      $region20: #{nlayer_discriminator_forward.8} parent=11 // pred_fallthru
        _
      // Predicated region
      $region21: #{nlayer_discriminator_forward.8} parent=11 // pred_check
        %p168 = pneg %p126
      $region22: #{nlayer_discriminator_forward.8} parent=11 // pred_check_branch
        %170 = sbr.rel (%p168) target = $region24
      $region23: #{nlayer_discriminator_forward.8} parent=11 // pred_region
        _
      $region24: #{nlayer_discriminator_forward.8} parent=11 // pred_fallthru
        _
    $region12: #{nlayer_discriminator_forward.8} parent=5 // pred_fallthru
      _
    %p171 = scmp.lt.s32.totalorder %s11, 4
    // Predicated region
    $region25: #{nlayer_discriminator_forward.8} parent=5 // pred_check
      %p172 = pneg %p171
    $region26: #{nlayer_discriminator_forward.8} parent=5 // pred_check_branch
      %174 = sbr.rel (%p172) target = $region28
    $region27: #{nlayer_discriminator_forward.8} parent=5 // pred_region
      // Predicated region
      $region29: #{nlayer_discriminator_forward.8} parent=27 // pred_check
        %p175 = pneg %p31
      $region30: #{nlayer_discriminator_forward.8} parent=27 // pred_check_branch
        %177 = sbr.rel (%p175) target = $region32
      $region31: #{nlayer_discriminator_forward.8} parent=27 // pred_region
        %p178 = scmp.lt.s32.totalorder %s11, 3
        %s179 = scalar_select %p178, %s11, 3
        %s180 = smul.addr %s179, 14
        %s181 = smul.addr %s180, 4
        %s182 = scalar_lea.vmem %s0, %s181
      $region32: #{nlayer_discriminator_forward.8} parent=27 // pred_fallthru
        _
      // Predicated region
      $region33: #{nlayer_discriminator_forward.8} parent=27 // pred_check
        %p183 = pneg %p57
      $region34: #{nlayer_discriminator_forward.8} parent=27 // pred_check_branch
        %185 = sbr.rel (%p183) target = $region36
      $region35: #{nlayer_discriminator_forward.8} parent=27 // pred_region
        %p186 = scmp.lt.s32.totalorder %s11, 3
        %s187 = scalar_select %p186, %s11, 3
        %s188 = smul.addr %s187, 64
        %s189 = smul.addr %s188, 4
        %s190 = scalar_lea.vmem %s1, %s189
      $region36: #{nlayer_discriminator_forward.8} parent=27 // pred_fallthru
        _
    $region28: #{nlayer_discriminator_forward.8} parent=5 // pred_fallthru
      _
    %p191 = scmp.le.s32.totalorder 1, %s11
    %p192 = scmp.lt.s32.totalorder %s11, 5
    %p193 = pnand %p191, %p192
    %p194 = pneg %p193
    // Predicated region
    $region37: #{nlayer_discriminator_forward.8} parent=5 // pred_check
      _
    $region38: #{nlayer_discriminator_forward.8} parent=5 // pred_check_branch
      %196 = sbr.rel (%p193) target = $region40
    $region39: #{nlayer_discriminator_forward.8} parent=5 // pred_region
      %s197 = ssub.s32 %s11, 1
      %p198 = scmp.lt.s32.totalorder %s16, 3
      %s199 = scalar_select %p198, %s16, 3
      %s200 = smul.addr %s199, 14
      %s201 = smul.addr %s200, 4
      %s202 = scalar_lea.vmem %s0, %s201
      %p203 = pneg %p37
      %p204 = pneg %p34
      %p205 = scmp.lt.s32.totalorder %s16, 3
      %s206 = scalar_select %p205, %s16, 3
      %s207 = smul.addr %s206, 64
      %s208 = smul.addr %s207, 4
      %s209 = scalar_lea.vmem %s1, %s208
      %p210 = pneg %p63
      %p211 = pneg %p60
      %p212 = pneg %p84
      %p213 = pneg %p81
      %p214 = pneg %p105
      %p215 = pneg %p102
      %p216 = pneg %p126
      %p217 = pneg %p123
      %p218 = pneg %p147
      %p219 = pneg %p144
      %p220 = scmp.lt.s32.totalorder %s16, 3
      %s221 = scalar_select %p220, %s16, 3
      %s222 = smul.addr %s221, 14
      %s223 = smul.addr %s222, 4
      %s224 = scalar_lea.vmem %s0, %s223
      %p225 = scmp.lt.s32.totalorder %s16, 3
      %s226 = scalar_select %p225, %s16, 3
      %s227 = smul.addr %s226, 64
      %s228 = smul.addr %s227, 4
      %s229 = scalar_lea.vmem %s1, %s228
      %p230 = scmp.eq.s32.totalorder %s16, 0
      // Predicated region
      $region41: #{nlayer_discriminator_forward.8} parent=39 // pred_check
        %p231 = pneg %p230
      $region42: #{nlayer_discriminator_forward.8} parent=39 // pred_check_branch
        %233 = sbr.rel (%p231) target = $region44
      $region43: #{nlayer_discriminator_forward.8} parent=39 // pred_region
        %234 = vst [vmem:[#allocation2] sm:$0xff] 0.0
        %235 = vst [vmem:[#allocation2 + $0x8] sm:$0xff] 0.0
        %236 = vst [vmem:[#allocation2 + $0x10] sm:$0xff] 0.0
        %237 = vst [vmem:[#allocation2 + $0x18] sm:$0xff] 0.0
        %238 = vst [vmem:[#allocation2 + $0x20] sm:$0xff] 0.0
        %239 = vst [vmem:[#allocation2 + $0x28] sm:$0xff] 0.0
        %240 = vst [vmem:[#allocation2 + $0x30] sm:$0xff] 0.0
        %241 = vst [vmem:[#allocation2 + $0x38] sm:$0xff] 0.0
        %242 = vst [vmem:[#allocation2 + $0x40] sm:$0xff] 0.0
        %243 = vst [vmem:[#allocation2 + $0x48] sm:$0xff] 0.0
        %244 = vst [vmem:[#allocation2 + $0x50] sm:$0xff] 0.0
        %245 = vst [vmem:[#allocation2 + $0x58] sm:$0xff] 0.0
        %246 = vst [vmem:[#allocation2 + $0x60] sm:$0xff] 0.0
      $region44: #{nlayer_discriminator_forward.8} parent=39 // pred_fallthru
        _
      %v247 = vld [vmem:[%s224] sm:$0xf]
      %v248 = vld [vmem:[%s224 + $0x4] sm:$0xf]
      %v249 = vld [vmem:[%s224 + $0x8] sm:$0xf]
      %v250 = vld [vmem:[%s224 + $0xc] sm:$0xf]
      %v251 = vld [vmem:[%s224 + $0x10] sm:$0xf]
      %v252 = vld [vmem:[%s224 + $0x14] sm:$0xf]
      %v253 = vld [vmem:[%s224 + $0x18] sm:$0xf]
      %v254 = vld [vmem:[%s224 + $0x1c] sm:$0xf]
      %v255 = vld [vmem:[%s224 + $0x20] sm:$0xf]
      %v256 = vld [vmem:[%s224 + $0x24] sm:$0xf]
      %v257 = vld [vmem:[%s224 + $0x28] sm:$0xf]
      %v258 = vld [vmem:[%s224 + $0x2c] sm:$0xf]
      %v259 = vld [vmem:[%s224 + $0x30] sm:$0xf]
      %v260 = vld [vmem:[%s224 + $0x34] sm:$0x3]
      %v261 = vld [vmem:[#allocation2] sm:$0xff]
      %v262 = vld [vmem:[#allocation2 + $0x8] sm:$0xff]
      %v263 = vld [vmem:[#allocation2 + $0x10] sm:$0xff]
      %v264 = vld [vmem:[#allocation2 + $0x18] sm:$0xff]
      %v265 = vld [vmem:[#allocation2 + $0x20] sm:$0xff]
      %v266 = vld [vmem:[#allocation2 + $0x28] sm:$0xff]
      %v267 = vld [vmem:[#allocation2 + $0x30] sm:$0xff]
      %v268 = vld [vmem:[#allocation2 + $0x38] sm:$0xff]
      %v269 = vld [vmem:[#allocation2 + $0x40] sm:$0xff]
      %v270 = vld [vmem:[#allocation2 + $0x48] sm:$0xff]
      %v271 = vld [vmem:[#allocation2 + $0x50] sm:$0xff]
      %v272 = vld [vmem:[#allocation2 + $0x58] sm:$0xff]
      %v273 = vld [vmem:[#allocation2 + $0x60] sm:$0xff]
      %v274 = vld [vmem:[%s229] sm:$0xf]
      %v275 = vld [vmem:[%s229 + $0x4] sm:$0xf]
      %v276 = vld [vmem:[%s229 + $0x8] sm:$0xf]
      %v277 = vld [vmem:[%s229 + $0xc] sm:$0xf]
      %v278 = vld [vmem:[%s229 + $0x10] sm:$0xf]
      %v279 = vld [vmem:[%s229 + $0x14] sm:$0xf]
      %v280 = vld [vmem:[%s229 + $0x18] sm:$0xf]
      %v281 = vld [vmem:[%s229 + $0x1c] sm:$0xf]
      %v282 = vld [vmem:[%s229 + $0x20] sm:$0xf]
      %v283 = vld [vmem:[%s229 + $0x24] sm:$0xf]
      %v284 = vld [vmem:[%s229 + $0x28] sm:$0xf]
      %v285 = vld [vmem:[%s229 + $0x2c] sm:$0xf]
      %v286 = vld [vmem:[%s229 + $0x30] sm:$0xf]
      %v287 = vld [vmem:[%s229 + $0x34] sm:$0xf]
      %v288 = vld [vmem:[%s229 + $0x38] sm:$0xf]
      %v289 = vld [vmem:[%s229 + $0x3c] sm:$0xf]
      %v303 = vunpack.c.l.b16 %v247
      %v304 = vunpack.c.l.b16 %v248
      %v305 = vunpack.c.l.b16 %v249
      %v306 = vunpack.c.l.b16 %v250
      %v307 = vunpack.c.l.b16 %v251
      %v308 = vunpack.c.l.b16 %v252
      %v309 = vunpack.c.l.b16 %v253
      %v310 = vunpack.c.l.b16 %v254
      %v311 = vunpack.c.l.b16 %v255
      %v312 = vunpack.c.l.b16 %v256
      %v313 = vunpack.c.l.b16 %v257
      %v314 = vunpack.c.l.b16 %v258
      %v315 = vunpack.c.l.b16 %v259
      %v316 = vpack.c.b16 %v304, %v303
      %v317 = vpack.c.b16 %v306, %v305
      %v318 = vpack.c.b16 %v308, %v307
      %v319 = vpack.c.b16 %v310, %v309
      %v320 = vpack.c.b16 %v312, %v311
      %v321 = vpack.c.b16 %v314, %v313
      %v322 = vpack.c.b16 %v315, %v315
      %v346 = vunpack.c.l.b16 %v274
      %v347 = vunpack.c.l.b16 %v275
      %v348 = vunpack.c.l.b16 %v276
      %v349 = vunpack.c.l.b16 %v277
      %v350 = vunpack.c.l.b16 %v278
      %v351 = vunpack.c.l.b16 %v279
      %v352 = vunpack.c.l.b16 %v280
      %v353 = vunpack.c.l.b16 %v281
      %v354 = vunpack.c.l.b16 %v282
      %v355 = vunpack.c.l.b16 %v283
      %v356 = vunpack.c.l.b16 %v284
      %v357 = vunpack.c.l.b16 %v285
      %v358 = vunpack.c.l.b16 %v286
      %v359 = vunpack.c.l.b16 %v287
      %v360 = vunpack.c.l.b16 %v288
      %v361 = vunpack.c.l.b16 %v289
      %v362 = vpack.c.b16 %v347, %v346
      %v363 = vpack.c.b16 %v349, %v348
      %v364 = vpack.c.b16 %v351, %v350
      %v365 = vpack.c.b16 %v353, %v352
      %v366 = vpack.c.b16 %v355, %v354
      %v367 = vpack.c.b16 %v357, %v356
      %v368 = vpack.c.b16 %v359, %v358
      %v369 = vpack.c.b16 %v361, %v360
      %378 = vmatpush.bf16.msra.mxu0 %v369
      %379 = vmatpush.bf16.msra.mxu0 %v368
      %380 = vmatpush.bf16.msra.mxu0 %v367
      %381 = vmatpush.bf16.msra.mxu0 %v366
      %382 = vmatpush.bf16.msra.mxu0 %v365
      %383 = vmatpush.bf16.msra.mxu0 %v364
      %384 = vmatpush.bf16.msra.mxu0 %v363
      %385 = vmatpush.bf16.msra.mxu0 %v362
      %386 = vmatmul.bf16.gmra.mxu0 %v316
      %v387 = vpop.f32.mrf.mxu0
      %v388 = vadd.f32 0.0, %v387
      %v389 = vpop.f32.mrf.mxu0
      %v390 = vadd.f32 0.0, %v389
      %391 = vmatmul.bf16.gmra.mxu0 %v317
      %v392 = vpop.f32.mrf.mxu0
      %v393 = vadd.f32 0.0, %v392
      %v394 = vpop.f32.mrf.mxu0
      %v395 = vadd.f32 0.0, %v394
      %396 = vmatmul.bf16.gmra.mxu0 %v318
      %v397 = vpop.f32.mrf.mxu0
      %v398 = vadd.f32 0.0, %v397
      %v399 = vpop.f32.mrf.mxu0
      %v400 = vadd.f32 0.0, %v399
      %401 = vmatmul.bf16.gmra.mxu0 %v319
      %v402 = vpop.f32.mrf.mxu0
      %v403 = vadd.f32 0.0, %v402
      %v404 = vpop.f32.mrf.mxu0
      %v405 = vadd.f32 0.0, %v404
      %406 = vmatmul.bf16.gmra.mxu0 %v320
      %v407 = vpop.f32.mrf.mxu0
      %v408 = vadd.f32 0.0, %v407
      %v409 = vpop.f32.mrf.mxu0
      %v410 = vadd.f32 0.0, %v409
      %411 = vmatmul.bf16.gmra.mxu0 %v321
      %v412 = vpop.f32.mrf.mxu0
      %v413 = vadd.f32 0.0, %v412
      %v414 = vpop.f32.mrf.mxu0
      %v415 = vadd.f32 0.0, %v414
      %416 = vmatmul.bf16.gmra.mxu0 %v322
      %v417 = vpop.f32.mrf.mxu0
      %v418 = vadd.f32 0.0, %v417
      %v419 = vpop.f32.mrf.mxu0
      %420 = vdwg.mxu0
      %v421 = vadd.f32 %v261, %v388
      %v422 = vadd.f32 %v262, %v390
      %v423 = vadd.f32 %v263, %v393
      %v424 = vadd.f32 %v264, %v395
      %v425 = vadd.f32 %v265, %v398
      %v426 = vadd.f32 %v266, %v400
      %v427 = vadd.f32 %v267, %v403
      %v428 = vadd.f32 %v268, %v405
      %v429 = vadd.f32 %v269, %v408
      %v430 = vadd.f32 %v270, %v410
      %v431 = vadd.f32 %v271, %v413
      %v432 = vadd.f32 %v272, %v415
      %v433 = vadd.f32 %v273, %v418
      %434 = vst [vmem:[#allocation2] sm:$0xff] %v421
      %435 = vst [vmem:[#allocation2 + $0x8] sm:$0xff] %v422
      %436 = vst [vmem:[#allocation2 + $0x10] sm:$0xff] %v423
      %437 = vst [vmem:[#allocation2 + $0x18] sm:$0xff] %v424
      %438 = vst [vmem:[#allocation2 + $0x20] sm:$0xff] %v425
      %439 = vst [vmem:[#allocation2 + $0x28] sm:$0xff] %v426
      %440 = vst [vmem:[#allocation2 + $0x30] sm:$0xff] %v427
      %441 = vst [vmem:[#allocation2 + $0x38] sm:$0xff] %v428
      %442 = vst [vmem:[#allocation2 + $0x40] sm:$0xff] %v429
      %443 = vst [vmem:[#allocation2 + $0x48] sm:$0xff] %v430
      %444 = vst [vmem:[#allocation2 + $0x50] sm:$0xff] %v431
      %445 = vst [vmem:[#allocation2 + $0x58] sm:$0xff] %v432
      %446 = vst [vmem:[#allocation2 + $0x60] sm:$0xff] %v433
      %v447 = vld [vmem:[#allocation2] sm:$0xff]
      %v448 = vld [vmem:[#allocation2 + $0x8] sm:$0xff]
      %v449 = vld [vmem:[#allocation2 + $0x10] sm:$0xff]
      %v450 = vld [vmem:[#allocation2 + $0x18] sm:$0xff]
      %v451 = vld [vmem:[#allocation2 + $0x20] sm:$0xff]
      %v452 = vld [vmem:[#allocation2 + $0x28] sm:$0xff]
      %v453 = vld [vmem:[#allocation2 + $0x30] sm:$0xff]
      %v454 = vld [vmem:[#allocation2 + $0x38] sm:$0xff]
      %v455 = vld [vmem:[#allocation2 + $0x40] sm:$0xff]
      %v456 = vld [vmem:[#allocation2 + $0x48] sm:$0xff]
      %v457 = vld [vmem:[#allocation2 + $0x50] sm:$0xff]
      %v458 = vld [vmem:[#allocation2 + $0x58] sm:$0xff]
      %v459 = vld [vmem:[#allocation2 + $0x60] sm:$0xff]
      %s460 = scalar_lea.vmem %s229, 64
      %v461 = vld [vmem:[%s460] sm:$0xf]
      %v462 = vld [vmem:[%s460 + $0x4] sm:$0xf]
      %v463 = vld [vmem:[%s460 + $0x8] sm:$0xf]
      %v464 = vld [vmem:[%s460 + $0xc] sm:$0xf]
      %v465 = vld [vmem:[%s460 + $0x10] sm:$0xf]
      %v466 = vld [vmem:[%s460 + $0x14] sm:$0xf]
      %v467 = vld [vmem:[%s460 + $0x18] sm:$0xf]
      %v468 = vld [vmem:[%s460 + $0x1c] sm:$0xf]
      %v469 = vld [vmem:[%s460 + $0x20] sm:$0xf]
      %v470 = vld [vmem:[%s460 + $0x24] sm:$0xf]
      %v471 = vld [vmem:[%s460 + $0x28] sm:$0xf]
      %v472 = vld [vmem:[%s460 + $0x2c] sm:$0xf]
      %v473 = vld [vmem:[%s460 + $0x30] sm:$0xf]
      %v474 = vld [vmem:[%s460 + $0x34] sm:$0xf]
      %v475 = vld [vmem:[%s460 + $0x38] sm:$0xf]
      %v476 = vld [vmem:[%s460 + $0x3c] sm:$0xf]
      %v478 = vunpack.c.l.b16 %v260
      %v479 = vpack.c.b16 %v478, %v315
      %vm480 = vsmask.f32 7424
      %v482 = vshrl.u32 %v316, 16
      %v484 = vshll.u32 %v316, 16
      %v486 = vrot.slane %v484, 1
      %v487 = vor.u32 %v482, %v486
      %v489 = vshll.u32 %v317, 16
      %v491 = vrot.slane %v489, 1
      %v492 = vsel %vm480, %v487, %v491
      %v493 = vshrl.u32 %v317, 16
      %v495 = vor.u32 %v493, %v491
      %v497 = vshll.u32 %v318, 16
      %v499 = vrot.slane %v497, 1
      %v500 = vsel %vm480, %v495, %v499
      %v501 = vshrl.u32 %v318, 16
      %v503 = vor.u32 %v501, %v499
      %v505 = vshll.u32 %v319, 16
      %v507 = vrot.slane %v505, 1
      %v508 = vsel %vm480, %v503, %v507
      %v509 = vshrl.u32 %v319, 16
      %v511 = vor.u32 %v509, %v507
      %v513 = vshll.u32 %v320, 16
      %v515 = vrot.slane %v513, 1
      %v516 = vsel %vm480, %v511, %v515
      %v517 = vshrl.u32 %v320, 16
      %v519 = vor.u32 %v517, %v515
      %v521 = vshll.u32 %v321, 16
      %v523 = vrot.slane %v521, 1
      %v524 = vsel %vm480, %v519, %v523
      %v525 = vshrl.u32 %v321, 16
      %v527 = vor.u32 %v525, %v523
      %v529 = vshll.u32 %v479, 16
      %v531 = vrot.slane %v529, 1
      %v532 = vsel %vm480, %v527, %v531
      %v533 = vshrl.u32 %v479, 16
      %v535 = vor.u32 %v533, %v531
      %v559 = vunpack.c.l.b16 %v461
      %v560 = vunpack.c.l.b16 %v462
      %v561 = vunpack.c.l.b16 %v463
      %v562 = vunpack.c.l.b16 %v464
      %v563 = vunpack.c.l.b16 %v465
      %v564 = vunpack.c.l.b16 %v466
      %v565 = vunpack.c.l.b16 %v467
      %v566 = vunpack.c.l.b16 %v468
      %v567 = vunpack.c.l.b16 %v469
      %v568 = vunpack.c.l.b16 %v470
      %v569 = vunpack.c.l.b16 %v471
      %v570 = vunpack.c.l.b16 %v472
      %v571 = vunpack.c.l.b16 %v473
      %v572 = vunpack.c.l.b16 %v474
      %v573 = vunpack.c.l.b16 %v475
      %v574 = vunpack.c.l.b16 %v476
      %v575 = vpack.c.b16 %v560, %v559
      %v576 = vpack.c.b16 %v562, %v561
      %v577 = vpack.c.b16 %v564, %v563
      %v578 = vpack.c.b16 %v566, %v565
      %v579 = vpack.c.b16 %v568, %v567
      %v580 = vpack.c.b16 %v570, %v569
      %v581 = vpack.c.b16 %v572, %v571
      %v582 = vpack.c.b16 %v574, %v573
      %591 = vmatpush.bf16.msra.mxu0 %v582
      %592 = vmatpush.bf16.msra.mxu0 %v581
      %593 = vmatpush.bf16.msra.mxu0 %v580
      %594 = vmatpush.bf16.msra.mxu0 %v579
      %595 = vmatpush.bf16.msra.mxu0 %v578
      %596 = vmatpush.bf16.msra.mxu0 %v577
      %597 = vmatpush.bf16.msra.mxu0 %v576
      %598 = vmatpush.bf16.msra.mxu0 %v575
      %599 = vmatmul.bf16.gmra.mxu0 %v492
      %v600 = vpop.f32.mrf.mxu0
      %v601 = vadd.f32 0.0, %v600
      %v602 = vpop.f32.mrf.mxu0
      %v603 = vadd.f32 0.0, %v602
      %604 = vmatmul.bf16.gmra.mxu0 %v500
      %v605 = vpop.f32.mrf.mxu0
      %v606 = vadd.f32 0.0, %v605
      %v607 = vpop.f32.mrf.mxu0
      %v608 = vadd.f32 0.0, %v607
      %609 = vmatmul.bf16.gmra.mxu0 %v508
      %v610 = vpop.f32.mrf.mxu0
      %v611 = vadd.f32 0.0, %v610
      %v612 = vpop.f32.mrf.mxu0
      %v613 = vadd.f32 0.0, %v612
      %614 = vmatmul.bf16.gmra.mxu0 %v516
      %v615 = vpop.f32.mrf.mxu0
      %v616 = vadd.f32 0.0, %v615
      %v617 = vpop.f32.mrf.mxu0
      %v618 = vadd.f32 0.0, %v617
      %619 = vmatmul.bf16.gmra.mxu0 %v524
      %v620 = vpop.f32.mrf.mxu0
      %v621 = vadd.f32 0.0, %v620
      %v622 = vpop.f32.mrf.mxu0
      %v623 = vadd.f32 0.0, %v622
      %624 = vmatmul.bf16.gmra.mxu0 %v532
      %v625 = vpop.f32.mrf.mxu0
      %v626 = vadd.f32 0.0, %v625
      %v627 = vpop.f32.mrf.mxu0
      %v628 = vadd.f32 0.0, %v627
      %629 = vmatmul.bf16.gmra.mxu0 %v535
      %v630 = vpop.f32.mrf.mxu0
      %v631 = vadd.f32 0.0, %v630
      %v632 = vpop.f32.mrf.mxu0
      %633 = vdwg.mxu0
      %v634 = vadd.f32 %v447, %v601
      %v635 = vadd.f32 %v448, %v603
      %v636 = vadd.f32 %v449, %v606
      %v637 = vadd.f32 %v450, %v608
      %v638 = vadd.f32 %v451, %v611
      %v639 = vadd.f32 %v452, %v613
      %v640 = vadd.f32 %v453, %v616
      %v641 = vadd.f32 %v454, %v618
      %v642 = vadd.f32 %v455, %v621
      %v643 = vadd.f32 %v456, %v623
      %v644 = vadd.f32 %v457, %v626
      %v645 = vadd.f32 %v458, %v628
      %v646 = vadd.f32 %v459, %v631
      %647 = vst [vmem:[#allocation2] sm:$0xff] %v634
      %648 = vst [vmem:[#allocation2 + $0x8] sm:$0xff] %v635
      %649 = vst [vmem:[#allocation2 + $0x10] sm:$0xff] %v636
      %650 = vst [vmem:[#allocation2 + $0x18] sm:$0xff] %v637
      %651 = vst [vmem:[#allocation2 + $0x20] sm:$0xff] %v638
      %652 = vst [vmem:[#allocation2 + $0x28] sm:$0xff] %v639
      %653 = vst [vmem:[#allocation2 + $0x30] sm:$0xff] %v640
      %654 = vst [vmem:[#allocation2 + $0x38] sm:$0xff] %v641
      %655 = vst [vmem:[#allocation2 + $0x40] sm:$0xff] %v642
      %656 = vst [vmem:[#allocation2 + $0x48] sm:$0xff] %v643
      %657 = vst [vmem:[#allocation2 + $0x50] sm:$0xff] %v644
      %658 = vst [vmem:[#allocation2 + $0x58] sm:$0xff] %v645
      %659 = vst [vmem:[#allocation2 + $0x60] sm:$0xff] %v646
      %v660 = vld [vmem:[#allocation2] sm:$0xff]
      %v661 = vld [vmem:[#allocation2 + $0x8] sm:$0xff]
      %v662 = vld [vmem:[#allocation2 + $0x10] sm:$0xff]
      %v663 = vld [vmem:[#allocation2 + $0x18] sm:$0xff]
      %v664 = vld [vmem:[#allocation2 + $0x20] sm:$0xff]
      %v665 = vld [vmem:[#allocation2 + $0x28] sm:$0xff]
      %v666 = vld [vmem:[#allocation2 + $0x30] sm:$0xff]
      %v667 = vld [vmem:[#allocation2 + $0x38] sm:$0xff]
      %v668 = vld [vmem:[#allocation2 + $0x40] sm:$0xff]
      %v669 = vld [vmem:[#allocation2 + $0x48] sm:$0xff]
      %v670 = vld [vmem:[#allocation2 + $0x50] sm:$0xff]
      %v671 = vld [vmem:[#allocation2 + $0x58] sm:$0xff]
      %v672 = vld [vmem:[#allocation2 + $0x60] sm:$0xff]
      %s673 = scalar_lea.vmem %s229, 128
      %v674 = vld [vmem:[%s673] sm:$0xf]
      %v675 = vld [vmem:[%s673 + $0x4] sm:$0xf]
      %v676 = vld [vmem:[%s673 + $0x8] sm:$0xf]
      %v677 = vld [vmem:[%s673 + $0xc] sm:$0xf]
      %v678 = vld [vmem:[%s673 + $0x10] sm:$0xf]
      %v679 = vld [vmem:[%s673 + $0x14] sm:$0xf]
      %v680 = vld [vmem:[%s673 + $0x18] sm:$0xf]
      %v681 = vld [vmem:[%s673 + $0x1c] sm:$0xf]
      %v682 = vld [vmem:[%s673 + $0x20] sm:$0xf]
      %v683 = vld [vmem:[%s673 + $0x24] sm:$0xf]
      %v684 = vld [vmem:[%s673 + $0x28] sm:$0xf]
      %v685 = vld [vmem:[%s673 + $0x2c] sm:$0xf]
      %v686 = vld [vmem:[%s673 + $0x30] sm:$0xf]
      %v687 = vld [vmem:[%s673 + $0x34] sm:$0xf]
      %v688 = vld [vmem:[%s673 + $0x38] sm:$0xf]
      %v689 = vld [vmem:[%s673 + $0x3c] sm:$0xf]
      %vm690 = vcmask 1046528
      %v691 = vrot.slane %v316, 1
      %v692 = vrot.slane %v317, 1
      %v693 = vsel %vm690, %v691, %v692
      %v694 = vrot.slane %v318, 1
      %v695 = vsel %vm690, %v692, %v694
      %v696 = vrot.slane %v319, 1
      %v697 = vsel %vm690, %v694, %v696
      %v698 = vrot.slane %v320, 1
      %v699 = vsel %vm690, %v696, %v698
      %v700 = vrot.slane %v321, 1
      %v701 = vsel %vm690, %v698, %v700
      %v702 = vrot.slane %v479, 1
      %v703 = vsel %vm690, %v700, %v702
      %v727 = vunpack.c.l.b16 %v674
      %v728 = vunpack.c.l.b16 %v675
      %v729 = vunpack.c.l.b16 %v676
      %v730 = vunpack.c.l.b16 %v677
      %v731 = vunpack.c.l.b16 %v678
      %v732 = vunpack.c.l.b16 %v679
      %v733 = vunpack.c.l.b16 %v680
      %v734 = vunpack.c.l.b16 %v681
      %v735 = vunpack.c.l.b16 %v682
      %v736 = vunpack.c.l.b16 %v683
      %v737 = vunpack.c.l.b16 %v684
      %v738 = vunpack.c.l.b16 %v685
      %v739 = vunpack.c.l.b16 %v686
      %v740 = vunpack.c.l.b16 %v687
      %v741 = vunpack.c.l.b16 %v688
      %v742 = vunpack.c.l.b16 %v689
      %v743 = vpack.c.b16 %v728, %v727
      %v744 = vpack.c.b16 %v730, %v729
      %v745 = vpack.c.b16 %v732, %v731
      %v746 = vpack.c.b16 %v734, %v733
      %v747 = vpack.c.b16 %v736, %v735
      %v748 = vpack.c.b16 %v738, %v737
      %v749 = vpack.c.b16 %v740, %v739
      %v750 = vpack.c.b16 %v742, %v741
      %759 = vmatpush.bf16.msra.mxu0 %v750
      %760 = vmatpush.bf16.msra.mxu0 %v749
      %761 = vmatpush.bf16.msra.mxu0 %v748
      %762 = vmatpush.bf16.msra.mxu0 %v747
      %763 = vmatpush.bf16.msra.mxu0 %v746
      %764 = vmatpush.bf16.msra.mxu0 %v745
      %765 = vmatpush.bf16.msra.mxu0 %v744
      %766 = vmatpush.bf16.msra.mxu0 %v743
      %767 = vmatmul.bf16.gmra.mxu0 %v693
      %v768 = vpop.f32.mrf.mxu0
      %v769 = vadd.f32 0.0, %v768
      %v770 = vpop.f32.mrf.mxu0
      %v771 = vadd.f32 0.0, %v770
      %772 = vmatmul.bf16.gmra.mxu0 %v695
      %v773 = vpop.f32.mrf.mxu0
      %v774 = vadd.f32 0.0, %v773
      %v775 = vpop.f32.mrf.mxu0
      %v776 = vadd.f32 0.0, %v775
      %777 = vmatmul.bf16.gmra.mxu0 %v697
      %v778 = vpop.f32.mrf.mxu0
      %v779 = vadd.f32 0.0, %v778
      %v780 = vpop.f32.mrf.mxu0
      %v781 = vadd.f32 0.0, %v780
      %782 = vmatmul.bf16.gmra.mxu0 %v699
      %v783 = vpop.f32.mrf.mxu0
      %v784 = vadd.f32 0.0, %v783
      %v785 = vpop.f32.mrf.mxu0
      %v786 = vadd.f32 0.0, %v785
      %787 = vmatmul.bf16.gmra.mxu0 %v701
      %v788 = vpop.f32.mrf.mxu0
      %v789 = vadd.f32 0.0, %v788
      %v790 = vpop.f32.mrf.mxu0
      %v791 = vadd.f32 0.0, %v790
      %792 = vmatmul.bf16.gmra.mxu0 %v703
      %v793 = vpop.f32.mrf.mxu0
      %v794 = vadd.f32 0.0, %v793
      %v795 = vpop.f32.mrf.mxu0
      %v796 = vadd.f32 0.0, %v795
      %797 = vmatmul.bf16.gmra.mxu0 %v702
      %v798 = vpop.f32.mrf.mxu0
      %v799 = vadd.f32 0.0, %v798
      %v800 = vpop.f32.mrf.mxu0
      %801 = vdwg.mxu0
      %v802 = vadd.f32 %v660, %v769
      %v803 = vadd.f32 %v661, %v771
      %v804 = vadd.f32 %v662, %v774
      %v805 = vadd.f32 %v663, %v776
      %v806 = vadd.f32 %v664, %v779
      %v807 = vadd.f32 %v665, %v781
      %v808 = vadd.f32 %v666, %v784
      %v809 = vadd.f32 %v667, %v786
      %v810 = vadd.f32 %v668, %v789
      %v811 = vadd.f32 %v669, %v791
      %v812 = vadd.f32 %v670, %v794
      %v813 = vadd.f32 %v671, %v796
      %v814 = vadd.f32 %v672, %v799
      %815 = vst [vmem:[#allocation2] sm:$0xff] %v802
      %816 = vst [vmem:[#allocation2 + $0x8] sm:$0xff] %v803
      %817 = vst [vmem:[#allocation2 + $0x10] sm:$0xff] %v804
      %818 = vst [vmem:[#allocation2 + $0x18] sm:$0xff] %v805
      %819 = vst [vmem:[#allocation2 + $0x20] sm:$0xff] %v806
      %820 = vst [vmem:[#allocation2 + $0x28] sm:$0xff] %v807
      %821 = vst [vmem:[#allocation2 + $0x30] sm:$0xff] %v808
      %822 = vst [vmem:[#allocation2 + $0x38] sm:$0xff] %v809
      %823 = vst [vmem:[#allocation2 + $0x40] sm:$0xff] %v810
      %824 = vst [vmem:[#allocation2 + $0x48] sm:$0xff] %v811
      %825 = vst [vmem:[#allocation2 + $0x50] sm:$0xff] %v812
      %826 = vst [vmem:[#allocation2 + $0x58] sm:$0xff] %v813
      %827 = vst [vmem:[#allocation2 + $0x60] sm:$0xff] %v814
      %v828 = vld [vmem:[#allocation2] sm:$0xff]
      %v829 = vld [vmem:[#allocation2 + $0x8] sm:$0xff]
      %v830 = vld [vmem:[#allocation2 + $0x10] sm:$0xff]
      %v831 = vld [vmem:[#allocation2 + $0x18] sm:$0xff]
      %v832 = vld [vmem:[#allocation2 + $0x20] sm:$0xff]
      %v833 = vld [vmem:[#allocation2 + $0x28] sm:$0xff]
      %v834 = vld [vmem:[#allocation2 + $0x30] sm:$0xff]
      %v835 = vld [vmem:[#allocation2 + $0x38] sm:$0xff]
      %v836 = vld [vmem:[#allocation2 + $0x40] sm:$0xff]
      %v837 = vld [vmem:[#allocation2 + $0x48] sm:$0xff]
      %v838 = vld [vmem:[#allocation2 + $0x50] sm:$0xff]
      %v839 = vld [vmem:[#allocation2 + $0x58] sm:$0xff]
      %v840 = vld [vmem:[#allocation2 + $0x60] sm:$0xff]
      %s841 = scalar_lea.vmem %s229, 192
      %v842 = vld [vmem:[%s841] sm:$0xf]
      %v843 = vld [vmem:[%s841 + $0x4] sm:$0xf]
      %v844 = vld [vmem:[%s841 + $0x8] sm:$0xf]
      %v845 = vld [vmem:[%s841 + $0xc] sm:$0xf]
      %v846 = vld [vmem:[%s841 + $0x10] sm:$0xf]
      %v847 = vld [vmem:[%s841 + $0x14] sm:$0xf]
      %v848 = vld [vmem:[%s841 + $0x18] sm:$0xf]
      %v849 = vld [vmem:[%s841 + $0x1c] sm:$0xf]
      %v850 = vld [vmem:[%s841 + $0x20] sm:$0xf]
      %v851 = vld [vmem:[%s841 + $0x24] sm:$0xf]
      %v852 = vld [vmem:[%s841 + $0x28] sm:$0xf]
      %v853 = vld [vmem:[%s841 + $0x2c] sm:$0xf]
      %v854 = vld [vmem:[%s841 + $0x30] sm:$0xf]
      %v855 = vld [vmem:[%s841 + $0x34] sm:$0xf]
      %v856 = vld [vmem:[%s841 + $0x38] sm:$0xf]
      %v857 = vld [vmem:[%s841 + $0x3c] sm:$0xf]
      %vm858 = vsmask.f32 6400
      %v859 = vrot.slane %v482, 1
      %v860 = vrot.slane %v484, 2
      %v861 = vor.u32 %v859, %v860
      %v862 = vrot.slane %v493, 1
      %v863 = vrot.slane %v489, 2
      %v864 = vor.u32 %v862, %v863
      %v865 = vsel %vm858, %v861, %v864
      %v866 = vrot.slane %v501, 1
      %v867 = vrot.slane %v497, 2
      %v868 = vor.u32 %v866, %v867
      %v869 = vsel %vm858, %v864, %v868
      %v870 = vrot.slane %v509, 1
      %v871 = vrot.slane %v505, 2
      %v872 = vor.u32 %v870, %v871
      %v873 = vsel %vm858, %v868, %v872
      %v874 = vrot.slane %v517, 1
      %v875 = vrot.slane %v513, 2
      %v876 = vor.u32 %v874, %v875
      %v877 = vsel %vm858, %v872, %v876
      %v878 = vrot.slane %v525, 1
      %v879 = vrot.slane %v521, 2
      %v880 = vor.u32 %v878, %v879
      %v881 = vsel %vm858, %v876, %v880
      %v882 = vrot.slane %v533, 1
      %v883 = vrot.slane %v529, 2
      %v884 = vor.u32 %v882, %v883
      %v885 = vsel %vm858, %v880, %v884
      %v909 = vunpack.c.l.b16 %v842
      %v910 = vunpack.c.l.b16 %v843
      %v911 = vunpack.c.l.b16 %v844
      %v912 = vunpack.c.l.b16 %v845
      %v913 = vunpack.c.l.b16 %v846
      %v914 = vunpack.c.l.b16 %v847
      %v915 = vunpack.c.l.b16 %v848
      %v916 = vunpack.c.l.b16 %v849
      %v917 = vunpack.c.l.b16 %v850
      %v918 = vunpack.c.l.b16 %v851
      %v919 = vunpack.c.l.b16 %v852
      %v920 = vunpack.c.l.b16 %v853
      %v921 = vunpack.c.l.b16 %v854
      %v922 = vunpack.c.l.b16 %v855
      %v923 = vunpack.c.l.b16 %v856
      %v924 = vunpack.c.l.b16 %v857
      %v925 = vpack.c.b16 %v910, %v909
      %v926 = vpack.c.b16 %v912, %v911
      %v927 = vpack.c.b16 %v914, %v913
      %v928 = vpack.c.b16 %v916, %v915
      %v929 = vpack.c.b16 %v918, %v917
      %v930 = vpack.c.b16 %v920, %v919
      %v931 = vpack.c.b16 %v922, %v921
      %v932 = vpack.c.b16 %v924, %v923
      %941 = vmatpush.bf16.msra.mxu0 %v932
      %942 = vmatpush.bf16.msra.mxu0 %v931
      %943 = vmatpush.bf16.msra.mxu0 %v930
      %944 = vmatpush.bf16.msra.mxu0 %v929
      %945 = vmatpush.bf16.msra.mxu0 %v928
      %946 = vmatpush.bf16.msra.mxu0 %v927
      %947 = vmatpush.bf16.msra.mxu0 %v926
      %948 = vmatpush.bf16.msra.mxu0 %v925
      %949 = vmatmul.bf16.gmra.mxu0 %v865
      %v950 = vpop.f32.mrf.mxu0
      %v951 = vadd.f32 0.0, %v950
      %v952 = vpop.f32.mrf.mxu0
      %v953 = vadd.f32 0.0, %v952
      %954 = vmatmul.bf16.gmra.mxu0 %v869
      %v955 = vpop.f32.mrf.mxu0
      %v956 = vadd.f32 0.0, %v955
      %v957 = vpop.f32.mrf.mxu0
      %v958 = vadd.f32 0.0, %v957
      %959 = vmatmul.bf16.gmra.mxu0 %v873
      %v960 = vpop.f32.mrf.mxu0
      %v961 = vadd.f32 0.0, %v960
      %v962 = vpop.f32.mrf.mxu0
      %v963 = vadd.f32 0.0, %v962
      %964 = vmatmul.bf16.gmra.mxu0 %v877
      %v965 = vpop.f32.mrf.mxu0
      %v966 = vadd.f32 0.0, %v965
      %v967 = vpop.f32.mrf.mxu0
      %v968 = vadd.f32 0.0, %v967
      %969 = vmatmul.bf16.gmra.mxu0 %v881
      %v970 = vpop.f32.mrf.mxu0
      %v971 = vadd.f32 0.0, %v970
      %v972 = vpop.f32.mrf.mxu0
      %v973 = vadd.f32 0.0, %v972
      %974 = vmatmul.bf16.gmra.mxu0 %v885
      %v975 = vpop.f32.mrf.mxu0
      %v976 = vadd.f32 0.0, %v975
      %v977 = vpop.f32.mrf.mxu0
      %v978 = vadd.f32 0.0, %v977
      %979 = vmatmul.bf16.gmra.mxu0 %v884
      %v980 = vpop.f32.mrf.mxu0
      %v981 = vadd.f32 0.0, %v980
      %v982 = vpop.f32.mrf.mxu0
      %983 = vdwg.mxu0
      %v984 = vadd.f32 %v828, %v951
      %v985 = vadd.f32 %v829, %v953
      %v986 = vadd.f32 %v830, %v956
      %v987 = vadd.f32 %v831, %v958
      %v988 = vadd.f32 %v832, %v961
      %v989 = vadd.f32 %v833, %v963
      %v990 = vadd.f32 %v834, %v966
      %v991 = vadd.f32 %v835, %v968
      %v992 = vadd.f32 %v836, %v971
      %v993 = vadd.f32 %v837, %v973
      %v994 = vadd.f32 %v838, %v976
      %v995 = vadd.f32 %v839, %v978
      %v996 = vadd.f32 %v840, %v981
      %997 = vst [vmem:[#allocation2] sm:$0xff] %v984
      %998 = vst [vmem:[#allocation2 + $0x8] sm:$0xff] %v985
      %999 = vst [vmem:[#allocation2 + $0x10] sm:$0xff] %v986
      %1000 = vst [vmem:[#allocation2 + $0x18] sm:$0xff] %v987
      %1001 = vst [vmem:[#allocation2 + $0x20] sm:$0xff] %v988
      %1002 = vst [vmem:[#allocation2 + $0x28] sm:$0xff] %v989
      %1003 = vst [vmem:[#allocation2 + $0x30] sm:$0xff] %v990
      %1004 = vst [vmem:[#allocation2 + $0x38] sm:$0xff] %v991
      %1005 = vst [vmem:[#allocation2 + $0x40] sm:$0xff] %v992
      %1006 = vst [vmem:[#allocation2 + $0x48] sm:$0xff] %v993
      %1007 = vst [vmem:[#allocation2 + $0x50] sm:$0xff] %v994
      %1008 = vst [vmem:[#allocation2 + $0x58] sm:$0xff] %v995
      %1009 = vst [vmem:[#allocation2 + $0x60] sm:$0xff] %v996
      %p1010 = scmp.eq.s32.totalorder %s16, 3
      // Predicated region
      $region45: #{nlayer_discriminator_forward.8} parent=39 // pred_check
        %p1011 = pneg %p1010
      $region46: #{nlayer_discriminator_forward.8} parent=39 // pred_check_branch
        %1013 = sbr.rel (%p1011) target = $region48
      $region47: #{nlayer_discriminator_forward.8} parent=39 // pred_region
        %v1014 = vld [vmem:[#allocation2] sm:$0xff]
        %v1015 = vld [vmem:[#allocation2 + $0x8] sm:$0xff]
        %v1016 = vld [vmem:[#allocation2 + $0x10] sm:$0xff]
        %v1017 = vld [vmem:[#allocation2 + $0x18] sm:$0xff]
        %v1018 = vld [vmem:[#allocation2 + $0x20] sm:$0xff]
        %v1019 = vld [vmem:[#allocation2 + $0x28] sm:$0xff]
        %v1020 = vld [vmem:[#allocation2 + $0x30] sm:$0xff]
        %v1021 = vld [vmem:[#allocation2 + $0x38] sm:$0xff]
        %v1022 = vld [vmem:[#allocation2 + $0x40] sm:$0xff]
        %v1023 = vld [vmem:[#allocation2 + $0x48] sm:$0xff]
        %v1024 = vld [vmem:[#allocation2 + $0x50] sm:$0xff]
        %v1025 = vld [vmem:[#allocation2 + $0x58] sm:$0xff]
        %v1026 = vld [vmem:[#allocation2 + $0x60] sm:$0xff]
        %v1027 = vld [vmem:[%s4] sm:$0xff]
        %v1028 = vld [vmem:[%s4 + $0x8] sm:$0xff]
        %v1029 = vld [vmem:[%s4 + $0x10] sm:$0xff]
        %v1030 = vld [vmem:[%s4 + $0x18] sm:$0xff]
        %v1031 = vld [vmem:[%s4 + $0x20] sm:$0xff]
        %v1032 = vld [vmem:[%s4 + $0x28] sm:$0xff]
        %v1033 = vld [vmem:[%s4 + $0x30] sm:$0xff]
        %v1034 = vld [vmem:[%s4 + $0x38] sm:$0xff]
        %v1035 = vld [vmem:[%s4 + $0x40] sm:$0xff]
        %v1036 = vld [vmem:[%s4 + $0x48] sm:$0xff]
        %v1037 = vld [vmem:[%s4 + $0x50] sm:$0xff]
        %v1038 = vld [vmem:[%s4 + $0x58] sm:$0xff]
        %v1039 = vld [vmem:[%s4 + $0x60] sm:$0xff]
        %1041 = vset.pattern.permute.xlu0 0
        %1042 = vperm.xlu0 %1041, %v1027
        %v1043 = vpop.permute.xlu0 %1042
        %1046 = vset.pattern.permute.xlu0 0
        %1047 = vperm.xlu0 %1046, %v1028
        %v1048 = vpop.permute.xlu0 %1047
        %1051 = vset.pattern.permute.xlu0 0
        %1052 = vperm.xlu0 %1051, %v1029
        %v1053 = vpop.permute.xlu0 %1052
        %1056 = vset.pattern.permute.xlu0 0
        %1057 = vperm.xlu0 %1056, %v1030
        %v1058 = vpop.permute.xlu0 %1057
        %1061 = vset.pattern.permute.xlu0 0
        %1062 = vperm.xlu0 %1061, %v1031
        %v1063 = vpop.permute.xlu0 %1062
        %1066 = vset.pattern.permute.xlu0 0
        %1067 = vperm.xlu0 %1066, %v1032
        %v1068 = vpop.permute.xlu0 %1067
        %1071 = vset.pattern.permute.xlu0 0
        %1072 = vperm.xlu0 %1071, %v1033
        %v1073 = vpop.permute.xlu0 %1072
        %1076 = vset.pattern.permute.xlu0 0
        %1077 = vperm.xlu0 %1076, %v1034
        %v1078 = vpop.permute.xlu0 %1077
        %1081 = vset.pattern.permute.xlu0 0
        %1082 = vperm.xlu0 %1081, %v1035
        %v1083 = vpop.permute.xlu0 %1082
        %1086 = vset.pattern.permute.xlu0 0
        %1087 = vperm.xlu0 %1086, %v1036
        %v1088 = vpop.permute.xlu0 %1087
        %1091 = vset.pattern.permute.xlu0 0
        %1092 = vperm.xlu0 %1091, %v1037
        %v1093 = vpop.permute.xlu0 %1092
        %1096 = vset.pattern.permute.xlu0 0
        %1097 = vperm.xlu0 %1096, %v1038
        %v1098 = vpop.permute.xlu0 %1097
        %1101 = vset.pattern.permute.xlu0 0
        %1102 = vperm.xlu0 %1101, %v1039
        %v1103 = vpop.permute.xlu0 %1102
        %v1105 = vmul.f32 %v1014, %v1043
        %v1106 = vmul.f32 %v1015, %v1048
        %v1107 = vmul.f32 %v1016, %v1053
        %v1108 = vmul.f32 %v1017, %v1058
        %v1109 = vmul.f32 %v1018, %v1063
        %v1110 = vmul.f32 %v1019, %v1068
        %v1111 = vmul.f32 %v1020, %v1073
        %v1112 = vmul.f32 %v1021, %v1078
        %v1113 = vmul.f32 %v1022, %v1083
        %v1114 = vmul.f32 %v1023, %v1088
        %v1115 = vmul.f32 %v1024, %v1093
        %v1116 = vmul.f32 %v1025, %v1098
        %v1117 = vmul.f32 %v1026, %v1103
        %v1118 = vadd.f32 %v1105, %v1106
        %v1119 = vadd.f32 %v1118, %v1107
        %v1120 = vadd.f32 %v1119, %v1108
        %v1121 = vadd.f32 %v1120, %v1109
        %v1122 = vadd.f32 %v1121, %v1110
        %v1123 = vadd.f32 %v1122, %v1111
        %v1124 = vadd.f32 %v1123, %v1112
        %v1125 = vadd.f32 %v1124, %v1113
        %v1126 = vadd.f32 %v1125, %v1114
        %v1127 = vadd.f32 %v1126, %v1115
        %v1128 = vadd.f32 %v1127, %v1116
        %v1129 = vadd.f32 %v1128, %v1117
        %v1130 = vrot.slane %v1129, 4
        %v1131 = vadd.f32 %v1129, %v1130
        %v1132 = vrot.slane %v1131, 2
        %v1133 = vadd.f32 %v1131, %v1132
        %v1134 = vrot.slane %v1133, 1
        %v1135 = vadd.f32 %v1133, %v1134
        %v1136 = vmul.f32 %v1135, 0.03125
        %v1137 = vsub.f32 %v1014, %v1136
        %v1138 = vsub.f32 %v1015, %v1136
        %v1139 = vsub.f32 %v1016, %v1136
        %v1140 = vsub.f32 %v1017, %v1136
        %v1141 = vsub.f32 %v1018, %v1136
        %v1142 = vsub.f32 %v1019, %v1136
        %v1143 = vsub.f32 %v1020, %v1136
        %v1144 = vsub.f32 %v1021, %v1136
        %v1145 = vsub.f32 %v1022, %v1136
        %v1146 = vsub.f32 %v1023, %v1136
        %v1147 = vsub.f32 %v1024, %v1136
        %v1148 = vsub.f32 %v1025, %v1136
        %v1149 = vsub.f32 %v1026, %v1136
        %v1150 = vmul.f32 %v1137, %v1137
        %v1151 = vmul.f32 %v1138, %v1138
        %v1152 = vmul.f32 %v1139, %v1139
        %v1153 = vmul.f32 %v1140, %v1140
        %v1154 = vmul.f32 %v1141, %v1141
        %v1155 = vmul.f32 %v1142, %v1142
        %v1156 = vmul.f32 %v1143, %v1143
        %v1157 = vmul.f32 %v1144, %v1144
        %v1158 = vmul.f32 %v1145, %v1145
        %v1159 = vmul.f32 %v1146, %v1146
        %v1160 = vmul.f32 %v1147, %v1147
        %v1161 = vmul.f32 %v1148, %v1148
        %v1162 = vmul.f32 %v1149, %v1149
        %v1163 = vmul.f32 %v1150, %v1043
        %v1164 = vmul.f32 %v1151, %v1048
        %v1165 = vmul.f32 %v1152, %v1053
        %v1166 = vmul.f32 %v1153, %v1058
        %v1167 = vmul.f32 %v1154, %v1063
        %v1168 = vmul.f32 %v1155, %v1068
        %v1169 = vmul.f32 %v1156, %v1073
        %v1170 = vmul.f32 %v1157, %v1078
        %v1171 = vmul.f32 %v1158, %v1083
        %v1172 = vmul.f32 %v1159, %v1088
        %v1173 = vmul.f32 %v1160, %v1093
        %v1174 = vmul.f32 %v1161, %v1098
        %v1175 = vmul.f32 %v1162, %v1103
        %v1176 = vadd.f32 %v1163, %v1164
        %v1177 = vadd.f32 %v1176, %v1165
        %v1178 = vadd.f32 %v1177, %v1166
        %v1179 = vadd.f32 %v1178, %v1167
        %v1180 = vadd.f32 %v1179, %v1168
        %v1181 = vadd.f32 %v1180, %v1169
        %v1182 = vadd.f32 %v1181, %v1170
        %v1183 = vadd.f32 %v1182, %v1171
        %v1184 = vadd.f32 %v1183, %v1172
        %v1185 = vadd.f32 %v1184, %v1173
        %v1186 = vadd.f32 %v1185, %v1174
        %v1187 = vadd.f32 %v1186, %v1175
        %v1188 = vrot.slane %v1187, 4
        %v1189 = vadd.f32 %v1187, %v1188
        %v1190 = vrot.slane %v1189, 2
        %v1191 = vadd.f32 %v1189, %v1190
        %v1192 = vrot.slane %v1191, 1
        %v1193 = vadd.f32 %v1191, %v1192
        %v1194 = vmul.f32 %v1193, 0.03125
        %v1195 = vadd.f32 %v1194, 1e-05
        %v1196 = vrsqrt.pop %v1195
        %v1197 = vmul.f32 %v1196, %v1195
        %v1198 = vmul.f32 %v1197, %v1196
        %v1199 = vmul.f32 0.5, %v1198
        %v1200 = vsub.f32 1.5, %v1199
        %v1201 = vmul.f32 %v1196, %v1200
        %vm1202 = vweird.f32 %v1195
        %vm1203 = vweird.f32 %v1196
        %vm1204 = vmor %vm1202, %vm1203
        %v1205 = vsel %vm1204, %v1196, %v1201
        %v1206 = vmul.f32 %v1137, %v1205
        %v1207 = vmul.f32 %v1138, %v1205
        %v1208 = vmul.f32 %v1139, %v1205
        %v1209 = vmul.f32 %v1140, %v1205
        %v1210 = vmul.f32 %v1141, %v1205
        %v1211 = vmul.f32 %v1142, %v1205
        %v1212 = vmul.f32 %v1143, %v1205
        %v1213 = vmul.f32 %v1144, %v1205
        %v1214 = vmul.f32 %v1145, %v1205
        %v1215 = vmul.f32 %v1146, %v1205
        %v1216 = vmul.f32 %v1147, %v1205
        %v1217 = vmul.f32 %v1148, %v1205
        %v1218 = vmul.f32 %v1149, %v1205
        %v1219 = vld [vmem:[%s2] sm:$0x1]
        %v1221 = vperm.slane %v1219, 0
        %v1223 = vmul.f32 %v1206, %v1221
        %v1224 = vmul.f32 %v1207, %v1221
        %v1225 = vmul.f32 %v1208, %v1221
        %v1226 = vmul.f32 %v1209, %v1221
        %v1227 = vmul.f32 %v1210, %v1221
        %v1228 = vmul.f32 %v1211, %v1221
        %v1229 = vmul.f32 %v1212, %v1221
        %v1230 = vmul.f32 %v1213, %v1221
        %v1231 = vmul.f32 %v1214, %v1221
        %v1232 = vmul.f32 %v1215, %v1221
        %v1233 = vmul.f32 %v1216, %v1221
        %v1234 = vmul.f32 %v1217, %v1221
        %v1235 = vmul.f32 %v1218, %v1221
        %v1236 = vld [vmem:[%s3] sm:$0x1]
        %v1238 = vperm.slane %v1236, 0
        %v1240 = vadd.f32 %v1223, %v1238
        %v1241 = vadd.f32 %v1224, %v1238
        %v1242 = vadd.f32 %v1225, %v1238
        %v1243 = vadd.f32 %v1226, %v1238
        %v1244 = vadd.f32 %v1227, %v1238
        %v1245 = vadd.f32 %v1228, %v1238
        %v1246 = vadd.f32 %v1229, %v1238
        %v1247 = vadd.f32 %v1230, %v1238
        %v1248 = vadd.f32 %v1231, %v1238
        %v1249 = vadd.f32 %v1232, %v1238
        %v1250 = vadd.f32 %v1233, %v1238
        %v1251 = vadd.f32 %v1234, %v1238
        %v1252 = vadd.f32 %v1235, %v1238
        %vm1253 = vcmp.gt.f32.partialorder %v1240, 0.0
        %vm1254 = vcmp.gt.f32.partialorder %v1241, 0.0
        %vm1255 = vcmp.gt.f32.partialorder %v1242, 0.0
        %vm1256 = vcmp.gt.f32.partialorder %v1243, 0.0
        %vm1257 = vcmp.gt.f32.partialorder %v1244, 0.0
        %vm1258 = vcmp.gt.f32.partialorder %v1245, 0.0
        %vm1259 = vcmp.gt.f32.partialorder %v1246, 0.0
        %vm1260 = vcmp.gt.f32.partialorder %v1247, 0.0
        %vm1261 = vcmp.gt.f32.partialorder %v1248, 0.0
        %vm1262 = vcmp.gt.f32.partialorder %v1249, 0.0
        %vm1263 = vcmp.gt.f32.partialorder %v1250, 0.0
        %vm1264 = vcmp.gt.f32.partialorder %v1251, 0.0
        %vm1265 = vcmp.gt.f32.partialorder %v1252, 0.0
        %v1266 = vmul.f32 %v1240, 0.2
        %v1267 = vmul.f32 %v1241, 0.2
        %v1268 = vmul.f32 %v1242, 0.2
        %v1269 = vmul.f32 %v1243, 0.2
        %v1270 = vmul.f32 %v1244, 0.2
        %v1271 = vmul.f32 %v1245, 0.2
        %v1272 = vmul.f32 %v1246, 0.2
        %v1273 = vmul.f32 %v1247, 0.2
        %v1274 = vmul.f32 %v1248, 0.2
        %v1275 = vmul.f32 %v1249, 0.2
        %v1276 = vmul.f32 %v1250, 0.2
        %v1277 = vmul.f32 %v1251, 0.2
        %v1278 = vmul.f32 %v1252, 0.2
        %v1279 = vsel %vm1253, %v1240, %v1266
        %v1280 = vsel %vm1254, %v1241, %v1267
        %v1281 = vsel %vm1255, %v1242, %v1268
        %v1282 = vsel %vm1256, %v1243, %v1269
        %v1283 = vsel %vm1257, %v1244, %v1270
        %v1284 = vsel %vm1258, %v1245, %v1271
        %v1285 = vsel %vm1259, %v1246, %v1272
        %v1286 = vsel %vm1260, %v1247, %v1273
        %v1287 = vsel %vm1261, %v1248, %v1274
        %v1288 = vsel %vm1262, %v1249, %v1275
        %v1289 = vsel %vm1263, %v1250, %v1276
        %v1290 = vsel %vm1264, %v1251, %v1277
        %v1291 = vsel %vm1265, %v1252, %v1278
        %v1292 = vpack.c.bf16 %v1279, %v1279
        %v1293 = vpack.c.bf16 %v1280, %v1280
        %v1294 = vpack.c.bf16 %v1281, %v1281
        %v1295 = vpack.c.bf16 %v1282, %v1282
        %v1296 = vpack.c.bf16 %v1283, %v1283
        %v1297 = vpack.c.bf16 %v1284, %v1284
        %v1298 = vpack.c.bf16 %v1285, %v1285
        %v1299 = vpack.c.bf16 %v1286, %v1286
        %v1300 = vpack.c.bf16 %v1287, %v1287
        %v1301 = vpack.c.bf16 %v1288, %v1288
        %v1302 = vpack.c.bf16 %v1289, %v1289
        %v1303 = vpack.c.bf16 %v1290, %v1290
        %v1304 = vpack.c.bf16 %v1291, %v1291
        %1305 = vst [vmem:[%s5] sm:$0xf] %v1292
        %1306 = vst [vmem:[%s5 + $0x4] sm:$0xf] %v1293
        %1307 = vst [vmem:[%s5 + $0x8] sm:$0xf] %v1294
        %1308 = vst [vmem:[%s5 + $0xc] sm:$0xf] %v1295
        %1309 = vst [vmem:[%s5 + $0x10] sm:$0xf] %v1296
        %1310 = vst [vmem:[%s5 + $0x14] sm:$0xf] %v1297
        %1311 = vst [vmem:[%s5 + $0x18] sm:$0xf] %v1298
        %1312 = vst [vmem:[%s5 + $0x1c] sm:$0xf] %v1299
        %1313 = vst [vmem:[%s5 + $0x20] sm:$0xf] %v1300
        %1314 = vst [vmem:[%s5 + $0x24] sm:$0xf] %v1301
        %1315 = vst [vmem:[%s5 + $0x28] sm:$0xf] %v1302
        %1316 = vst [vmem:[%s5 + $0x2c] sm:$0xf] %v1303
        %1317 = vst [vmem:[%s5 + $0x30] sm:$0xf] %v1304
      $region48: #{nlayer_discriminator_forward.8} parent=39 // pred_fallthru
        _
      // Predicated region
      $region49: #{nlayer_discriminator_forward.8} parent=39 // pred_check
        %p1318 = pneg %p144
      $region50: #{nlayer_discriminator_forward.8} parent=39 // pred_check_branch
        %1320 = sbr.rel (%p1318) target = $region52
      $region51: #{nlayer_discriminator_forward.8} parent=39 // pred_region
        _
      $region52: #{nlayer_discriminator_forward.8} parent=39 // pred_fallthru
        _
      // Predicated region
      $region53: #{nlayer_discriminator_forward.8} parent=39 // pred_check
        %p1321 = pneg %p144
      $region54: #{nlayer_discriminator_forward.8} parent=39 // pred_check_branch
        %1323 = sbr.rel (%p1321) target = $region56
      $region55: #{nlayer_discriminator_forward.8} parent=39 // pred_region
        _
      $region56: #{nlayer_discriminator_forward.8} parent=39 // pred_fallthru
        _
    $region40: #{nlayer_discriminator_forward.8} parent=5 // pred_fallthru
      _
    %p1324 = scmp.le.s32.totalorder 2, %s11
    // Predicated region
    $region57: #{nlayer_discriminator_forward.8} parent=5 // pred_check
      %p1325 = pneg %p1324
    $region58: #{nlayer_discriminator_forward.8} parent=5 // pred_check_branch
      %1327 = sbr.rel (%p1325) target = $region60
    $region59: #{nlayer_discriminator_forward.8} parent=5 // pred_region
      %s1328 = ssub.s32 %s11, 2
    $region60: #{nlayer_discriminator_forward.8} parent=5 // pred_fallthru
      _
  $region6: #{nlayer_discriminator_forward.8} parent=0 // loop_footer
    %s15 = sadd.s32 1, %s11
  $region7: #{nlayer_discriminator_forward.8} parent=0 // loop_footer_branch
    %10 = sbr.rel target = $region3
  $region8: #{nlayer_discriminator_forward.8} parent=0 // loop_exit
    _

// kernel: nlayer_discriminator_forward.9
$region0: #{nlayer_discriminator_forward.9}
  #allocation0 [shape = 'u32[]', space=smem, size = 0x4, offset = 0x4, fixed_abs, tag = 'smem constant byte address 0x4 - core index']
  #allocation1 [shape = 'u32[72,128]{1,0:T(1,128)}', space=vmem, size = 0x9000, scoped, tag = 'internal scratch']
  #allocation2 [shape = 'f32[128,128]{1,0:T(8,128)}', space=vmem, size = 0x10000, scoped, tag = 'scratch operand']
  %s0 = inlined_call_operand.vmem [shape: bf16[4,1,131,128], index: 0, kind: input, shape index: {}]
  %s1 = inlined_call_operand.vmem [shape: bf16[4,4,128,128], index: 1, kind: input, shape index: {}]
  %s2 = inlined_call_operand.vmem [shape: f32[1,128], index: 2, kind: input, shape index: {}]
  %s3 = inlined_call_operand.vmem [shape: bf16[128,128], index: 3, kind: output, shape index: {}]
  %s4 = sld [smem:[#allocation0]]
  $region53: #{nlayer_discriminator_forward.9} parent=0
    _
  %s6 = ssub.s32 1, %s4
  %s7 = scalar_select 0, %s6, %s4
  loop: start=0, step=1, limit=6
  $region2: #{nlayer_discriminator_forward.9} parent=0 // loop_pre_header
    _
  $region3: #{nlayer_discriminator_forward.9} parent=0 // loop_header
    %s9 = sphi 0, %s13
    %p10 = scmp.ge.s32.totalorder %s9, 6
    %s19 = sphi 0, %s21
    %s22 = sphi 0, %s19
    %s23 = sphi 0, %s22
    %s39 = sphi 0, %s23
    %s45 = sphi 0, %s47
    %s48 = sphi 0, %s45
    %s49 = sphi 0, %s48
    %s65 = sphi 0, %s49
    %s69 = sphi 0, %s69
    %s71 = sphi 0, %s69
    %s72 = sphi 0, %s71
    %s86 = sphi 0, %s72
    %s90 = sphi 0, %s90
    %s92 = sphi 0, %s90
    %s93 = sphi 0, %s92
    %s107 = sphi 0, %s93
  $region4: #{nlayer_discriminator_forward.9} parent=0 // loop_header_branch
    %12 = sbr.rel (%p10) target = $region8
  $region5: #{nlayer_discriminator_forward.9} parent=0 // loop_body
    %s14 = ssub.s32 %s9, 1
    %s15 = ssub.s32 %s9, 2
    %s16 = sadd.s32 %s9, 1
    %s17 = ssub.s32 %s9, %s16
    %p18 = scmp.eq.s32.totalorder %s17, 0
    %s20 = sadd.s32 %s19, 1
    %s21 = scalar_select %p18, %s19, %s20
    %p24 = pneg %p18
    %p25 = scmp.eq.s32.totalorder %s9, 3
    %p26 = por %p24, %p25
    %p27 = scmp.ne.s32.totalorder %s19, %s22
    %p28 = scmp.eq.s32.totalorder %s9, 0
    %p29 = por %p27, %p28
    %p30 = scmp.ne.s32.totalorder %s19, %s22
    %p31 = scmp.eq.s32.totalorder %s14, 3
    %p32 = por %p30, %p31
    %p33 = scmp.ne.s32.totalorder %s22, %s23
    %p34 = scmp.eq.s32.totalorder %s14, 0
    %p35 = por %p33, %p34
    %p36 = scmp.ne.s32.totalorder %s22, %s23
    %p37 = scmp.eq.s32.totalorder %s15, 3
    %p38 = por %p36, %p37
    %p40 = scmp.ne.s32.totalorder %s23, %s39
    %p41 = scmp.eq.s32.totalorder %s15, 0
    %p42 = por %p40, %p41
    %s43 = ssub.s32 %s9, %s16
    %p44 = scmp.eq.s32.totalorder %s43, 0
    %s46 = sadd.s32 %s45, 1
    %s47 = scalar_select %p44, %s45, %s46
    %p50 = pneg %p44
    %p51 = scmp.eq.s32.totalorder %s9, 3
    %p52 = por %p50, %p51
    %p53 = scmp.ne.s32.totalorder %s45, %s48
    %p54 = scmp.eq.s32.totalorder %s9, 0
    %p55 = por %p53, %p54
    %p56 = scmp.ne.s32.totalorder %s45, %s48
    %p57 = scmp.eq.s32.totalorder %s14, 3
    %p58 = por %p56, %p57
    %p59 = scmp.ne.s32.totalorder %s48, %s49
    %p60 = scmp.eq.s32.totalorder %s14, 0
    %p61 = por %p59, %p60
    %p62 = scmp.ne.s32.totalorder %s48, %s49
    %p63 = scmp.eq.s32.totalorder %s15, 3
    %p64 = por %p62, %p63
    %p66 = scmp.ne.s32.totalorder %s49, %s65
    %p67 = scmp.eq.s32.totalorder %s15, 0
    %p68 = por %p66, %p67
    %s70 = sadd.s32 %s69, 1
    %p73 = scmp.eq.s32.totalorder %s9, 3
    %p74 = scmp.ne.s32.totalorder %s69, %s71
    %p75 = scmp.eq.s32.totalorder %s9, 0
    %p76 = por %p74, %p75
    %p77 = scmp.ne.s32.totalorder %s69, %s71
    %p78 = scmp.eq.s32.totalorder %s14, 3
    %p79 = por %p77, %p78
    %p80 = scmp.ne.s32.totalorder %s71, %s72
    %p81 = scmp.eq.s32.totalorder %s14, 0
    %p82 = por %p80, %p81
    %p83 = scmp.ne.s32.totalorder %s71, %s72
    %p84 = scmp.eq.s32.totalorder %s15, 3
    %p85 = por %p83, %p84
    %p87 = scmp.ne.s32.totalorder %s72, %s86
    %p88 = scmp.eq.s32.totalorder %s15, 0
    %p89 = por %p87, %p88
    %s91 = sadd.s32 %s90, 1
    %p94 = scmp.eq.s32.totalorder %s9, 3
    %p95 = scmp.ne.s32.totalorder %s90, %s92
    %p96 = scmp.eq.s32.totalorder %s9, 0
    %p97 = por %p95, %p96
    %p98 = scmp.ne.s32.totalorder %s90, %s92
    %p99 = scmp.eq.s32.totalorder %s14, 3
    %p100 = por %p98, %p99
    %p101 = scmp.ne.s32.totalorder %s92, %s93
    %p102 = scmp.eq.s32.totalorder %s14, 0
    %p103 = por %p101, %p102
    %p104 = scmp.ne.s32.totalorder %s92, %s93
    %p105 = scmp.eq.s32.totalorder %s15, 3
    %p106 = por %p104, %p105
    %p108 = scmp.ne.s32.totalorder %s93, %s107
    %p109 = scmp.eq.s32.totalorder %s15, 0
    %p110 = por %p108, %p109
    %p111 = scmp.le.s32.totalorder 1, %s9
    %p112 = scmp.lt.s32.totalorder %s9, 5
    %p113 = pnand %p111, %p112
    %p114 = pneg %p113
    // Predicated region
    $region9: #{nlayer_discriminator_forward.9} parent=5 // pred_check
      _
    $region10: #{nlayer_discriminator_forward.9} parent=5 // pred_check_branch
      %116 = sbr.rel (%p113) target = $region12
    $region11: #{nlayer_discriminator_forward.9} parent=5 // pred_region
      %s117 = ssub.s32 %s9, 1
      // Predicated region
      $region13: #{nlayer_discriminator_forward.9} parent=11 // pred_check
        %p118 = pneg %p82
      $region14: #{nlayer_discriminator_forward.9} parent=11 // pred_check_branch
        %120 = sbr.rel (%p118) target = $region16
      $region15: #{nlayer_discriminator_forward.9} parent=11 // pred_region
        _
      $region16: #{nlayer_discriminator_forward.9} parent=11 // pred_fallthru
        _
    $region12: #{nlayer_discriminator_forward.9} parent=5 // pred_fallthru
      _
    %p121 = scmp.lt.s32.totalorder %s9, 4
    // Predicated region
    $region17: #{nlayer_discriminator_forward.9} parent=5 // pred_check
      %p122 = pneg %p121
    $region18: #{nlayer_discriminator_forward.9} parent=5 // pred_check_branch
      %124 = sbr.rel (%p122) target = $region20
    $region19: #{nlayer_discriminator_forward.9} parent=5 // pred_region
      // Predicated region
      $region21: #{nlayer_discriminator_forward.9} parent=19 // pred_check
        %p125 = pneg %p29
      $region22: #{nlayer_discriminator_forward.9} parent=19 // pred_check_branch
        %127 = sbr.rel (%p125) target = $region24
      $region23: #{nlayer_discriminator_forward.9} parent=19 // pred_region
        %p128 = scmp.lt.s32.totalorder %s9, 3
        %s129 = scalar_select %p128, %s9, 3
        %s130 = smul.addr %s129, 17
        %s131 = smul.addr %s130, 4
        %s132 = scalar_lea.vmem %s0, %s131
      $region24: #{nlayer_discriminator_forward.9} parent=19 // pred_fallthru
        _
      // Predicated region
      $region25: #{nlayer_discriminator_forward.9} parent=19 // pred_check
        %p133 = pneg %p55
      $region26: #{nlayer_discriminator_forward.9} parent=19 // pred_check_branch
        %135 = sbr.rel (%p133) target = $region28
      $region27: #{nlayer_discriminator_forward.9} parent=19 // pred_region
        %p136 = scmp.lt.s32.totalorder %s9, 3
        %s137 = scalar_select %p136, %s9, 3
        %s138 = smul.addr %s137, 64
        %s139 = smul.addr %s138, 4
        %s140 = scalar_lea.vmem %s1, %s139
      $region28: #{nlayer_discriminator_forward.9} parent=19 // pred_fallthru
        _
    $region20: #{nlayer_discriminator_forward.9} parent=5 // pred_fallthru
      _
    %p141 = scmp.le.s32.totalorder 1, %s9
    %p142 = scmp.lt.s32.totalorder %s9, 5
    %p143 = pnand %p141, %p142
    %p144 = pneg %p143
    // Predicated region
    $region29: #{nlayer_discriminator_forward.9} parent=5 // pred_check
      _
    $region30: #{nlayer_discriminator_forward.9} parent=5 // pred_check_branch
      %146 = sbr.rel (%p143) target = $region32
    $region31: #{nlayer_discriminator_forward.9} parent=5 // pred_region
      %s147 = ssub.s32 %s9, 1
      %p148 = scmp.lt.s32.totalorder %s14, 3
      %s149 = scalar_select %p148, %s14, 3
      %s150 = smul.addr %s149, 17
      %s151 = smul.addr %s150, 4
      %s152 = scalar_lea.vmem %s0, %s151
      %p153 = pneg %p35
      %p154 = pneg %p32
      %p155 = scmp.lt.s32.totalorder %s14, 3
      %s156 = scalar_select %p155, %s14, 3
      %s157 = smul.addr %s156, 64
      %s158 = smul.addr %s157, 4
      %s159 = scalar_lea.vmem %s1, %s158
      %p160 = pneg %p61
      %p161 = pneg %p58
      %p162 = pneg %p82
      %p163 = pneg %p79
      %p164 = pneg %p103
      %p165 = pneg %p100
      %p166 = scmp.lt.s32.totalorder %s14, 3
      %s167 = scalar_select %p166, %s14, 3
      %s168 = smul.addr %s167, 17
      %s169 = smul.addr %s168, 4
      %s170 = scalar_lea.vmem %s0, %s169
      %p171 = scmp.lt.s32.totalorder %s14, 3
      %s172 = scalar_select %p171, %s14, 3
      %s173 = smul.addr %s172, 64
      %s174 = smul.addr %s173, 4
      %s175 = scalar_lea.vmem %s1, %s174
      %p176 = scmp.eq.s32.totalorder %s14, 0
      // Predicated region
      $region33: #{nlayer_discriminator_forward.9} parent=31 // pred_check
        %p177 = pneg %p176
      $region34: #{nlayer_discriminator_forward.9} parent=31 // pred_check_branch
        %179 = sbr.rel (%p177) target = $region36
      $region35: #{nlayer_discriminator_forward.9} parent=31 // pred_region
        %180 = vst [vmem:[#allocation2] sm:$0xff] 0.0
        %181 = vst [vmem:[#allocation2 + $0x8] sm:$0xff] 0.0
        %182 = vst [vmem:[#allocation2 + $0x10] sm:$0xff] 0.0
        %183 = vst [vmem:[#allocation2 + $0x18] sm:$0xff] 0.0
        %184 = vst [vmem:[#allocation2 + $0x20] sm:$0xff] 0.0
        %185 = vst [vmem:[#allocation2 + $0x28] sm:$0xff] 0.0
        %186 = vst [vmem:[#allocation2 + $0x30] sm:$0xff] 0.0
        %187 = vst [vmem:[#allocation2 + $0x38] sm:$0xff] 0.0
        %188 = vst [vmem:[#allocation2 + $0x40] sm:$0xff] 0.0
        %189 = vst [vmem:[#allocation2 + $0x48] sm:$0xff] 0.0
        %190 = vst [vmem:[#allocation2 + $0x50] sm:$0xff] 0.0
        %191 = vst [vmem:[#allocation2 + $0x58] sm:$0xff] 0.0
        %192 = vst [vmem:[#allocation2 + $0x60] sm:$0xff] 0.0
        %193 = vst [vmem:[#allocation2 + $0x68] sm:$0xff] 0.0
        %194 = vst [vmem:[#allocation2 + $0x70] sm:$0xff] 0.0
        %195 = vst [vmem:[#allocation2 + $0x78] sm:$0xff] 0.0
      $region36: #{nlayer_discriminator_forward.9} parent=31 // pred_fallthru
        _
      %v196 = vld [vmem:[%s170] sm:$0xf]
      %v197 = vld [vmem:[%s170 + $0x4] sm:$0xf]
      %v198 = vld [vmem:[%s170 + $0x8] sm:$0xf]
      %v199 = vld [vmem:[%s170 + $0xc] sm:$0xf]
      %v200 = vld [vmem:[%s170 + $0x10] sm:$0xf]
      %v201 = vld [vmem:[%s170 + $0x14] sm:$0xf]
      %v202 = vld [vmem:[%s170 + $0x18] sm:$0xf]
      %v203 = vld [vmem:[%s170 + $0x1c] sm:$0xf]
      %v204 = vld [vmem:[%s170 + $0x20] sm:$0xf]
      %v205 = vld [vmem:[%s170 + $0x24] sm:$0xf]
      %v206 = vld [vmem:[%s170 + $0x28] sm:$0xf]
      %v207 = vld [vmem:[%s170 + $0x2c] sm:$0xf]
      %v208 = vld [vmem:[%s170 + $0x30] sm:$0xf]
      %v209 = vld [vmem:[%s170 + $0x34] sm:$0xf]
      %v210 = vld [vmem:[%s170 + $0x38] sm:$0xf]
      %v211 = vld [vmem:[%s170 + $0x3c] sm:$0xf]
      %v212 = vld [vmem:[%s170 + $0x40] sm:$0x3]
      %v213 = vld [vmem:[#allocation2] sm:$0xff]
      %v214 = vld [vmem:[#allocation2 + $0x8] sm:$0xff]
      %v215 = vld [vmem:[#allocation2 + $0x10] sm:$0xff]
      %v216 = vld [vmem:[#allocation2 + $0x18] sm:$0xff]
      %v217 = vld [vmem:[#allocation2 + $0x20] sm:$0xff]
      %v218 = vld [vmem:[#allocation2 + $0x28] sm:$0xff]
      %v219 = vld [vmem:[#allocation2 + $0x30] sm:$0xff]
      %v220 = vld [vmem:[#allocation2 + $0x38] sm:$0xff]
      %v221 = vld [vmem:[#allocation2 + $0x40] sm:$0xff]
      %v222 = vld [vmem:[#allocation2 + $0x48] sm:$0xff]
      %v223 = vld [vmem:[#allocation2 + $0x50] sm:$0xff]
      %v224 = vld [vmem:[#allocation2 + $0x58] sm:$0xff]
      %v225 = vld [vmem:[#allocation2 + $0x60] sm:$0xff]
      %v226 = vld [vmem:[#allocation2 + $0x68] sm:$0xff]
      %v227 = vld [vmem:[#allocation2 + $0x70] sm:$0xff]
      %v228 = vld [vmem:[#allocation2 + $0x78] sm:$0xff]
      %v229 = vld [vmem:[%s175] sm:$0xf]
      %v230 = vld [vmem:[%s175 + $0x4] sm:$0xf]
      %v231 = vld [vmem:[%s175 + $0x8] sm:$0xf]
      %v232 = vld [vmem:[%s175 + $0xc] sm:$0xf]
      %v233 = vld [vmem:[%s175 + $0x10] sm:$0xf]
      %v234 = vld [vmem:[%s175 + $0x14] sm:$0xf]
      %v235 = vld [vmem:[%s175 + $0x18] sm:$0xf]
      %v236 = vld [vmem:[%s175 + $0x1c] sm:$0xf]
      %v237 = vld [vmem:[%s175 + $0x20] sm:$0xf]
      %v238 = vld [vmem:[%s175 + $0x24] sm:$0xf]
      %v239 = vld [vmem:[%s175 + $0x28] sm:$0xf]
      %v240 = vld [vmem:[%s175 + $0x2c] sm:$0xf]
      %v241 = vld [vmem:[%s175 + $0x30] sm:$0xf]
      %v242 = vld [vmem:[%s175 + $0x34] sm:$0xf]
      %v243 = vld [vmem:[%s175 + $0x38] sm:$0xf]
      %v244 = vld [vmem:[%s175 + $0x3c] sm:$0xf]
      %v261 = vunpack.c.l.b16 %v196
      %v262 = vunpack.c.l.b16 %v197
      %v263 = vunpack.c.l.b16 %v198
      %v264 = vunpack.c.l.b16 %v199
      %v265 = vunpack.c.l.b16 %v200
      %v266 = vunpack.c.l.b16 %v201
      %v267 = vunpack.c.l.b16 %v202
      %v268 = vunpack.c.l.b16 %v203
      %v269 = vunpack.c.l.b16 %v204
      %v270 = vunpack.c.l.b16 %v205
      %v271 = vunpack.c.l.b16 %v206
      %v272 = vunpack.c.l.b16 %v207
      %v273 = vunpack.c.l.b16 %v208
      %v274 = vunpack.c.l.b16 %v209
      %v275 = vunpack.c.l.b16 %v210
      %v276 = vunpack.c.l.b16 %v211
      %v277 = vpack.c.b16 %v262, %v261
      %v278 = vpack.c.b16 %v264, %v263
      %v279 = vpack.c.b16 %v266, %v265
      %v280 = vpack.c.b16 %v268, %v267
      %v281 = vpack.c.b16 %v270, %v269
      %v282 = vpack.c.b16 %v272, %v271
      %v283 = vpack.c.b16 %v274, %v273
      %v284 = vpack.c.b16 %v276, %v275
      %v309 = vunpack.c.l.b16 %v229
      %v310 = vunpack.c.l.b16 %v230
      %v311 = vunpack.c.l.b16 %v231
      %v312 = vunpack.c.l.b16 %v232
      %v313 = vunpack.c.l.b16 %v233
      %v314 = vunpack.c.l.b16 %v234
      %v315 = vunpack.c.l.b16 %v235
      %v316 = vunpack.c.l.b16 %v236
      %v317 = vunpack.c.l.b16 %v237
      %v318 = vunpack.c.l.b16 %v238
      %v319 = vunpack.c.l.b16 %v239
      %v320 = vunpack.c.l.b16 %v240
      %v321 = vunpack.c.l.b16 %v241
      %v322 = vunpack.c.l.b16 %v242
      %v323 = vunpack.c.l.b16 %v243
      %v324 = vunpack.c.l.b16 %v244
      %v325 = vpack.c.b16 %v310, %v309
      %v326 = vpack.c.b16 %v312, %v311
      %v327 = vpack.c.b16 %v314, %v313
      %v328 = vpack.c.b16 %v316, %v315
      %v329 = vpack.c.b16 %v318, %v317
      %v330 = vpack.c.b16 %v320, %v319
      %v331 = vpack.c.b16 %v322, %v321
      %v332 = vpack.c.b16 %v324, %v323
      %341 = vmatpush.bf16.msra.mxu0 %v332
      %342 = vmatpush.bf16.msra.mxu0 %v331
      %343 = vmatpush.bf16.msra.mxu0 %v330
      %344 = vmatpush.bf16.msra.mxu0 %v329
      %345 = vmatpush.bf16.msra.mxu0 %v328
      %346 = vmatpush.bf16.msra.mxu0 %v327
      %347 = vmatpush.bf16.msra.mxu0 %v326
      %348 = vmatpush.bf16.msra.mxu0 %v325
      %349 = vmatmul.bf16.gmra.mxu0 %v277
      %v350 = vpop.f32.mrf.mxu0
      %v351 = vadd.f32 0.0, %v350
      %v352 = vpop.f32.mrf.mxu0
      %v353 = vadd.f32 0.0, %v352
      %354 = vmatmul.bf16.gmra.mxu0 %v278
      %v355 = vpop.f32.mrf.mxu0
      %v356 = vadd.f32 0.0, %v355
      %v357 = vpop.f32.mrf.mxu0
      %v358 = vadd.f32 0.0, %v357
      %359 = vmatmul.bf16.gmra.mxu0 %v279
      %v360 = vpop.f32.mrf.mxu0
      %v361 = vadd.f32 0.0, %v360
      %v362 = vpop.f32.mrf.mxu0
      %v363 = vadd.f32 0.0, %v362
      %364 = vmatmul.bf16.gmra.mxu0 %v280
      %v365 = vpop.f32.mrf.mxu0
      %v366 = vadd.f32 0.0, %v365
      %v367 = vpop.f32.mrf.mxu0
      %v368 = vadd.f32 0.0, %v367
      %369 = vmatmul.bf16.gmra.mxu0 %v281
      %v370 = vpop.f32.mrf.mxu0
      %v371 = vadd.f32 0.0, %v370
      %v372 = vpop.f32.mrf.mxu0
      %v373 = vadd.f32 0.0, %v372
      %374 = vmatmul.bf16.gmra.mxu0 %v282
      %v375 = vpop.f32.mrf.mxu0
      %v376 = vadd.f32 0.0, %v375
      %v377 = vpop.f32.mrf.mxu0
      %v378 = vadd.f32 0.0, %v377
      %379 = vmatmul.bf16.gmra.mxu0 %v283
      %v380 = vpop.f32.mrf.mxu0
      %v381 = vadd.f32 0.0, %v380
      %v382 = vpop.f32.mrf.mxu0
      %v383 = vadd.f32 0.0, %v382
      %384 = vmatmul.bf16.gmra.mxu0 %v284
      %v385 = vpop.f32.mrf.mxu0
      %v386 = vadd.f32 0.0, %v385
      %v387 = vpop.f32.mrf.mxu0
      %v388 = vadd.f32 0.0, %v387
      %389 = vdwg.mxu0
      %v390 = vadd.f32 %v213, %v351
      %v391 = vadd.f32 %v214, %v353
      %v392 = vadd.f32 %v215, %v356
      %v393 = vadd.f32 %v216, %v358
      %v394 = vadd.f32 %v217, %v361
      %v395 = vadd.f32 %v218, %v363
      %v396 = vadd.f32 %v219, %v366
      %v397 = vadd.f32 %v220, %v368
      %v398 = vadd.f32 %v221, %v371
      %v399 = vadd.f32 %v222, %v373
      %v400 = vadd.f32 %v223, %v376
      %v401 = vadd.f32 %v224, %v378
      %v402 = vadd.f32 %v225, %v381
      %v403 = vadd.f32 %v226, %v383
      %v404 = vadd.f32 %v227, %v386
      %v405 = vadd.f32 %v228, %v388
      %406 = vst [vmem:[#allocation2] sm:$0xff] %v390
      %407 = vst [vmem:[#allocation2 + $0x8] sm:$0xff] %v391
      %408 = vst [vmem:[#allocation2 + $0x10] sm:$0xff] %v392
      %409 = vst [vmem:[#allocation2 + $0x18] sm:$0xff] %v393
      %410 = vst [vmem:[#allocation2 + $0x20] sm:$0xff] %v394
      %411 = vst [vmem:[#allocation2 + $0x28] sm:$0xff] %v395
      %412 = vst [vmem:[#allocation2 + $0x30] sm:$0xff] %v396
      %413 = vst [vmem:[#allocation2 + $0x38] sm:$0xff] %v397
      %414 = vst [vmem:[#allocation2 + $0x40] sm:$0xff] %v398
      %415 = vst [vmem:[#allocation2 + $0x48] sm:$0xff] %v399
      %416 = vst [vmem:[#allocation2 + $0x50] sm:$0xff] %v400
      %417 = vst [vmem:[#allocation2 + $0x58] sm:$0xff] %v401
      %418 = vst [vmem:[#allocation2 + $0x60] sm:$0xff] %v402
      %419 = vst [vmem:[#allocation2 + $0x68] sm:$0xff] %v403
      %420 = vst [vmem:[#allocation2 + $0x70] sm:$0xff] %v404
      %421 = vst [vmem:[#allocation2 + $0x78] sm:$0xff] %v405
      %v422 = vld [vmem:[#allocation2] sm:$0xff]
      %v423 = vld [vmem:[#allocation2 + $0x8] sm:$0xff]
      %v424 = vld [vmem:[#allocation2 + $0x10] sm:$0xff]
      %v425 = vld [vmem:[#allocation2 + $0x18] sm:$0xff]
      %v426 = vld [vmem:[#allocation2 + $0x20] sm:$0xff]
      %v427 = vld [vmem:[#allocation2 + $0x28] sm:$0xff]
      %v428 = vld [vmem:[#allocation2 + $0x30] sm:$0xff]
      %v429 = vld [vmem:[#allocation2 + $0x38] sm:$0xff]
      %v430 = vld [vmem:[#allocation2 + $0x40] sm:$0xff]
      %v431 = vld [vmem:[#allocation2 + $0x48] sm:$0xff]
      %v432 = vld [vmem:[#allocation2 + $0x50] sm:$0xff]
      %v433 = vld [vmem:[#allocation2 + $0x58] sm:$0xff]
      %v434 = vld [vmem:[#allocation2 + $0x60] sm:$0xff]
      %v435 = vld [vmem:[#allocation2 + $0x68] sm:$0xff]
      %v436 = vld [vmem:[#allocation2 + $0x70] sm:$0xff]
      %v437 = vld [vmem:[#allocation2 + $0x78] sm:$0xff]
      %s438 = scalar_lea.vmem %s175, 64
      %v439 = vld [vmem:[%s438] sm:$0xf]
      %v440 = vld [vmem:[%s438 + $0x4] sm:$0xf]
      %v441 = vld [vmem:[%s438 + $0x8] sm:$0xf]
      %v442 = vld [vmem:[%s438 + $0xc] sm:$0xf]
      %v443 = vld [vmem:[%s438 + $0x10] sm:$0xf]
      %v444 = vld [vmem:[%s438 + $0x14] sm:$0xf]
      %v445 = vld [vmem:[%s438 + $0x18] sm:$0xf]
      %v446 = vld [vmem:[%s438 + $0x1c] sm:$0xf]
      %v447 = vld [vmem:[%s438 + $0x20] sm:$0xf]
      %v448 = vld [vmem:[%s438 + $0x24] sm:$0xf]
      %v449 = vld [vmem:[%s438 + $0x28] sm:$0xf]
      %v450 = vld [vmem:[%s438 + $0x2c] sm:$0xf]
      %v451 = vld [vmem:[%s438 + $0x30] sm:$0xf]
      %v452 = vld [vmem:[%s438 + $0x34] sm:$0xf]
      %v453 = vld [vmem:[%s438 + $0x38] sm:$0xf]
      %v454 = vld [vmem:[%s438 + $0x3c] sm:$0xf]
      %v456 = vunpack.c.l.b16 %v212
      %v457 = vpack.c.b16 %v456, %v456
      %vm458 = vsmask.f32 7424
      %v460 = vshrl.u32 %v277, 16
      %v462 = vshll.u32 %v277, 16
      %v464 = vrot.slane %v462, 1
      %v465 = vor.u32 %v460, %v464
      %v467 = vshll.u32 %v278, 16
      %v469 = vrot.slane %v467, 1
      %v470 = vsel %vm458, %v465, %v469
      %v471 = vshrl.u32 %v278, 16
      %v473 = vor.u32 %v471, %v469
      %v475 = vshll.u32 %v279, 16
      %v477 = vrot.slane %v475, 1
      %v478 = vsel %vm458, %v473, %v477
      %v479 = vshrl.u32 %v279, 16
      %v481 = vor.u32 %v479, %v477
      %v483 = vshll.u32 %v280, 16
      %v485 = vrot.slane %v483, 1
      %v486 = vsel %vm458, %v481, %v485
      %v487 = vshrl.u32 %v280, 16
      %v489 = vor.u32 %v487, %v485
      %v491 = vshll.u32 %v281, 16
      %v493 = vrot.slane %v491, 1
      %v494 = vsel %vm458, %v489, %v493
      %v495 = vshrl.u32 %v281, 16
      %v497 = vor.u32 %v495, %v493
      %v499 = vshll.u32 %v282, 16
      %v501 = vrot.slane %v499, 1
      %v502 = vsel %vm458, %v497, %v501
      %v503 = vshrl.u32 %v282, 16
      %v505 = vor.u32 %v503, %v501
      %v507 = vshll.u32 %v283, 16
      %v509 = vrot.slane %v507, 1
      %v510 = vsel %vm458, %v505, %v509
      %v511 = vshrl.u32 %v283, 16
      %v513 = vor.u32 %v511, %v509
      %v515 = vshll.u32 %v284, 16
      %v517 = vrot.slane %v515, 1
      %v518 = vsel %vm458, %v513, %v517
      %v519 = vshrl.u32 %v284, 16
      %v521 = vor.u32 %v519, %v517
      %v523 = vshll.u32 %v457, 16
      %v525 = vrot.slane %v523, 1
      %v526 = vsel %vm458, %v521, %v525
      %v551 = vunpack.c.l.b16 %v439
      %v552 = vunpack.c.l.b16 %v440
      %v553 = vunpack.c.l.b16 %v441
      %v554 = vunpack.c.l.b16 %v442
      %v555 = vunpack.c.l.b16 %v443
      %v556 = vunpack.c.l.b16 %v444
      %v557 = vunpack.c.l.b16 %v445
      %v558 = vunpack.c.l.b16 %v446
      %v559 = vunpack.c.l.b16 %v447
      %v560 = vunpack.c.l.b16 %v448
      %v561 = vunpack.c.l.b16 %v449
      %v562 = vunpack.c.l.b16 %v450
      %v563 = vunpack.c.l.b16 %v451
      %v564 = vunpack.c.l.b16 %v452
      %v565 = vunpack.c.l.b16 %v453
      %v566 = vunpack.c.l.b16 %v454
      %v567 = vpack.c.b16 %v552, %v551
      %v568 = vpack.c.b16 %v554, %v553
      %v569 = vpack.c.b16 %v556, %v555
      %v570 = vpack.c.b16 %v558, %v557
      %v571 = vpack.c.b16 %v560, %v559
      %v572 = vpack.c.b16 %v562, %v561
      %v573 = vpack.c.b16 %v564, %v563
      %v574 = vpack.c.b16 %v566, %v565
      %583 = vmatpush.bf16.msra.mxu0 %v574
      %584 = vmatpush.bf16.msra.mxu0 %v573
      %585 = vmatpush.bf16.msra.mxu0 %v572
      %586 = vmatpush.bf16.msra.mxu0 %v571
      %587 = vmatpush.bf16.msra.mxu0 %v570
      %588 = vmatpush.bf16.msra.mxu0 %v569
      %589 = vmatpush.bf16.msra.mxu0 %v568
      %590 = vmatpush.bf16.msra.mxu0 %v567
      %591 = vmatmul.bf16.gmra.mxu0 %v470
      %v592 = vpop.f32.mrf.mxu0
      %v593 = vadd.f32 0.0, %v592
      %v594 = vpop.f32.mrf.mxu0
      %v595 = vadd.f32 0.0, %v594
      %596 = vmatmul.bf16.gmra.mxu0 %v478
      %v597 = vpop.f32.mrf.mxu0
      %v598 = vadd.f32 0.0, %v597
      %v599 = vpop.f32.mrf.mxu0
      %v600 = vadd.f32 0.0, %v599
      %601 = vmatmul.bf16.gmra.mxu0 %v486
      %v602 = vpop.f32.mrf.mxu0
      %v603 = vadd.f32 0.0, %v602
      %v604 = vpop.f32.mrf.mxu0
      %v605 = vadd.f32 0.0, %v604
      %606 = vmatmul.bf16.gmra.mxu0 %v494
      %v607 = vpop.f32.mrf.mxu0
      %v608 = vadd.f32 0.0, %v607
      %v609 = vpop.f32.mrf.mxu0
      %v610 = vadd.f32 0.0, %v609
      %611 = vmatmul.bf16.gmra.mxu0 %v502
      %v612 = vpop.f32.mrf.mxu0
      %v613 = vadd.f32 0.0, %v612
      %v614 = vpop.f32.mrf.mxu0
      %v615 = vadd.f32 0.0, %v614
      %616 = vmatmul.bf16.gmra.mxu0 %v510
      %v617 = vpop.f32.mrf.mxu0
      %v618 = vadd.f32 0.0, %v617
      %v619 = vpop.f32.mrf.mxu0
      %v620 = vadd.f32 0.0, %v619
      %621 = vmatmul.bf16.gmra.mxu0 %v518
      %v622 = vpop.f32.mrf.mxu0
      %v623 = vadd.f32 0.0, %v622
      %v624 = vpop.f32.mrf.mxu0
      %v625 = vadd.f32 0.0, %v624
      %626 = vmatmul.bf16.gmra.mxu0 %v526
      %v627 = vpop.f32.mrf.mxu0
      %v628 = vadd.f32 0.0, %v627
      %v629 = vpop.f32.mrf.mxu0
      %v630 = vadd.f32 0.0, %v629
      %631 = vdwg.mxu0
      %v632 = vadd.f32 %v422, %v593
      %v633 = vadd.f32 %v423, %v595
      %v634 = vadd.f32 %v424, %v598
      %v635 = vadd.f32 %v425, %v600
      %v636 = vadd.f32 %v426, %v603
      %v637 = vadd.f32 %v427, %v605
      %v638 = vadd.f32 %v428, %v608
      %v639 = vadd.f32 %v429, %v610
      %v640 = vadd.f32 %v430, %v613
      %v641 = vadd.f32 %v431, %v615
      %v642 = vadd.f32 %v432, %v618
      %v643 = vadd.f32 %v433, %v620
      %v644 = vadd.f32 %v434, %v623
      %v645 = vadd.f32 %v435, %v625
      %v646 = vadd.f32 %v436, %v628
      %v647 = vadd.f32 %v437, %v630
      %648 = vst [vmem:[#allocation2] sm:$0xff] %v632
      %649 = vst [vmem:[#allocation2 + $0x8] sm:$0xff] %v633
      %650 = vst [vmem:[#allocation2 + $0x10] sm:$0xff] %v634
      %651 = vst [vmem:[#allocation2 + $0x18] sm:$0xff] %v635
      %652 = vst [vmem:[#allocation2 + $0x20] sm:$0xff] %v636
      %653 = vst [vmem:[#allocation2 + $0x28] sm:$0xff] %v637
      %654 = vst [vmem:[#allocation2 + $0x30] sm:$0xff] %v638
      %655 = vst [vmem:[#allocation2 + $0x38] sm:$0xff] %v639
      %656 = vst [vmem:[#allocation2 + $0x40] sm:$0xff] %v640
      %657 = vst [vmem:[#allocation2 + $0x48] sm:$0xff] %v641
      %658 = vst [vmem:[#allocation2 + $0x50] sm:$0xff] %v642
      %659 = vst [vmem:[#allocation2 + $0x58] sm:$0xff] %v643
      %660 = vst [vmem:[#allocation2 + $0x60] sm:$0xff] %v644
      %661 = vst [vmem:[#allocation2 + $0x68] sm:$0xff] %v645
      %662 = vst [vmem:[#allocation2 + $0x70] sm:$0xff] %v646
      %663 = vst [vmem:[#allocation2 + $0x78] sm:$0xff] %v647
      %v664 = vld [vmem:[#allocation2] sm:$0xff]
      %v665 = vld [vmem:[#allocation2 + $0x8] sm:$0xff]
      %v666 = vld [vmem:[#allocation2 + $0x10] sm:$0xff]
      %v667 = vld [vmem:[#allocation2 + $0x18] sm:$0xff]
      %v668 = vld [vmem:[#allocation2 + $0x20] sm:$0xff]
      %v669 = vld [vmem:[#allocation2 + $0x28] sm:$0xff]
      %v670 = vld [vmem:[#allocation2 + $0x30] sm:$0xff]
      %v671 = vld [vmem:[#allocation2 + $0x38] sm:$0xff]
      %v672 = vld [vmem:[#allocation2 + $0x40] sm:$0xff]
      %v673 = vld [vmem:[#allocation2 + $0x48] sm:$0xff]
      %v674 = vld [vmem:[#allocation2 + $0x50] sm:$0xff]
      %v675 = vld [vmem:[#allocation2 + $0x58] sm:$0xff]
      %v676 = vld [vmem:[#allocation2 + $0x60] sm:$0xff]
      %v677 = vld [vmem:[#allocation2 + $0x68] sm:$0xff]
      %v678 = vld [vmem:[#allocation2 + $0x70] sm:$0xff]
      %v679 = vld [vmem:[#allocation2 + $0x78] sm:$0xff]
      %s680 = scalar_lea.vmem %s175, 128
      %v681 = vld [vmem:[%s680] sm:$0xf]
      %v682 = vld [vmem:[%s680 + $0x4] sm:$0xf]
      %v683 = vld [vmem:[%s680 + $0x8] sm:$0xf]
      %v684 = vld [vmem:[%s680 + $0xc] sm:$0xf]
      %v685 = vld [vmem:[%s680 + $0x10] sm:$0xf]
      %v686 = vld [vmem:[%s680 + $0x14] sm:$0xf]
      %v687 = vld [vmem:[%s680 + $0x18] sm:$0xf]
      %v688 = vld [vmem:[%s680 + $0x1c] sm:$0xf]
      %v689 = vld [vmem:[%s680 + $0x20] sm:$0xf]
      %v690 = vld [vmem:[%s680 + $0x24] sm:$0xf]
      %v691 = vld [vmem:[%s680 + $0x28] sm:$0xf]
      %v692 = vld [vmem:[%s680 + $0x2c] sm:$0xf]
      %v693 = vld [vmem:[%s680 + $0x30] sm:$0xf]
      %v694 = vld [vmem:[%s680 + $0x34] sm:$0xf]
      %v695 = vld [vmem:[%s680 + $0x38] sm:$0xf]
      %v696 = vld [vmem:[%s680 + $0x3c] sm:$0xf]
      %vm697 = vcmask 1046528
      %v698 = vrot.slane %v277, 1
      %v699 = vrot.slane %v278, 1
      %v700 = vsel %vm697, %v698, %v699
      %v701 = vrot.slane %v279, 1
      %v702 = vsel %vm697, %v699, %v701
      %v703 = vrot.slane %v280, 1
      %v704 = vsel %vm697, %v701, %v703
      %v705 = vrot.slane %v281, 1
      %v706 = vsel %vm697, %v703, %v705
      %v707 = vrot.slane %v282, 1
      %v708 = vsel %vm697, %v705, %v707
      %v709 = vrot.slane %v283, 1
      %v710 = vsel %vm697, %v707, %v709
      %v711 = vrot.slane %v284, 1
      %v712 = vsel %vm697, %v709, %v711
      %v713 = vrot.slane %v457, 1
      %v714 = vsel %vm697, %v711, %v713
      %v739 = vunpack.c.l.b16 %v681
      %v740 = vunpack.c.l.b16 %v682
      %v741 = vunpack.c.l.b16 %v683
      %v742 = vunpack.c.l.b16 %v684
      %v743 = vunpack.c.l.b16 %v685
      %v744 = vunpack.c.l.b16 %v686
      %v745 = vunpack.c.l.b16 %v687
      %v746 = vunpack.c.l.b16 %v688
      %v747 = vunpack.c.l.b16 %v689
      %v748 = vunpack.c.l.b16 %v690
      %v749 = vunpack.c.l.b16 %v691
      %v750 = vunpack.c.l.b16 %v692
      %v751 = vunpack.c.l.b16 %v693
      %v752 = vunpack.c.l.b16 %v694
      %v753 = vunpack.c.l.b16 %v695
      %v754 = vunpack.c.l.b16 %v696
      %v755 = vpack.c.b16 %v740, %v739
      %v756 = vpack.c.b16 %v742, %v741
      %v757 = vpack.c.b16 %v744, %v743
      %v758 = vpack.c.b16 %v746, %v745
      %v759 = vpack.c.b16 %v748, %v747
      %v760 = vpack.c.b16 %v750, %v749
      %v761 = vpack.c.b16 %v752, %v751
      %v762 = vpack.c.b16 %v754, %v753
      %771 = vmatpush.bf16.msra.mxu0 %v762
      %772 = vmatpush.bf16.msra.mxu0 %v761
      %773 = vmatpush.bf16.msra.mxu0 %v760
      %774 = vmatpush.bf16.msra.mxu0 %v759
      %775 = vmatpush.bf16.msra.mxu0 %v758
      %776 = vmatpush.bf16.msra.mxu0 %v757
      %777 = vmatpush.bf16.msra.mxu0 %v756
      %778 = vmatpush.bf16.msra.mxu0 %v755
      %779 = vmatmul.bf16.gmra.mxu0 %v700
      %v780 = vpop.f32.mrf.mxu0
      %v781 = vadd.f32 0.0, %v780
      %v782 = vpop.f32.mrf.mxu0
      %v783 = vadd.f32 0.0, %v782
      %784 = vmatmul.bf16.gmra.mxu0 %v702
      %v785 = vpop.f32.mrf.mxu0
      %v786 = vadd.f32 0.0, %v785
      %v787 = vpop.f32.mrf.mxu0
      %v788 = vadd.f32 0.0, %v787
      %789 = vmatmul.bf16.gmra.mxu0 %v704
      %v790 = vpop.f32.mrf.mxu0
      %v791 = vadd.f32 0.0, %v790
      %v792 = vpop.f32.mrf.mxu0
      %v793 = vadd.f32 0.0, %v792
      %794 = vmatmul.bf16.gmra.mxu0 %v706
      %v795 = vpop.f32.mrf.mxu0
      %v796 = vadd.f32 0.0, %v795
      %v797 = vpop.f32.mrf.mxu0
      %v798 = vadd.f32 0.0, %v797
      %799 = vmatmul.bf16.gmra.mxu0 %v708
      %v800 = vpop.f32.mrf.mxu0
      %v801 = vadd.f32 0.0, %v800
      %v802 = vpop.f32.mrf.mxu0
      %v803 = vadd.f32 0.0, %v802
      %804 = vmatmul.bf16.gmra.mxu0 %v710
      %v805 = vpop.f32.mrf.mxu0
      %v806 = vadd.f32 0.0, %v805
      %v807 = vpop.f32.mrf.mxu0
      %v808 = vadd.f32 0.0, %v807
      %809 = vmatmul.bf16.gmra.mxu0 %v712
      %v810 = vpop.f32.mrf.mxu0
      %v811 = vadd.f32 0.0, %v810
      %v812 = vpop.f32.mrf.mxu0
      %v813 = vadd.f32 0.0, %v812
      %814 = vmatmul.bf16.gmra.mxu0 %v714
      %v815 = vpop.f32.mrf.mxu0
      %v816 = vadd.f32 0.0, %v815
      %v817 = vpop.f32.mrf.mxu0
      %v818 = vadd.f32 0.0, %v817
      %819 = vdwg.mxu0
      %v820 = vadd.f32 %v664, %v781
      %v821 = vadd.f32 %v665, %v783
      %v822 = vadd.f32 %v666, %v786
      %v823 = vadd.f32 %v667, %v788
      %v824 = vadd.f32 %v668, %v791
      %v825 = vadd.f32 %v669, %v793
      %v826 = vadd.f32 %v670, %v796
      %v827 = vadd.f32 %v671, %v798
      %v828 = vadd.f32 %v672, %v801
      %v829 = vadd.f32 %v673, %v803
      %v830 = vadd.f32 %v674, %v806
      %v831 = vadd.f32 %v675, %v808
      %v832 = vadd.f32 %v676, %v811
      %v833 = vadd.f32 %v677, %v813
      %v834 = vadd.f32 %v678, %v816
      %v835 = vadd.f32 %v679, %v818
      %836 = vst [vmem:[#allocation2] sm:$0xff] %v820
      %837 = vst [vmem:[#allocation2 + $0x8] sm:$0xff] %v821
      %838 = vst [vmem:[#allocation2 + $0x10] sm:$0xff] %v822
      %839 = vst [vmem:[#allocation2 + $0x18] sm:$0xff] %v823
      %840 = vst [vmem:[#allocation2 + $0x20] sm:$0xff] %v824
      %841 = vst [vmem:[#allocation2 + $0x28] sm:$0xff] %v825
      %842 = vst [vmem:[#allocation2 + $0x30] sm:$0xff] %v826
      %843 = vst [vmem:[#allocation2 + $0x38] sm:$0xff] %v827
      %844 = vst [vmem:[#allocation2 + $0x40] sm:$0xff] %v828
      %845 = vst [vmem:[#allocation2 + $0x48] sm:$0xff] %v829
      %846 = vst [vmem:[#allocation2 + $0x50] sm:$0xff] %v830
      %847 = vst [vmem:[#allocation2 + $0x58] sm:$0xff] %v831
      %848 = vst [vmem:[#allocation2 + $0x60] sm:$0xff] %v832
      %849 = vst [vmem:[#allocation2 + $0x68] sm:$0xff] %v833
      %850 = vst [vmem:[#allocation2 + $0x70] sm:$0xff] %v834
      %851 = vst [vmem:[#allocation2 + $0x78] sm:$0xff] %v835
      %v852 = vld [vmem:[#allocation2] sm:$0xff]
      %v853 = vld [vmem:[#allocation2 + $0x8] sm:$0xff]
      %v854 = vld [vmem:[#allocation2 + $0x10] sm:$0xff]
      %v855 = vld [vmem:[#allocation2 + $0x18] sm:$0xff]
      %v856 = vld [vmem:[#allocation2 + $0x20] sm:$0xff]
      %v857 = vld [vmem:[#allocation2 + $0x28] sm:$0xff]
      %v858 = vld [vmem:[#allocation2 + $0x30] sm:$0xff]
      %v859 = vld [vmem:[#allocation2 + $0x38] sm:$0xff]
      %v860 = vld [vmem:[#allocation2 + $0x40] sm:$0xff]
      %v861 = vld [vmem:[#allocation2 + $0x48] sm:$0xff]
      %v862 = vld [vmem:[#allocation2 + $0x50] sm:$0xff]
      %v863 = vld [vmem:[#allocation2 + $0x58] sm:$0xff]
      %v864 = vld [vmem:[#allocation2 + $0x60] sm:$0xff]
      %v865 = vld [vmem:[#allocation2 + $0x68] sm:$0xff]
      %v866 = vld [vmem:[#allocation2 + $0x70] sm:$0xff]
      %v867 = vld [vmem:[#allocation2 + $0x78] sm:$0xff]
      %s868 = scalar_lea.vmem %s175, 192
      %v869 = vld [vmem:[%s868] sm:$0xf]
      %v870 = vld [vmem:[%s868 + $0x4] sm:$0xf]
      %v871 = vld [vmem:[%s868 + $0x8] sm:$0xf]
      %v872 = vld [vmem:[%s868 + $0xc] sm:$0xf]
      %v873 = vld [vmem:[%s868 + $0x10] sm:$0xf]
      %v874 = vld [vmem:[%s868 + $0x14] sm:$0xf]
      %v875 = vld [vmem:[%s868 + $0x18] sm:$0xf]
      %v876 = vld [vmem:[%s868 + $0x1c] sm:$0xf]
      %v877 = vld [vmem:[%s868 + $0x20] sm:$0xf]
      %v878 = vld [vmem:[%s868 + $0x24] sm:$0xf]
      %v879 = vld [vmem:[%s868 + $0x28] sm:$0xf]
      %v880 = vld [vmem:[%s868 + $0x2c] sm:$0xf]
      %v881 = vld [vmem:[%s868 + $0x30] sm:$0xf]
      %v882 = vld [vmem:[%s868 + $0x34] sm:$0xf]
      %v883 = vld [vmem:[%s868 + $0x38] sm:$0xf]
      %v884 = vld [vmem:[%s868 + $0x3c] sm:$0xf]
      %vm885 = vsmask.f32 6400
      %v886 = vrot.slane %v460, 1
      %v887 = vrot.slane %v462, 2
      %v888 = vor.u32 %v886, %v887
      %v889 = vrot.slane %v471, 1
      %v890 = vrot.slane %v467, 2
      %v891 = vor.u32 %v889, %v890
      %v892 = vsel %vm885, %v888, %v891
      %v893 = vrot.slane %v479, 1
      %v894 = vrot.slane %v475, 2
      %v895 = vor.u32 %v893, %v894
      %v896 = vsel %vm885, %v891, %v895
      %v897 = vrot.slane %v487, 1
      %v898 = vrot.slane %v483, 2
      %v899 = vor.u32 %v897, %v898
      %v900 = vsel %vm885, %v895, %v899
      %v901 = vrot.slane %v495, 1
      %v902 = vrot.slane %v491, 2
      %v903 = vor.u32 %v901, %v902
      %v904 = vsel %vm885, %v899, %v903
      %v905 = vrot.slane %v503, 1
      %v906 = vrot.slane %v499, 2
      %v907 = vor.u32 %v905, %v906
      %v908 = vsel %vm885, %v903, %v907
      %v909 = vrot.slane %v511, 1
      %v910 = vrot.slane %v507, 2
      %v911 = vor.u32 %v909, %v910
      %v912 = vsel %vm885, %v907, %v911
      %v913 = vrot.slane %v519, 1
      %v914 = vrot.slane %v515, 2
      %v915 = vor.u32 %v913, %v914
      %v916 = vsel %vm885, %v911, %v915
      %v917 = vshrl.u32 %v457, 16
      %v919 = vrot.slane %v917, 1
      %v920 = vrot.slane %v523, 2
      %v921 = vor.u32 %v919, %v920
      %v922 = vsel %vm885, %v915, %v921
      %v947 = vunpack.c.l.b16 %v869
      %v948 = vunpack.c.l.b16 %v870
      %v949 = vunpack.c.l.b16 %v871
      %v950 = vunpack.c.l.b16 %v872
      %v951 = vunpack.c.l.b16 %v873
      %v952 = vunpack.c.l.b16 %v874
      %v953 = vunpack.c.l.b16 %v875
      %v954 = vunpack.c.l.b16 %v876
      %v955 = vunpack.c.l.b16 %v877
      %v956 = vunpack.c.l.b16 %v878
      %v957 = vunpack.c.l.b16 %v879
      %v958 = vunpack.c.l.b16 %v880
      %v959 = vunpack.c.l.b16 %v881
      %v960 = vunpack.c.l.b16 %v882
      %v961 = vunpack.c.l.b16 %v883
      %v962 = vunpack.c.l.b16 %v884
      %v963 = vpack.c.b16 %v948, %v947
      %v964 = vpack.c.b16 %v950, %v949
      %v965 = vpack.c.b16 %v952, %v951
      %v966 = vpack.c.b16 %v954, %v953
      %v967 = vpack.c.b16 %v956, %v955
      %v968 = vpack.c.b16 %v958, %v957
      %v969 = vpack.c.b16 %v960, %v959
      %v970 = vpack.c.b16 %v962, %v961
      %979 = vmatpush.bf16.msra.mxu0 %v970
      %980 = vmatpush.bf16.msra.mxu0 %v969
      %981 = vmatpush.bf16.msra.mxu0 %v968
      %982 = vmatpush.bf16.msra.mxu0 %v967
      %983 = vmatpush.bf16.msra.mxu0 %v966
      %984 = vmatpush.bf16.msra.mxu0 %v965
      %985 = vmatpush.bf16.msra.mxu0 %v964
      %986 = vmatpush.bf16.msra.mxu0 %v963
      %987 = vmatmul.bf16.gmra.mxu0 %v892
      %v988 = vpop.f32.mrf.mxu0
      %v989 = vadd.f32 0.0, %v988
      %v990 = vpop.f32.mrf.mxu0
      %v991 = vadd.f32 0.0, %v990
      %992 = vmatmul.bf16.gmra.mxu0 %v896
      %v993 = vpop.f32.mrf.mxu0
      %v994 = vadd.f32 0.0, %v993
      %v995 = vpop.f32.mrf.mxu0
      %v996 = vadd.f32 0.0, %v995
      %997 = vmatmul.bf16.gmra.mxu0 %v900
      %v998 = vpop.f32.mrf.mxu0
      %v999 = vadd.f32 0.0, %v998
      %v1000 = vpop.f32.mrf.mxu0
      %v1001 = vadd.f32 0.0, %v1000
      %1002 = vmatmul.bf16.gmra.mxu0 %v904
      %v1003 = vpop.f32.mrf.mxu0
      %v1004 = vadd.f32 0.0, %v1003
      %v1005 = vpop.f32.mrf.mxu0
      %v1006 = vadd.f32 0.0, %v1005
      %1007 = vmatmul.bf16.gmra.mxu0 %v908
      %v1008 = vpop.f32.mrf.mxu0
      %v1009 = vadd.f32 0.0, %v1008
      %v1010 = vpop.f32.mrf.mxu0
      %v1011 = vadd.f32 0.0, %v1010
      %1012 = vmatmul.bf16.gmra.mxu0 %v912
      %v1013 = vpop.f32.mrf.mxu0
      %v1014 = vadd.f32 0.0, %v1013
      %v1015 = vpop.f32.mrf.mxu0
      %v1016 = vadd.f32 0.0, %v1015
      %1017 = vmatmul.bf16.gmra.mxu0 %v916
      %v1018 = vpop.f32.mrf.mxu0
      %v1019 = vadd.f32 0.0, %v1018
      %v1020 = vpop.f32.mrf.mxu0
      %v1021 = vadd.f32 0.0, %v1020
      %1022 = vmatmul.bf16.gmra.mxu0 %v922
      %v1023 = vpop.f32.mrf.mxu0
      %v1024 = vadd.f32 0.0, %v1023
      %v1025 = vpop.f32.mrf.mxu0
      %v1026 = vadd.f32 0.0, %v1025
      %1027 = vdwg.mxu0
      %v1028 = vadd.f32 %v852, %v989
      %v1029 = vadd.f32 %v853, %v991
      %v1030 = vadd.f32 %v854, %v994
      %v1031 = vadd.f32 %v855, %v996
      %v1032 = vadd.f32 %v856, %v999
      %v1033 = vadd.f32 %v857, %v1001
      %v1034 = vadd.f32 %v858, %v1004
      %v1035 = vadd.f32 %v859, %v1006
      %v1036 = vadd.f32 %v860, %v1009
      %v1037 = vadd.f32 %v861, %v1011
      %v1038 = vadd.f32 %v862, %v1014
      %v1039 = vadd.f32 %v863, %v1016
      %v1040 = vadd.f32 %v864, %v1019
      %v1041 = vadd.f32 %v865, %v1021
      %v1042 = vadd.f32 %v866, %v1024
      %v1043 = vadd.f32 %v867, %v1026
      %1044 = vst [vmem:[#allocation2] sm:$0xff] %v1028
      %1045 = vst [vmem:[#allocation2 + $0x8] sm:$0xff] %v1029
      %1046 = vst [vmem:[#allocation2 + $0x10] sm:$0xff] %v1030
      %1047 = vst [vmem:[#allocation2 + $0x18] sm:$0xff] %v1031
      %1048 = vst [vmem:[#allocation2 + $0x20] sm:$0xff] %v1032
      %1049 = vst [vmem:[#allocation2 + $0x28] sm:$0xff] %v1033
      %1050 = vst [vmem:[#allocation2 + $0x30] sm:$0xff] %v1034
      %1051 = vst [vmem:[#allocation2 + $0x38] sm:$0xff] %v1035
      %1052 = vst [vmem:[#allocation2 + $0x40] sm:$0xff] %v1036
      %1053 = vst [vmem:[#allocation2 + $0x48] sm:$0xff] %v1037
      %1054 = vst [vmem:[#allocation2 + $0x50] sm:$0xff] %v1038
      %1055 = vst [vmem:[#allocation2 + $0x58] sm:$0xff] %v1039
      %1056 = vst [vmem:[#allocation2 + $0x60] sm:$0xff] %v1040
      %1057 = vst [vmem:[#allocation2 + $0x68] sm:$0xff] %v1041
      %1058 = vst [vmem:[#allocation2 + $0x70] sm:$0xff] %v1042
      %1059 = vst [vmem:[#allocation2 + $0x78] sm:$0xff] %v1043
      %p1060 = scmp.eq.s32.totalorder %s14, 3
      // Predicated region
      $region37: #{nlayer_discriminator_forward.9} parent=31 // pred_check
        %p1061 = pneg %p1060
      $region38: #{nlayer_discriminator_forward.9} parent=31 // pred_check_branch
        %1063 = sbr.rel (%p1061) target = $region40
      $region39: #{nlayer_discriminator_forward.9} parent=31 // pred_region
        %v1064 = vld [vmem:[#allocation2] sm:$0xff]
        %v1065 = vld [vmem:[#allocation2 + $0x8] sm:$0xff]
        %v1066 = vld [vmem:[#allocation2 + $0x10] sm:$0xff]
        %v1067 = vld [vmem:[#allocation2 + $0x18] sm:$0xff]
        %v1068 = vld [vmem:[#allocation2 + $0x20] sm:$0xff]
        %v1069 = vld [vmem:[#allocation2 + $0x28] sm:$0xff]
        %v1070 = vld [vmem:[#allocation2 + $0x30] sm:$0xff]
        %v1071 = vld [vmem:[#allocation2 + $0x38] sm:$0xff]
        %v1072 = vld [vmem:[#allocation2 + $0x40] sm:$0xff]
        %v1073 = vld [vmem:[#allocation2 + $0x48] sm:$0xff]
        %v1074 = vld [vmem:[#allocation2 + $0x50] sm:$0xff]
        %v1075 = vld [vmem:[#allocation2 + $0x58] sm:$0xff]
        %v1076 = vld [vmem:[#allocation2 + $0x60] sm:$0xff]
        %v1077 = vld [vmem:[#allocation2 + $0x68] sm:$0xff]
        %v1078 = vld [vmem:[#allocation2 + $0x70] sm:$0xff]
        %v1079 = vld [vmem:[#allocation2 + $0x78] sm:$0xff]
        %v1080 = vld [vmem:[%s2] sm:$0x1]
        %v1082 = vperm.slane %v1080, 0
        %v1084 = vadd.f32 %v1064, %v1082
        %v1085 = vadd.f32 %v1065, %v1082
        %v1086 = vadd.f32 %v1066, %v1082
        %v1087 = vadd.f32 %v1067, %v1082
        %v1088 = vadd.f32 %v1068, %v1082
        %v1089 = vadd.f32 %v1069, %v1082
        %v1090 = vadd.f32 %v1070, %v1082
        %v1091 = vadd.f32 %v1071, %v1082
        %v1092 = vadd.f32 %v1072, %v1082
        %v1093 = vadd.f32 %v1073, %v1082
        %v1094 = vadd.f32 %v1074, %v1082
        %v1095 = vadd.f32 %v1075, %v1082
        %v1096 = vadd.f32 %v1076, %v1082
        %v1097 = vadd.f32 %v1077, %v1082
        %v1098 = vadd.f32 %v1078, %v1082
        %v1099 = vadd.f32 %v1079, %v1082
        %v1100 = vpack.c.bf16 %v1084, %v1084
        %v1101 = vpack.c.bf16 %v1085, %v1085
        %v1102 = vpack.c.bf16 %v1086, %v1086
        %v1103 = vpack.c.bf16 %v1087, %v1087
        %v1104 = vpack.c.bf16 %v1088, %v1088
        %v1105 = vpack.c.bf16 %v1089, %v1089
        %v1106 = vpack.c.bf16 %v1090, %v1090
        %v1107 = vpack.c.bf16 %v1091, %v1091
        %v1108 = vpack.c.bf16 %v1092, %v1092
        %v1109 = vpack.c.bf16 %v1093, %v1093
        %v1110 = vpack.c.bf16 %v1094, %v1094
        %v1111 = vpack.c.bf16 %v1095, %v1095
        %v1112 = vpack.c.bf16 %v1096, %v1096
        %v1113 = vpack.c.bf16 %v1097, %v1097
        %v1114 = vpack.c.bf16 %v1098, %v1098
        %v1115 = vpack.c.bf16 %v1099, %v1099
        %1116 = vst [vmem:[%s3] sm:$0xf] %v1100
        %1117 = vst [vmem:[%s3 + $0x4] sm:$0xf] %v1101
        %1118 = vst [vmem:[%s3 + $0x8] sm:$0xf] %v1102
        %1119 = vst [vmem:[%s3 + $0xc] sm:$0xf] %v1103
        %1120 = vst [vmem:[%s3 + $0x10] sm:$0xf] %v1104
        %1121 = vst [vmem:[%s3 + $0x14] sm:$0xf] %v1105
        %1122 = vst [vmem:[%s3 + $0x18] sm:$0xf] %v1106
        %1123 = vst [vmem:[%s3 + $0x1c] sm:$0xf] %v1107
        %1124 = vst [vmem:[%s3 + $0x20] sm:$0xf] %v1108
        %1125 = vst [vmem:[%s3 + $0x24] sm:$0xf] %v1109
        %1126 = vst [vmem:[%s3 + $0x28] sm:$0xf] %v1110
        %1127 = vst [vmem:[%s3 + $0x2c] sm:$0xf] %v1111
        %1128 = vst [vmem:[%s3 + $0x30] sm:$0xf] %v1112
        %1129 = vst [vmem:[%s3 + $0x34] sm:$0xf] %v1113
        %1130 = vst [vmem:[%s3 + $0x38] sm:$0xf] %v1114
        %1131 = vst [vmem:[%s3 + $0x3c] sm:$0xf] %v1115
      $region40: #{nlayer_discriminator_forward.9} parent=31 // pred_fallthru
        _
      // Predicated region
      $region41: #{nlayer_discriminator_forward.9} parent=31 // pred_check
        %p1132 = pneg %p100
      $region42: #{nlayer_discriminator_forward.9} parent=31 // pred_check_branch
        %1134 = sbr.rel (%p1132) target = $region44
      $region43: #{nlayer_discriminator_forward.9} parent=31 // pred_region
        _
      $region44: #{nlayer_discriminator_forward.9} parent=31 // pred_fallthru
        _
      // Predicated region
      $region45: #{nlayer_discriminator_forward.9} parent=31 // pred_check
        %p1135 = pneg %p100
      $region46: #{nlayer_discriminator_forward.9} parent=31 // pred_check_branch
        %1137 = sbr.rel (%p1135) target = $region48
      $region47: #{nlayer_discriminator_forward.9} parent=31 // pred_region
        _
      $region48: #{nlayer_discriminator_forward.9} parent=31 // pred_fallthru
        _
    $region32: #{nlayer_discriminator_forward.9} parent=5 // pred_fallthru
      _
    %p1138 = scmp.le.s32.totalorder 2, %s9
    // Predicated region
    $region49: #{nlayer_discriminator_forward.9} parent=5 // pred_check
      %p1139 = pneg %p1138
    $region50: #{nlayer_discriminator_forward.9} parent=5 // pred_check_branch
      %1141 = sbr.rel (%p1139) target = $region52
    $region51: #{nlayer_discriminator_forward.9} parent=5 // pred_region
      %s1142 = ssub.s32 %s9, 2
    $region52: #{nlayer_discriminator_forward.9} parent=5 // pred_fallthru
      _
  $region6: #{nlayer_discriminator_forward.9} parent=0 // loop_footer
    %s13 = sadd.s32 1, %s9
  $region7: #{nlayer_discriminator_forward.9} parent=0 // loop_footer_branch
    %8 = sbr.rel target = $region3
  $region8: #{nlayer_discriminator_forward.9} parent=0 // loop_exit
    _

</llo_original>
